<compile_context>
chip_gen: v7x
topology: tpu7x:2x2x1
jax: 0.10.0
libtpu: 0.0.40
codegen_flags: <defaults>
</compile_context>

<pallas_src>
import functools

import jax
import jax.numpy as jnp
from jax import lax
from jax.experimental import pallas as pl
from jax.experimental.pallas import tpu as pltpu


_EPS = 1e-5
_VMEM_LIMIT = 32 * 1024 * 1024   # explicit scoped-VMEM cap; safe on v5e/v6e/v7x


# -----------------------------------------------------------------------------
# Kernel 1: stage 0 -- fused Linear -> ReLU -> ConvT(hidden, 64, 4) on a 1x1
# map.  A ConvTranspose on a 1x1 input just "paints" the kernel, i.e. a GEMM:
#     g0[b, (co, oy, ox)] = relu(x @ Wl + bl)[b, :] @ W0[:, (co, oy, ox)]
# ct0's bias is dropped (cancelled by the following train-mode BatchNorm).
# Single grid step: the Linear sub-GEMM is computed exactly once.
# -----------------------------------------------------------------------------
def _stage0_kernel(x_ref, wl_ref, bl_ref, w0_ref, o_ref):
    h = jnp.dot(x_ref[...].astype(jnp.bfloat16), wl_ref[...],
                preferred_element_type=jnp.float32)          # (B, hidden) f32
    h = jnp.maximum(h + bl_ref[...], 0.0).astype(jnp.bfloat16)
    o_ref[...] = jnp.dot(h, w0_ref[...], preferred_element_type=jnp.float32)


def stage0_linear_convt(x, wl_bf16, bl_row, w0_bf16):
    B, z = x.shape
    hidden, n = w0_bf16.shape                                # n = 16 * c0
    return pl.pallas_call(
        _stage0_kernel,
        out_shape=jax.ShapeDtypeStruct((B, n), jnp.float32),
        grid=(1,),
        in_specs=[
            pl.BlockSpec((B, z), lambda i: (0, 0)),
            pl.BlockSpec((z, hidden), lambda i: (0, 0)),
            pl.BlockSpec((1, hidden), lambda i: (0, 0)),
            pl.BlockSpec((hidden, n), lambda i: (0, 0)),
        ],
        out_specs=pl.BlockSpec((B, n), lambda i: (0, 0)),
        compiler_params=pltpu.CompilerParams(
            dimension_semantics=("arbitrary",),
            vmem_limit_bytes=_VMEM_LIMIT),
    )(x, wl_bf16, bl_row, w0_bf16)


# -----------------------------------------------------------------------------
# Kernel 2..5: one fused kernel per stride-2 ConvTranspose stage.
#   input  y (Cin, N) f32, N = B*sh*sw, channels-first, plain spatial order
#   output P (4*Cout, N) f32 -- the 4 output-parity phases of the ConvT,
#                               rows ordered ((r, s), co), columns (b, m, n)
# Inside one kernel body (whole problem is a single VMEM block):
#   1) per-channel batch mean / biased variance of the INPUT (BN of the
#      previous layer)   2) BN scale/shift (computed once) + ReLU -> bf16
#   3) nine statically shifted + boundary-masked copies of the activation
#   4) one MXU GEMM against the precomputed phase weight matrix.
# -----------------------------------------------------------------------------
def _stride2_stage_kernel(y_ref, gamma_ref, beta_ref, w_ref, o_ref,
                          *, sh, sw, eps):
    x = y_ref[...]                                           # (Cin, N) f32
    cin, n = x.shape
    inv_n = 1.0 / n

    # --- train-mode BatchNorm batch statistics (order-independent) ---
    s1 = jnp.sum(x, axis=1, keepdims=True)
    s2 = jnp.sum(x * x, axis=1, keepdims=True)
    mean = s1 * inv_n
    var = jnp.maximum(s2 * inv_n - mean * mean, 0.0)         # clamp cancellation
    scale = gamma_ref[...] * lax.rsqrt(var + eps)            # (Cin, 1)
    shift = beta_ref[...] - mean * scale

    # --- BN apply + ReLU, bf16 MXU operand ---
    xb = jnp.maximum(x * scale + shift, 0.0).astype(jnp.bfloat16)

    # --- spatial coordinates of every column (sh, sw are powers of two) ---
    lane = lax.broadcasted_iota(jnp.int32, (cin, n), 1)
    ix = lane & (sw - 1)
    iy = (lane >> (sw.bit_length() - 1)) & (sh - 1)

    # --- nine shifted + masked copies: tap t=(dy+1)*3+(dx+1) reads (iy+dy, ix+dx)
    parts = []
    for dy in (-1, 0, 1):
        for dx in (-1, 0, 1):
            d = dy * sw + dx
            if d == 0:
                shifted = xb
            elif d > 0:
                shifted = jnp.concatenate(
                    [xb[:, d:], jnp.zeros((cin, d), xb.dtype)], axis=1)
            else:
                shifted = jnp.concatenate(
                    [jnp.zeros((cin, -d), xb.dtype), xb[:, :n + d]], axis=1)
            valid = ((ix + dx >= 0) & (ix + dx < sw) &
                     (iy + dy >= 0) & (iy + dy < sh))
            parts.append(jnp.where(valid, shifted, jnp.zeros_like(shifted)))
    x9 = jnp.concatenate(parts, axis=0)                      # (9*Cin, N) bf16

    # --- phase GEMM: overlap-add of the ConvTranspose folded into the weights
    o_ref[...] = jnp.dot(w_ref[...], x9, preferred_element_type=jnp.float32)


def stride2_stage(y_cf, gamma, beta, w_all, *, sh, sw, eps=_EPS):
    cin, n = y_cf.shape
    rows = w_all.shape[0]                                    # 4 * Cout
    kernel = functools.partial(_stride2_stage_kernel, sh=sh, sw=sw, eps=eps)
    return pl.pallas_call(
        kernel,
        out_shape=jax.ShapeDtypeStruct((rows, n), jnp.float32),
        grid=(1,),
        in_specs=[
            pl.BlockSpec((cin, n), lambda i: (0, 0)),
            pl.BlockSpec((cin, 1), lambda i: (0, 0)),
            pl.BlockSpec((cin, 1), lambda i: (0, 0)),
            pl.BlockSpec((rows, 9 * cin), lambda i: (0, 0)),
        ],
        out_specs=pl.BlockSpec((rows, n), lambda i: (0, 0)),
        compiler_params=pltpu.CompilerParams(
            dimension_semantics=("arbitrary",),
            vmem_limit_bytes=_VMEM_LIMIT),
    )(y_cf, gamma, beta, w_all)


# -----------------------------------------------------------------------------
# XLA glue: pure 2x2 sub-pixel interleave of the phase-major kernel output.
#   y[co, b, 2m+r, 2n+s] = P[(2r+s)*Cout + co, b*sh*sw + m*sw + n]
# (No overlap-add / padding here -- that is already inside the GEMM.)
# -----------------------------------------------------------------------------
def interleave_2x(p, cout, batch, sh, sw):
    y = p.reshape(2, 2, cout, batch, sh, sw)
    y = jnp.transpose(y, (2, 3, 4, 0, 5, 1))                 # (C, B, sh, 2, sw, 2)
    return y.reshape(cout, batch * (2 * sh) * (2 * sw))


# -----------------------------------------------------------------------------
# Parameters (deterministic, synthetic) in PyTorch layout + kernel-side prep.
# -----------------------------------------------------------------------------
def init_params(key, z_dim=10, nc=3, hidden_dim=256):
    ks = jax.random.split(key, 16)
    s = 0.05
    p = {}
    p["lin_w"] = s * jax.random.normal(ks[0], (z_dim, hidden_dim), jnp.float32)
    p["lin_b"] = s * jax.random.normal(ks[1], (hidden_dim,), jnp.float32)

    def convt(kw, kb, cin, cout):
        return (s * jax.random.normal(kw, (cin, cout, 4, 4), jnp.float32),
                s * jax.random.normal(kb, (cout,), jnp.float32))

    p["ct0_w"], p["ct0_b"] = convt(ks[2], ks[3], hidden_dim, 64)
    p["ct1_w"], p["ct1_b"] = convt(ks[4], ks[5], 64, 64)
    p["ct2_w"], p["ct2_b"] = convt(ks[6], ks[7], 64, 32)
    p["ct3_w"], p["ct3_b"] = convt(ks[8], ks[9], 32, 32)
    p["ct4_w"], p["ct4_b"] = convt(ks[10], ks[11], 32, nc)

    for name, c in (("bn0", 64), ("bn1", 64), ("bn2", 32), ("bn3", 32)):
        p[name + "_g"] = jnp.ones((c,), jnp.float32)
        p[name + "_b"] = jnp.zeros((c,), jnp.float32)
    return p


def _phase_weight(w):
    """ConvT(k=4,s=2,p=1) weight (Cin,Cout,4,4) -> phase GEMM matrix.

    Result: (4*Cout, 9*Cin) bf16.  Rows ordered ((r, s), co) over the 2x2
    output parities; columns ordered (tap t=(dy+1)*3+(dx+1), ci).  Entry is
    w[ci, co, ky, kx] for the kernel tap that maps input offset (dy, dx) to
    output parity (r, s) (from oy = 2*iy + ky - 1), zero otherwise.
    """
    cin, cout = w.shape[0], w.shape[1]
    zeros = jnp.zeros((cout, cin), jnp.float32)

    def k_of(r, d):
        return ({0: 1, -1: 3} if r == 0 else {0: 2, 1: 0}).get(d)

    row_blocks = []
    for r in (0, 1):
        for s in (0, 1):
            blocks = []
            for dy in (-1, 0, 1):
                for dx in (-1, 0, 1):
                    ky, kx = k_of(r, dy), k_of(s, dx)
                    blocks.append(zeros if (ky is None or kx is None)
                                  else jnp.transpose(w[:, :, ky, kx]))
            row_blocks.append(jnp.concatenate(blocks, axis=1))   # (Cout, 9*Cin)
    return jnp.concatenate(row_blocks, axis=0).astype(jnp.bfloat16)


def prepare_params(p):
    kp = {
        "lin_w": p["lin_w"].astype(jnp.bfloat16),                     # (z, hidden)
        "lin_b": p["lin_b"].reshape(1, -1),                           # (1, hidden)
        # 1x1 ConvT == GEMM; columns ordered (co, ky, kx)
        "w0": p["ct0_w"].reshape(p["ct0_w"].shape[0], -1).astype(jnp.bfloat16),
        "b4": p["ct4_b"],
    }
    for i in (1, 2, 3, 4):
        kp[f"w{i}"] = _phase_weight(p[f"ct{i}_w"])                    # (4*Cout, 9*Cin)
    for i in range(4):
        kp[f"gamma{i}"] = p[f"bn{i}_g"].reshape(-1, 1)
        kp[f"beta{i}"] = p[f"bn{i}_b"].reshape(-1, 1)
    # ct0_b..ct3_b intentionally unused: each is immediately followed by a
    # train-mode BatchNorm (batch statistics), which subtracts the per-channel
    # batch mean and cancels any per-channel constant exactly.
    return kp


# -----------------------------------------------------------------------------
# Full forward pass
# -----------------------------------------------------------------------------
def kitti_conv_decoder_forward(kp, x):
    """x: (B, z_dim) -> (B, nc, 64, 64) NCHW, matching the PyTorch module."""
    B = x.shape[0]

    # Stage 0: Linear -> View -> ReLU -> ConvT(hidden, 64, 4) on 1x1.
    g0 = stage0_linear_convt(x, kp["lin_w"], kp["lin_b"], kp["w0"])   # (B, 16*c0)
    c0 = g0.shape[1] // 16
    # tiny transpose to channels-first plain order (c0, B*4*4)
    y = g0.reshape(B, c0, 16).transpose(1, 0, 2).reshape(c0, B * 16)

    nc = kp["w4"].shape[0] // 4
    sh = 4
    for i, cout in ((1, 64), (2, 32), (3, 32), (4, nc)):
        p_phase = stride2_stage(y, kp[f"gamma{i-1}"], kp[f"beta{i-1}"],
                                kp[f"w{i}"], sh=sh, sw=sh)            # (4*Cout, N)
        y = interleave_2x(p_phase, cout, B, sh, sh)                   # (Cout, 4*N)
        sh *= 2

    out = y.reshape(nc, B, 64, 64).transpose(1, 0, 2, 3)              # NCHW
    return out + kp["b4"][None, :, None, None]                        # final ConvT bias


# -----------------------------------------------------------------------------
# Pure-JAX/XLA reference (f32, PyTorch-layout params) for a numerical check.
# -----------------------------------------------------------------------------
def reference_forward(p, x, eps=_EPS):
    B = x.shape[0]
    h = jnp.maximum(x @ p["lin_w"] + p["lin_b"], 0.0)
    y = h.reshape(B, -1, 1, 1)

    def conv_t(y, w, b, stride, pad):
        k = jnp.transpose(w[:, :, ::-1, ::-1], (1, 0, 2, 3))          # (Cout,Cin,K,K)
        K = w.shape[2]
        out = lax.conv_general_dilated(
            y, k, window_strides=(1, 1),
            padding=[(K - 1 - pad, K - 1 - pad)] * 2,
            lhs_dilation=(stride, stride),
            dimension_numbers=("NCHW", "OIHW", "NCHW"))
        return out + b[None, :, None, None]

    def bn_relu(y, g, bb):
        m = jnp.mean(y, axis=(0, 2, 3), keepdims=True)
        v = jnp.mean((y - m) ** 2, axis=(0, 2, 3), keepdims=True)
        yn = (y - m) * lax.rsqrt(v + eps) * g[None, :, None, None] \
            + bb[None, :, None, None]
        return jnp.maximum(yn, 0.0)

    y = conv_t(y, p["ct0_w"], p["ct0_b"], 1, 0); y = bn_relu(y, p["bn0_g"], p["bn0_b"])
    y = conv_t(y, p["ct1_w"], p["ct1_b"], 2, 1); y = bn_relu(y, p["bn1_g"], p["bn1_b"])
    y = conv_t(y, p["ct2_w"], p["ct2_b"], 2, 1); y = bn_relu(y, p["bn2_g"], p["bn2_b"])
    y = conv_t(y, p["ct3_w"], p["ct3_b"], 2, 1); y = bn_relu(y, p["bn3_g"], p["bn3_b"])
    return conv_t(y, p["ct4_w"], p["ct4_b"], 2, 1)


if __name__ == "__main__":
    key = jax.random.PRNGKey(0)
    k_param, k_x = jax.random.split(key)

    z_dim, nc, hidden_dim, B = 10, 3, 256, 2
    params = init_params(k_param, z_dim=z_dim, nc=nc, hidden_dim=hidden_dim)
    kparams = prepare_params(params)
    x = jax.random.normal(k_x, (B, z_dim), jnp.float32)

    out = jax.jit(kitti_conv_decoder_forward)(kparams, x)
    out = jax.block_until_ready(out)

    assert out.shape == (B, nc, 64, 64), out.shape
    assert out.dtype == jnp.float32
    assert bool(jnp.all(jnp.isfinite(out)))

    # Compare against the f32 XLA reference (Pallas path uses bf16 MXU
    # operands, hence the loose tolerance).
    ref = jax.jit(reference_forward)(params, x)
    ref = jax.block_until_ready(ref)
    max_err = float(jnp.max(jnp.abs(out - ref)))
    assert max_err < 2e-1, max_err

    print("KERNEL_OK")
</pallas_src>

<mosaic_0001>
module attributes {stable_mosaic.version = 11 : i64} {
  func.func @_stage0_kernel(%arg0: i32, %arg1: memref<2x10xf32, #tpu.memory_space<vmem>>, %arg2: memref<10x256xbf16, #tpu.memory_space<vmem>>, %arg3: memref<1x256xf32, #tpu.memory_space<vmem>>, %arg4: memref<256x1024xbf16, #tpu.memory_space<vmem>>, %arg5: memref<2x1024xf32, #tpu.memory_space<vmem>>) attributes {dimension_semantics = [#tpu.dimension_semantics<arbitrary>], iteration_bounds = array<i64: 1>, scalar_prefetch = 0 : i64, scratch_operands = 0 : i64, tpu.core_type = #tpu.core_type<tc>, window_params = [{pipeline_mode = #tpu.pipeline_mode<synchronous>, transform_indices = @transform_0, window_bounds = array<i64: 2, 10>}, {pipeline_mode = #tpu.pipeline_mode<synchronous>, transform_indices = @transform_1, window_bounds = array<i64: 10, 256>}, {pipeline_mode = #tpu.pipeline_mode<synchronous>, transform_indices = @transform_2, window_bounds = array<i64: 1, 256>}, {pipeline_mode = #tpu.pipeline_mode<synchronous>, transform_indices = @transform_3, window_bounds = array<i64: 256, 1024>}, {pipeline_mode = #tpu.pipeline_mode<synchronous>, transform_indices = @transform_4, window_bounds = array<i64: 2, 1024>}]} {
    %c0 = arith.constant 0 : index
    %c0_0 = arith.constant 0 : index
    %0 = vector.load %arg1[%c0, %c0_0] : memref<2x10xf32, #tpu.memory_space<vmem>>, vector<2x10xf32>
    %1 = arith.truncf %0 : vector<2x10xf32> to vector<2x10xbf16>
    %c0_1 = arith.constant 0 : index
    %c0_2 = arith.constant 0 : index
    %2 = vector.load %arg2[%c0_1, %c0_2] : memref<10x256xbf16, #tpu.memory_space<vmem>>, vector<10x256xbf16>
    %cst = arith.constant dense<0.000000e+00> : vector<2x256xf32>
    %3 = tpu.matmul %1, %2, %cst {dimension_numbers = #tpu.dot_dimension_numbers<[1], [0], [0], [1], [0, 0, 1, 1], [], []>} : vector<2x10xbf16>, vector<10x256xbf16>, vector<2x256xf32> -> vector<2x256xf32>
    %c0_3 = arith.constant 0 : index
    %c0_4 = arith.constant 0 : index
    %4 = vector.load %arg3[%c0_3, %c0_4] : memref<1x256xf32, #tpu.memory_space<vmem>>, vector<1x256xf32>
    %5 = vector.broadcast %4 : vector<1x256xf32> to vector<2x256xf32>
    %6 = arith.addf %3, %5 : vector<2x256xf32>
    %cst_5 = arith.constant 0.000000e+00 : f32
    %7 = vector.broadcast %cst_5 : f32 to vector<2x256xf32>
    %8 = arith.maximumf %6, %7 : vector<2x256xf32>
    %9 = arith.truncf %8 : vector<2x256xf32> to vector<2x256xbf16>
    %c0_6 = arith.constant 0 : index
    %c0_7 = arith.constant 0 : index
    %10 = vector.load %arg4[%c0_6, %c0_7] : memref<256x1024xbf16, #tpu.memory_space<vmem>>, vector<256x1024xbf16>
    %cst_8 = arith.constant dense<0.000000e+00> : vector<2x1024xf32>
    %11 = tpu.matmul %9, %10, %cst_8 {dimension_numbers = #tpu.dot_dimension_numbers<[1], [0], [0], [1], [0, 0, 1, 1], [], []>} : vector<2x256xbf16>, vector<256x1024xbf16>, vector<2x1024xf32> -> vector<2x1024xf32>
    %c0_9 = arith.constant 0 : index
    %c0_10 = arith.constant 0 : index
    %12 = vector.load %arg5[%c0_9, %c0_10] : memref<2x1024xf32, #tpu.memory_space<vmem>>, vector<2x1024xf32>
    tpu.vector_store %arg5[%c0_9, %c0_10], %11 {strides = array<i32>} : memref<2x1024xf32, #tpu.memory_space<vmem>>, vector<2x1024xf32>,
    return
  }
  func.func @transform_0(%arg0: i32) -> (i32, i32) {
    %c0_i32 = arith.constant 0 : i32
    %c0_i32_0 = arith.constant 0 : i32
    %c0_i32_1 = arith.constant 0 : i32
    return %c0_i32, %c0_i32_0 : i32, i32
  }
  func.func @transform_1(%arg0: i32) -> (i32, i32) {
    %c0_i32 = arith.constant 0 : i32
    %c0_i32_0 = arith.constant 0 : i32
    %c0_i32_1 = arith.constant 0 : i32
    return %c0_i32, %c0_i32_0 : i32, i32
  }
  func.func @transform_2(%arg0: i32) -> (i32, i32) {
    %c0_i32 = arith.constant 0 : i32
    %c0_i32_0 = arith.constant 0 : i32
    %c0_i32_1 = arith.constant 0 : i32
    return %c0_i32, %c0_i32_0 : i32, i32
  }
  func.func @transform_3(%arg0: i32) -> (i32, i32) {
    %c0_i32 = arith.constant 0 : i32
    %c0_i32_0 = arith.constant 0 : i32
    %c0_i32_1 = arith.constant 0 : i32
    return %c0_i32, %c0_i32_0 : i32, i32
  }
  func.func @transform_4(%arg0: i32) -> (i32, i32) {
    %c0_i32 = arith.constant 0 : i32
    %c0_i32_0 = arith.constant 0 : i32
    %c0_i32_1 = arith.constant 0 : i32
    return %c0_i32, %c0_i32_0 : i32, i32
  }
}

module attributes {stable_mosaic.version = 11 : i64} {
  func.func @_stride2_stage_kernel(%arg0: i32, %arg1: memref<64x32xf32, #tpu.memory_space<vmem>>, %arg2: memref<64x1xf32, #tpu.memory_space<vmem>>, %arg3: memref<64x1xf32, #tpu.memory_space<vmem>>, %arg4: memref<256x576xbf16, #tpu.memory_space<vmem>>, %arg5: memref<256x32xf32, #tpu.memory_space<vmem>>) attributes {dimension_semantics = [#tpu.dimension_semantics<arbitrary>], iteration_bounds = array<i64: 1>, scalar_prefetch = 0 : i64, scratch_operands = 0 : i64, tpu.core_type = #tpu.core_type<tc>, window_params = [{pipeline_mode = #tpu.pipeline_mode<synchronous>, transform_indices = @transform_0, window_bounds = array<i64: 64, 32>}, {pipeline_mode = #tpu.pipeline_mode<synchronous>, transform_indices = @transform_1, window_bounds = array<i64: 64, 1>}, {pipeline_mode = #tpu.pipeline_mode<synchronous>, transform_indices = @transform_2, window_bounds = array<i64: 64, 1>}, {pipeline_mode = #tpu.pipeline_mode<synchronous>, transform_indices = @transform_3, window_bounds = array<i64: 256, 576>}, {pipeline_mode = #tpu.pipeline_mode<synchronous>, transform_indices = @transform_4, window_bounds = array<i64: 256, 32>}]} {
    %c0 = arith.constant 0 : index
    %c0_0 = arith.constant 0 : index
    %0 = vector.load %arg1[%c0, %c0_0] : memref<64x32xf32, #tpu.memory_space<vmem>>, vector<64x32xf32>
    %cst = arith.constant dense<0.000000e+00> : vector<64xf32>
    %1 = vector.multi_reduction <add>, %0, %cst [1] : vector<64x32xf32> to vector<64xf32>
    %2 = vector.shape_cast %1 : vector<64xf32> to vector<64x1xf32>
    %3 = arith.mulf %0, %0 : vector<64x32xf32>
    %cst_1 = arith.constant dense<0.000000e+00> : vector<64xf32>
    %4 = vector.multi_reduction <add>, %3, %cst_1 [1] : vector<64x32xf32> to vector<64xf32>
    %5 = vector.shape_cast %4 : vector<64xf32> to vector<64x1xf32>
    %cst_2 = arith.constant 3.125000e-02 : f32
    %6 = vector.broadcast %cst_2 : f32 to vector<64x1xf32>
    %7 = arith.mulf %2, %6 : vector<64x1xf32>
    %cst_3 = arith.constant 3.125000e-02 : f32
    %8 = vector.broadcast %cst_3 : f32 to vector<64x1xf32>
    %9 = arith.mulf %5, %8 : vector<64x1xf32>
    %10 = arith.mulf %7, %7 : vector<64x1xf32>
    %11 = arith.subf %9, %10 : vector<64x1xf32>
    %cst_4 = arith.constant 0.000000e+00 : f32
    %12 = vector.broadcast %cst_4 : f32 to vector<64x1xf32>
    %13 = arith.maximumf %11, %12 : vector<64x1xf32>
    %c0_5 = arith.constant 0 : index
    %c0_6 = arith.constant 0 : index
    %14 = vector.load %arg2[%c0_5, %c0_6] : memref<64x1xf32, #tpu.memory_space<vmem>>, vector<64x1xf32>
    %cst_7 = arith.constant 9.99999974E-6 : f32
    %15 = vector.broadcast %cst_7 : f32 to vector<64x1xf32>
    %16 = arith.addf %13, %15 : vector<64x1xf32>
    %17 = math.rsqrt %16 : vector<64x1xf32>
    %18 = arith.mulf %14, %17 : vector<64x1xf32>
    %c0_8 = arith.constant 0 : index
    %c0_9 = arith.constant 0 : index
    %19 = vector.load %arg3[%c0_8, %c0_9] : memref<64x1xf32, #tpu.memory_space<vmem>>, vector<64x1xf32>
    %20 = arith.mulf %7, %18 : vector<64x1xf32>
    %21 = arith.subf %19, %20 : vector<64x1xf32>
    %22 = vector.broadcast %18 : vector<64x1xf32> to vector<64x32xf32>
    %23 = arith.mulf %0, %22 : vector<64x32xf32>
    %24 = vector.broadcast %21 : vector<64x1xf32> to vector<64x32xf32>
    %25 = arith.addf %23, %24 : vector<64x32xf32>
    %cst_10 = arith.constant 0.000000e+00 : f32
    %26 = vector.broadcast %cst_10 : f32 to vector<64x32xf32>
    %27 = arith.maximumf %25, %26 : vector<64x32xf32>
    %28 = arith.truncf %27 : vector<64x32xf32> to vector<64x32xbf16>
    %29 = tpu.iota {dimensions = array<i32: 1>} : vector<64x32xi32>
    %c3_i32 = arith.constant 3 : i32
    %30 = vector.broadcast %c3_i32 : i32 to vector<64x32xi32>
    %31 = arith.andi %29, %30 : vector<64x32xi32>
    %c2_i32 = arith.constant 2 : i32
    %32 = vector.broadcast %c2_i32 : i32 to vector<64x32xi32>
    %33 = arith.shrsi %29, %32 : vector<64x32xi32>
    %c3_i32_11 = arith.constant 3 : i32
    %34 = vector.broadcast %c3_i32_11 : i32 to vector<64x32xi32>
    %35 = arith.andi %33, %34 : vector<64x32xi32>
    %cst_12 = arith.constant 0.000000e+00 : bf16
    %36 = vector.broadcast %cst_12 : bf16 to vector<64x5xbf16>
    %37 = vector.extract_strided_slice %28 {offsets = [0, 0], sizes = [64, 27], strides = [1, 1]} : vector<64x32xbf16> to vector<64x27xbf16>
    %38 = tpu.concatenate %36, %37 in 1 : vector<64x5xbf16>, vector<64x27xbf16> -> vector<64x32xbf16>
    %c-1_i32 = arith.constant -1 : i32
    %39 = vector.broadcast %c-1_i32 : i32 to vector<64x32xi32>
    %40 = arith.addi %31, %39 : vector<64x32xi32>
    %c0_i32 = arith.constant 0 : i32
    %41 = vector.broadcast %c0_i32 : i32 to vector<64x32xi32>
    %42 = arith.cmpi sge, %40, %41 : vector<64x32xi32>
    %c-1_i32_13 = arith.constant -1 : i32
    %43 = vector.broadcast %c-1_i32_13 : i32 to vector<64x32xi32>
    %44 = arith.addi %31, %43 : vector<64x32xi32>
    %c4_i32 = arith.constant 4 : i32
    %45 = vector.broadcast %c4_i32 : i32 to vector<64x32xi32>
    %46 = arith.cmpi slt, %44, %45 : vector<64x32xi32>
    %47 = arith.andi %42, %46 : vector<64x32xi1>
    %c-1_i32_14 = arith.constant -1 : i32
    %48 = vector.broadcast %c-1_i32_14 : i32 to vector<64x32xi32>
    %49 = arith.addi %35, %48 : vector<64x32xi32>
    %c0_i32_15 = arith.constant 0 : i32
    %50 = vector.broadcast %c0_i32_15 : i32 to vector<64x32xi32>
    %51 = arith.cmpi sge, %49, %50 : vector<64x32xi32>
    %52 = arith.andi %47, %51 : vector<64x32xi1>
    %c-1_i32_16 = arith.constant -1 : i32
    %53 = vector.broadcast %c-1_i32_16 : i32 to vector<64x32xi32>
    %54 = arith.addi %35, %53 : vector<64x32xi32>
    %c4_i32_17 = arith.constant 4 : i32
    %55 = vector.broadcast %c4_i32_17 : i32 to vector<64x32xi32>
    %56 = arith.cmpi slt, %54, %55 : vector<64x32xi32>
    %57 = arith.andi %52, %56 : vector<64x32xi1>
    %cst_18 = arith.constant 0.000000e+00 : bf16
    %58 = vector.broadcast %cst_18 : bf16 to vector<64x32xbf16>
    %59 = arith.select %57, %38, %58 : vector<64x32xi1>, vector<64x32xbf16>
    %cst_19 = arith.constant 0.000000e+00 : bf16
    %60 = vector.broadcast %cst_19 : bf16 to vector<64x4xbf16>
    %61 = vector.extract_strided_slice %28 {offsets = [0, 0], sizes = [64, 28], strides = [1, 1]} : vector<64x32xbf16> to vector<64x28xbf16>
    %62 = tpu.concatenate %60, %61 in 1 : vector<64x4xbf16>, vector<64x28xbf16> -> vector<64x32xbf16>
    %c0_i32_20 = arith.constant 0 : i32
    %63 = vector.broadcast %c0_i32_20 : i32 to vector<64x32xi32>
    %64 = arith.addi %31, %63 : vector<64x32xi32>
    %c0_i32_21 = arith.constant 0 : i32
    %65 = vector.broadcast %c0_i32_21 : i32 to vector<64x32xi32>
    %66 = arith.cmpi sge, %64, %65 : vector<64x32xi32>
    %c0_i32_22 = arith.constant 0 : i32
    %67 = vector.broadcast %c0_i32_22 : i32 to vector<64x32xi32>
    %68 = arith.addi %31, %67 : vector<64x32xi32>
    %c4_i32_23 = arith.constant 4 : i32
    %69 = vector.broadcast %c4_i32_23 : i32 to vector<64x32xi32>
    %70 = arith.cmpi slt, %68, %69 : vector<64x32xi32>
    %71 = arith.andi %66, %70 : vector<64x32xi1>
    %c-1_i32_24 = arith.constant -1 : i32
    %72 = vector.broadcast %c-1_i32_24 : i32 to vector<64x32xi32>
    %73 = arith.addi %35, %72 : vector<64x32xi32>
    %c0_i32_25 = arith.constant 0 : i32
    %74 = vector.broadcast %c0_i32_25 : i32 to vector<64x32xi32>
    %75 = arith.cmpi sge, %73, %74 : vector<64x32xi32>
    %76 = arith.andi %71, %75 : vector<64x32xi1>
    %c-1_i32_26 = arith.constant -1 : i32
    %77 = vector.broadcast %c-1_i32_26 : i32 to vector<64x32xi32>
    %78 = arith.addi %35, %77 : vector<64x32xi32>
    %c4_i32_27 = arith.constant 4 : i32
    %79 = vector.broadcast %c4_i32_27 : i32 to vector<64x32xi32>
    %80 = arith.cmpi slt, %78, %79 : vector<64x32xi32>
    %81 = arith.andi %76, %80 : vector<64x32xi1>
    %cst_28 = arith.constant 0.000000e+00 : bf16
    %82 = vector.broadcast %cst_28 : bf16 to vector<64x32xbf16>
    %83 = arith.select %81, %62, %82 : vector<64x32xi1>, vector<64x32xbf16>
    %cst_29 = arith.constant 0.000000e+00 : bf16
    %84 = vector.broadcast %cst_29 : bf16 to vector<64x3xbf16>
    %85 = vector.extract_strided_slice %28 {offsets = [0, 0], sizes = [64, 29], strides = [1, 1]} : vector<64x32xbf16> to vector<64x29xbf16>
    %86 = tpu.concatenate %84, %85 in 1 : vector<64x3xbf16>, vector<64x29xbf16> -> vector<64x32xbf16>
    %c1_i32 = arith.constant 1 : i32
    %87 = vector.broadcast %c1_i32 : i32 to vector<64x32xi32>
    %88 = arith.addi %31, %87 : vector<64x32xi32>
    %c0_i32_30 = arith.constant 0 : i32
    %89 = vector.broadcast %c0_i32_30 : i32 to vector<64x32xi32>
    %90 = arith.cmpi sge, %88, %89 : vector<64x32xi32>
    %c1_i32_31 = arith.constant 1 : i32
    %91 = vector.broadcast %c1_i32_31 : i32 to vector<64x32xi32>
    %92 = arith.addi %31, %91 : vector<64x32xi32>
    %c4_i32_32 = arith.constant 4 : i32
    %93 = vector.broadcast %c4_i32_32 : i32 to vector<64x32xi32>
    %94 = arith.cmpi slt, %92, %93 : vector<64x32xi32>
    %95 = arith.andi %90, %94 : vector<64x32xi1>
    %c-1_i32_33 = arith.constant -1 : i32
    %96 = vector.broadcast %c-1_i32_33 : i32 to vector<64x32xi32>
    %97 = arith.addi %35, %96 : vector<64x32xi32>
    %c0_i32_34 = arith.constant 0 : i32
    %98 = vector.broadcast %c0_i32_34 : i32 to vector<64x32xi32>
    %99 = arith.cmpi sge, %97, %98 : vector<64x32xi32>
    %100 = arith.andi %95, %99 : vector<64x32xi1>
    %c-1_i32_35 = arith.constant -1 : i32
    %101 = vector.broadcast %c-1_i32_35 : i32 to vector<64x32xi32>
    %102 = arith.addi %35, %101 : vector<64x32xi32>
    %c4_i32_36 = arith.constant 4 : i32
    %103 = vector.broadcast %c4_i32_36 : i32 to vector<64x32xi32>
    %104 = arith.cmpi slt, %102, %103 : vector<64x32xi32>
    %105 = arith.andi %100, %104 : vector<64x32xi1>
    %cst_37 = arith.constant 0.000000e+00 : bf16
    %106 = vector.broadcast %cst_37 : bf16 to vector<64x32xbf16>
    %107 = arith.select %105, %86, %106 : vector<64x32xi1>, vector<64x32xbf16>
    %cst_38 = arith.constant 0.000000e+00 : bf16
    %108 = vector.broadcast %cst_38 : bf16 to vector<64x1xbf16>
    %109 = vector.extract_strided_slice %28 {offsets = [0, 0], sizes = [64, 31], strides = [1, 1]} : vector<64x32xbf16> to vector<64x31xbf16>
    %110 = tpu.concatenate %108, %109 in 1 : vector<64x1xbf16>, vector<64x31xbf16> -> vector<64x32xbf16>
    %c-1_i32_39 = arith.constant -1 : i32
    %111 = vector.broadcast %c-1_i32_39 : i32 to vector<64x32xi32>
    %112 = arith.addi %31, %111 : vector<64x32xi32>
    %c0_i32_40 = arith.constant 0 : i32
    %113 = vector.broadcast %c0_i32_40 : i32 to vector<64x32xi32>
    %114 = arith.cmpi sge, %112, %113 : vector<64x32xi32>
    %c-1_i32_41 = arith.constant -1 : i32
    %115 = vector.broadcast %c-1_i32_41 : i32 to vector<64x32xi32>
    %116 = arith.addi %31, %115 : vector<64x32xi32>
    %c4_i32_42 = arith.constant 4 : i32
    %117 = vector.broadcast %c4_i32_42 : i32 to vector<64x32xi32>
    %118 = arith.cmpi slt, %116, %117 : vector<64x32xi32>
    %119 = arith.andi %114, %118 : vector<64x32xi1>
    %c0_i32_43 = arith.constant 0 : i32
    %120 = vector.broadcast %c0_i32_43 : i32 to vector<64x32xi32>
    %121 = arith.addi %35, %120 : vector<64x32xi32>
    %c0_i32_44 = arith.constant 0 : i32
    %122 = vector.broadcast %c0_i32_44 : i32 to vector<64x32xi32>
    %123 = arith.cmpi sge, %121, %122 : vector<64x32xi32>
    %124 = arith.andi %119, %123 : vector<64x32xi1>
    %c0_i32_45 = arith.constant 0 : i32
    %125 = vector.broadcast %c0_i32_45 : i32 to vector<64x32xi32>
    %126 = arith.addi %35, %125 : vector<64x32xi32>
    %c4_i32_46 = arith.constant 4 : i32
    %127 = vector.broadcast %c4_i32_46 : i32 to vector<64x32xi32>
    %128 = arith.cmpi slt, %126, %127 : vector<64x32xi32>
    %129 = arith.andi %124, %128 : vector<64x32xi1>
    %cst_47 = arith.constant 0.000000e+00 : bf16
    %130 = vector.broadcast %cst_47 : bf16 to vector<64x32xbf16>
    %131 = arith.select %129, %110, %130 : vector<64x32xi1>, vector<64x32xbf16>
    %c0_i32_48 = arith.constant 0 : i32
    %132 = vector.broadcast %c0_i32_48 : i32 to vector<64x32xi32>
    %133 = arith.addi %31, %132 : vector<64x32xi32>
    %c0_i32_49 = arith.constant 0 : i32
    %134 = vector.broadcast %c0_i32_49 : i32 to vector<64x32xi32>
    %135 = arith.cmpi sge, %133, %134 : vector<64x32xi32>
    %c0_i32_50 = arith.constant 0 : i32
    %136 = vector.broadcast %c0_i32_50 : i32 to vector<64x32xi32>
    %137 = arith.addi %31, %136 : vector<64x32xi32>
    %c4_i32_51 = arith.constant 4 : i32
    %138 = vector.broadcast %c4_i32_51 : i32 to vector<64x32xi32>
    %139 = arith.cmpi slt, %137, %138 : vector<64x32xi32>
    %140 = arith.andi %135, %139 : vector<64x32xi1>
    %c0_i32_52 = arith.constant 0 : i32
    %141 = vector.broadcast %c0_i32_52 : i32 to vector<64x32xi32>
    %142 = arith.addi %35, %141 : vector<64x32xi32>
    %c0_i32_53 = arith.constant 0 : i32
    %143 = vector.broadcast %c0_i32_53 : i32 to vector<64x32xi32>
    %144 = arith.cmpi sge, %142, %143 : vector<64x32xi32>
    %145 = arith.andi %140, %144 : vector<64x32xi1>
    %c0_i32_54 = arith.constant 0 : i32
    %146 = vector.broadcast %c0_i32_54 : i32 to vector<64x32xi32>
    %147 = arith.addi %35, %146 : vector<64x32xi32>
    %c4_i32_55 = arith.constant 4 : i32
    %148 = vector.broadcast %c4_i32_55 : i32 to vector<64x32xi32>
    %149 = arith.cmpi slt, %147, %148 : vector<64x32xi32>
    %150 = arith.andi %145, %149 : vector<64x32xi1>
    %cst_56 = arith.constant 0.000000e+00 : bf16
    %151 = vector.broadcast %cst_56 : bf16 to vector<64x32xbf16>
    %152 = arith.select %150, %28, %151 : vector<64x32xi1>, vector<64x32xbf16>
    %153 = vector.extract_strided_slice %28 {offsets = [0, 1], sizes = [64, 31], strides = [1, 1]} : vector<64x32xbf16> to vector<64x31xbf16>
    %cst_57 = arith.constant 0.000000e+00 : bf16
    %154 = vector.broadcast %cst_57 : bf16 to vector<64x1xbf16>
    %155 = tpu.concatenate %153, %154 in 1 : vector<64x31xbf16>, vector<64x1xbf16> -> vector<64x32xbf16>
    %c1_i32_58 = arith.constant 1 : i32
    %156 = vector.broadcast %c1_i32_58 : i32 to vector<64x32xi32>
    %157 = arith.addi %31, %156 : vector<64x32xi32>
    %c0_i32_59 = arith.constant 0 : i32
    %158 = vector.broadcast %c0_i32_59 : i32 to vector<64x32xi32>
    %159 = arith.cmpi sge, %157, %158 : vector<64x32xi32>
    %c1_i32_60 = arith.constant 1 : i32
    %160 = vector.broadcast %c1_i32_60 : i32 to vector<64x32xi32>
    %161 = arith.addi %31, %160 : vector<64x32xi32>
    %c4_i32_61 = arith.constant 4 : i32
    %162 = vector.broadcast %c4_i32_61 : i32 to vector<64x32xi32>
    %163 = arith.cmpi slt, %161, %162 : vector<64x32xi32>
    %164 = arith.andi %159, %163 : vector<64x32xi1>
    %c0_i32_62 = arith.constant 0 : i32
    %165 = vector.broadcast %c0_i32_62 : i32 to vector<64x32xi32>
    %166 = arith.addi %35, %165 : vector<64x32xi32>
    %c0_i32_63 = arith.constant 0 : i32
    %167 = vector.broadcast %c0_i32_63 : i32 to vector<64x32xi32>
    %168 = arith.cmpi sge, %166, %167 : vector<64x32xi32>
    %169 = arith.andi %164, %168 : vector<64x32xi1>
    %c0_i32_64 = arith.constant 0 : i32
    %170 = vector.broadcast %c0_i32_64 : i32 to vector<64x32xi32>
    %171 = arith.addi %35, %170 : vector<64x32xi32>
    %c4_i32_65 = arith.constant 4 : i32
    %172 = vector.broadcast %c4_i32_65 : i32 to vector<64x32xi32>
    %173 = arith.cmpi slt, %171, %172 : vector<64x32xi32>
    %174 = arith.andi %169, %173 : vector<64x32xi1>
    %cst_66 = arith.constant 0.000000e+00 : bf16
    %175 = vector.broadcast %cst_66 : bf16 to vector<64x32xbf16>
    %176 = arith.select %174, %155, %175 : vector<64x32xi1>, vector<64x32xbf16>
    %177 = vector.extract_strided_slice %28 {offsets = [0, 3], sizes = [64, 29], strides = [1, 1]} : vector<64x32xbf16> to vector<64x29xbf16>
    %cst_67 = arith.constant 0.000000e+00 : bf16
    %178 = vector.broadcast %cst_67 : bf16 to vector<64x3xbf16>
    %179 = tpu.concatenate %177, %178 in 1 : vector<64x29xbf16>, vector<64x3xbf16> -> vector<64x32xbf16>
    %c-1_i32_68 = arith.constant -1 : i32
    %180 = vector.broadcast %c-1_i32_68 : i32 to vector<64x32xi32>
    %181 = arith.addi %31, %180 : vector<64x32xi32>
    %c0_i32_69 = arith.constant 0 : i32
    %182 = vector.broadcast %c0_i32_69 : i32 to vector<64x32xi32>
    %183 = arith.cmpi sge, %181, %182 : vector<64x32xi32>
    %c-1_i32_70 = arith.constant -1 : i32
    %184 = vector.broadcast %c-1_i32_70 : i32 to vector<64x32xi32>
    %185 = arith.addi %31, %184 : vector<64x32xi32>
    %c4_i32_71 = arith.constant 4 : i32
    %186 = vector.broadcast %c4_i32_71 : i32 to vector<64x32xi32>
    %187 = arith.cmpi slt, %185, %186 : vector<64x32xi32>
    %188 = arith.andi %183, %187 : vector<64x32xi1>
    %c1_i32_72 = arith.constant 1 : i32
    %189 = vector.broadcast %c1_i32_72 : i32 to vector<64x32xi32>
    %190 = arith.addi %35, %189 : vector<64x32xi32>
    %c0_i32_73 = arith.constant 0 : i32
    %191 = vector.broadcast %c0_i32_73 : i32 to vector<64x32xi32>
    %192 = arith.cmpi sge, %190, %191 : vector<64x32xi32>
    %193 = arith.andi %188, %192 : vector<64x32xi1>
    %c1_i32_74 = arith.constant 1 : i32
    %194 = vector.broadcast %c1_i32_74 : i32 to vector<64x32xi32>
    %195 = arith.addi %35, %194 : vector<64x32xi32>
    %c4_i32_75 = arith.constant 4 : i32
    %196 = vector.broadcast %c4_i32_75 : i32 to vector<64x32xi32>
    %197 = arith.cmpi slt, %195, %196 : vector<64x32xi32>
    %198 = arith.andi %193, %197 : vector<64x32xi1>
    %cst_76 = arith.constant 0.000000e+00 : bf16
    %199 = vector.broadcast %cst_76 : bf16 to vector<64x32xbf16>
    %200 = arith.select %198, %179, %199 : vector<64x32xi1>, vector<64x32xbf16>
    %201 = vector.extract_strided_slice %28 {offsets = [0, 4], sizes = [64, 28], strides = [1, 1]} : vector<64x32xbf16> to vector<64x28xbf16>
    %cst_77 = arith.constant 0.000000e+00 : bf16
    %202 = vector.broadcast %cst_77 : bf16 to vector<64x4xbf16>
    %203 = tpu.concatenate %201, %202 in 1 : vector<64x28xbf16>, vector<64x4xbf16> -> vector<64x32xbf16>
    %c0_i32_78 = arith.constant 0 : i32
    %204 = vector.broadcast %c0_i32_78 : i32 to vector<64x32xi32>
    %205 = arith.addi %31, %204 : vector<64x32xi32>
    %c0_i32_79 = arith.constant 0 : i32
    %206 = vector.broadcast %c0_i32_79 : i32 to vector<64x32xi32>
    %207 = arith.cmpi sge, %205, %206 : vector<64x32xi32>
    %c0_i32_80 = arith.constant 0 : i32
    %208 = vector.broadcast %c0_i32_80 : i32 to vector<64x32xi32>
    %209 = arith.addi %31, %208 : vector<64x32xi32>
    %c4_i32_81 = arith.constant 4 : i32
    %210 = vector.broadcast %c4_i32_81 : i32 to vector<64x32xi32>
    %211 = arith.cmpi slt, %209, %210 : vector<64x32xi32>
    %212 = arith.andi %207, %211 : vector<64x32xi1>
    %c1_i32_82 = arith.constant 1 : i32
    %213 = vector.broadcast %c1_i32_82 : i32 to vector<64x32xi32>
    %214 = arith.addi %35, %213 : vector<64x32xi32>
    %c0_i32_83 = arith.constant 0 : i32
    %215 = vector.broadcast %c0_i32_83 : i32 to vector<64x32xi32>
    %216 = arith.cmpi sge, %214, %215 : vector<64x32xi32>
    %217 = arith.andi %212, %216 : vector<64x32xi1>
    %c1_i32_84 = arith.constant 1 : i32
    %218 = vector.broadcast %c1_i32_84 : i32 to vector<64x32xi32>
    %219 = arith.addi %35, %218 : vector<64x32xi32>
    %c4_i32_85 = arith.constant 4 : i32
    %220 = vector.broadcast %c4_i32_85 : i32 to vector<64x32xi32>
    %221 = arith.cmpi slt, %219, %220 : vector<64x32xi32>
    %222 = arith.andi %217, %221 : vector<64x32xi1>
    %cst_86 = arith.constant 0.000000e+00 : bf16
    %223 = vector.broadcast %cst_86 : bf16 to vector<64x32xbf16>
    %224 = arith.select %222, %203, %223 : vector<64x32xi1>, vector<64x32xbf16>
    %225 = vector.extract_strided_slice %28 {offsets = [0, 5], sizes = [64, 27], strides = [1, 1]} : vector<64x32xbf16> to vector<64x27xbf16>
    %cst_87 = arith.constant 0.000000e+00 : bf16
    %226 = vector.broadcast %cst_87 : bf16 to vector<64x5xbf16>
    %227 = tpu.concatenate %225, %226 in 1 : vector<64x27xbf16>, vector<64x5xbf16> -> vector<64x32xbf16>
    %c1_i32_88 = arith.constant 1 : i32
    %228 = vector.broadcast %c1_i32_88 : i32 to vector<64x32xi32>
    %229 = arith.addi %31, %228 : vector<64x32xi32>
    %c0_i32_89 = arith.constant 0 : i32
    %230 = vector.broadcast %c0_i32_89 : i32 to vector<64x32xi32>
    %231 = arith.cmpi sge, %229, %230 : vector<64x32xi32>
    %c1_i32_90 = arith.constant 1 : i32
    %232 = vector.broadcast %c1_i32_90 : i32 to vector<64x32xi32>
    %233 = arith.addi %31, %232 : vector<64x32xi32>
    %c4_i32_91 = arith.constant 4 : i32
    %234 = vector.broadcast %c4_i32_91 : i32 to vector<64x32xi32>
    %235 = arith.cmpi slt, %233, %234 : vector<64x32xi32>
    %236 = arith.andi %231, %235 : vector<64x32xi1>
    %c1_i32_92 = arith.constant 1 : i32
    %237 = vector.broadcast %c1_i32_92 : i32 to vector<64x32xi32>
    %238 = arith.addi %35, %237 : vector<64x32xi32>
    %c0_i32_93 = arith.constant 0 : i32
    %239 = vector.broadcast %c0_i32_93 : i32 to vector<64x32xi32>
    %240 = arith.cmpi sge, %238, %239 : vector<64x32xi32>
    %241 = arith.andi %236, %240 : vector<64x32xi1>
    %c1_i32_94 = arith.constant 1 : i32
    %242 = vector.broadcast %c1_i32_94 : i32 to vector<64x32xi32>
    %243 = arith.addi %35, %242 : vector<64x32xi32>
    %c4_i32_95 = arith.constant 4 : i32
    %244 = vector.broadcast %c4_i32_95 : i32 to vector<64x32xi32>
    %245 = arith.cmpi slt, %243, %244 : vector<64x32xi32>
    %246 = arith.andi %241, %245 : vector<64x32xi1>
    %cst_96 = arith.constant 0.000000e+00 : bf16
    %247 = vector.broadcast %cst_96 : bf16 to vector<64x32xbf16>
    %248 = arith.select %246, %227, %247 : vector<64x32xi1>, vector<64x32xbf16>
    %249 = tpu.concatenate %59, %83, %107, %131, %152, %176, %200, %224, %248 in 0 : vector<64x32xbf16>, vector<64x32xbf16>, vector<64x32xbf16>, vector<64x32xbf16>, vector<64x32xbf16>, vector<64x32xbf16>, vector<64x32xbf16>, vector<64x32xbf16>, vector<64x32xbf16> -> vector<576x32xbf16>
    %c0_97 = arith.constant 0 : index
    %c0_98 = arith.constant 0 : index
    %250 = vector.load %arg4[%c0_97, %c0_98] : memref<256x576xbf16, #tpu.memory_space<vmem>>, vector<256x576xbf16>
    %cst_99 = arith.constant dense<0.000000e+00> : vector<256x32xf32>
    %251 = tpu.matmul %250, %249, %cst_99 {dimension_numbers = #tpu.dot_dimension_numbers<[1], [0], [0], [1], [0, 0, 1, 1], [], []>} : vector<256x576xbf16>, vector<576x32xbf16>, vector<256x32xf32> -> vector<256x32xf32>
    %c0_100 = arith.constant 0 : index
    %c0_101 = arith.constant 0 : index
    %252 = vector.load %arg5[%c0_100, %c0_101] : memref<256x32xf32, #tpu.memory_space<vmem>>, vector<256x32xf32>
    tpu.vector_store %arg5[%c0_100, %c0_101], %251 {strides = array<i32>} : memref<256x32xf32, #tpu.memory_space<vmem>>, vector<256x32xf32>,
    return
  }
  func.func @transform_0(%arg0: i32) -> (i32, i32) {
    %c0_i32 = arith.constant 0 : i32
    %c0_i32_0 = arith.constant 0 : i32
    %c0_i32_1 = arith.constant 0 : i32
    return %c0_i32, %c0_i32_0 : i32, i32
  }
  func.func @transform_1(%arg0: i32) -> (i32, i32) {
    %c0_i32 = arith.constant 0 : i32
    %c0_i32_0 = arith.constant 0 : i32
    %c0_i32_1 = arith.constant 0 : i32
    return %c0_i32, %c0_i32_0 : i32, i32
  }
  func.func @transform_2(%arg0: i32) -> (i32, i32) {
    %c0_i32 = arith.constant 0 : i32
    %c0_i32_0 = arith.constant 0 : i32
    %c0_i32_1 = arith.constant 0 : i32
    return %c0_i32, %c0_i32_0 : i32, i32
  }
  func.func @transform_3(%arg0: i32) -> (i32, i32) {
    %c0_i32 = arith.constant 0 : i32
    %c0_i32_0 = arith.constant 0 : i32
    %c0_i32_1 = arith.constant 0 : i32
    return %c0_i32, %c0_i32_0 : i32, i32
  }
  func.func @transform_4(%arg0: i32) -> (i32, i32) {
    %c0_i32 = arith.constant 0 : i32
    %c0_i32_0 = arith.constant 0 : i32
    %c0_i32_1 = arith.constant 0 : i32
    return %c0_i32, %c0_i32_0 : i32, i32
  }
}

module attributes {stable_mosaic.version = 11 : i64} {
  func.func @_stride2_stage_kernel(%arg0: i32, %arg1: memref<64x128xf32, #tpu.memory_space<vmem>>, %arg2: memref<64x1xf32, #tpu.memory_space<vmem>>, %arg3: memref<64x1xf32, #tpu.memory_space<vmem>>, %arg4: memref<128x576xbf16, #tpu.memory_space<vmem>>, %arg5: memref<128x128xf32, #tpu.memory_space<vmem>>) attributes {dimension_semantics = [#tpu.dimension_semantics<arbitrary>], iteration_bounds = array<i64: 1>, scalar_prefetch = 0 : i64, scratch_operands = 0 : i64, tpu.core_type = #tpu.core_type<tc>, window_params = [{pipeline_mode = #tpu.pipeline_mode<synchronous>, transform_indices = @transform_0, window_bounds = array<i64: 64, 128>}, {pipeline_mode = #tpu.pipeline_mode<synchronous>, transform_indices = @transform_1, window_bounds = array<i64: 64, 1>}, {pipeline_mode = #tpu.pipeline_mode<synchronous>, transform_indices = @transform_2, window_bounds = array<i64: 64, 1>}, {pipeline_mode = #tpu.pipeline_mode<synchronous>, transform_indices = @transform_3, window_bounds = array<i64: 128, 576>}, {pipeline_mode = #tpu.pipeline_mode<synchronous>, transform_indices = @transform_4, window_bounds = array<i64: 128, 128>}]} {
    %c0 = arith.constant 0 : index
    %c0_0 = arith.constant 0 : index
    %0 = vector.load %arg1[%c0, %c0_0] : memref<64x128xf32, #tpu.memory_space<vmem>>, vector<64x128xf32>
    %cst = arith.constant dense<0.000000e+00> : vector<64xf32>
    %1 = vector.multi_reduction <add>, %0, %cst [1] : vector<64x128xf32> to vector<64xf32>
    %2 = vector.shape_cast %1 : vector<64xf32> to vector<64x1xf32>
    %3 = arith.mulf %0, %0 : vector<64x128xf32>
    %cst_1 = arith.constant dense<0.000000e+00> : vector<64xf32>
    %4 = vector.multi_reduction <add>, %3, %cst_1 [1] : vector<64x128xf32> to vector<64xf32>
    %5 = vector.shape_cast %4 : vector<64xf32> to vector<64x1xf32>
    %cst_2 = arith.constant 7.812500e-03 : f32
    %6 = vector.broadcast %cst_2 : f32 to vector<64x1xf32>
    %7 = arith.mulf %2, %6 : vector<64x1xf32>
    %cst_3 = arith.constant 7.812500e-03 : f32
    %8 = vector.broadcast %cst_3 : f32 to vector<64x1xf32>
    %9 = arith.mulf %5, %8 : vector<64x1xf32>
    %10 = arith.mulf %7, %7 : vector<64x1xf32>
    %11 = arith.subf %9, %10 : vector<64x1xf32>
    %cst_4 = arith.constant 0.000000e+00 : f32
    %12 = vector.broadcast %cst_4 : f32 to vector<64x1xf32>
    %13 = arith.maximumf %11, %12 : vector<64x1xf32>
    %c0_5 = arith.constant 0 : index
    %c0_6 = arith.constant 0 : index
    %14 = vector.load %arg2[%c0_5, %c0_6] : memref<64x1xf32, #tpu.memory_space<vmem>>, vector<64x1xf32>
    %cst_7 = arith.constant 9.99999974E-6 : f32
    %15 = vector.broadcast %cst_7 : f32 to vector<64x1xf32>
    %16 = arith.addf %13, %15 : vector<64x1xf32>
    %17 = math.rsqrt %16 : vector<64x1xf32>
    %18 = arith.mulf %14, %17 : vector<64x1xf32>
    %c0_8 = arith.constant 0 : index
    %c0_9 = arith.constant 0 : index
    %19 = vector.load %arg3[%c0_8, %c0_9] : memref<64x1xf32, #tpu.memory_space<vmem>>, vector<64x1xf32>
    %20 = arith.mulf %7, %18 : vector<64x1xf32>
    %21 = arith.subf %19, %20 : vector<64x1xf32>
    %22 = vector.broadcast %18 : vector<64x1xf32> to vector<64x128xf32>
    %23 = arith.mulf %0, %22 : vector<64x128xf32>
    %24 = vector.broadcast %21 : vector<64x1xf32> to vector<64x128xf32>
    %25 = arith.addf %23, %24 : vector<64x128xf32>
    %cst_10 = arith.constant 0.000000e+00 : f32
    %26 = vector.broadcast %cst_10 : f32 to vector<64x128xf32>
    %27 = arith.maximumf %25, %26 : vector<64x128xf32>
    %28 = arith.truncf %27 : vector<64x128xf32> to vector<64x128xbf16>
    %29 = tpu.iota {dimensions = array<i32: 1>} : vector<64x128xi32>
    %c7_i32 = arith.constant 7 : i32
    %30 = vector.broadcast %c7_i32 : i32 to vector<64x128xi32>
    %31 = arith.andi %29, %30 : vector<64x128xi32>
    %c3_i32 = arith.constant 3 : i32
    %32 = vector.broadcast %c3_i32 : i32 to vector<64x128xi32>
    %33 = arith.shrsi %29, %32 : vector<64x128xi32>
    %c7_i32_11 = arith.constant 7 : i32
    %34 = vector.broadcast %c7_i32_11 : i32 to vector<64x128xi32>
    %35 = arith.andi %33, %34 : vector<64x128xi32>
    %cst_12 = arith.constant 0.000000e+00 : bf16
    %36 = vector.broadcast %cst_12 : bf16 to vector<64x9xbf16>
    %37 = vector.extract_strided_slice %28 {offsets = [0, 0], sizes = [64, 119], strides = [1, 1]} : vector<64x128xbf16> to vector<64x119xbf16>
    %38 = tpu.concatenate %36, %37 in 1 : vector<64x9xbf16>, vector<64x119xbf16> -> vector<64x128xbf16>
    %c-1_i32 = arith.constant -1 : i32
    %39 = vector.broadcast %c-1_i32 : i32 to vector<64x128xi32>
    %40 = arith.addi %31, %39 : vector<64x128xi32>
    %c0_i32 = arith.constant 0 : i32
    %41 = vector.broadcast %c0_i32 : i32 to vector<64x128xi32>
    %42 = arith.cmpi sge, %40, %41 : vector<64x128xi32>
    %c-1_i32_13 = arith.constant -1 : i32
    %43 = vector.broadcast %c-1_i32_13 : i32 to vector<64x128xi32>
    %44 = arith.addi %31, %43 : vector<64x128xi32>
    %c8_i32 = arith.constant 8 : i32
    %45 = vector.broadcast %c8_i32 : i32 to vector<64x128xi32>
    %46 = arith.cmpi slt, %44, %45 : vector<64x128xi32>
    %47 = arith.andi %42, %46 : vector<64x128xi1>
    %c-1_i32_14 = arith.constant -1 : i32
    %48 = vector.broadcast %c-1_i32_14 : i32 to vector<64x128xi32>
    %49 = arith.addi %35, %48 : vector<64x128xi32>
    %c0_i32_15 = arith.constant 0 : i32
    %50 = vector.broadcast %c0_i32_15 : i32 to vector<64x128xi32>
    %51 = arith.cmpi sge, %49, %50 : vector<64x128xi32>
    %52 = arith.andi %47, %51 : vector<64x128xi1>
    %c-1_i32_16 = arith.constant -1 : i32
    %53 = vector.broadcast %c-1_i32_16 : i32 to vector<64x128xi32>
    %54 = arith.addi %35, %53 : vector<64x128xi32>
    %c8_i32_17 = arith.constant 8 : i32
    %55 = vector.broadcast %c8_i32_17 : i32 to vector<64x128xi32>
    %56 = arith.cmpi slt, %54, %55 : vector<64x128xi32>
    %57 = arith.andi %52, %56 : vector<64x128xi1>
    %cst_18 = arith.constant 0.000000e+00 : bf16
    %58 = vector.broadcast %cst_18 : bf16 to vector<64x128xbf16>
    %59 = arith.select %57, %38, %58 : vector<64x128xi1>, vector<64x128xbf16>
    %cst_19 = arith.constant 0.000000e+00 : bf16
    %60 = vector.broadcast %cst_19 : bf16 to vector<64x8xbf16>
    %61 = vector.extract_strided_slice %28 {offsets = [0, 0], sizes = [64, 120], strides = [1, 1]} : vector<64x128xbf16> to vector<64x120xbf16>
    %62 = tpu.concatenate %60, %61 in 1 : vector<64x8xbf16>, vector<64x120xbf16> -> vector<64x128xbf16>
    %c0_i32_20 = arith.constant 0 : i32
    %63 = vector.broadcast %c0_i32_20 : i32 to vector<64x128xi32>
    %64 = arith.addi %31, %63 : vector<64x128xi32>
    %c0_i32_21 = arith.constant 0 : i32
    %65 = vector.broadcast %c0_i32_21 : i32 to vector<64x128xi32>
    %66 = arith.cmpi sge, %64, %65 : vector<64x128xi32>
    %c0_i32_22 = arith.constant 0 : i32
    %67 = vector.broadcast %c0_i32_22 : i32 to vector<64x128xi32>
    %68 = arith.addi %31, %67 : vector<64x128xi32>
    %c8_i32_23 = arith.constant 8 : i32
    %69 = vector.broadcast %c8_i32_23 : i32 to vector<64x128xi32>
    %70 = arith.cmpi slt, %68, %69 : vector<64x128xi32>
    %71 = arith.andi %66, %70 : vector<64x128xi1>
    %c-1_i32_24 = arith.constant -1 : i32
    %72 = vector.broadcast %c-1_i32_24 : i32 to vector<64x128xi32>
    %73 = arith.addi %35, %72 : vector<64x128xi32>
    %c0_i32_25 = arith.constant 0 : i32
    %74 = vector.broadcast %c0_i32_25 : i32 to vector<64x128xi32>
    %75 = arith.cmpi sge, %73, %74 : vector<64x128xi32>
    %76 = arith.andi %71, %75 : vector<64x128xi1>
    %c-1_i32_26 = arith.constant -1 : i32
    %77 = vector.broadcast %c-1_i32_26 : i32 to vector<64x128xi32>
    %78 = arith.addi %35, %77 : vector<64x128xi32>
    %c8_i32_27 = arith.constant 8 : i32
    %79 = vector.broadcast %c8_i32_27 : i32 to vector<64x128xi32>
    %80 = arith.cmpi slt, %78, %79 : vector<64x128xi32>
    %81 = arith.andi %76, %80 : vector<64x128xi1>
    %cst_28 = arith.constant 0.000000e+00 : bf16
    %82 = vector.broadcast %cst_28 : bf16 to vector<64x128xbf16>
    %83 = arith.select %81, %62, %82 : vector<64x128xi1>, vector<64x128xbf16>
    %cst_29 = arith.constant 0.000000e+00 : bf16
    %84 = vector.broadcast %cst_29 : bf16 to vector<64x7xbf16>
    %85 = vector.extract_strided_slice %28 {offsets = [0, 0], sizes = [64, 121], strides = [1, 1]} : vector<64x128xbf16> to vector<64x121xbf16>
    %86 = tpu.concatenate %84, %85 in 1 : vector<64x7xbf16>, vector<64x121xbf16> -> vector<64x128xbf16>
    %c1_i32 = arith.constant 1 : i32
    %87 = vector.broadcast %c1_i32 : i32 to vector<64x128xi32>
    %88 = arith.addi %31, %87 : vector<64x128xi32>
    %c0_i32_30 = arith.constant 0 : i32
    %89 = vector.broadcast %c0_i32_30 : i32 to vector<64x128xi32>
    %90 = arith.cmpi sge, %88, %89 : vector<64x128xi32>
    %c1_i32_31 = arith.constant 1 : i32
    %91 = vector.broadcast %c1_i32_31 : i32 to vector<64x128xi32>
    %92 = arith.addi %31, %91 : vector<64x128xi32>
    %c8_i32_32 = arith.constant 8 : i32
    %93 = vector.broadcast %c8_i32_32 : i32 to vector<64x128xi32>
    %94 = arith.cmpi slt, %92, %93 : vector<64x128xi32>
    %95 = arith.andi %90, %94 : vector<64x128xi1>
    %c-1_i32_33 = arith.constant -1 : i32
    %96 = vector.broadcast %c-1_i32_33 : i32 to vector<64x128xi32>
    %97 = arith.addi %35, %96 : vector<64x128xi32>
    %c0_i32_34 = arith.constant 0 : i32
    %98 = vector.broadcast %c0_i32_34 : i32 to vector<64x128xi32>
    %99 = arith.cmpi sge, %97, %98 : vector<64x128xi32>
    %100 = arith.andi %95, %99 : vector<64x128xi1>
    %c-1_i32_35 = arith.constant -1 : i32
    %101 = vector.broadcast %c-1_i32_35 : i32 to vector<64x128xi32>
    %102 = arith.addi %35, %101 : vector<64x128xi32>
    %c8_i32_36 = arith.constant 8 : i32
    %103 = vector.broadcast %c8_i32_36 : i32 to vector<64x128xi32>
    %104 = arith.cmpi slt, %102, %103 : vector<64x128xi32>
    %105 = arith.andi %100, %104 : vector<64x128xi1>
    %cst_37 = arith.constant 0.000000e+00 : bf16
    %106 = vector.broadcast %cst_37 : bf16 to vector<64x128xbf16>
    %107 = arith.select %105, %86, %106 : vector<64x128xi1>, vector<64x128xbf16>
    %cst_38 = arith.constant 0.000000e+00 : bf16
    %108 = vector.broadcast %cst_38 : bf16 to vector<64x1xbf16>
    %109 = vector.extract_strided_slice %28 {offsets = [0, 0], sizes = [64, 127], strides = [1, 1]} : vector<64x128xbf16> to vector<64x127xbf16>
    %110 = tpu.concatenate %108, %109 in 1 : vector<64x1xbf16>, vector<64x127xbf16> -> vector<64x128xbf16>
    %c-1_i32_39 = arith.constant -1 : i32
    %111 = vector.broadcast %c-1_i32_39 : i32 to vector<64x128xi32>
    %112 = arith.addi %31, %111 : vector<64x128xi32>
    %c0_i32_40 = arith.constant 0 : i32
    %113 = vector.broadcast %c0_i32_40 : i32 to vector<64x128xi32>
    %114 = arith.cmpi sge, %112, %113 : vector<64x128xi32>
    %c-1_i32_41 = arith.constant -1 : i32
    %115 = vector.broadcast %c-1_i32_41 : i32 to vector<64x128xi32>
    %116 = arith.addi %31, %115 : vector<64x128xi32>
    %c8_i32_42 = arith.constant 8 : i32
    %117 = vector.broadcast %c8_i32_42 : i32 to vector<64x128xi32>
    %118 = arith.cmpi slt, %116, %117 : vector<64x128xi32>
    %119 = arith.andi %114, %118 : vector<64x128xi1>
    %c0_i32_43 = arith.constant 0 : i32
    %120 = vector.broadcast %c0_i32_43 : i32 to vector<64x128xi32>
    %121 = arith.addi %35, %120 : vector<64x128xi32>
    %c0_i32_44 = arith.constant 0 : i32
    %122 = vector.broadcast %c0_i32_44 : i32 to vector<64x128xi32>
    %123 = arith.cmpi sge, %121, %122 : vector<64x128xi32>
    %124 = arith.andi %119, %123 : vector<64x128xi1>
    %c0_i32_45 = arith.constant 0 : i32
    %125 = vector.broadcast %c0_i32_45 : i32 to vector<64x128xi32>
    %126 = arith.addi %35, %125 : vector<64x128xi32>
    %c8_i32_46 = arith.constant 8 : i32
    %127 = vector.broadcast %c8_i32_46 : i32 to vector<64x128xi32>
    %128 = arith.cmpi slt, %126, %127 : vector<64x128xi32>
    %129 = arith.andi %124, %128 : vector<64x128xi1>
    %cst_47 = arith.constant 0.000000e+00 : bf16
    %130 = vector.broadcast %cst_47 : bf16 to vector<64x128xbf16>
    %131 = arith.select %129, %110, %130 : vector<64x128xi1>, vector<64x128xbf16>
    %c0_i32_48 = arith.constant 0 : i32
    %132 = vector.broadcast %c0_i32_48 : i32 to vector<64x128xi32>
    %133 = arith.addi %31, %132 : vector<64x128xi32>
    %c0_i32_49 = arith.constant 0 : i32
    %134 = vector.broadcast %c0_i32_49 : i32 to vector<64x128xi32>
    %135 = arith.cmpi sge, %133, %134 : vector<64x128xi32>
    %c0_i32_50 = arith.constant 0 : i32
    %136 = vector.broadcast %c0_i32_50 : i32 to vector<64x128xi32>
    %137 = arith.addi %31, %136 : vector<64x128xi32>
    %c8_i32_51 = arith.constant 8 : i32
    %138 = vector.broadcast %c8_i32_51 : i32 to vector<64x128xi32>
    %139 = arith.cmpi slt, %137, %138 : vector<64x128xi32>
    %140 = arith.andi %135, %139 : vector<64x128xi1>
    %c0_i32_52 = arith.constant 0 : i32
    %141 = vector.broadcast %c0_i32_52 : i32 to vector<64x128xi32>
    %142 = arith.addi %35, %141 : vector<64x128xi32>
    %c0_i32_53 = arith.constant 0 : i32
    %143 = vector.broadcast %c0_i32_53 : i32 to vector<64x128xi32>
    %144 = arith.cmpi sge, %142, %143 : vector<64x128xi32>
    %145 = arith.andi %140, %144 : vector<64x128xi1>
    %c0_i32_54 = arith.constant 0 : i32
    %146 = vector.broadcast %c0_i32_54 : i32 to vector<64x128xi32>
    %147 = arith.addi %35, %146 : vector<64x128xi32>
    %c8_i32_55 = arith.constant 8 : i32
    %148 = vector.broadcast %c8_i32_55 : i32 to vector<64x128xi32>
    %149 = arith.cmpi slt, %147, %148 : vector<64x128xi32>
    %150 = arith.andi %145, %149 : vector<64x128xi1>
    %cst_56 = arith.constant 0.000000e+00 : bf16
    %151 = vector.broadcast %cst_56 : bf16 to vector<64x128xbf16>
    %152 = arith.select %150, %28, %151 : vector<64x128xi1>, vector<64x128xbf16>
    %153 = vector.extract_strided_slice %28 {offsets = [0, 1], sizes = [64, 127], strides = [1, 1]} : vector<64x128xbf16> to vector<64x127xbf16>
    %cst_57 = arith.constant 0.000000e+00 : bf16
    %154 = vector.broadcast %cst_57 : bf16 to vector<64x1xbf16>
    %155 = tpu.concatenate %153, %154 in 1 : vector<64x127xbf16>, vector<64x1xbf16> -> vector<64x128xbf16>
    %c1_i32_58 = arith.constant 1 : i32
    %156 = vector.broadcast %c1_i32_58 : i32 to vector<64x128xi32>
    %157 = arith.addi %31, %156 : vector<64x128xi32>
    %c0_i32_59 = arith.constant 0 : i32
    %158 = vector.broadcast %c0_i32_59 : i32 to vector<64x128xi32>
    %159 = arith.cmpi sge, %157, %158 : vector<64x128xi32>
    %c1_i32_60 = arith.constant 1 : i32
    %160 = vector.broadcast %c1_i32_60 : i32 to vector<64x128xi32>
    %161 = arith.addi %31, %160 : vector<64x128xi32>
    %c8_i32_61 = arith.constant 8 : i32
    %162 = vector.broadcast %c8_i32_61 : i32 to vector<64x128xi32>
    %163 = arith.cmpi slt, %161, %162 : vector<64x128xi32>
    %164 = arith.andi %159, %163 : vector<64x128xi1>
    %c0_i32_62 = arith.constant 0 : i32
    %165 = vector.broadcast %c0_i32_62 : i32 to vector<64x128xi32>
    %166 = arith.addi %35, %165 : vector<64x128xi32>
    %c0_i32_63 = arith.constant 0 : i32
    %167 = vector.broadcast %c0_i32_63 : i32 to vector<64x128xi32>
    %168 = arith.cmpi sge, %166, %167 : vector<64x128xi32>
    %169 = arith.andi %164, %168 : vector<64x128xi1>
    %c0_i32_64 = arith.constant 0 : i32
    %170 = vector.broadcast %c0_i32_64 : i32 to vector<64x128xi32>
    %171 = arith.addi %35, %170 : vector<64x128xi32>
    %c8_i32_65 = arith.constant 8 : i32
    %172 = vector.broadcast %c8_i32_65 : i32 to vector<64x128xi32>
    %173 = arith.cmpi slt, %171, %172 : vector<64x128xi32>
    %174 = arith.andi %169, %173 : vector<64x128xi1>
    %cst_66 = arith.constant 0.000000e+00 : bf16
    %175 = vector.broadcast %cst_66 : bf16 to vector<64x128xbf16>
    %176 = arith.select %174, %155, %175 : vector<64x128xi1>, vector<64x128xbf16>
    %177 = vector.extract_strided_slice %28 {offsets = [0, 7], sizes = [64, 121], strides = [1, 1]} : vector<64x128xbf16> to vector<64x121xbf16>
    %cst_67 = arith.constant 0.000000e+00 : bf16
    %178 = vector.broadcast %cst_67 : bf16 to vector<64x7xbf16>
    %179 = tpu.concatenate %177, %178 in 1 : vector<64x121xbf16>, vector<64x7xbf16> -> vector<64x128xbf16>
    %c-1_i32_68 = arith.constant -1 : i32
    %180 = vector.broadcast %c-1_i32_68 : i32 to vector<64x128xi32>
    %181 = arith.addi %31, %180 : vector<64x128xi32>
    %c0_i32_69 = arith.constant 0 : i32
    %182 = vector.broadcast %c0_i32_69 : i32 to vector<64x128xi32>
    %183 = arith.cmpi sge, %181, %182 : vector<64x128xi32>
    %c-1_i32_70 = arith.constant -1 : i32
    %184 = vector.broadcast %c-1_i32_70 : i32 to vector<64x128xi32>
    %185 = arith.addi %31, %184 : vector<64x128xi32>
    %c8_i32_71 = arith.constant 8 : i32
    %186 = vector.broadcast %c8_i32_71 : i32 to vector<64x128xi32>
    %187 = arith.cmpi slt, %185, %186 : vector<64x128xi32>
    %188 = arith.andi %183, %187 : vector<64x128xi1>
    %c1_i32_72 = arith.constant 1 : i32
    %189 = vector.broadcast %c1_i32_72 : i32 to vector<64x128xi32>
    %190 = arith.addi %35, %189 : vector<64x128xi32>
    %c0_i32_73 = arith.constant 0 : i32
    %191 = vector.broadcast %c0_i32_73 : i32 to vector<64x128xi32>
    %192 = arith.cmpi sge, %190, %191 : vector<64x128xi32>
    %193 = arith.andi %188, %192 : vector<64x128xi1>
    %c1_i32_74 = arith.constant 1 : i32
    %194 = vector.broadcast %c1_i32_74 : i32 to vector<64x128xi32>
    %195 = arith.addi %35, %194 : vector<64x128xi32>
    %c8_i32_75 = arith.constant 8 : i32
    %196 = vector.broadcast %c8_i32_75 : i32 to vector<64x128xi32>
    %197 = arith.cmpi slt, %195, %196 : vector<64x128xi32>
    %198 = arith.andi %193, %197 : vector<64x128xi1>
    %cst_76 = arith.constant 0.000000e+00 : bf16
    %199 = vector.broadcast %cst_76 : bf16 to vector<64x128xbf16>
    %200 = arith.select %198, %179, %199 : vector<64x128xi1>, vector<64x128xbf16>
    %201 = vector.extract_strided_slice %28 {offsets = [0, 8], sizes = [64, 120], strides = [1, 1]} : vector<64x128xbf16> to vector<64x120xbf16>
    %cst_77 = arith.constant 0.000000e+00 : bf16
    %202 = vector.broadcast %cst_77 : bf16 to vector<64x8xbf16>
    %203 = tpu.concatenate %201, %202 in 1 : vector<64x120xbf16>, vector<64x8xbf16> -> vector<64x128xbf16>
    %c0_i32_78 = arith.constant 0 : i32
    %204 = vector.broadcast %c0_i32_78 : i32 to vector<64x128xi32>
    %205 = arith.addi %31, %204 : vector<64x128xi32>
    %c0_i32_79 = arith.constant 0 : i32
    %206 = vector.broadcast %c0_i32_79 : i32 to vector<64x128xi32>
    %207 = arith.cmpi sge, %205, %206 : vector<64x128xi32>
    %c0_i32_80 = arith.constant 0 : i32
    %208 = vector.broadcast %c0_i32_80 : i32 to vector<64x128xi32>
    %209 = arith.addi %31, %208 : vector<64x128xi32>
    %c8_i32_81 = arith.constant 8 : i32
    %210 = vector.broadcast %c8_i32_81 : i32 to vector<64x128xi32>
    %211 = arith.cmpi slt, %209, %210 : vector<64x128xi32>
    %212 = arith.andi %207, %211 : vector<64x128xi1>
    %c1_i32_82 = arith.constant 1 : i32
    %213 = vector.broadcast %c1_i32_82 : i32 to vector<64x128xi32>
    %214 = arith.addi %35, %213 : vector<64x128xi32>
    %c0_i32_83 = arith.constant 0 : i32
    %215 = vector.broadcast %c0_i32_83 : i32 to vector<64x128xi32>
    %216 = arith.cmpi sge, %214, %215 : vector<64x128xi32>
    %217 = arith.andi %212, %216 : vector<64x128xi1>
    %c1_i32_84 = arith.constant 1 : i32
    %218 = vector.broadcast %c1_i32_84 : i32 to vector<64x128xi32>
    %219 = arith.addi %35, %218 : vector<64x128xi32>
    %c8_i32_85 = arith.constant 8 : i32
    %220 = vector.broadcast %c8_i32_85 : i32 to vector<64x128xi32>
    %221 = arith.cmpi slt, %219, %220 : vector<64x128xi32>
    %222 = arith.andi %217, %221 : vector<64x128xi1>
    %cst_86 = arith.constant 0.000000e+00 : bf16
    %223 = vector.broadcast %cst_86 : bf16 to vector<64x128xbf16>
    %224 = arith.select %222, %203, %223 : vector<64x128xi1>, vector<64x128xbf16>
    %225 = vector.extract_strided_slice %28 {offsets = [0, 9], sizes = [64, 119], strides = [1, 1]} : vector<64x128xbf16> to vector<64x119xbf16>
    %cst_87 = arith.constant 0.000000e+00 : bf16
    %226 = vector.broadcast %cst_87 : bf16 to vector<64x9xbf16>
    %227 = tpu.concatenate %225, %226 in 1 : vector<64x119xbf16>, vector<64x9xbf16> -> vector<64x128xbf16>
    %c1_i32_88 = arith.constant 1 : i32
    %228 = vector.broadcast %c1_i32_88 : i32 to vector<64x128xi32>
    %229 = arith.addi %31, %228 : vector<64x128xi32>
    %c0_i32_89 = arith.constant 0 : i32
    %230 = vector.broadcast %c0_i32_89 : i32 to vector<64x128xi32>
    %231 = arith.cmpi sge, %229, %230 : vector<64x128xi32>
    %c1_i32_90 = arith.constant 1 : i32
    %232 = vector.broadcast %c1_i32_90 : i32 to vector<64x128xi32>
    %233 = arith.addi %31, %232 : vector<64x128xi32>
    %c8_i32_91 = arith.constant 8 : i32
    %234 = vector.broadcast %c8_i32_91 : i32 to vector<64x128xi32>
    %235 = arith.cmpi slt, %233, %234 : vector<64x128xi32>
    %236 = arith.andi %231, %235 : vector<64x128xi1>
    %c1_i32_92 = arith.constant 1 : i32
    %237 = vector.broadcast %c1_i32_92 : i32 to vector<64x128xi32>
    %238 = arith.addi %35, %237 : vector<64x128xi32>
    %c0_i32_93 = arith.constant 0 : i32
    %239 = vector.broadcast %c0_i32_93 : i32 to vector<64x128xi32>
    %240 = arith.cmpi sge, %238, %239 : vector<64x128xi32>
    %241 = arith.andi %236, %240 : vector<64x128xi1>
    %c1_i32_94 = arith.constant 1 : i32
    %242 = vector.broadcast %c1_i32_94 : i32 to vector<64x128xi32>
    %243 = arith.addi %35, %242 : vector<64x128xi32>
    %c8_i32_95 = arith.constant 8 : i32
    %244 = vector.broadcast %c8_i32_95 : i32 to vector<64x128xi32>
    %245 = arith.cmpi slt, %243, %244 : vector<64x128xi32>
    %246 = arith.andi %241, %245 : vector<64x128xi1>
    %cst_96 = arith.constant 0.000000e+00 : bf16
    %247 = vector.broadcast %cst_96 : bf16 to vector<64x128xbf16>
    %248 = arith.select %246, %227, %247 : vector<64x128xi1>, vector<64x128xbf16>
    %249 = tpu.concatenate %59, %83, %107, %131, %152, %176, %200, %224, %248 in 0 : vector<64x128xbf16>, vector<64x128xbf16>, vector<64x128xbf16>, vector<64x128xbf16>, vector<64x128xbf16>, vector<64x128xbf16>, vector<64x128xbf16>, vector<64x128xbf16>, vector<64x128xbf16> -> vector<576x128xbf16>
    %c0_97 = arith.constant 0 : index
    %c0_98 = arith.constant 0 : index
    %250 = vector.load %arg4[%c0_97, %c0_98] : memref<128x576xbf16, #tpu.memory_space<vmem>>, vector<128x576xbf16>
    %cst_99 = arith.constant dense<0.000000e+00> : vector<128x128xf32>
    %251 = tpu.matmul %250, %249, %cst_99 {dimension_numbers = #tpu.dot_dimension_numbers<[1], [0], [0], [1], [0, 0, 1, 1], [], []>} : vector<128x576xbf16>, vector<576x128xbf16>, vector<128x128xf32> -> vector<128x128xf32>
    %c0_100 = arith.constant 0 : index
    %c0_101 = arith.constant 0 : index
    %252 = vector.load %arg5[%c0_100, %c0_101] : memref<128x128xf32, #tpu.memory_space<vmem>>, vector<128x128xf32>
    tpu.vector_store %arg5[%c0_100, %c0_101], %251 {strides = array<i32>} : memref<128x128xf32, #tpu.memory_space<vmem>>, vector<128x128xf32>,
    return
  }
  func.func @transform_0(%arg0: i32) -> (i32, i32) {
    %c0_i32 = arith.constant 0 : i32
    %c0_i32_0 = arith.constant 0 : i32
    %c0_i32_1 = arith.constant 0 : i32
    return %c0_i32, %c0_i32_0 : i32, i32
  }
  func.func @transform_1(%arg0: i32) -> (i32, i32) {
    %c0_i32 = arith.constant 0 : i32
    %c0_i32_0 = arith.constant 0 : i32
    %c0_i32_1 = arith.constant 0 : i32
    return %c0_i32, %c0_i32_0 : i32, i32
  }
  func.func @transform_2(%arg0: i32) -> (i32, i32) {
    %c0_i32 = arith.constant 0 : i32
    %c0_i32_0 = arith.constant 0 : i32
    %c0_i32_1 = arith.constant 0 : i32
    return %c0_i32, %c0_i32_0 : i32, i32
  }
  func.func @transform_3(%arg0: i32) -> (i32, i32) {
    %c0_i32 = arith.constant 0 : i32
    %c0_i32_0 = arith.constant 0 : i32
    %c0_i32_1 = arith.constant 0 : i32
    return %c0_i32, %c0_i32_0 : i32, i32
  }
  func.func @transform_4(%arg0: i32) -> (i32, i32) {
    %c0_i32 = arith.constant 0 : i32
    %c0_i32_0 = arith.constant 0 : i32
    %c0_i32_1 = arith.constant 0 : i32
    return %c0_i32, %c0_i32_0 : i32, i32
  }
}

module attributes {stable_mosaic.version = 11 : i64} {
  func.func @_stride2_stage_kernel(%arg0: i32, %arg1: memref<32x512xf32, #tpu.memory_space<vmem>>, %arg2: memref<32x1xf32, #tpu.memory_space<vmem>>, %arg3: memref<32x1xf32, #tpu.memory_space<vmem>>, %arg4: memref<128x288xbf16, #tpu.memory_space<vmem>>, %arg5: memref<128x512xf32, #tpu.memory_space<vmem>>) attributes {dimension_semantics = [#tpu.dimension_semantics<arbitrary>], iteration_bounds = array<i64: 1>, scalar_prefetch = 0 : i64, scratch_operands = 0 : i64, tpu.core_type = #tpu.core_type<tc>, window_params = [{pipeline_mode = #tpu.pipeline_mode<synchronous>, transform_indices = @transform_0, window_bounds = array<i64: 32, 512>}, {pipeline_mode = #tpu.pipeline_mode<synchronous>, transform_indices = @transform_1, window_bounds = array<i64: 32, 1>}, {pipeline_mode = #tpu.pipeline_mode<synchronous>, transform_indices = @transform_2, window_bounds = array<i64: 32, 1>}, {pipeline_mode = #tpu.pipeline_mode<synchronous>, transform_indices = @transform_3, window_bounds = array<i64: 128, 288>}, {pipeline_mode = #tpu.pipeline_mode<synchronous>, transform_indices = @transform_4, window_bounds = array<i64: 128, 512>}]} {
    %c0 = arith.constant 0 : index
    %c0_0 = arith.constant 0 : index
    %0 = vector.load %arg1[%c0, %c0_0] : memref<32x512xf32, #tpu.memory_space<vmem>>, vector<32x512xf32>
    %cst = arith.constant dense<0.000000e+00> : vector<32xf32>
    %1 = vector.multi_reduction <add>, %0, %cst [1] : vector<32x512xf32> to vector<32xf32>
    %2 = vector.shape_cast %1 : vector<32xf32> to vector<32x1xf32>
    %3 = arith.mulf %0, %0 : vector<32x512xf32>
    %cst_1 = arith.constant dense<0.000000e+00> : vector<32xf32>
    %4 = vector.multi_reduction <add>, %3, %cst_1 [1] : vector<32x512xf32> to vector<32xf32>
    %5 = vector.shape_cast %4 : vector<32xf32> to vector<32x1xf32>
    %cst_2 = arith.constant 0.001953125 : f32
    %6 = vector.broadcast %cst_2 : f32 to vector<32x1xf32>
    %7 = arith.mulf %2, %6 : vector<32x1xf32>
    %cst_3 = arith.constant 0.001953125 : f32
    %8 = vector.broadcast %cst_3 : f32 to vector<32x1xf32>
    %9 = arith.mulf %5, %8 : vector<32x1xf32>
    %10 = arith.mulf %7, %7 : vector<32x1xf32>
    %11 = arith.subf %9, %10 : vector<32x1xf32>
    %cst_4 = arith.constant 0.000000e+00 : f32
    %12 = vector.broadcast %cst_4 : f32 to vector<32x1xf32>
    %13 = arith.maximumf %11, %12 : vector<32x1xf32>
    %c0_5 = arith.constant 0 : index
    %c0_6 = arith.constant 0 : index
    %14 = vector.load %arg2[%c0_5, %c0_6] : memref<32x1xf32, #tpu.memory_space<vmem>>, vector<32x1xf32>
    %cst_7 = arith.constant 9.99999974E-6 : f32
    %15 = vector.broadcast %cst_7 : f32 to vector<32x1xf32>
    %16 = arith.addf %13, %15 : vector<32x1xf32>
    %17 = math.rsqrt %16 : vector<32x1xf32>
    %18 = arith.mulf %14, %17 : vector<32x1xf32>
    %c0_8 = arith.constant 0 : index
    %c0_9 = arith.constant 0 : index
    %19 = vector.load %arg3[%c0_8, %c0_9] : memref<32x1xf32, #tpu.memory_space<vmem>>, vector<32x1xf32>
    %20 = arith.mulf %7, %18 : vector<32x1xf32>
    %21 = arith.subf %19, %20 : vector<32x1xf32>
    %22 = vector.broadcast %18 : vector<32x1xf32> to vector<32x512xf32>
    %23 = arith.mulf %0, %22 : vector<32x512xf32>
    %24 = vector.broadcast %21 : vector<32x1xf32> to vector<32x512xf32>
    %25 = arith.addf %23, %24 : vector<32x512xf32>
    %cst_10 = arith.constant 0.000000e+00 : f32
    %26 = vector.broadcast %cst_10 : f32 to vector<32x512xf32>
    %27 = arith.maximumf %25, %26 : vector<32x512xf32>
    %28 = arith.truncf %27 : vector<32x512xf32> to vector<32x512xbf16>
    %29 = tpu.iota {dimensions = array<i32: 1>} : vector<32x512xi32>
    %c15_i32 = arith.constant 15 : i32
    %30 = vector.broadcast %c15_i32 : i32 to vector<32x512xi32>
    %31 = arith.andi %29, %30 : vector<32x512xi32>
    %c4_i32 = arith.constant 4 : i32
    %32 = vector.broadcast %c4_i32 : i32 to vector<32x512xi32>
    %33 = arith.shrsi %29, %32 : vector<32x512xi32>
    %c15_i32_11 = arith.constant 15 : i32
    %34 = vector.broadcast %c15_i32_11 : i32 to vector<32x512xi32>
    %35 = arith.andi %33, %34 : vector<32x512xi32>
    %cst_12 = arith.constant 0.000000e+00 : bf16
    %36 = vector.broadcast %cst_12 : bf16 to vector<32x17xbf16>
    %37 = vector.extract_strided_slice %28 {offsets = [0, 0], sizes = [32, 495], strides = [1, 1]} : vector<32x512xbf16> to vector<32x495xbf16>
    %38 = tpu.concatenate %36, %37 in 1 : vector<32x17xbf16>, vector<32x495xbf16> -> vector<32x512xbf16>
    %c-1_i32 = arith.constant -1 : i32
    %39 = vector.broadcast %c-1_i32 : i32 to vector<32x512xi32>
    %40 = arith.addi %31, %39 : vector<32x512xi32>
    %c0_i32 = arith.constant 0 : i32
    %41 = vector.broadcast %c0_i32 : i32 to vector<32x512xi32>
    %42 = arith.cmpi sge, %40, %41 : vector<32x512xi32>
    %c-1_i32_13 = arith.constant -1 : i32
    %43 = vector.broadcast %c-1_i32_13 : i32 to vector<32x512xi32>
    %44 = arith.addi %31, %43 : vector<32x512xi32>
    %c16_i32 = arith.constant 16 : i32
    %45 = vector.broadcast %c16_i32 : i32 to vector<32x512xi32>
    %46 = arith.cmpi slt, %44, %45 : vector<32x512xi32>
    %47 = arith.andi %42, %46 : vector<32x512xi1>
    %c-1_i32_14 = arith.constant -1 : i32
    %48 = vector.broadcast %c-1_i32_14 : i32 to vector<32x512xi32>
    %49 = arith.addi %35, %48 : vector<32x512xi32>
    %c0_i32_15 = arith.constant 0 : i32
    %50 = vector.broadcast %c0_i32_15 : i32 to vector<32x512xi32>
    %51 = arith.cmpi sge, %49, %50 : vector<32x512xi32>
    %52 = arith.andi %47, %51 : vector<32x512xi1>
    %c-1_i32_16 = arith.constant -1 : i32
    %53 = vector.broadcast %c-1_i32_16 : i32 to vector<32x512xi32>
    %54 = arith.addi %35, %53 : vector<32x512xi32>
    %c16_i32_17 = arith.constant 16 : i32
    %55 = vector.broadcast %c16_i32_17 : i32 to vector<32x512xi32>
    %56 = arith.cmpi slt, %54, %55 : vector<32x512xi32>
    %57 = arith.andi %52, %56 : vector<32x512xi1>
    %cst_18 = arith.constant 0.000000e+00 : bf16
    %58 = vector.broadcast %cst_18 : bf16 to vector<32x512xbf16>
    %59 = arith.select %57, %38, %58 : vector<32x512xi1>, vector<32x512xbf16>
    %cst_19 = arith.constant 0.000000e+00 : bf16
    %60 = vector.broadcast %cst_19 : bf16 to vector<32x16xbf16>
    %61 = vector.extract_strided_slice %28 {offsets = [0, 0], sizes = [32, 496], strides = [1, 1]} : vector<32x512xbf16> to vector<32x496xbf16>
    %62 = tpu.concatenate %60, %61 in 1 : vector<32x16xbf16>, vector<32x496xbf16> -> vector<32x512xbf16>
    %c0_i32_20 = arith.constant 0 : i32
    %63 = vector.broadcast %c0_i32_20 : i32 to vector<32x512xi32>
    %64 = arith.addi %31, %63 : vector<32x512xi32>
    %c0_i32_21 = arith.constant 0 : i32
    %65 = vector.broadcast %c0_i32_21 : i32 to vector<32x512xi32>
    %66 = arith.cmpi sge, %64, %65 : vector<32x512xi32>
    %c0_i32_22 = arith.constant 0 : i32
    %67 = vector.broadcast %c0_i32_22 : i32 to vector<32x512xi32>
    %68 = arith.addi %31, %67 : vector<32x512xi32>
    %c16_i32_23 = arith.constant 16 : i32
    %69 = vector.broadcast %c16_i32_23 : i32 to vector<32x512xi32>
    %70 = arith.cmpi slt, %68, %69 : vector<32x512xi32>
    %71 = arith.andi %66, %70 : vector<32x512xi1>
    %c-1_i32_24 = arith.constant -1 : i32
    %72 = vector.broadcast %c-1_i32_24 : i32 to vector<32x512xi32>
    %73 = arith.addi %35, %72 : vector<32x512xi32>
    %c0_i32_25 = arith.constant 0 : i32
    %74 = vector.broadcast %c0_i32_25 : i32 to vector<32x512xi32>
    %75 = arith.cmpi sge, %73, %74 : vector<32x512xi32>
    %76 = arith.andi %71, %75 : vector<32x512xi1>
    %c-1_i32_26 = arith.constant -1 : i32
    %77 = vector.broadcast %c-1_i32_26 : i32 to vector<32x512xi32>
    %78 = arith.addi %35, %77 : vector<32x512xi32>
    %c16_i32_27 = arith.constant 16 : i32
    %79 = vector.broadcast %c16_i32_27 : i32 to vector<32x512xi32>
    %80 = arith.cmpi slt, %78, %79 : vector<32x512xi32>
    %81 = arith.andi %76, %80 : vector<32x512xi1>
    %cst_28 = arith.constant 0.000000e+00 : bf16
    %82 = vector.broadcast %cst_28 : bf16 to vector<32x512xbf16>
    %83 = arith.select %81, %62, %82 : vector<32x512xi1>, vector<32x512xbf16>
    %cst_29 = arith.constant 0.000000e+00 : bf16
    %84 = vector.broadcast %cst_29 : bf16 to vector<32x15xbf16>
    %85 = vector.extract_strided_slice %28 {offsets = [0, 0], sizes = [32, 497], strides = [1, 1]} : vector<32x512xbf16> to vector<32x497xbf16>
    %86 = tpu.concatenate %84, %85 in 1 : vector<32x15xbf16>, vector<32x497xbf16> -> vector<32x512xbf16>
    %c1_i32 = arith.constant 1 : i32
    %87 = vector.broadcast %c1_i32 : i32 to vector<32x512xi32>
    %88 = arith.addi %31, %87 : vector<32x512xi32>
    %c0_i32_30 = arith.constant 0 : i32
    %89 = vector.broadcast %c0_i32_30 : i32 to vector<32x512xi32>
    %90 = arith.cmpi sge, %88, %89 : vector<32x512xi32>
    %c1_i32_31 = arith.constant 1 : i32
    %91 = vector.broadcast %c1_i32_31 : i32 to vector<32x512xi32>
    %92 = arith.addi %31, %91 : vector<32x512xi32>
    %c16_i32_32 = arith.constant 16 : i32
    %93 = vector.broadcast %c16_i32_32 : i32 to vector<32x512xi32>
    %94 = arith.cmpi slt, %92, %93 : vector<32x512xi32>
    %95 = arith.andi %90, %94 : vector<32x512xi1>
    %c-1_i32_33 = arith.constant -1 : i32
    %96 = vector.broadcast %c-1_i32_33 : i32 to vector<32x512xi32>
    %97 = arith.addi %35, %96 : vector<32x512xi32>
    %c0_i32_34 = arith.constant 0 : i32
    %98 = vector.broadcast %c0_i32_34 : i32 to vector<32x512xi32>
    %99 = arith.cmpi sge, %97, %98 : vector<32x512xi32>
    %100 = arith.andi %95, %99 : vector<32x512xi1>
    %c-1_i32_35 = arith.constant -1 : i32
    %101 = vector.broadcast %c-1_i32_35 : i32 to vector<32x512xi32>
    %102 = arith.addi %35, %101 : vector<32x512xi32>
    %c16_i32_36 = arith.constant 16 : i32
    %103 = vector.broadcast %c16_i32_36 : i32 to vector<32x512xi32>
    %104 = arith.cmpi slt, %102, %103 : vector<32x512xi32>
    %105 = arith.andi %100, %104 : vector<32x512xi1>
    %cst_37 = arith.constant 0.000000e+00 : bf16
    %106 = vector.broadcast %cst_37 : bf16 to vector<32x512xbf16>
    %107 = arith.select %105, %86, %106 : vector<32x512xi1>, vector<32x512xbf16>
    %cst_38 = arith.constant 0.000000e+00 : bf16
    %108 = vector.broadcast %cst_38 : bf16 to vector<32x1xbf16>
    %109 = vector.extract_strided_slice %28 {offsets = [0, 0], sizes = [32, 511], strides = [1, 1]} : vector<32x512xbf16> to vector<32x511xbf16>
    %110 = tpu.concatenate %108, %109 in 1 : vector<32x1xbf16>, vector<32x511xbf16> -> vector<32x512xbf16>
    %c-1_i32_39 = arith.constant -1 : i32
    %111 = vector.broadcast %c-1_i32_39 : i32 to vector<32x512xi32>
    %112 = arith.addi %31, %111 : vector<32x512xi32>
    %c0_i32_40 = arith.constant 0 : i32
    %113 = vector.broadcast %c0_i32_40 : i32 to vector<32x512xi32>
    %114 = arith.cmpi sge, %112, %113 : vector<32x512xi32>
    %c-1_i32_41 = arith.constant -1 : i32
    %115 = vector.broadcast %c-1_i32_41 : i32 to vector<32x512xi32>
    %116 = arith.addi %31, %115 : vector<32x512xi32>
    %c16_i32_42 = arith.constant 16 : i32
    %117 = vector.broadcast %c16_i32_42 : i32 to vector<32x512xi32>
    %118 = arith.cmpi slt, %116, %117 : vector<32x512xi32>
    %119 = arith.andi %114, %118 : vector<32x512xi1>
    %c0_i32_43 = arith.constant 0 : i32
    %120 = vector.broadcast %c0_i32_43 : i32 to vector<32x512xi32>
    %121 = arith.addi %35, %120 : vector<32x512xi32>
    %c0_i32_44 = arith.constant 0 : i32
    %122 = vector.broadcast %c0_i32_44 : i32 to vector<32x512xi32>
    %123 = arith.cmpi sge, %121, %122 : vector<32x512xi32>
    %124 = arith.andi %119, %123 : vector<32x512xi1>
    %c0_i32_45 = arith.constant 0 : i32
    %125 = vector.broadcast %c0_i32_45 : i32 to vector<32x512xi32>
    %126 = arith.addi %35, %125 : vector<32x512xi32>
    %c16_i32_46 = arith.constant 16 : i32
    %127 = vector.broadcast %c16_i32_46 : i32 to vector<32x512xi32>
    %128 = arith.cmpi slt, %126, %127 : vector<32x512xi32>
    %129 = arith.andi %124, %128 : vector<32x512xi1>
    %cst_47 = arith.constant 0.000000e+00 : bf16
    %130 = vector.broadcast %cst_47 : bf16 to vector<32x512xbf16>
    %131 = arith.select %129, %110, %130 : vector<32x512xi1>, vector<32x512xbf16>
    %c0_i32_48 = arith.constant 0 : i32
    %132 = vector.broadcast %c0_i32_48 : i32 to vector<32x512xi32>
    %133 = arith.addi %31, %132 : vector<32x512xi32>
    %c0_i32_49 = arith.constant 0 : i32
    %134 = vector.broadcast %c0_i32_49 : i32 to vector<32x512xi32>
    %135 = arith.cmpi sge, %133, %134 : vector<32x512xi32>
    %c0_i32_50 = arith.constant 0 : i32
    %136 = vector.broadcast %c0_i32_50 : i32 to vector<32x512xi32>
    %137 = arith.addi %31, %136 : vector<32x512xi32>
    %c16_i32_51 = arith.constant 16 : i32
    %138 = vector.broadcast %c16_i32_51 : i32 to vector<32x512xi32>
    %139 = arith.cmpi slt, %137, %138 : vector<32x512xi32>
    %140 = arith.andi %135, %139 : vector<32x512xi1>
    %c0_i32_52 = arith.constant 0 : i32
    %141 = vector.broadcast %c0_i32_52 : i32 to vector<32x512xi32>
    %142 = arith.addi %35, %141 : vector<32x512xi32>
    %c0_i32_53 = arith.constant 0 : i32
    %143 = vector.broadcast %c0_i32_53 : i32 to vector<32x512xi32>
    %144 = arith.cmpi sge, %142, %143 : vector<32x512xi32>
    %145 = arith.andi %140, %144 : vector<32x512xi1>
    %c0_i32_54 = arith.constant 0 : i32
    %146 = vector.broadcast %c0_i32_54 : i32 to vector<32x512xi32>
    %147 = arith.addi %35, %146 : vector<32x512xi32>
    %c16_i32_55 = arith.constant 16 : i32
    %148 = vector.broadcast %c16_i32_55 : i32 to vector<32x512xi32>
    %149 = arith.cmpi slt, %147, %148 : vector<32x512xi32>
    %150 = arith.andi %145, %149 : vector<32x512xi1>
    %cst_56 = arith.constant 0.000000e+00 : bf16
    %151 = vector.broadcast %cst_56 : bf16 to vector<32x512xbf16>
    %152 = arith.select %150, %28, %151 : vector<32x512xi1>, vector<32x512xbf16>
    %153 = vector.extract_strided_slice %28 {offsets = [0, 1], sizes = [32, 511], strides = [1, 1]} : vector<32x512xbf16> to vector<32x511xbf16>
    %cst_57 = arith.constant 0.000000e+00 : bf16
    %154 = vector.broadcast %cst_57 : bf16 to vector<32x1xbf16>
    %155 = tpu.concatenate %153, %154 in 1 : vector<32x511xbf16>, vector<32x1xbf16> -> vector<32x512xbf16>
    %c1_i32_58 = arith.constant 1 : i32
    %156 = vector.broadcast %c1_i32_58 : i32 to vector<32x512xi32>
    %157 = arith.addi %31, %156 : vector<32x512xi32>
    %c0_i32_59 = arith.constant 0 : i32
    %158 = vector.broadcast %c0_i32_59 : i32 to vector<32x512xi32>
    %159 = arith.cmpi sge, %157, %158 : vector<32x512xi32>
    %c1_i32_60 = arith.constant 1 : i32
    %160 = vector.broadcast %c1_i32_60 : i32 to vector<32x512xi32>
    %161 = arith.addi %31, %160 : vector<32x512xi32>
    %c16_i32_61 = arith.constant 16 : i32
    %162 = vector.broadcast %c16_i32_61 : i32 to vector<32x512xi32>
    %163 = arith.cmpi slt, %161, %162 : vector<32x512xi32>
    %164 = arith.andi %159, %163 : vector<32x512xi1>
    %c0_i32_62 = arith.constant 0 : i32
    %165 = vector.broadcast %c0_i32_62 : i32 to vector<32x512xi32>
    %166 = arith.addi %35, %165 : vector<32x512xi32>
    %c0_i32_63 = arith.constant 0 : i32
    %167 = vector.broadcast %c0_i32_63 : i32 to vector<32x512xi32>
    %168 = arith.cmpi sge, %166, %167 : vector<32x512xi32>
    %169 = arith.andi %164, %168 : vector<32x512xi1>
    %c0_i32_64 = arith.constant 0 : i32
    %170 = vector.broadcast %c0_i32_64 : i32 to vector<32x512xi32>
    %171 = arith.addi %35, %170 : vector<32x512xi32>
    %c16_i32_65 = arith.constant 16 : i32
    %172 = vector.broadcast %c16_i32_65 : i32 to vector<32x512xi32>
    %173 = arith.cmpi slt, %171, %172 : vector<32x512xi32>
    %174 = arith.andi %169, %173 : vector<32x512xi1>
    %cst_66 = arith.constant 0.000000e+00 : bf16
    %175 = vector.broadcast %cst_66 : bf16 to vector<32x512xbf16>
    %176 = arith.select %174, %155, %175 : vector<32x512xi1>, vector<32x512xbf16>
    %177 = vector.extract_strided_slice %28 {offsets = [0, 15], sizes = [32, 497], strides = [1, 1]} : vector<32x512xbf16> to vector<32x497xbf16>
    %cst_67 = arith.constant 0.000000e+00 : bf16
    %178 = vector.broadcast %cst_67 : bf16 to vector<32x15xbf16>
    %179 = tpu.concatenate %177, %178 in 1 : vector<32x497xbf16>, vector<32x15xbf16> -> vector<32x512xbf16>
    %c-1_i32_68 = arith.constant -1 : i32
    %180 = vector.broadcast %c-1_i32_68 : i32 to vector<32x512xi32>
    %181 = arith.addi %31, %180 : vector<32x512xi32>
    %c0_i32_69 = arith.constant 0 : i32
    %182 = vector.broadcast %c0_i32_69 : i32 to vector<32x512xi32>
    %183 = arith.cmpi sge, %181, %182 : vector<32x512xi32>
    %c-1_i32_70 = arith.constant -1 : i32
    %184 = vector.broadcast %c-1_i32_70 : i32 to vector<32x512xi32>
    %185 = arith.addi %31, %184 : vector<32x512xi32>
    %c16_i32_71 = arith.constant 16 : i32
    %186 = vector.broadcast %c16_i32_71 : i32 to vector<32x512xi32>
    %187 = arith.cmpi slt, %185, %186 : vector<32x512xi32>
    %188 = arith.andi %183, %187 : vector<32x512xi1>
    %c1_i32_72 = arith.constant 1 : i32
    %189 = vector.broadcast %c1_i32_72 : i32 to vector<32x512xi32>
    %190 = arith.addi %35, %189 : vector<32x512xi32>
    %c0_i32_73 = arith.constant 0 : i32
    %191 = vector.broadcast %c0_i32_73 : i32 to vector<32x512xi32>
    %192 = arith.cmpi sge, %190, %191 : vector<32x512xi32>
    %193 = arith.andi %188, %192 : vector<32x512xi1>
    %c1_i32_74 = arith.constant 1 : i32
    %194 = vector.broadcast %c1_i32_74 : i32 to vector<32x512xi32>
    %195 = arith.addi %35, %194 : vector<32x512xi32>
    %c16_i32_75 = arith.constant 16 : i32
    %196 = vector.broadcast %c16_i32_75 : i32 to vector<32x512xi32>
    %197 = arith.cmpi slt, %195, %196 : vector<32x512xi32>
    %198 = arith.andi %193, %197 : vector<32x512xi1>
    %cst_76 = arith.constant 0.000000e+00 : bf16
    %199 = vector.broadcast %cst_76 : bf16 to vector<32x512xbf16>
    %200 = arith.select %198, %179, %199 : vector<32x512xi1>, vector<32x512xbf16>
    %201 = vector.extract_strided_slice %28 {offsets = [0, 16], sizes = [32, 496], strides = [1, 1]} : vector<32x512xbf16> to vector<32x496xbf16>
    %cst_77 = arith.constant 0.000000e+00 : bf16
    %202 = vector.broadcast %cst_77 : bf16 to vector<32x16xbf16>
    %203 = tpu.concatenate %201, %202 in 1 : vector<32x496xbf16>, vector<32x16xbf16> -> vector<32x512xbf16>
    %c0_i32_78 = arith.constant 0 : i32
    %204 = vector.broadcast %c0_i32_78 : i32 to vector<32x512xi32>
    %205 = arith.addi %31, %204 : vector<32x512xi32>
    %c0_i32_79 = arith.constant 0 : i32
    %206 = vector.broadcast %c0_i32_79 : i32 to vector<32x512xi32>
    %207 = arith.cmpi sge, %205, %206 : vector<32x512xi32>
    %c0_i32_80 = arith.constant 0 : i32
    %208 = vector.broadcast %c0_i32_80 : i32 to vector<32x512xi32>
    %209 = arith.addi %31, %208 : vector<32x512xi32>
    %c16_i32_81 = arith.constant 16 : i32
    %210 = vector.broadcast %c16_i32_81 : i32 to vector<32x512xi32>
    %211 = arith.cmpi slt, %209, %210 : vector<32x512xi32>
    %212 = arith.andi %207, %211 : vector<32x512xi1>
    %c1_i32_82 = arith.constant 1 : i32
    %213 = vector.broadcast %c1_i32_82 : i32 to vector<32x512xi32>
    %214 = arith.addi %35, %213 : vector<32x512xi32>
    %c0_i32_83 = arith.constant 0 : i32
    %215 = vector.broadcast %c0_i32_83 : i32 to vector<32x512xi32>
    %216 = arith.cmpi sge, %214, %215 : vector<32x512xi32>
    %217 = arith.andi %212, %216 : vector<32x512xi1>
    %c1_i32_84 = arith.constant 1 : i32
    %218 = vector.broadcast %c1_i32_84 : i32 to vector<32x512xi32>
    %219 = arith.addi %35, %218 : vector<32x512xi32>
    %c16_i32_85 = arith.constant 16 : i32
    %220 = vector.broadcast %c16_i32_85 : i32 to vector<32x512xi32>
    %221 = arith.cmpi slt, %219, %220 : vector<32x512xi32>
    %222 = arith.andi %217, %221 : vector<32x512xi1>
    %cst_86 = arith.constant 0.000000e+00 : bf16
    %223 = vector.broadcast %cst_86 : bf16 to vector<32x512xbf16>
    %224 = arith.select %222, %203, %223 : vector<32x512xi1>, vector<32x512xbf16>
    %225 = vector.extract_strided_slice %28 {offsets = [0, 17], sizes = [32, 495], strides = [1, 1]} : vector<32x512xbf16> to vector<32x495xbf16>
    %cst_87 = arith.constant 0.000000e+00 : bf16
    %226 = vector.broadcast %cst_87 : bf16 to vector<32x17xbf16>
    %227 = tpu.concatenate %225, %226 in 1 : vector<32x495xbf16>, vector<32x17xbf16> -> vector<32x512xbf16>
    %c1_i32_88 = arith.constant 1 : i32
    %228 = vector.broadcast %c1_i32_88 : i32 to vector<32x512xi32>
    %229 = arith.addi %31, %228 : vector<32x512xi32>
    %c0_i32_89 = arith.constant 0 : i32
    %230 = vector.broadcast %c0_i32_89 : i32 to vector<32x512xi32>
    %231 = arith.cmpi sge, %229, %230 : vector<32x512xi32>
    %c1_i32_90 = arith.constant 1 : i32
    %232 = vector.broadcast %c1_i32_90 : i32 to vector<32x512xi32>
    %233 = arith.addi %31, %232 : vector<32x512xi32>
    %c16_i32_91 = arith.constant 16 : i32
    %234 = vector.broadcast %c16_i32_91 : i32 to vector<32x512xi32>
    %235 = arith.cmpi slt, %233, %234 : vector<32x512xi32>
    %236 = arith.andi %231, %235 : vector<32x512xi1>
    %c1_i32_92 = arith.constant 1 : i32
    %237 = vector.broadcast %c1_i32_92 : i32 to vector<32x512xi32>
    %238 = arith.addi %35, %237 : vector<32x512xi32>
    %c0_i32_93 = arith.constant 0 : i32
    %239 = vector.broadcast %c0_i32_93 : i32 to vector<32x512xi32>
    %240 = arith.cmpi sge, %238, %239 : vector<32x512xi32>
    %241 = arith.andi %236, %240 : vector<32x512xi1>
    %c1_i32_94 = arith.constant 1 : i32
    %242 = vector.broadcast %c1_i32_94 : i32 to vector<32x512xi32>
    %243 = arith.addi %35, %242 : vector<32x512xi32>
    %c16_i32_95 = arith.constant 16 : i32
    %244 = vector.broadcast %c16_i32_95 : i32 to vector<32x512xi32>
    %245 = arith.cmpi slt, %243, %244 : vector<32x512xi32>
    %246 = arith.andi %241, %245 : vector<32x512xi1>
    %cst_96 = arith.constant 0.000000e+00 : bf16
    %247 = vector.broadcast %cst_96 : bf16 to vector<32x512xbf16>
    %248 = arith.select %246, %227, %247 : vector<32x512xi1>, vector<32x512xbf16>
    %249 = tpu.concatenate %59, %83, %107, %131, %152, %176, %200, %224, %248 in 0 : vector<32x512xbf16>, vector<32x512xbf16>, vector<32x512xbf16>, vector<32x512xbf16>, vector<32x512xbf16>, vector<32x512xbf16>, vector<32x512xbf16>, vector<32x512xbf16>, vector<32x512xbf16> -> vector<288x512xbf16>
    %c0_97 = arith.constant 0 : index
    %c0_98 = arith.constant 0 : index
    %250 = vector.load %arg4[%c0_97, %c0_98] : memref<128x288xbf16, #tpu.memory_space<vmem>>, vector<128x288xbf16>
    %cst_99 = arith.constant dense<0.000000e+00> : vector<128x512xf32>
    %251 = tpu.matmul %250, %249, %cst_99 {dimension_numbers = #tpu.dot_dimension_numbers<[1], [0], [0], [1], [0, 0, 1, 1], [], []>} : vector<128x288xbf16>, vector<288x512xbf16>, vector<128x512xf32> -> vector<128x512xf32>
    %c0_100 = arith.constant 0 : index
    %c0_101 = arith.constant 0 : index
    %252 = vector.load %arg5[%c0_100, %c0_101] : memref<128x512xf32, #tpu.memory_space<vmem>>, vector<128x512xf32>
    tpu.vector_store %arg5[%c0_100, %c0_101], %251 {strides = array<i32>} : memref<128x512xf32, #tpu.memory_space<vmem>>, vector<128x512xf32>,
    return
  }
  func.func @transform_0(%arg0: i32) -> (i32, i32) {
    %c0_i32 = arith.constant 0 : i32
    %c0_i32_0 = arith.constant 0 : i32
    %c0_i32_1 = arith.constant 0 : i32
    return %c0_i32, %c0_i32_0 : i32, i32
  }
  func.func @transform_1(%arg0: i32) -> (i32, i32) {
    %c0_i32 = arith.constant 0 : i32
    %c0_i32_0 = arith.constant 0 : i32
    %c0_i32_1 = arith.constant 0 : i32
    return %c0_i32, %c0_i32_0 : i32, i32
  }
  func.func @transform_2(%arg0: i32) -> (i32, i32) {
    %c0_i32 = arith.constant 0 : i32
    %c0_i32_0 = arith.constant 0 : i32
    %c0_i32_1 = arith.constant 0 : i32
    return %c0_i32, %c0_i32_0 : i32, i32
  }
  func.func @transform_3(%arg0: i32) -> (i32, i32) {
    %c0_i32 = arith.constant 0 : i32
    %c0_i32_0 = arith.constant 0 : i32
    %c0_i32_1 = arith.constant 0 : i32
    return %c0_i32, %c0_i32_0 : i32, i32
  }
  func.func @transform_4(%arg0: i32) -> (i32, i32) {
    %c0_i32 = arith.constant 0 : i32
    %c0_i32_0 = arith.constant 0 : i32
    %c0_i32_1 = arith.constant 0 : i32
    return %c0_i32, %c0_i32_0 : i32, i32
  }
}

module attributes {stable_mosaic.version = 11 : i64} {
  func.func @_stride2_stage_kernel(%arg0: i32, %arg1: memref<32x2048xf32, #tpu.memory_space<vmem>>, %arg2: memref<32x1xf32, #tpu.memory_space<vmem>>, %arg3: memref<32x1xf32, #tpu.memory_space<vmem>>, %arg4: memref<12x288xbf16, #tpu.memory_space<vmem>>, %arg5: memref<12x2048xf32, #tpu.memory_space<vmem>>) attributes {dimension_semantics = [#tpu.dimension_semantics<arbitrary>], iteration_bounds = array<i64: 1>, scalar_prefetch = 0 : i64, scratch_operands = 0 : i64, tpu.core_type = #tpu.core_type<tc>, window_params = [{pipeline_mode = #tpu.pipeline_mode<synchronous>, transform_indices = @transform_0, window_bounds = array<i64: 32, 2048>}, {pipeline_mode = #tpu.pipeline_mode<synchronous>, transform_indices = @transform_1, window_bounds = array<i64: 32, 1>}, {pipeline_mode = #tpu.pipeline_mode<synchronous>, transform_indices = @transform_2, window_bounds = array<i64: 32, 1>}, {pipeline_mode = #tpu.pipeline_mode<synchronous>, transform_indices = @transform_3, window_bounds = array<i64: 12, 288>}, {pipeline_mode = #tpu.pipeline_mode<synchronous>, transform_indices = @transform_4, window_bounds = array<i64: 12, 2048>}]} {
    %c0 = arith.constant 0 : index
    %c0_0 = arith.constant 0 : index
    %0 = vector.load %arg1[%c0, %c0_0] : memref<32x2048xf32, #tpu.memory_space<vmem>>, vector<32x2048xf32>
    %cst = arith.constant dense<0.000000e+00> : vector<32xf32>
    %1 = vector.multi_reduction <add>, %0, %cst [1] : vector<32x2048xf32> to vector<32xf32>
    %2 = vector.shape_cast %1 : vector<32xf32> to vector<32x1xf32>
    %3 = arith.mulf %0, %0 : vector<32x2048xf32>
    %cst_1 = arith.constant dense<0.000000e+00> : vector<32xf32>
    %4 = vector.multi_reduction <add>, %3, %cst_1 [1] : vector<32x2048xf32> to vector<32xf32>
    %5 = vector.shape_cast %4 : vector<32xf32> to vector<32x1xf32>
    %cst_2 = arith.constant 4.8828125E-4 : f32
    %6 = vector.broadcast %cst_2 : f32 to vector<32x1xf32>
    %7 = arith.mulf %2, %6 : vector<32x1xf32>
    %cst_3 = arith.constant 4.8828125E-4 : f32
    %8 = vector.broadcast %cst_3 : f32 to vector<32x1xf32>
    %9 = arith.mulf %5, %8 : vector<32x1xf32>
    %10 = arith.mulf %7, %7 : vector<32x1xf32>
    %11 = arith.subf %9, %10 : vector<32x1xf32>
    %cst_4 = arith.constant 0.000000e+00 : f32
    %12 = vector.broadcast %cst_4 : f32 to vector<32x1xf32>
    %13 = arith.maximumf %11, %12 : vector<32x1xf32>
    %c0_5 = arith.constant 0 : index
    %c0_6 = arith.constant 0 : index
    %14 = vector.load %arg2[%c0_5, %c0_6] : memref<32x1xf32, #tpu.memory_space<vmem>>, vector<32x1xf32>
    %cst_7 = arith.constant 9.99999974E-6 : f32
    %15 = vector.broadcast %cst_7 : f32 to vector<32x1xf32>
    %16 = arith.addf %13, %15 : vector<32x1xf32>
    %17 = math.rsqrt %16 : vector<32x1xf32>
    %18 = arith.mulf %14, %17 : vector<32x1xf32>
    %c0_8 = arith.constant 0 : index
    %c0_9 = arith.constant 0 : index
    %19 = vector.load %arg3[%c0_8, %c0_9] : memref<32x1xf32, #tpu.memory_space<vmem>>, vector<32x1xf32>
    %20 = arith.mulf %7, %18 : vector<32x1xf32>
    %21 = arith.subf %19, %20 : vector<32x1xf32>
    %22 = vector.broadcast %18 : vector<32x1xf32> to vector<32x2048xf32>
    %23 = arith.mulf %0, %22 : vector<32x2048xf32>
    %24 = vector.broadcast %21 : vector<32x1xf32> to vector<32x2048xf32>
    %25 = arith.addf %23, %24 : vector<32x2048xf32>
    %cst_10 = arith.constant 0.000000e+00 : f32
    %26 = vector.broadcast %cst_10 : f32 to vector<32x2048xf32>
    %27 = arith.maximumf %25, %26 : vector<32x2048xf32>
    %28 = arith.truncf %27 : vector<32x2048xf32> to vector<32x2048xbf16>
    %29 = tpu.iota {dimensions = array<i32: 1>} : vector<32x2048xi32>
    %c31_i32 = arith.constant 31 : i32
    %30 = vector.broadcast %c31_i32 : i32 to vector<32x2048xi32>
    %31 = arith.andi %29, %30 : vector<32x2048xi32>
    %c5_i32 = arith.constant 5 : i32
    %32 = vector.broadcast %c5_i32 : i32 to vector<32x2048xi32>
    %33 = arith.shrsi %29, %32 : vector<32x2048xi32>
    %c31_i32_11 = arith.constant 31 : i32
    %34 = vector.broadcast %c31_i32_11 : i32 to vector<32x2048xi32>
    %35 = arith.andi %33, %34 : vector<32x2048xi32>
    %cst_12 = arith.constant 0.000000e+00 : bf16
    %36 = vector.broadcast %cst_12 : bf16 to vector<32x33xbf16>
    %37 = vector.extract_strided_slice %28 {offsets = [0, 0], sizes = [32, 2015], strides = [1, 1]} : vector<32x2048xbf16> to vector<32x2015xbf16>
    %38 = tpu.concatenate %36, %37 in 1 : vector<32x33xbf16>, vector<32x2015xbf16> -> vector<32x2048xbf16>
    %c-1_i32 = arith.constant -1 : i32
    %39 = vector.broadcast %c-1_i32 : i32 to vector<32x2048xi32>
    %40 = arith.addi %31, %39 : vector<32x2048xi32>
    %c0_i32 = arith.constant 0 : i32
    %41 = vector.broadcast %c0_i32 : i32 to vector<32x2048xi32>
    %42 = arith.cmpi sge, %40, %41 : vector<32x2048xi32>
    %c-1_i32_13 = arith.constant -1 : i32
    %43 = vector.broadcast %c-1_i32_13 : i32 to vector<32x2048xi32>
    %44 = arith.addi %31, %43 : vector<32x2048xi32>
    %c32_i32 = arith.constant 32 : i32
    %45 = vector.broadcast %c32_i32 : i32 to vector<32x2048xi32>
    %46 = arith.cmpi slt, %44, %45 : vector<32x2048xi32>
    %47 = arith.andi %42, %46 : vector<32x2048xi1>
    %c-1_i32_14 = arith.constant -1 : i32
    %48 = vector.broadcast %c-1_i32_14 : i32 to vector<32x2048xi32>
    %49 = arith.addi %35, %48 : vector<32x2048xi32>
    %c0_i32_15 = arith.constant 0 : i32
    %50 = vector.broadcast %c0_i32_15 : i32 to vector<32x2048xi32>
    %51 = arith.cmpi sge, %49, %50 : vector<32x2048xi32>
    %52 = arith.andi %47, %51 : vector<32x2048xi1>
    %c-1_i32_16 = arith.constant -1 : i32
    %53 = vector.broadcast %c-1_i32_16 : i32 to vector<32x2048xi32>
    %54 = arith.addi %35, %53 : vector<32x2048xi32>
    %c32_i32_17 = arith.constant 32 : i32
    %55 = vector.broadcast %c32_i32_17 : i32 to vector<32x2048xi32>
    %56 = arith.cmpi slt, %54, %55 : vector<32x2048xi32>
    %57 = arith.andi %52, %56 : vector<32x2048xi1>
    %cst_18 = arith.constant 0.000000e+00 : bf16
    %58 = vector.broadcast %cst_18 : bf16 to vector<32x2048xbf16>
    %59 = arith.select %57, %38, %58 : vector<32x2048xi1>, vector<32x2048xbf16>
    %cst_19 = arith.constant 0.000000e+00 : bf16
    %60 = vector.broadcast %cst_19 : bf16 to vector<32x32xbf16>
    %61 = vector.extract_strided_slice %28 {offsets = [0, 0], sizes = [32, 2016], strides = [1, 1]} : vector<32x2048xbf16> to vector<32x2016xbf16>
    %62 = tpu.concatenate %60, %61 in 1 : vector<32x32xbf16>, vector<32x2016xbf16> -> vector<32x2048xbf16>
    %c0_i32_20 = arith.constant 0 : i32
    %63 = vector.broadcast %c0_i32_20 : i32 to vector<32x2048xi32>
    %64 = arith.addi %31, %63 : vector<32x2048xi32>
    %c0_i32_21 = arith.constant 0 : i32
    %65 = vector.broadcast %c0_i32_21 : i32 to vector<32x2048xi32>
    %66 = arith.cmpi sge, %64, %65 : vector<32x2048xi32>
    %c0_i32_22 = arith.constant 0 : i32
    %67 = vector.broadcast %c0_i32_22 : i32 to vector<32x2048xi32>
    %68 = arith.addi %31, %67 : vector<32x2048xi32>
    %c32_i32_23 = arith.constant 32 : i32
    %69 = vector.broadcast %c32_i32_23 : i32 to vector<32x2048xi32>
    %70 = arith.cmpi slt, %68, %69 : vector<32x2048xi32>
    %71 = arith.andi %66, %70 : vector<32x2048xi1>
    %c-1_i32_24 = arith.constant -1 : i32
    %72 = vector.broadcast %c-1_i32_24 : i32 to vector<32x2048xi32>
    %73 = arith.addi %35, %72 : vector<32x2048xi32>
    %c0_i32_25 = arith.constant 0 : i32
    %74 = vector.broadcast %c0_i32_25 : i32 to vector<32x2048xi32>
    %75 = arith.cmpi sge, %73, %74 : vector<32x2048xi32>
    %76 = arith.andi %71, %75 : vector<32x2048xi1>
    %c-1_i32_26 = arith.constant -1 : i32
    %77 = vector.broadcast %c-1_i32_26 : i32 to vector<32x2048xi32>
    %78 = arith.addi %35, %77 : vector<32x2048xi32>
    %c32_i32_27 = arith.constant 32 : i32
    %79 = vector.broadcast %c32_i32_27 : i32 to vector<32x2048xi32>
    %80 = arith.cmpi slt, %78, %79 : vector<32x2048xi32>
    %81 = arith.andi %76, %80 : vector<32x2048xi1>
    %cst_28 = arith.constant 0.000000e+00 : bf16
    %82 = vector.broadcast %cst_28 : bf16 to vector<32x2048xbf16>
    %83 = arith.select %81, %62, %82 : vector<32x2048xi1>, vector<32x2048xbf16>
    %cst_29 = arith.constant 0.000000e+00 : bf16
    %84 = vector.broadcast %cst_29 : bf16 to vector<32x31xbf16>
    %85 = vector.extract_strided_slice %28 {offsets = [0, 0], sizes = [32, 2017], strides = [1, 1]} : vector<32x2048xbf16> to vector<32x2017xbf16>
    %86 = tpu.concatenate %84, %85 in 1 : vector<32x31xbf16>, vector<32x2017xbf16> -> vector<32x2048xbf16>
    %c1_i32 = arith.constant 1 : i32
    %87 = vector.broadcast %c1_i32 : i32 to vector<32x2048xi32>
    %88 = arith.addi %31, %87 : vector<32x2048xi32>
    %c0_i32_30 = arith.constant 0 : i32
    %89 = vector.broadcast %c0_i32_30 : i32 to vector<32x2048xi32>
    %90 = arith.cmpi sge, %88, %89 : vector<32x2048xi32>
    %c1_i32_31 = arith.constant 1 : i32
    %91 = vector.broadcast %c1_i32_31 : i32 to vector<32x2048xi32>
    %92 = arith.addi %31, %91 : vector<32x2048xi32>
    %c32_i32_32 = arith.constant 32 : i32
    %93 = vector.broadcast %c32_i32_32 : i32 to vector<32x2048xi32>
    %94 = arith.cmpi slt, %92, %93 : vector<32x2048xi32>
    %95 = arith.andi %90, %94 : vector<32x2048xi1>
    %c-1_i32_33 = arith.constant -1 : i32
    %96 = vector.broadcast %c-1_i32_33 : i32 to vector<32x2048xi32>
    %97 = arith.addi %35, %96 : vector<32x2048xi32>
    %c0_i32_34 = arith.constant 0 : i32
    %98 = vector.broadcast %c0_i32_34 : i32 to vector<32x2048xi32>
    %99 = arith.cmpi sge, %97, %98 : vector<32x2048xi32>
    %100 = arith.andi %95, %99 : vector<32x2048xi1>
    %c-1_i32_35 = arith.constant -1 : i32
    %101 = vector.broadcast %c-1_i32_35 : i32 to vector<32x2048xi32>
    %102 = arith.addi %35, %101 : vector<32x2048xi32>
    %c32_i32_36 = arith.constant 32 : i32
    %103 = vector.broadcast %c32_i32_36 : i32 to vector<32x2048xi32>
    %104 = arith.cmpi slt, %102, %103 : vector<32x2048xi32>
    %105 = arith.andi %100, %104 : vector<32x2048xi1>
    %cst_37 = arith.constant 0.000000e+00 : bf16
    %106 = vector.broadcast %cst_37 : bf16 to vector<32x2048xbf16>
    %107 = arith.select %105, %86, %106 : vector<32x2048xi1>, vector<32x2048xbf16>
    %cst_38 = arith.constant 0.000000e+00 : bf16
    %108 = vector.broadcast %cst_38 : bf16 to vector<32x1xbf16>
    %109 = vector.extract_strided_slice %28 {offsets = [0, 0], sizes = [32, 2047], strides = [1, 1]} : vector<32x2048xbf16> to vector<32x2047xbf16>
    %110 = tpu.concatenate %108, %109 in 1 : vector<32x1xbf16>, vector<32x2047xbf16> -> vector<32x2048xbf16>
    %c-1_i32_39 = arith.constant -1 : i32
    %111 = vector.broadcast %c-1_i32_39 : i32 to vector<32x2048xi32>
    %112 = arith.addi %31, %111 : vector<32x2048xi32>
    %c0_i32_40 = arith.constant 0 : i32
    %113 = vector.broadcast %c0_i32_40 : i32 to vector<32x2048xi32>
    %114 = arith.cmpi sge, %112, %113 : vector<32x2048xi32>
    %c-1_i32_41 = arith.constant -1 : i32
    %115 = vector.broadcast %c-1_i32_41 : i32 to vector<32x2048xi32>
    %116 = arith.addi %31, %115 : vector<32x2048xi32>
    %c32_i32_42 = arith.constant 32 : i32
    %117 = vector.broadcast %c32_i32_42 : i32 to vector<32x2048xi32>
    %118 = arith.cmpi slt, %116, %117 : vector<32x2048xi32>
    %119 = arith.andi %114, %118 : vector<32x2048xi1>
    %c0_i32_43 = arith.constant 0 : i32
    %120 = vector.broadcast %c0_i32_43 : i32 to vector<32x2048xi32>
    %121 = arith.addi %35, %120 : vector<32x2048xi32>
    %c0_i32_44 = arith.constant 0 : i32
    %122 = vector.broadcast %c0_i32_44 : i32 to vector<32x2048xi32>
    %123 = arith.cmpi sge, %121, %122 : vector<32x2048xi32>
    %124 = arith.andi %119, %123 : vector<32x2048xi1>
    %c0_i32_45 = arith.constant 0 : i32
    %125 = vector.broadcast %c0_i32_45 : i32 to vector<32x2048xi32>
    %126 = arith.addi %35, %125 : vector<32x2048xi32>
    %c32_i32_46 = arith.constant 32 : i32
    %127 = vector.broadcast %c32_i32_46 : i32 to vector<32x2048xi32>
    %128 = arith.cmpi slt, %126, %127 : vector<32x2048xi32>
    %129 = arith.andi %124, %128 : vector<32x2048xi1>
    %cst_47 = arith.constant 0.000000e+00 : bf16
    %130 = vector.broadcast %cst_47 : bf16 to vector<32x2048xbf16>
    %131 = arith.select %129, %110, %130 : vector<32x2048xi1>, vector<32x2048xbf16>
    %c0_i32_48 = arith.constant 0 : i32
    %132 = vector.broadcast %c0_i32_48 : i32 to vector<32x2048xi32>
    %133 = arith.addi %31, %132 : vector<32x2048xi32>
    %c0_i32_49 = arith.constant 0 : i32
    %134 = vector.broadcast %c0_i32_49 : i32 to vector<32x2048xi32>
    %135 = arith.cmpi sge, %133, %134 : vector<32x2048xi32>
    %c0_i32_50 = arith.constant 0 : i32
    %136 = vector.broadcast %c0_i32_50 : i32 to vector<32x2048xi32>
    %137 = arith.addi %31, %136 : vector<32x2048xi32>
    %c32_i32_51 = arith.constant 32 : i32
    %138 = vector.broadcast %c32_i32_51 : i32 to vector<32x2048xi32>
    %139 = arith.cmpi slt, %137, %138 : vector<32x2048xi32>
    %140 = arith.andi %135, %139 : vector<32x2048xi1>
    %c0_i32_52 = arith.constant 0 : i32
    %141 = vector.broadcast %c0_i32_52 : i32 to vector<32x2048xi32>
    %142 = arith.addi %35, %141 : vector<32x2048xi32>
    %c0_i32_53 = arith.constant 0 : i32
    %143 = vector.broadcast %c0_i32_53 : i32 to vector<32x2048xi32>
    %144 = arith.cmpi sge, %142, %143 : vector<32x2048xi32>
    %145 = arith.andi %140, %144 : vector<32x2048xi1>
    %c0_i32_54 = arith.constant 0 : i32
    %146 = vector.broadcast %c0_i32_54 : i32 to vector<32x2048xi32>
    %147 = arith.addi %35, %146 : vector<32x2048xi32>
    %c32_i32_55 = arith.constant 32 : i32
    %148 = vector.broadcast %c32_i32_55 : i32 to vector<32x2048xi32>
    %149 = arith.cmpi slt, %147, %148 : vector<32x2048xi32>
    %150 = arith.andi %145, %149 : vector<32x2048xi1>
    %cst_56 = arith.constant 0.000000e+00 : bf16
    %151 = vector.broadcast %cst_56 : bf16 to vector<32x2048xbf16>
    %152 = arith.select %150, %28, %151 : vector<32x2048xi1>, vector<32x2048xbf16>
    %153 = vector.extract_strided_slice %28 {offsets = [0, 1], sizes = [32, 2047], strides = [1, 1]} : vector<32x2048xbf16> to vector<32x2047xbf16>
    %cst_57 = arith.constant 0.000000e+00 : bf16
    %154 = vector.broadcast %cst_57 : bf16 to vector<32x1xbf16>
    %155 = tpu.concatenate %153, %154 in 1 : vector<32x2047xbf16>, vector<32x1xbf16> -> vector<32x2048xbf16>
    %c1_i32_58 = arith.constant 1 : i32
    %156 = vector.broadcast %c1_i32_58 : i32 to vector<32x2048xi32>
    %157 = arith.addi %31, %156 : vector<32x2048xi32>
    %c0_i32_59 = arith.constant 0 : i32
    %158 = vector.broadcast %c0_i32_59 : i32 to vector<32x2048xi32>
    %159 = arith.cmpi sge, %157, %158 : vector<32x2048xi32>
    %c1_i32_60 = arith.constant 1 : i32
    %160 = vector.broadcast %c1_i32_60 : i32 to vector<32x2048xi32>
    %161 = arith.addi %31, %160 : vector<32x2048xi32>
    %c32_i32_61 = arith.constant 32 : i32
    %162 = vector.broadcast %c32_i32_61 : i32 to vector<32x2048xi32>
    %163 = arith.cmpi slt, %161, %162 : vector<32x2048xi32>
    %164 = arith.andi %159, %163 : vector<32x2048xi1>
    %c0_i32_62 = arith.constant 0 : i32
    %165 = vector.broadcast %c0_i32_62 : i32 to vector<32x2048xi32>
    %166 = arith.addi %35, %165 : vector<32x2048xi32>
    %c0_i32_63 = arith.constant 0 : i32
    %167 = vector.broadcast %c0_i32_63 : i32 to vector<32x2048xi32>
    %168 = arith.cmpi sge, %166, %167 : vector<32x2048xi32>
    %169 = arith.andi %164, %168 : vector<32x2048xi1>
    %c0_i32_64 = arith.constant 0 : i32
    %170 = vector.broadcast %c0_i32_64 : i32 to vector<32x2048xi32>
    %171 = arith.addi %35, %170 : vector<32x2048xi32>
    %c32_i32_65 = arith.constant 32 : i32
    %172 = vector.broadcast %c32_i32_65 : i32 to vector<32x2048xi32>
    %173 = arith.cmpi slt, %171, %172 : vector<32x2048xi32>
    %174 = arith.andi %169, %173 : vector<32x2048xi1>
    %cst_66 = arith.constant 0.000000e+00 : bf16
    %175 = vector.broadcast %cst_66 : bf16 to vector<32x2048xbf16>
    %176 = arith.select %174, %155, %175 : vector<32x2048xi1>, vector<32x2048xbf16>
    %177 = vector.extract_strided_slice %28 {offsets = [0, 31], sizes = [32, 2017], strides = [1, 1]} : vector<32x2048xbf16> to vector<32x2017xbf16>
    %cst_67 = arith.constant 0.000000e+00 : bf16
    %178 = vector.broadcast %cst_67 : bf16 to vector<32x31xbf16>
    %179 = tpu.concatenate %177, %178 in 1 : vector<32x2017xbf16>, vector<32x31xbf16> -> vector<32x2048xbf16>
    %c-1_i32_68 = arith.constant -1 : i32
    %180 = vector.broadcast %c-1_i32_68 : i32 to vector<32x2048xi32>
    %181 = arith.addi %31, %180 : vector<32x2048xi32>
    %c0_i32_69 = arith.constant 0 : i32
    %182 = vector.broadcast %c0_i32_69 : i32 to vector<32x2048xi32>
    %183 = arith.cmpi sge, %181, %182 : vector<32x2048xi32>
    %c-1_i32_70 = arith.constant -1 : i32
    %184 = vector.broadcast %c-1_i32_70 : i32 to vector<32x2048xi32>
    %185 = arith.addi %31, %184 : vector<32x2048xi32>
    %c32_i32_71 = arith.constant 32 : i32
    %186 = vector.broadcast %c32_i32_71 : i32 to vector<32x2048xi32>
    %187 = arith.cmpi slt, %185, %186 : vector<32x2048xi32>
    %188 = arith.andi %183, %187 : vector<32x2048xi1>
    %c1_i32_72 = arith.constant 1 : i32
    %189 = vector.broadcast %c1_i32_72 : i32 to vector<32x2048xi32>
    %190 = arith.addi %35, %189 : vector<32x2048xi32>
    %c0_i32_73 = arith.constant 0 : i32
    %191 = vector.broadcast %c0_i32_73 : i32 to vector<32x2048xi32>
    %192 = arith.cmpi sge, %190, %191 : vector<32x2048xi32>
    %193 = arith.andi %188, %192 : vector<32x2048xi1>
    %c1_i32_74 = arith.constant 1 : i32
    %194 = vector.broadcast %c1_i32_74 : i32 to vector<32x2048xi32>
    %195 = arith.addi %35, %194 : vector<32x2048xi32>
    %c32_i32_75 = arith.constant 32 : i32
    %196 = vector.broadcast %c32_i32_75 : i32 to vector<32x2048xi32>
    %197 = arith.cmpi slt, %195, %196 : vector<32x2048xi32>
    %198 = arith.andi %193, %197 : vector<32x2048xi1>
    %cst_76 = arith.constant 0.000000e+00 : bf16
    %199 = vector.broadcast %cst_76 : bf16 to vector<32x2048xbf16>
    %200 = arith.select %198, %179, %199 : vector<32x2048xi1>, vector<32x2048xbf16>
    %201 = vector.extract_strided_slice %28 {offsets = [0, 32], sizes = [32, 2016], strides = [1, 1]} : vector<32x2048xbf16> to vector<32x2016xbf16>
    %cst_77 = arith.constant 0.000000e+00 : bf16
    %202 = vector.broadcast %cst_77 : bf16 to vector<32x32xbf16>
    %203 = tpu.concatenate %201, %202 in 1 : vector<32x2016xbf16>, vector<32x32xbf16> -> vector<32x2048xbf16>
    %c0_i32_78 = arith.constant 0 : i32
    %204 = vector.broadcast %c0_i32_78 : i32 to vector<32x2048xi32>
    %205 = arith.addi %31, %204 : vector<32x2048xi32>
    %c0_i32_79 = arith.constant 0 : i32
    %206 = vector.broadcast %c0_i32_79 : i32 to vector<32x2048xi32>
    %207 = arith.cmpi sge, %205, %206 : vector<32x2048xi32>
    %c0_i32_80 = arith.constant 0 : i32
    %208 = vector.broadcast %c0_i32_80 : i32 to vector<32x2048xi32>
    %209 = arith.addi %31, %208 : vector<32x2048xi32>
    %c32_i32_81 = arith.constant 32 : i32
    %210 = vector.broadcast %c32_i32_81 : i32 to vector<32x2048xi32>
    %211 = arith.cmpi slt, %209, %210 : vector<32x2048xi32>
    %212 = arith.andi %207, %211 : vector<32x2048xi1>
    %c1_i32_82 = arith.constant 1 : i32
    %213 = vector.broadcast %c1_i32_82 : i32 to vector<32x2048xi32>
    %214 = arith.addi %35, %213 : vector<32x2048xi32>
    %c0_i32_83 = arith.constant 0 : i32
    %215 = vector.broadcast %c0_i32_83 : i32 to vector<32x2048xi32>
    %216 = arith.cmpi sge, %214, %215 : vector<32x2048xi32>
    %217 = arith.andi %212, %216 : vector<32x2048xi1>
    %c1_i32_84 = arith.constant 1 : i32
    %218 = vector.broadcast %c1_i32_84 : i32 to vector<32x2048xi32>
    %219 = arith.addi %35, %218 : vector<32x2048xi32>
    %c32_i32_85 = arith.constant 32 : i32
    %220 = vector.broadcast %c32_i32_85 : i32 to vector<32x2048xi32>
    %221 = arith.cmpi slt, %219, %220 : vector<32x2048xi32>
    %222 = arith.andi %217, %221 : vector<32x2048xi1>
    %cst_86 = arith.constant 0.000000e+00 : bf16
    %223 = vector.broadcast %cst_86 : bf16 to vector<32x2048xbf16>
    %224 = arith.select %222, %203, %223 : vector<32x2048xi1>, vector<32x2048xbf16>
    %225 = vector.extract_strided_slice %28 {offsets = [0, 33], sizes = [32, 2015], strides = [1, 1]} : vector<32x2048xbf16> to vector<32x2015xbf16>
    %cst_87 = arith.constant 0.000000e+00 : bf16
    %226 = vector.broadcast %cst_87 : bf16 to vector<32x33xbf16>
    %227 = tpu.concatenate %225, %226 in 1 : vector<32x2015xbf16>, vector<32x33xbf16> -> vector<32x2048xbf16>
    %c1_i32_88 = arith.constant 1 : i32
    %228 = vector.broadcast %c1_i32_88 : i32 to vector<32x2048xi32>
    %229 = arith.addi %31, %228 : vector<32x2048xi32>
    %c0_i32_89 = arith.constant 0 : i32
    %230 = vector.broadcast %c0_i32_89 : i32 to vector<32x2048xi32>
    %231 = arith.cmpi sge, %229, %230 : vector<32x2048xi32>
    %c1_i32_90 = arith.constant 1 : i32
    %232 = vector.broadcast %c1_i32_90 : i32 to vector<32x2048xi32>
    %233 = arith.addi %31, %232 : vector<32x2048xi32>
    %c32_i32_91 = arith.constant 32 : i32
    %234 = vector.broadcast %c32_i32_91 : i32 to vector<32x2048xi32>
    %235 = arith.cmpi slt, %233, %234 : vector<32x2048xi32>
    %236 = arith.andi %231, %235 : vector<32x2048xi1>
    %c1_i32_92 = arith.constant 1 : i32
    %237 = vector.broadcast %c1_i32_92 : i32 to vector<32x2048xi32>
    %238 = arith.addi %35, %237 : vector<32x2048xi32>
    %c0_i32_93 = arith.constant 0 : i32
    %239 = vector.broadcast %c0_i32_93 : i32 to vector<32x2048xi32>
    %240 = arith.cmpi sge, %238, %239 : vector<32x2048xi32>
    %241 = arith.andi %236, %240 : vector<32x2048xi1>
    %c1_i32_94 = arith.constant 1 : i32
    %242 = vector.broadcast %c1_i32_94 : i32 to vector<32x2048xi32>
    %243 = arith.addi %35, %242 : vector<32x2048xi32>
    %c32_i32_95 = arith.constant 32 : i32
    %244 = vector.broadcast %c32_i32_95 : i32 to vector<32x2048xi32>
    %245 = arith.cmpi slt, %243, %244 : vector<32x2048xi32>
    %246 = arith.andi %241, %245 : vector<32x2048xi1>
    %cst_96 = arith.constant 0.000000e+00 : bf16
    %247 = vector.broadcast %cst_96 : bf16 to vector<32x2048xbf16>
    %248 = arith.select %246, %227, %247 : vector<32x2048xi1>, vector<32x2048xbf16>
    %249 = tpu.concatenate %59, %83, %107, %131, %152, %176, %200, %224, %248 in 0 : vector<32x2048xbf16>, vector<32x2048xbf16>, vector<32x2048xbf16>, vector<32x2048xbf16>, vector<32x2048xbf16>, vector<32x2048xbf16>, vector<32x2048xbf16>, vector<32x2048xbf16>, vector<32x2048xbf16> -> vector<288x2048xbf16>
    %c0_97 = arith.constant 0 : index
    %c0_98 = arith.constant 0 : index
    %250 = vector.load %arg4[%c0_97, %c0_98] : memref<12x288xbf16, #tpu.memory_space<vmem>>, vector<12x288xbf16>
    %cst_99 = arith.constant dense<0.000000e+00> : vector<12x2048xf32>
    %251 = tpu.matmul %250, %249, %cst_99 {dimension_numbers = #tpu.dot_dimension_numbers<[1], [0], [0], [1], [0, 0, 1, 1], [], []>} : vector<12x288xbf16>, vector<288x2048xbf16>, vector<12x2048xf32> -> vector<12x2048xf32>
    %c0_100 = arith.constant 0 : index
    %c0_101 = arith.constant 0 : index
    %252 = vector.load %arg5[%c0_100, %c0_101] : memref<12x2048xf32, #tpu.memory_space<vmem>>, vector<12x2048xf32>
    tpu.vector_store %arg5[%c0_100, %c0_101], %251 {strides = array<i32>} : memref<12x2048xf32, #tpu.memory_space<vmem>>, vector<12x2048xf32>,
    return
  }
  func.func @transform_0(%arg0: i32) -> (i32, i32) {
    %c0_i32 = arith.constant 0 : i32
    %c0_i32_0 = arith.constant 0 : i32
    %c0_i32_1 = arith.constant 0 : i32
    return %c0_i32, %c0_i32_0 : i32, i32
  }
  func.func @transform_1(%arg0: i32) -> (i32, i32) {
    %c0_i32 = arith.constant 0 : i32
    %c0_i32_0 = arith.constant 0 : i32
    %c0_i32_1 = arith.constant 0 : i32
    return %c0_i32, %c0_i32_0 : i32, i32
  }
  func.func @transform_2(%arg0: i32) -> (i32, i32) {
    %c0_i32 = arith.constant 0 : i32
    %c0_i32_0 = arith.constant 0 : i32
    %c0_i32_1 = arith.constant 0 : i32
    return %c0_i32, %c0_i32_0 : i32, i32
  }
  func.func @transform_3(%arg0: i32) -> (i32, i32) {
    %c0_i32 = arith.constant 0 : i32
    %c0_i32_0 = arith.constant 0 : i32
    %c0_i32_1 = arith.constant 0 : i32
    return %c0_i32, %c0_i32_0 : i32, i32
  }
  func.func @transform_4(%arg0: i32) -> (i32, i32) {
    %c0_i32 = arith.constant 0 : i32
    %c0_i32_0 = arith.constant 0 : i32
    %c0_i32_1 = arith.constant 0 : i32
    return %c0_i32, %c0_i32_0 : i32, i32
  }
}

</mosaic_0001>

<llo_original>
// kernel: kitti_conv_decoder_forward.5
$region0: #{kitti_conv_decoder_forward.5}
  #allocation0 [shape = 'u32[]', space=smem, size = 0x4, offset = 0x4, fixed_abs, tag = 'smem constant byte address 0x4 - core index']
  #allocation1 [shape = 'u32[144,128]{1,0:T(1,128)}', space=vmem, size = 0x12000, scoped, tag = 'internal scratch']
  %s0 = inlined_call_operand.hbm [shape: f32[2,10], index: 0, kind: input, shape index: {}]
  %s1 = inlined_call_operand.hbm [shape: bf16[10,256], index: 1, kind: input, shape index: {}]
  %s2 = inlined_call_operand.hbm [shape: f32[1,256], index: 2, kind: input, shape index: {}]
  %s3 = inlined_call_operand.hbm [shape: bf16[256,1024], index: 3, kind: input, shape index: {}]
  %s4 = inlined_call_operand.vmem [shape: f32[2,1024], index: 4, kind: output, shape index: {}]
  %s5 = sld [smem:[#allocation0]]
  $region42: #{kitti_conv_decoder_forward.5} parent=0
    _
  %s7 = ssub.s32 1, %s5
  %s8 = scalar_select 0, %s7, %s5
  $region1: #{kitti_conv_decoder_forward.5} parent=0
    #allocation2 [shape = 'u8[1024]{0}', space=vmem, size = 0x400, scoped, tag = 'input window, operand 0, single buffered']
    #allocation3 [shape = 's32[1]{0}', space=sflag, size = 0x4, scoped, tag = 'scoped memory for kitti_conv_decoder_forward.5']
    #allocation4 [shape = 'u8[8192]{0}', space=vmem, size = 0x2000, scoped, tag = 'input window, operand 1, single buffered']
    #allocation5 [shape = 's32[1]{0}', space=sflag, size = 0x4, scoped, tag = 'scoped memory for kitti_conv_decoder_forward.5']
    #allocation6 [shape = 'u8[1024]{0}', space=vmem, size = 0x400, scoped, tag = 'input window, operand 2, single buffered']
    #allocation7 [shape = 'u8[524288]{0}', space=vmem, size = 0x80000, scoped, tag = 'input window, operand 3, single buffered']
    #allocation8 [shape = 's32[1]{0}', space=sflag, size = 0x4, scoped, tag = 'scoped memory for kitti_conv_decoder_forward.5']
    %9 = vsyncpa [#allocation3], 0
    %10 = vsyncpa [#allocation5], 0
    %11 = vsyncpa [#allocation8], 0
    // Predicated region
    $region2: #{kitti_conv_decoder_forward.5} parent=1 // pred_check
      _
    $region3: #{kitti_conv_decoder_forward.5} parent=1 // pred_check_branch
      %13 = sbr.rel (0) target = $region5
    $region4: #{kitti_conv_decoder_forward.5} parent=1 // pred_region
      %s15 = ssub.s32 32, 32
      %16 = vsyncadd [#allocation3], %s15
      %s18 = sshll.u32 [#allocation2], 4
      %s19 = int_to_ptr.vmem [resolvable:$true] %s18
      %21 = dma.hbm_to_vmem [thread:$0]  %s0, 32, %s19, [#allocation3]
    $region5: #{kitti_conv_decoder_forward.5} parent=1 // pred_fallthru
      _
    // Predicated region
    $region6: #{kitti_conv_decoder_forward.5} parent=1 // pred_check
      _
    $region7: #{kitti_conv_decoder_forward.5} parent=1 // pred_check_branch
      %23 = sbr.rel (0) target = $region9
    $region8: #{kitti_conv_decoder_forward.5} parent=1 // pred_region
      %s25 = ssub.s32 256, 256
      %26 = vsyncadd [#allocation5], %s25
      %s27 = sshll.u32 [#allocation4], 4
      %s28 = int_to_ptr.vmem [resolvable:$true] %s27
      %33 = dma.hbm_to_vmem [thread:$0]  %s1, 256, %s28, [#allocation5], 128, 128, 8
    $region9: #{kitti_conv_decoder_forward.5} parent=1 // pred_fallthru
      _
    // Predicated region
    $region10: #{kitti_conv_decoder_forward.5} parent=1 // pred_check
      _
    $region11: #{kitti_conv_decoder_forward.5} parent=1 // pred_check_branch
      %35 = sbr.rel (0) target = $region13
    $region12: #{kitti_conv_decoder_forward.5} parent=1 // pred_region
      %s37 = ssub.s32 32, 32
      %38 = vsyncadd [#allocation5], %s37
      %s40 = sshll.u32 [#allocation6], 4
      %s41 = int_to_ptr.vmem [resolvable:$true] %s40
      %43 = dma.hbm_to_vmem [thread:$0]  %s2, 32, %s41, [#allocation5]
    $region13: #{kitti_conv_decoder_forward.5} parent=1 // pred_fallthru
      _
    // Predicated region
    $region14: #{kitti_conv_decoder_forward.5} parent=1 // pred_check
      _
    $region15: #{kitti_conv_decoder_forward.5} parent=1 // pred_check_branch
      %45 = sbr.rel (0) target = $region17
    $region16: #{kitti_conv_decoder_forward.5} parent=1 // pred_region
      %s47 = ssub.s32 16384, 16384
      %48 = vsyncadd [#allocation8], %s47
      %s49 = sshll.u32 [#allocation7], 4
      %s50 = int_to_ptr.vmem [resolvable:$true] %s49
      %55 = dma.hbm_to_vmem [thread:$0]  %s3, 16384, %s50, [#allocation8], 512, 512, 32
    $region17: #{kitti_conv_decoder_forward.5} parent=1 // pred_fallthru
      _
    // Predicated region
    $region18: #{kitti_conv_decoder_forward.5} parent=1 // pred_check
      _
    $region19: #{kitti_conv_decoder_forward.5} parent=1 // pred_check_branch
      %57 = sbr.rel (0) target = $region21
    $region20: #{kitti_conv_decoder_forward.5} parent=1 // pred_region
      %58 = dma.done [#allocation3], 32
    $region21: #{kitti_conv_decoder_forward.5} parent=1 // pred_fallthru
      _
    // Predicated region
    $region22: #{kitti_conv_decoder_forward.5} parent=1 // pred_check
      _
    $region23: #{kitti_conv_decoder_forward.5} parent=1 // pred_check_branch
      %60 = sbr.rel (0) target = $region25
    $region24: #{kitti_conv_decoder_forward.5} parent=1 // pred_region
      %61 = dma.done [#allocation5], 256
    $region25: #{kitti_conv_decoder_forward.5} parent=1 // pred_fallthru
      _
    // Predicated region
    $region26: #{kitti_conv_decoder_forward.5} parent=1 // pred_check
      _
    $region27: #{kitti_conv_decoder_forward.5} parent=1 // pred_check_branch
      %63 = sbr.rel (0) target = $region29
    $region28: #{kitti_conv_decoder_forward.5} parent=1 // pred_region
      %64 = dma.done [#allocation5], 32
    $region29: #{kitti_conv_decoder_forward.5} parent=1 // pred_fallthru
      _
    // Predicated region
    $region30: #{kitti_conv_decoder_forward.5} parent=1 // pred_check
      _
    $region31: #{kitti_conv_decoder_forward.5} parent=1 // pred_check_branch
      %66 = sbr.rel (0) target = $region33
    $region32: #{kitti_conv_decoder_forward.5} parent=1 // pred_region
      %67 = dma.done [#allocation8], 16384
    $region33: #{kitti_conv_decoder_forward.5} parent=1 // pred_fallthru
      _
    %v69 = vld [vmem:[#allocation2] sm:$0x3]
    %v70 = vpack.c.bf16 %v69, %v69
    %v71 = vld [vmem:[#allocation4] sm:$0xff]
    %v72 = vld [vmem:[#allocation4 + $0x8] sm:$0x11]
    %v73 = vld [vmem:[#allocation6] sm:$0x3]
    %v75 = vlaneseq
    %v76 = vshrl.u32 %v75, 7
    %v77 = vsub.s32 0, %v76
    %v78 = vrot.slane %v73, %v77
    %v79 = vlaneseq
    %v80 = vshrl.u32 %v79, 7
    %v81 = vsub.s32 1, %v80
    %v82 = vrot.slane %v73, %v81
    %v87 = vunpack.c.l.b16 %v71
    %v88 = vunpack.c.h.b16 %v71
    %v89 = vunpack.c.l.b16 %v72
    %v90 = vunpack.c.h.b16 %v72
    %v91 = vpack.c.b16 %v89, %v87
    %v92 = vpack.c.b16 %v90, %v88
    %vm93 = vcmask 80896
    %v95 = vsel %vm93, %v70, 0
    %vm97 = vcmask 1044480
    %v99 = vsel %vm97, %v91, 0
    %v102 = vsel %vm97, %v92, 0
    %104 = vmatprep.subr.bf16.mxu0 %v102
    %105 = vmatpush1.bf16.msra.mxu0 %v99
    %106 = vmatprep.subr.bf16.mxu0 0
    %107 = vmatpush1.bf16.msra.mxu0 0
    %108 = vmatprep.subr.bf16.mxu0 0
    %109 = vmatpush1.bf16.msra.mxu0 0
    %110 = vmatprep.subr.bf16.mxu0 0
    %111 = vmatpush1.bf16.msra.mxu0 0
    %112 = vmatprep.subr.bf16.mxu0 0
    %113 = vmatpush1.bf16.msra.mxu0 0
    %114 = vmatprep.subr.bf16.mxu0 0
    %115 = vmatpush1.bf16.msra.mxu0 0
    %116 = vmatprep.subr.bf16.mxu0 0
    %117 = vmatpush1.bf16.msra.mxu0 0
    %118 = vmatprep.subr.bf16.mxu0 0
    %119 = vmatpush1.bf16.msra.mxu0 0
    %120 = vmatprep.subr.bf16.mxu0 0
    %121 = vmatpush1.bf16.msra.mxu0 0
    %122 = vmatprep.subr.bf16.mxu0 0
    %123 = vmatpush1.bf16.msra.mxu0 0
    %124 = vmatprep.subr.bf16.mxu0 0
    %125 = vmatpush1.bf16.msra.mxu0 0
    %126 = vmatprep.subr.bf16.mxu0 0
    %127 = vmatpush1.bf16.msra.mxu0 0
    %128 = vmatprep.subr.bf16.mxu0 0
    %129 = vmatpush1.bf16.msra.mxu0 0
    %130 = vmatprep.subr.bf16.mxu0 0
    %131 = vmatpush1.bf16.msra.mxu0 0
    %132 = vmatprep.subr.bf16.mxu0 0
    %133 = vmatpush1.bf16.msra.mxu0 0
    %134 = vmatprep.subr.bf16.mxu0 0
    %135 = vmatpush1.bf16.msra.mxu0 0
    %136 = vmatprep.mubr.bf16.mxu0 0
    %137 = vmatmul.mubr.bf16.gmra.mrb[0].mxu0 %v95
    %v138 = vpop.f32.mrb[0].mxu0
    %v139 = vadd.f32 %v78, %v138
    %v140 = vpop.f32.mrb[0].mxu0
    %v141 = vadd.f32 %v82, %v140
    %v142 = vpop.f32.mrb[0].mxu0
    %v143 = vpop.f32.mrb[0].mxu0
    %144 = vdwg.mxu0
    %v145 = vmax.f32 %v139, 0.0
    %v146 = vmax.f32 %v141, 0.0
    %v147 = vpack.c.bf16 %v145, %v145
    %v148 = vpack.c.bf16 %v146, %v146
    %v149 = vld [vmem:[#allocation7] sm:$0xff]
    %v150 = vld [vmem:[#allocation7 + $0x8] sm:$0xff]
    %v151 = vld [vmem:[#allocation7 + $0x10] sm:$0xff]
    %v152 = vld [vmem:[#allocation7 + $0x18] sm:$0xff]
    %v153 = vld [vmem:[#allocation7 + $0x20] sm:$0xff]
    %v154 = vld [vmem:[#allocation7 + $0x28] sm:$0xff]
    %v155 = vld [vmem:[#allocation7 + $0x30] sm:$0xff]
    %v156 = vld [vmem:[#allocation7 + $0x38] sm:$0xff]
    %v157 = vld [vmem:[#allocation7 + $0x40] sm:$0xff]
    %v158 = vld [vmem:[#allocation7 + $0x48] sm:$0xff]
    %v159 = vld [vmem:[#allocation7 + $0x50] sm:$0xff]
    %v160 = vld [vmem:[#allocation7 + $0x58] sm:$0xff]
    %v161 = vld [vmem:[#allocation7 + $0x60] sm:$0xff]
    %v162 = vld [vmem:[#allocation7 + $0x68] sm:$0xff]
    %v163 = vld [vmem:[#allocation7 + $0x70] sm:$0xff]
    %v164 = vld [vmem:[#allocation7 + $0x78] sm:$0xff]
    %v165 = vld [vmem:[#allocation7 + $0x80] sm:$0xff]
    %v166 = vld [vmem:[#allocation7 + $0x88] sm:$0xff]
    %v167 = vld [vmem:[#allocation7 + $0x90] sm:$0xff]
    %v168 = vld [vmem:[#allocation7 + $0x98] sm:$0xff]
    %v169 = vld [vmem:[#allocation7 + $0xa0] sm:$0xff]
    %v170 = vld [vmem:[#allocation7 + $0xa8] sm:$0xff]
    %v171 = vld [vmem:[#allocation7 + $0xb0] sm:$0xff]
    %v172 = vld [vmem:[#allocation7 + $0xb8] sm:$0xff]
    %v173 = vld [vmem:[#allocation7 + $0xc0] sm:$0xff]
    %v174 = vld [vmem:[#allocation7 + $0xc8] sm:$0xff]
    %v175 = vld [vmem:[#allocation7 + $0xd0] sm:$0xff]
    %v176 = vld [vmem:[#allocation7 + $0xd8] sm:$0xff]
    %v177 = vld [vmem:[#allocation7 + $0xe0] sm:$0xff]
    %v178 = vld [vmem:[#allocation7 + $0xe8] sm:$0xff]
    %v179 = vld [vmem:[#allocation7 + $0xf0] sm:$0xff]
    %v180 = vld [vmem:[#allocation7 + $0xf8] sm:$0xff]
    %v181 = vld [vmem:[#allocation7 + $0x100] sm:$0xff]
    %v182 = vld [vmem:[#allocation7 + $0x108] sm:$0xff]
    %v183 = vld [vmem:[#allocation7 + $0x110] sm:$0xff]
    %v184 = vld [vmem:[#allocation7 + $0x118] sm:$0xff]
    %v185 = vld [vmem:[#allocation7 + $0x120] sm:$0xff]
    %v186 = vld [vmem:[#allocation7 + $0x128] sm:$0xff]
    %v187 = vld [vmem:[#allocation7 + $0x130] sm:$0xff]
    %v188 = vld [vmem:[#allocation7 + $0x138] sm:$0xff]
    %v189 = vld [vmem:[#allocation7 + $0x140] sm:$0xff]
    %v190 = vld [vmem:[#allocation7 + $0x148] sm:$0xff]
    %v191 = vld [vmem:[#allocation7 + $0x150] sm:$0xff]
    %v192 = vld [vmem:[#allocation7 + $0x158] sm:$0xff]
    %v193 = vld [vmem:[#allocation7 + $0x160] sm:$0xff]
    %v194 = vld [vmem:[#allocation7 + $0x168] sm:$0xff]
    %v195 = vld [vmem:[#allocation7 + $0x170] sm:$0xff]
    %v196 = vld [vmem:[#allocation7 + $0x178] sm:$0xff]
    %v197 = vld [vmem:[#allocation7 + $0x180] sm:$0xff]
    %v198 = vld [vmem:[#allocation7 + $0x188] sm:$0xff]
    %v199 = vld [vmem:[#allocation7 + $0x190] sm:$0xff]
    %v200 = vld [vmem:[#allocation7 + $0x198] sm:$0xff]
    %v201 = vld [vmem:[#allocation7 + $0x1a0] sm:$0xff]
    %v202 = vld [vmem:[#allocation7 + $0x1a8] sm:$0xff]
    %v203 = vld [vmem:[#allocation7 + $0x1b0] sm:$0xff]
    %v204 = vld [vmem:[#allocation7 + $0x1b8] sm:$0xff]
    %v205 = vld [vmem:[#allocation7 + $0x1c0] sm:$0xff]
    %v206 = vld [vmem:[#allocation7 + $0x1c8] sm:$0xff]
    %v207 = vld [vmem:[#allocation7 + $0x1d0] sm:$0xff]
    %v208 = vld [vmem:[#allocation7 + $0x1d8] sm:$0xff]
    %v209 = vld [vmem:[#allocation7 + $0x1e0] sm:$0xff]
    %v210 = vld [vmem:[#allocation7 + $0x1e8] sm:$0xff]
    %v211 = vld [vmem:[#allocation7 + $0x1f0] sm:$0xff]
    %v212 = vld [vmem:[#allocation7 + $0x1f8] sm:$0xff]
    %v213 = vld [vmem:[#allocation7 + $0x200] sm:$0xff]
    %v214 = vld [vmem:[#allocation7 + $0x208] sm:$0xff]
    %v215 = vld [vmem:[#allocation7 + $0x210] sm:$0xff]
    %v216 = vld [vmem:[#allocation7 + $0x218] sm:$0xff]
    %v217 = vld [vmem:[#allocation7 + $0x220] sm:$0xff]
    %v218 = vld [vmem:[#allocation7 + $0x228] sm:$0xff]
    %v219 = vld [vmem:[#allocation7 + $0x230] sm:$0xff]
    %v220 = vld [vmem:[#allocation7 + $0x238] sm:$0xff]
    %v221 = vld [vmem:[#allocation7 + $0x240] sm:$0xff]
    %v222 = vld [vmem:[#allocation7 + $0x248] sm:$0xff]
    %v223 = vld [vmem:[#allocation7 + $0x250] sm:$0xff]
    %v224 = vld [vmem:[#allocation7 + $0x258] sm:$0xff]
    %v225 = vld [vmem:[#allocation7 + $0x260] sm:$0xff]
    %v226 = vld [vmem:[#allocation7 + $0x268] sm:$0xff]
    %v227 = vld [vmem:[#allocation7 + $0x270] sm:$0xff]
    %v228 = vld [vmem:[#allocation7 + $0x278] sm:$0xff]
    %v229 = vld [vmem:[#allocation7 + $0x280] sm:$0xff]
    %v230 = vld [vmem:[#allocation7 + $0x288] sm:$0xff]
    %v231 = vld [vmem:[#allocation7 + $0x290] sm:$0xff]
    %v232 = vld [vmem:[#allocation7 + $0x298] sm:$0xff]
    %v233 = vld [vmem:[#allocation7 + $0x2a0] sm:$0xff]
    %v234 = vld [vmem:[#allocation7 + $0x2a8] sm:$0xff]
    %v235 = vld [vmem:[#allocation7 + $0x2b0] sm:$0xff]
    %v236 = vld [vmem:[#allocation7 + $0x2b8] sm:$0xff]
    %v237 = vld [vmem:[#allocation7 + $0x2c0] sm:$0xff]
    %v238 = vld [vmem:[#allocation7 + $0x2c8] sm:$0xff]
    %v239 = vld [vmem:[#allocation7 + $0x2d0] sm:$0xff]
    %v240 = vld [vmem:[#allocation7 + $0x2d8] sm:$0xff]
    %v241 = vld [vmem:[#allocation7 + $0x2e0] sm:$0xff]
    %v242 = vld [vmem:[#allocation7 + $0x2e8] sm:$0xff]
    %v243 = vld [vmem:[#allocation7 + $0x2f0] sm:$0xff]
    %v244 = vld [vmem:[#allocation7 + $0x2f8] sm:$0xff]
    %v245 = vld [vmem:[#allocation7 + $0x300] sm:$0xff]
    %v246 = vld [vmem:[#allocation7 + $0x308] sm:$0xff]
    %v247 = vld [vmem:[#allocation7 + $0x310] sm:$0xff]
    %v248 = vld [vmem:[#allocation7 + $0x318] sm:$0xff]
    %v249 = vld [vmem:[#allocation7 + $0x320] sm:$0xff]
    %v250 = vld [vmem:[#allocation7 + $0x328] sm:$0xff]
    %v251 = vld [vmem:[#allocation7 + $0x330] sm:$0xff]
    %v252 = vld [vmem:[#allocation7 + $0x338] sm:$0xff]
    %v253 = vld [vmem:[#allocation7 + $0x340] sm:$0xff]
    %v254 = vld [vmem:[#allocation7 + $0x348] sm:$0xff]
    %v255 = vld [vmem:[#allocation7 + $0x350] sm:$0xff]
    %v256 = vld [vmem:[#allocation7 + $0x358] sm:$0xff]
    %v257 = vld [vmem:[#allocation7 + $0x360] sm:$0xff]
    %v258 = vld [vmem:[#allocation7 + $0x368] sm:$0xff]
    %v259 = vld [vmem:[#allocation7 + $0x370] sm:$0xff]
    %v260 = vld [vmem:[#allocation7 + $0x378] sm:$0xff]
    %v261 = vld [vmem:[#allocation7 + $0x380] sm:$0xff]
    %v262 = vld [vmem:[#allocation7 + $0x388] sm:$0xff]
    %v263 = vld [vmem:[#allocation7 + $0x390] sm:$0xff]
    %v264 = vld [vmem:[#allocation7 + $0x398] sm:$0xff]
    %v265 = vld [vmem:[#allocation7 + $0x3a0] sm:$0xff]
    %v266 = vld [vmem:[#allocation7 + $0x3a8] sm:$0xff]
    %v267 = vld [vmem:[#allocation7 + $0x3b0] sm:$0xff]
    %v268 = vld [vmem:[#allocation7 + $0x3b8] sm:$0xff]
    %v269 = vld [vmem:[#allocation7 + $0x3c0] sm:$0xff]
    %v270 = vld [vmem:[#allocation7 + $0x3c8] sm:$0xff]
    %v271 = vld [vmem:[#allocation7 + $0x3d0] sm:$0xff]
    %v272 = vld [vmem:[#allocation7 + $0x3d8] sm:$0xff]
    %v273 = vld [vmem:[#allocation7 + $0x3e0] sm:$0xff]
    %v274 = vld [vmem:[#allocation7 + $0x3e8] sm:$0xff]
    %v275 = vld [vmem:[#allocation7 + $0x3f0] sm:$0xff]
    %v276 = vld [vmem:[#allocation7 + $0x3f8] sm:$0xff]
    %v405 = vunpack.c.l.b16 %v149
    %v406 = vunpack.c.h.b16 %v149
    %v407 = vunpack.c.l.b16 %v150
    %v408 = vunpack.c.h.b16 %v150
    %v409 = vunpack.c.l.b16 %v151
    %v410 = vunpack.c.h.b16 %v151
    %v411 = vunpack.c.l.b16 %v152
    %v412 = vunpack.c.h.b16 %v152
    %v413 = vunpack.c.l.b16 %v153
    %v414 = vunpack.c.h.b16 %v153
    %v415 = vunpack.c.l.b16 %v154
    %v416 = vunpack.c.h.b16 %v154
    %v417 = vunpack.c.l.b16 %v155
    %v418 = vunpack.c.h.b16 %v155
    %v419 = vunpack.c.l.b16 %v156
    %v420 = vunpack.c.h.b16 %v156
    %v421 = vunpack.c.l.b16 %v157
    %v422 = vunpack.c.h.b16 %v157
    %v423 = vunpack.c.l.b16 %v158
    %v424 = vunpack.c.h.b16 %v158
    %v425 = vunpack.c.l.b16 %v159
    %v426 = vunpack.c.h.b16 %v159
    %v427 = vunpack.c.l.b16 %v160
    %v428 = vunpack.c.h.b16 %v160
    %v429 = vunpack.c.l.b16 %v161
    %v430 = vunpack.c.h.b16 %v161
    %v431 = vunpack.c.l.b16 %v162
    %v432 = vunpack.c.h.b16 %v162
    %v433 = vunpack.c.l.b16 %v163
    %v434 = vunpack.c.h.b16 %v163
    %v435 = vunpack.c.l.b16 %v164
    %v436 = vunpack.c.h.b16 %v164
    %v437 = vunpack.c.l.b16 %v165
    %v438 = vunpack.c.h.b16 %v165
    %v439 = vunpack.c.l.b16 %v166
    %v440 = vunpack.c.h.b16 %v166
    %v441 = vunpack.c.l.b16 %v167
    %v442 = vunpack.c.h.b16 %v167
    %v443 = vunpack.c.l.b16 %v168
    %v444 = vunpack.c.h.b16 %v168
    %v445 = vunpack.c.l.b16 %v169
    %v446 = vunpack.c.h.b16 %v169
    %v447 = vunpack.c.l.b16 %v170
    %v448 = vunpack.c.h.b16 %v170
    %v449 = vunpack.c.l.b16 %v171
    %v450 = vunpack.c.h.b16 %v171
    %v451 = vunpack.c.l.b16 %v172
    %v452 = vunpack.c.h.b16 %v172
    %v453 = vunpack.c.l.b16 %v173
    %v454 = vunpack.c.h.b16 %v173
    %v455 = vunpack.c.l.b16 %v174
    %v456 = vunpack.c.h.b16 %v174
    %v457 = vunpack.c.l.b16 %v175
    %v458 = vunpack.c.h.b16 %v175
    %v459 = vunpack.c.l.b16 %v176
    %v460 = vunpack.c.h.b16 %v176
    %v461 = vunpack.c.l.b16 %v177
    %v462 = vunpack.c.h.b16 %v177
    %v463 = vunpack.c.l.b16 %v178
    %v464 = vunpack.c.h.b16 %v178
    %v465 = vunpack.c.l.b16 %v179
    %v466 = vunpack.c.h.b16 %v179
    %v467 = vunpack.c.l.b16 %v180
    %v468 = vunpack.c.h.b16 %v180
    %v469 = vunpack.c.l.b16 %v181
    %v470 = vunpack.c.h.b16 %v181
    %v471 = vunpack.c.l.b16 %v182
    %v472 = vunpack.c.h.b16 %v182
    %v473 = vunpack.c.l.b16 %v183
    %v474 = vunpack.c.h.b16 %v183
    %v475 = vunpack.c.l.b16 %v184
    %v476 = vunpack.c.h.b16 %v184
    %v477 = vunpack.c.l.b16 %v185
    %v478 = vunpack.c.h.b16 %v185
    %v479 = vunpack.c.l.b16 %v186
    %v480 = vunpack.c.h.b16 %v186
    %v481 = vunpack.c.l.b16 %v187
    %v482 = vunpack.c.h.b16 %v187
    %v483 = vunpack.c.l.b16 %v188
    %v484 = vunpack.c.h.b16 %v188
    %v485 = vunpack.c.l.b16 %v189
    %v486 = vunpack.c.h.b16 %v189
    %v487 = vunpack.c.l.b16 %v190
    %v488 = vunpack.c.h.b16 %v190
    %v489 = vunpack.c.l.b16 %v191
    %v490 = vunpack.c.h.b16 %v191
    %v491 = vunpack.c.l.b16 %v192
    %v492 = vunpack.c.h.b16 %v192
    %v493 = vunpack.c.l.b16 %v193
    %v494 = vunpack.c.h.b16 %v193
    %v495 = vunpack.c.l.b16 %v194
    %v496 = vunpack.c.h.b16 %v194
    %v497 = vunpack.c.l.b16 %v195
    %v498 = vunpack.c.h.b16 %v195
    %v499 = vunpack.c.l.b16 %v196
    %v500 = vunpack.c.h.b16 %v196
    %v501 = vunpack.c.l.b16 %v197
    %v502 = vunpack.c.h.b16 %v197
    %v503 = vunpack.c.l.b16 %v198
    %v504 = vunpack.c.h.b16 %v198
    %v505 = vunpack.c.l.b16 %v199
    %v506 = vunpack.c.h.b16 %v199
    %v507 = vunpack.c.l.b16 %v200
    %v508 = vunpack.c.h.b16 %v200
    %v509 = vunpack.c.l.b16 %v201
    %v510 = vunpack.c.h.b16 %v201
    %v511 = vunpack.c.l.b16 %v202
    %v512 = vunpack.c.h.b16 %v202
    %v513 = vunpack.c.l.b16 %v203
    %v514 = vunpack.c.h.b16 %v203
    %v515 = vunpack.c.l.b16 %v204
    %v516 = vunpack.c.h.b16 %v204
    %v517 = vunpack.c.l.b16 %v205
    %v518 = vunpack.c.h.b16 %v205
    %v519 = vunpack.c.l.b16 %v206
    %v520 = vunpack.c.h.b16 %v206
    %v521 = vunpack.c.l.b16 %v207
    %v522 = vunpack.c.h.b16 %v207
    %v523 = vunpack.c.l.b16 %v208
    %v524 = vunpack.c.h.b16 %v208
    %v525 = vunpack.c.l.b16 %v209
    %v526 = vunpack.c.h.b16 %v209
    %v527 = vunpack.c.l.b16 %v210
    %v528 = vunpack.c.h.b16 %v210
    %v529 = vunpack.c.l.b16 %v211
    %v530 = vunpack.c.h.b16 %v211
    %v531 = vunpack.c.l.b16 %v212
    %v532 = vunpack.c.h.b16 %v212
    %v533 = vunpack.c.l.b16 %v213
    %v534 = vunpack.c.h.b16 %v213
    %v535 = vunpack.c.l.b16 %v214
    %v536 = vunpack.c.h.b16 %v214
    %v537 = vunpack.c.l.b16 %v215
    %v538 = vunpack.c.h.b16 %v215
    %v539 = vunpack.c.l.b16 %v216
    %v540 = vunpack.c.h.b16 %v216
    %v541 = vunpack.c.l.b16 %v217
    %v542 = vunpack.c.h.b16 %v217
    %v543 = vunpack.c.l.b16 %v218
    %v544 = vunpack.c.h.b16 %v218
    %v545 = vunpack.c.l.b16 %v219
    %v546 = vunpack.c.h.b16 %v219
    %v547 = vunpack.c.l.b16 %v220
    %v548 = vunpack.c.h.b16 %v220
    %v549 = vunpack.c.l.b16 %v221
    %v550 = vunpack.c.h.b16 %v221
    %v551 = vunpack.c.l.b16 %v222
    %v552 = vunpack.c.h.b16 %v222
    %v553 = vunpack.c.l.b16 %v223
    %v554 = vunpack.c.h.b16 %v223
    %v555 = vunpack.c.l.b16 %v224
    %v556 = vunpack.c.h.b16 %v224
    %v557 = vunpack.c.l.b16 %v225
    %v558 = vunpack.c.h.b16 %v225
    %v559 = vunpack.c.l.b16 %v226
    %v560 = vunpack.c.h.b16 %v226
    %v561 = vunpack.c.l.b16 %v227
    %v562 = vunpack.c.h.b16 %v227
    %v563 = vunpack.c.l.b16 %v228
    %v564 = vunpack.c.h.b16 %v228
    %v565 = vunpack.c.l.b16 %v229
    %v566 = vunpack.c.h.b16 %v229
    %v567 = vunpack.c.l.b16 %v230
    %v568 = vunpack.c.h.b16 %v230
    %v569 = vunpack.c.l.b16 %v231
    %v570 = vunpack.c.h.b16 %v231
    %v571 = vunpack.c.l.b16 %v232
    %v572 = vunpack.c.h.b16 %v232
    %v573 = vunpack.c.l.b16 %v233
    %v574 = vunpack.c.h.b16 %v233
    %v575 = vunpack.c.l.b16 %v234
    %v576 = vunpack.c.h.b16 %v234
    %v577 = vunpack.c.l.b16 %v235
    %v578 = vunpack.c.h.b16 %v235
    %v579 = vunpack.c.l.b16 %v236
    %v580 = vunpack.c.h.b16 %v236
    %v581 = vunpack.c.l.b16 %v237
    %v582 = vunpack.c.h.b16 %v237
    %v583 = vunpack.c.l.b16 %v238
    %v584 = vunpack.c.h.b16 %v238
    %v585 = vunpack.c.l.b16 %v239
    %v586 = vunpack.c.h.b16 %v239
    %v587 = vunpack.c.l.b16 %v240
    %v588 = vunpack.c.h.b16 %v240
    %v589 = vunpack.c.l.b16 %v241
    %v590 = vunpack.c.h.b16 %v241
    %v591 = vunpack.c.l.b16 %v242
    %v592 = vunpack.c.h.b16 %v242
    %v593 = vunpack.c.l.b16 %v243
    %v594 = vunpack.c.h.b16 %v243
    %v595 = vunpack.c.l.b16 %v244
    %v596 = vunpack.c.h.b16 %v244
    %v597 = vunpack.c.l.b16 %v245
    %v598 = vunpack.c.h.b16 %v245
    %v599 = vunpack.c.l.b16 %v246
    %v600 = vunpack.c.h.b16 %v246
    %v601 = vunpack.c.l.b16 %v247
    %v602 = vunpack.c.h.b16 %v247
    %v603 = vunpack.c.l.b16 %v248
    %v604 = vunpack.c.h.b16 %v248
    %v605 = vunpack.c.l.b16 %v249
    %v606 = vunpack.c.h.b16 %v249
    %v607 = vunpack.c.l.b16 %v250
    %v608 = vunpack.c.h.b16 %v250
    %v609 = vunpack.c.l.b16 %v251
    %v610 = vunpack.c.h.b16 %v251
    %v611 = vunpack.c.l.b16 %v252
    %v612 = vunpack.c.h.b16 %v252
    %v613 = vunpack.c.l.b16 %v253
    %v614 = vunpack.c.h.b16 %v253
    %v615 = vunpack.c.l.b16 %v254
    %v616 = vunpack.c.h.b16 %v254
    %v617 = vunpack.c.l.b16 %v255
    %v618 = vunpack.c.h.b16 %v255
    %v619 = vunpack.c.l.b16 %v256
    %v620 = vunpack.c.h.b16 %v256
    %v621 = vunpack.c.l.b16 %v257
    %v622 = vunpack.c.h.b16 %v257
    %v623 = vunpack.c.l.b16 %v258
    %v624 = vunpack.c.h.b16 %v258
    %v625 = vunpack.c.l.b16 %v259
    %v626 = vunpack.c.h.b16 %v259
    %v627 = vunpack.c.l.b16 %v260
    %v628 = vunpack.c.h.b16 %v260
    %v629 = vunpack.c.l.b16 %v261
    %v630 = vunpack.c.h.b16 %v261
    %v631 = vunpack.c.l.b16 %v262
    %v632 = vunpack.c.h.b16 %v262
    %v633 = vunpack.c.l.b16 %v263
    %v634 = vunpack.c.h.b16 %v263
    %v635 = vunpack.c.l.b16 %v264
    %v636 = vunpack.c.h.b16 %v264
    %v637 = vunpack.c.l.b16 %v265
    %v638 = vunpack.c.h.b16 %v265
    %v639 = vunpack.c.l.b16 %v266
    %v640 = vunpack.c.h.b16 %v266
    %v641 = vunpack.c.l.b16 %v267
    %v642 = vunpack.c.h.b16 %v267
    %v643 = vunpack.c.l.b16 %v268
    %v644 = vunpack.c.h.b16 %v268
    %v645 = vunpack.c.l.b16 %v269
    %v646 = vunpack.c.h.b16 %v269
    %v647 = vunpack.c.l.b16 %v270
    %v648 = vunpack.c.h.b16 %v270
    %v649 = vunpack.c.l.b16 %v271
    %v650 = vunpack.c.h.b16 %v271
    %v651 = vunpack.c.l.b16 %v272
    %v652 = vunpack.c.h.b16 %v272
    %v653 = vunpack.c.l.b16 %v273
    %v654 = vunpack.c.h.b16 %v273
    %v655 = vunpack.c.l.b16 %v274
    %v656 = vunpack.c.h.b16 %v274
    %v657 = vunpack.c.l.b16 %v275
    %v658 = vunpack.c.h.b16 %v275
    %v659 = vunpack.c.l.b16 %v276
    %v660 = vunpack.c.h.b16 %v276
    %v661 = vpack.c.b16 %v413, %v405
    %v662 = vpack.c.b16 %v414, %v406
    %v663 = vpack.c.b16 %v415, %v407
    %v664 = vpack.c.b16 %v416, %v408
    %v665 = vpack.c.b16 %v417, %v409
    %v666 = vpack.c.b16 %v418, %v410
    %v667 = vpack.c.b16 %v419, %v411
    %v668 = vpack.c.b16 %v420, %v412
    %v669 = vpack.c.b16 %v429, %v421
    %v670 = vpack.c.b16 %v430, %v422
    %v671 = vpack.c.b16 %v431, %v423
    %v672 = vpack.c.b16 %v432, %v424
    %v673 = vpack.c.b16 %v433, %v425
    %v674 = vpack.c.b16 %v434, %v426
    %v675 = vpack.c.b16 %v435, %v427
    %v676 = vpack.c.b16 %v436, %v428
    %v677 = vpack.c.b16 %v445, %v437
    %v678 = vpack.c.b16 %v446, %v438
    %v679 = vpack.c.b16 %v447, %v439
    %v680 = vpack.c.b16 %v448, %v440
    %v681 = vpack.c.b16 %v449, %v441
    %v682 = vpack.c.b16 %v450, %v442
    %v683 = vpack.c.b16 %v451, %v443
    %v684 = vpack.c.b16 %v452, %v444
    %v685 = vpack.c.b16 %v461, %v453
    %v686 = vpack.c.b16 %v462, %v454
    %v687 = vpack.c.b16 %v463, %v455
    %v688 = vpack.c.b16 %v464, %v456
    %v689 = vpack.c.b16 %v465, %v457
    %v690 = vpack.c.b16 %v466, %v458
    %v691 = vpack.c.b16 %v467, %v459
    %v692 = vpack.c.b16 %v468, %v460
    %v693 = vpack.c.b16 %v477, %v469
    %v694 = vpack.c.b16 %v478, %v470
    %v695 = vpack.c.b16 %v479, %v471
    %v696 = vpack.c.b16 %v480, %v472
    %v697 = vpack.c.b16 %v481, %v473
    %v698 = vpack.c.b16 %v482, %v474
    %v699 = vpack.c.b16 %v483, %v475
    %v700 = vpack.c.b16 %v484, %v476
    %v701 = vpack.c.b16 %v493, %v485
    %v702 = vpack.c.b16 %v494, %v486
    %v703 = vpack.c.b16 %v495, %v487
    %v704 = vpack.c.b16 %v496, %v488
    %v705 = vpack.c.b16 %v497, %v489
    %v706 = vpack.c.b16 %v498, %v490
    %v707 = vpack.c.b16 %v499, %v491
    %v708 = vpack.c.b16 %v500, %v492
    %v709 = vpack.c.b16 %v509, %v501
    %v710 = vpack.c.b16 %v510, %v502
    %v711 = vpack.c.b16 %v511, %v503
    %v712 = vpack.c.b16 %v512, %v504
    %v713 = vpack.c.b16 %v513, %v505
    %v714 = vpack.c.b16 %v514, %v506
    %v715 = vpack.c.b16 %v515, %v507
    %v716 = vpack.c.b16 %v516, %v508
    %v717 = vpack.c.b16 %v525, %v517
    %v718 = vpack.c.b16 %v526, %v518
    %v719 = vpack.c.b16 %v527, %v519
    %v720 = vpack.c.b16 %v528, %v520
    %v721 = vpack.c.b16 %v529, %v521
    %v722 = vpack.c.b16 %v530, %v522
    %v723 = vpack.c.b16 %v531, %v523
    %v724 = vpack.c.b16 %v532, %v524
    %v725 = vpack.c.b16 %v541, %v533
    %v726 = vpack.c.b16 %v542, %v534
    %v727 = vpack.c.b16 %v543, %v535
    %v728 = vpack.c.b16 %v544, %v536
    %v729 = vpack.c.b16 %v545, %v537
    %v730 = vpack.c.b16 %v546, %v538
    %v731 = vpack.c.b16 %v547, %v539
    %v732 = vpack.c.b16 %v548, %v540
    %v733 = vpack.c.b16 %v557, %v549
    %v734 = vpack.c.b16 %v558, %v550
    %v735 = vpack.c.b16 %v559, %v551
    %v736 = vpack.c.b16 %v560, %v552
    %v737 = vpack.c.b16 %v561, %v553
    %v738 = vpack.c.b16 %v562, %v554
    %v739 = vpack.c.b16 %v563, %v555
    %v740 = vpack.c.b16 %v564, %v556
    %v741 = vpack.c.b16 %v573, %v565
    %v742 = vpack.c.b16 %v574, %v566
    %v743 = vpack.c.b16 %v575, %v567
    %v744 = vpack.c.b16 %v576, %v568
    %v745 = vpack.c.b16 %v577, %v569
    %v746 = vpack.c.b16 %v578, %v570
    %v747 = vpack.c.b16 %v579, %v571
    %v748 = vpack.c.b16 %v580, %v572
    %v749 = vpack.c.b16 %v589, %v581
    %v750 = vpack.c.b16 %v590, %v582
    %v751 = vpack.c.b16 %v591, %v583
    %v752 = vpack.c.b16 %v592, %v584
    %v753 = vpack.c.b16 %v593, %v585
    %v754 = vpack.c.b16 %v594, %v586
    %v755 = vpack.c.b16 %v595, %v587
    %v756 = vpack.c.b16 %v596, %v588
    %v757 = vpack.c.b16 %v605, %v597
    %v758 = vpack.c.b16 %v606, %v598
    %v759 = vpack.c.b16 %v607, %v599
    %v760 = vpack.c.b16 %v608, %v600
    %v761 = vpack.c.b16 %v609, %v601
    %v762 = vpack.c.b16 %v610, %v602
    %v763 = vpack.c.b16 %v611, %v603
    %v764 = vpack.c.b16 %v612, %v604
    %v765 = vpack.c.b16 %v621, %v613
    %v766 = vpack.c.b16 %v622, %v614
    %v767 = vpack.c.b16 %v623, %v615
    %v768 = vpack.c.b16 %v624, %v616
    %v769 = vpack.c.b16 %v625, %v617
    %v770 = vpack.c.b16 %v626, %v618
    %v771 = vpack.c.b16 %v627, %v619
    %v772 = vpack.c.b16 %v628, %v620
    %v773 = vpack.c.b16 %v637, %v629
    %v774 = vpack.c.b16 %v638, %v630
    %v775 = vpack.c.b16 %v639, %v631
    %v776 = vpack.c.b16 %v640, %v632
    %v777 = vpack.c.b16 %v641, %v633
    %v778 = vpack.c.b16 %v642, %v634
    %v779 = vpack.c.b16 %v643, %v635
    %v780 = vpack.c.b16 %v644, %v636
    %v781 = vpack.c.b16 %v653, %v645
    %v782 = vpack.c.b16 %v654, %v646
    %v783 = vpack.c.b16 %v655, %v647
    %v784 = vpack.c.b16 %v656, %v648
    %v785 = vpack.c.b16 %v657, %v649
    %v786 = vpack.c.b16 %v658, %v650
    %v787 = vpack.c.b16 %v659, %v651
    %v788 = vpack.c.b16 %v660, %v652
    %917 = vmatprep.subr.bf16.mxu0 %v662
    %918 = vmatpush1.bf16.msra.mxu0 %v661
    %919 = vmatprep.subr.bf16.mxu0 %v670
    %920 = vmatpush1.bf16.msra.mxu0 %v669
    %921 = vmatprep.subr.bf16.mxu0 %v678
    %922 = vmatpush1.bf16.msra.mxu0 %v677
    %923 = vmatprep.subr.bf16.mxu0 %v686
    %924 = vmatpush1.bf16.msra.mxu0 %v685
    %925 = vmatprep.subr.bf16.mxu0 %v694
    %926 = vmatpush1.bf16.msra.mxu0 %v693
    %927 = vmatprep.subr.bf16.mxu0 %v702
    %928 = vmatpush1.bf16.msra.mxu0 %v701
    %929 = vmatprep.subr.bf16.mxu0 %v710
    %930 = vmatpush1.bf16.msra.mxu0 %v709
    %931 = vmatprep.subr.bf16.mxu0 %v718
    %932 = vmatpush1.bf16.msra.mxu0 %v717
    %933 = vmatprep.subr.bf16.mxu0 %v726
    %934 = vmatpush1.bf16.msra.mxu0 %v725
    %935 = vmatprep.subr.bf16.mxu0 %v734
    %936 = vmatpush1.bf16.msra.mxu0 %v733
    %937 = vmatprep.subr.bf16.mxu0 %v742
    %938 = vmatpush1.bf16.msra.mxu0 %v741
    %939 = vmatprep.subr.bf16.mxu0 %v750
    %940 = vmatpush1.bf16.msra.mxu0 %v749
    %941 = vmatprep.subr.bf16.mxu0 %v758
    %942 = vmatpush1.bf16.msra.mxu0 %v757
    %943 = vmatprep.subr.bf16.mxu0 %v766
    %944 = vmatpush1.bf16.msra.mxu0 %v765
    %945 = vmatprep.subr.bf16.mxu0 %v774
    %946 = vmatpush1.bf16.msra.mxu0 %v773
    %947 = vmatprep.subr.bf16.mxu0 %v782
    %948 = vmatpush1.bf16.msra.mxu0 %v781
    %949 = vmatprep.mubr.bf16.mxu0 %v148
    %950 = vmatmul.mubr.bf16.gmra.mrb[0].mxu0 %v147
    %v951 = vpop.f32.mrb[0].mxu0
    %v952 = vadd.f32 0.0, %v951
    %v953 = vpop.f32.mrb[0].mxu0
    %v954 = vadd.f32 0.0, %v953
    %v955 = vpop.f32.mrb[0].mxu0
    %v956 = vpop.f32.mrb[0].mxu0
    %957 = vdwg.mxu0
    %958 = vmatprep.subr.bf16.mxu0 %v664
    %959 = vmatpush1.bf16.msra.mxu0 %v663
    %960 = vmatprep.subr.bf16.mxu0 %v672
    %961 = vmatpush1.bf16.msra.mxu0 %v671
    %962 = vmatprep.subr.bf16.mxu0 %v680
    %963 = vmatpush1.bf16.msra.mxu0 %v679
    %964 = vmatprep.subr.bf16.mxu0 %v688
    %965 = vmatpush1.bf16.msra.mxu0 %v687
    %966 = vmatprep.subr.bf16.mxu0 %v696
    %967 = vmatpush1.bf16.msra.mxu0 %v695
    %968 = vmatprep.subr.bf16.mxu0 %v704
    %969 = vmatpush1.bf16.msra.mxu0 %v703
    %970 = vmatprep.subr.bf16.mxu0 %v712
    %971 = vmatpush1.bf16.msra.mxu0 %v711
    %972 = vmatprep.subr.bf16.mxu0 %v720
    %973 = vmatpush1.bf16.msra.mxu0 %v719
    %974 = vmatprep.subr.bf16.mxu0 %v728
    %975 = vmatpush1.bf16.msra.mxu0 %v727
    %976 = vmatprep.subr.bf16.mxu0 %v736
    %977 = vmatpush1.bf16.msra.mxu0 %v735
    %978 = vmatprep.subr.bf16.mxu0 %v744
    %979 = vmatpush1.bf16.msra.mxu0 %v743
    %980 = vmatprep.subr.bf16.mxu0 %v752
    %981 = vmatpush1.bf16.msra.mxu0 %v751
    %982 = vmatprep.subr.bf16.mxu0 %v760
    %983 = vmatpush1.bf16.msra.mxu0 %v759
    %984 = vmatprep.subr.bf16.mxu0 %v768
    %985 = vmatpush1.bf16.msra.mxu0 %v767
    %986 = vmatprep.subr.bf16.mxu0 %v776
    %987 = vmatpush1.bf16.msra.mxu0 %v775
    %988 = vmatprep.subr.bf16.mxu0 %v784
    %989 = vmatpush1.bf16.msra.mxu0 %v783
    %990 = vmatprep.mubr.bf16.mxu0 %v148
    %991 = vmatmul.mubr.bf16.gmra.mrb[0].mxu0 %v147
    %v992 = vpop.f32.mrb[0].mxu0
    %v993 = vadd.f32 0.0, %v992
    %v994 = vpop.f32.mrb[0].mxu0
    %v995 = vadd.f32 0.0, %v994
    %v996 = vpop.f32.mrb[0].mxu0
    %v997 = vpop.f32.mrb[0].mxu0
    %998 = vdwg.mxu0
    %999 = vmatprep.subr.bf16.mxu0 %v666
    %1000 = vmatpush1.bf16.msra.mxu0 %v665
    %1001 = vmatprep.subr.bf16.mxu0 %v674
    %1002 = vmatpush1.bf16.msra.mxu0 %v673
    %1003 = vmatprep.subr.bf16.mxu0 %v682
    %1004 = vmatpush1.bf16.msra.mxu0 %v681
    %1005 = vmatprep.subr.bf16.mxu0 %v690
    %1006 = vmatpush1.bf16.msra.mxu0 %v689
    %1007 = vmatprep.subr.bf16.mxu0 %v698
    %1008 = vmatpush1.bf16.msra.mxu0 %v697
    %1009 = vmatprep.subr.bf16.mxu0 %v706
    %1010 = vmatpush1.bf16.msra.mxu0 %v705
    %1011 = vmatprep.subr.bf16.mxu0 %v714
    %1012 = vmatpush1.bf16.msra.mxu0 %v713
    %1013 = vmatprep.subr.bf16.mxu0 %v722
    %1014 = vmatpush1.bf16.msra.mxu0 %v721
    %1015 = vmatprep.subr.bf16.mxu0 %v730
    %1016 = vmatpush1.bf16.msra.mxu0 %v729
    %1017 = vmatprep.subr.bf16.mxu0 %v738
    %1018 = vmatpush1.bf16.msra.mxu0 %v737
    %1019 = vmatprep.subr.bf16.mxu0 %v746
    %1020 = vmatpush1.bf16.msra.mxu0 %v745
    %1021 = vmatprep.subr.bf16.mxu0 %v754
    %1022 = vmatpush1.bf16.msra.mxu0 %v753
    %1023 = vmatprep.subr.bf16.mxu0 %v762
    %1024 = vmatpush1.bf16.msra.mxu0 %v761
    %1025 = vmatprep.subr.bf16.mxu0 %v770
    %1026 = vmatpush1.bf16.msra.mxu0 %v769
    %1027 = vmatprep.subr.bf16.mxu0 %v778
    %1028 = vmatpush1.bf16.msra.mxu0 %v777
    %1029 = vmatprep.subr.bf16.mxu0 %v786
    %1030 = vmatpush1.bf16.msra.mxu0 %v785
    %1031 = vmatprep.mubr.bf16.mxu0 %v148
    %1032 = vmatmul.mubr.bf16.gmra.mrb[0].mxu0 %v147
    %v1033 = vpop.f32.mrb[0].mxu0
    %v1034 = vadd.f32 0.0, %v1033
    %v1035 = vpop.f32.mrb[0].mxu0
    %v1036 = vadd.f32 0.0, %v1035
    %v1037 = vpop.f32.mrb[0].mxu0
    %v1038 = vpop.f32.mrb[0].mxu0
    %1039 = vdwg.mxu0
    %1040 = vmatprep.subr.bf16.mxu0 %v668
    %1041 = vmatpush1.bf16.msra.mxu0 %v667
    %1042 = vmatprep.subr.bf16.mxu0 %v676
    %1043 = vmatpush1.bf16.msra.mxu0 %v675
    %1044 = vmatprep.subr.bf16.mxu0 %v684
    %1045 = vmatpush1.bf16.msra.mxu0 %v683
    %1046 = vmatprep.subr.bf16.mxu0 %v692
    %1047 = vmatpush1.bf16.msra.mxu0 %v691
    %1048 = vmatprep.subr.bf16.mxu0 %v700
    %1049 = vmatpush1.bf16.msra.mxu0 %v699
    %1050 = vmatprep.subr.bf16.mxu0 %v708
    %1051 = vmatpush1.bf16.msra.mxu0 %v707
    %1052 = vmatprep.subr.bf16.mxu0 %v716
    %1053 = vmatpush1.bf16.msra.mxu0 %v715
    %1054 = vmatprep.subr.bf16.mxu0 %v724
    %1055 = vmatpush1.bf16.msra.mxu0 %v723
    %1056 = vmatprep.subr.bf16.mxu0 %v732
    %1057 = vmatpush1.bf16.msra.mxu0 %v731
    %1058 = vmatprep.subr.bf16.mxu0 %v740
    %1059 = vmatpush1.bf16.msra.mxu0 %v739
    %1060 = vmatprep.subr.bf16.mxu0 %v748
    %1061 = vmatpush1.bf16.msra.mxu0 %v747
    %1062 = vmatprep.subr.bf16.mxu0 %v756
    %1063 = vmatpush1.bf16.msra.mxu0 %v755
    %1064 = vmatprep.subr.bf16.mxu0 %v764
    %1065 = vmatpush1.bf16.msra.mxu0 %v763
    %1066 = vmatprep.subr.bf16.mxu0 %v772
    %1067 = vmatpush1.bf16.msra.mxu0 %v771
    %1068 = vmatprep.subr.bf16.mxu0 %v780
    %1069 = vmatpush1.bf16.msra.mxu0 %v779
    %1070 = vmatprep.subr.bf16.mxu0 %v788
    %1071 = vmatpush1.bf16.msra.mxu0 %v787
    %1072 = vmatprep.mubr.bf16.mxu0 %v148
    %1073 = vmatmul.mubr.bf16.gmra.mrb[0].mxu0 %v147
    %v1074 = vpop.f32.mrb[0].mxu0
    %v1075 = vadd.f32 0.0, %v1074
    %v1076 = vpop.f32.mrb[0].mxu0
    %v1077 = vadd.f32 0.0, %v1076
    %v1078 = vpop.f32.mrb[0].mxu0
    %v1079 = vpop.f32.mrb[0].mxu0
    %1080 = vdwg.mxu0
    %v1089 = vcombine.low %v952, %v954
    %v1090 = vcombine.low %v993, %v995
    %v1092 = vunpack.c.l.s4 1983009808
    %v1093 = vunpack.c.0.s8 %v1092
    %v1094 = vlaneseq
    %v1095 = vshrl.u32 %v1094, 7
    %v1096 = vsub.s32 %v1093, %v1095
    %v1097 = vrot.slane %v1089, %v1096
    %v1099 = vunpack.c.l.s4 1983009808
    %v1100 = vunpack.c.0.s8 %v1099
    %v1101 = vlaneseq
    %v1102 = vshrl.u32 %v1101, 7
    %v1103 = vsub.s32 %v1100, %v1102
    %v1104 = vrot.slane %v1090, %v1103
    %v1105 = vcombine.low %v1097, %v1104
    %v1106 = vcombine.low %v1034, %v1036
    %v1107 = vcombine.low %v1075, %v1077
    %v1109 = vunpack.c.l.s4 1983009808
    %v1110 = vunpack.c.0.s8 %v1109
    %v1111 = vlaneseq
    %v1112 = vshrl.u32 %v1111, 7
    %v1113 = vsub.s32 %v1110, %v1112
    %v1114 = vrot.slane %v1106, %v1113
    %v1116 = vunpack.c.l.s4 1983009808
    %v1117 = vunpack.c.0.s8 %v1116
    %v1118 = vlaneseq
    %v1119 = vshrl.u32 %v1118, 7
    %v1120 = vsub.s32 %v1117, %v1119
    %v1121 = vrot.slane %v1107, %v1120
    %v1122 = vcombine.low %v1114, %v1121
    %1125 = vst [vmem:[%s4] sm:$0xff] %v1105
    %1126 = vst [vmem:[%s4 + $0x8] sm:$0xff] %v1122
    // Predicated region
    $region34: #{kitti_conv_decoder_forward.5} parent=1 // pred_check
      _
    $region35: #{kitti_conv_decoder_forward.5} parent=1 // pred_check_branch
      %1128 = sbr.rel (0) target = $region37
    $region36: #{kitti_conv_decoder_forward.5} parent=1 // pred_region
      _
    $region37: #{kitti_conv_decoder_forward.5} parent=1 // pred_fallthru
      _
    // Predicated region
    $region38: #{kitti_conv_decoder_forward.5} parent=1 // pred_check
      _
    $region39: #{kitti_conv_decoder_forward.5} parent=1 // pred_check_branch
      %1130 = sbr.rel (0) target = $region41
    $region40: #{kitti_conv_decoder_forward.5} parent=1 // pred_region
      _
    $region41: #{kitti_conv_decoder_forward.5} parent=1 // pred_fallthru
      _
    %1131 = vsyncpa [#allocation3], 1
    %1132 = vsyncpa [#allocation5], 1
    %1133 = vsyncpa [#allocation8], 1

// kernel: kitti_conv_decoder_forward.6
$region0: #{kitti_conv_decoder_forward.6}
  #allocation0 [shape = 'u32[]', space=smem, size = 0x4, offset = 0x4, fixed_abs, tag = 'smem constant byte address 0x4 - core index']
  #allocation1 [shape = 'u32[144,128]{1,0:T(1,128)}', space=vmem, size = 0x12000, scoped, tag = 'internal scratch']
  %s0 = inlined_call_operand.vmem [shape: f32[64,32], index: 0, kind: input, shape index: {}]
  %s1 = inlined_call_operand.vmem [shape: f32[64,1], index: 1, kind: input, shape index: {}]
  %s2 = inlined_call_operand.vmem [shape: f32[64,1], index: 2, kind: input, shape index: {}]
  %s3 = inlined_call_operand.vmem [shape: bf16[256,576], index: 3, kind: input, shape index: {}]
  %s4 = inlined_call_operand.vmem [shape: f32[256,32], index: 4, kind: output, shape index: {}]
  %s5 = sld [smem:[#allocation0]]
  $region26: #{kitti_conv_decoder_forward.6} parent=0
    _
  %s7 = ssub.s32 1, %s5
  %s8 = scalar_select 0, %s7, %s5
  // Predicated region
  $region2: #{kitti_conv_decoder_forward.6} parent=0 // pred_check
    _
  $region3: #{kitti_conv_decoder_forward.6} parent=0 // pred_check_branch
    %10 = sbr.rel (0) target = $region5
  $region4: #{kitti_conv_decoder_forward.6} parent=0 // pred_region
    _
  $region5: #{kitti_conv_decoder_forward.6} parent=0 // pred_fallthru
    _
  // Predicated region
  $region6: #{kitti_conv_decoder_forward.6} parent=0 // pred_check
    _
  $region7: #{kitti_conv_decoder_forward.6} parent=0 // pred_check_branch
    %12 = sbr.rel (0) target = $region9
  $region8: #{kitti_conv_decoder_forward.6} parent=0 // pred_region
    _
  $region9: #{kitti_conv_decoder_forward.6} parent=0 // pred_fallthru
    _
  // Predicated region
  $region10: #{kitti_conv_decoder_forward.6} parent=0 // pred_check
    _
  $region11: #{kitti_conv_decoder_forward.6} parent=0 // pred_check_branch
    %14 = sbr.rel (0) target = $region13
  $region12: #{kitti_conv_decoder_forward.6} parent=0 // pred_region
    _
  $region13: #{kitti_conv_decoder_forward.6} parent=0 // pred_fallthru
    _
  // Predicated region
  $region14: #{kitti_conv_decoder_forward.6} parent=0 // pred_check
    _
  $region15: #{kitti_conv_decoder_forward.6} parent=0 // pred_check_branch
    %16 = sbr.rel (0) target = $region17
  $region16: #{kitti_conv_decoder_forward.6} parent=0 // pred_region
    _
  $region17: #{kitti_conv_decoder_forward.6} parent=0 // pred_fallthru
    _
  %v20 = vld [vmem:[%s0] sm:$0xff]
  %v21 = vld [vmem:[%s0 + $0x8] sm:$0xff]
  %v22 = vld [vmem:[%s0 + $0x10] sm:$0xff]
  %v23 = vld [vmem:[%s0 + $0x18] sm:$0xff]
  %v24 = vld [vmem:[%s0 + $0x20] sm:$0xff]
  %v25 = vld [vmem:[%s0 + $0x28] sm:$0xff]
  %v26 = vld [vmem:[%s0 + $0x30] sm:$0xff]
  %v27 = vld [vmem:[%s0 + $0x38] sm:$0xff]
  %vm28 = vcmask 261120
  %v29 = vsel %vm28, %v20, 0.0
  %30 = vadd.xlane.f32.xlu0 %v29
  %v31 = vpop.xlane.xlu0 %30
  %v32 = vsel %vm28, %v21, 0.0
  %33 = vadd.xlane.f32.xlu0 %v32
  %v34 = vpop.xlane.xlu0 %33
  %v35 = vsel %vm28, %v22, 0.0
  %36 = vadd.xlane.f32.xlu0 %v35
  %v37 = vpop.xlane.xlu0 %36
  %v38 = vsel %vm28, %v23, 0.0
  %39 = vadd.xlane.f32.xlu0 %v38
  %v40 = vpop.xlane.xlu0 %39
  %v41 = vsel %vm28, %v24, 0.0
  %42 = vadd.xlane.f32.xlu0 %v41
  %v43 = vpop.xlane.xlu0 %42
  %v44 = vsel %vm28, %v25, 0.0
  %45 = vadd.xlane.f32.xlu0 %v44
  %v46 = vpop.xlane.xlu0 %45
  %v47 = vsel %vm28, %v26, 0.0
  %48 = vadd.xlane.f32.xlu0 %v47
  %v49 = vpop.xlane.xlu0 %48
  %v50 = vsel %vm28, %v27, 0.0
  %51 = vadd.xlane.f32.xlu0 %v50
  %v52 = vpop.xlane.xlu0 %51
  %v53 = vmul.f32 %v20, %v20
  %v54 = vmul.f32 %v21, %v21
  %v55 = vmul.f32 %v22, %v22
  %v56 = vmul.f32 %v23, %v23
  %v57 = vmul.f32 %v24, %v24
  %v58 = vmul.f32 %v25, %v25
  %v59 = vmul.f32 %v26, %v26
  %v60 = vmul.f32 %v27, %v27
  %v61 = vsel %vm28, %v53, 0.0
  %62 = vadd.xlane.f32.xlu0 %v61
  %v63 = vpop.xlane.xlu0 %62
  %v64 = vsel %vm28, %v54, 0.0
  %65 = vadd.xlane.f32.xlu0 %v64
  %v66 = vpop.xlane.xlu0 %65
  %v67 = vsel %vm28, %v55, 0.0
  %68 = vadd.xlane.f32.xlu0 %v67
  %v69 = vpop.xlane.xlu0 %68
  %v70 = vsel %vm28, %v56, 0.0
  %71 = vadd.xlane.f32.xlu0 %v70
  %v72 = vpop.xlane.xlu0 %71
  %v73 = vsel %vm28, %v57, 0.0
  %74 = vadd.xlane.f32.xlu0 %v73
  %v75 = vpop.xlane.xlu0 %74
  %v76 = vsel %vm28, %v58, 0.0
  %77 = vadd.xlane.f32.xlu0 %v76
  %v78 = vpop.xlane.xlu0 %77
  %v79 = vsel %vm28, %v59, 0.0
  %80 = vadd.xlane.f32.xlu0 %v79
  %v81 = vpop.xlane.xlu0 %80
  %v82 = vsel %vm28, %v60, 0.0
  %83 = vadd.xlane.f32.xlu0 %v82
  %v84 = vpop.xlane.xlu0 %83
  %v85 = vmul.f32 %v31, 0.03125
  %v86 = vmul.f32 %v34, 0.03125
  %v87 = vmul.f32 %v37, 0.03125
  %v88 = vmul.f32 %v40, 0.03125
  %v89 = vmul.f32 %v43, 0.03125
  %v90 = vmul.f32 %v46, 0.03125
  %v91 = vmul.f32 %v49, 0.03125
  %v92 = vmul.f32 %v52, 0.03125
  %v93 = vmul.f32 %v63, 0.03125
  %v94 = vmul.f32 %v66, 0.03125
  %v95 = vmul.f32 %v69, 0.03125
  %v96 = vmul.f32 %v72, 0.03125
  %v97 = vmul.f32 %v75, 0.03125
  %v98 = vmul.f32 %v78, 0.03125
  %v99 = vmul.f32 %v81, 0.03125
  %v100 = vmul.f32 %v84, 0.03125
  %v101 = vmul.f32 %v85, %v85
  %v102 = vmul.f32 %v86, %v86
  %v103 = vmul.f32 %v87, %v87
  %v104 = vmul.f32 %v88, %v88
  %v105 = vmul.f32 %v89, %v89
  %v106 = vmul.f32 %v90, %v90
  %v107 = vmul.f32 %v91, %v91
  %v108 = vmul.f32 %v92, %v92
  %v109 = vsub.f32 %v93, %v101
  %v110 = vsub.f32 %v94, %v102
  %v111 = vsub.f32 %v95, %v103
  %v112 = vsub.f32 %v96, %v104
  %v113 = vsub.f32 %v97, %v105
  %v114 = vsub.f32 %v98, %v106
  %v115 = vsub.f32 %v99, %v107
  %v116 = vsub.f32 %v100, %v108
  %v117 = vmax.f32 %v109, 0.0
  %v118 = vmax.f32 %v110, 0.0
  %v119 = vmax.f32 %v111, 0.0
  %v120 = vmax.f32 %v112, 0.0
  %v121 = vmax.f32 %v113, 0.0
  %v122 = vmax.f32 %v114, 0.0
  %v123 = vmax.f32 %v115, 0.0
  %v124 = vmax.f32 %v116, 0.0
  %v125 = vld [vmem:[%s1] sm:$0xff]
  %v126 = vld [vmem:[%s1 + $0x8] sm:$0xff]
  %v127 = vld [vmem:[%s1 + $0x10] sm:$0xff]
  %v128 = vld [vmem:[%s1 + $0x18] sm:$0xff]
  %v129 = vld [vmem:[%s1 + $0x20] sm:$0xff]
  %v130 = vld [vmem:[%s1 + $0x28] sm:$0xff]
  %v131 = vld [vmem:[%s1 + $0x30] sm:$0xff]
  %v132 = vld [vmem:[%s1 + $0x38] sm:$0xff]
  %v133 = vadd.f32 %v117, 1e-05
  %v134 = vadd.f32 %v118, 1e-05
  %v135 = vadd.f32 %v119, 1e-05
  %v136 = vadd.f32 %v120, 1e-05
  %v137 = vadd.f32 %v121, 1e-05
  %v138 = vadd.f32 %v122, 1e-05
  %v139 = vadd.f32 %v123, 1e-05
  %v140 = vadd.f32 %v124, 1e-05
  %v141 = vrsqrt.pop %v133
  %v142 = vrsqrt.pop %v134
  %v143 = vrsqrt.pop %v135
  %v144 = vrsqrt.pop %v136
  %v145 = vrsqrt.pop %v137
  %v146 = vrsqrt.pop %v138
  %v147 = vrsqrt.pop %v139
  %v148 = vrsqrt.pop %v140
  %v149 = vmul.f32 %v125, %v141
  %v150 = vmul.f32 %v126, %v142
  %v151 = vmul.f32 %v127, %v143
  %v152 = vmul.f32 %v128, %v144
  %v153 = vmul.f32 %v129, %v145
  %v154 = vmul.f32 %v130, %v146
  %v155 = vmul.f32 %v131, %v147
  %v156 = vmul.f32 %v132, %v148
  %v157 = vld [vmem:[%s2] sm:$0xff]
  %v158 = vld [vmem:[%s2 + $0x8] sm:$0xff]
  %v159 = vld [vmem:[%s2 + $0x10] sm:$0xff]
  %v160 = vld [vmem:[%s2 + $0x18] sm:$0xff]
  %v161 = vld [vmem:[%s2 + $0x20] sm:$0xff]
  %v162 = vld [vmem:[%s2 + $0x28] sm:$0xff]
  %v163 = vld [vmem:[%s2 + $0x30] sm:$0xff]
  %v164 = vld [vmem:[%s2 + $0x38] sm:$0xff]
  %v165 = vmul.f32 %v85, %v149
  %v166 = vmul.f32 %v86, %v150
  %v167 = vmul.f32 %v87, %v151
  %v168 = vmul.f32 %v88, %v152
  %v169 = vmul.f32 %v89, %v153
  %v170 = vmul.f32 %v90, %v154
  %v171 = vmul.f32 %v91, %v155
  %v172 = vmul.f32 %v92, %v156
  %v173 = vsub.f32 %v157, %v165
  %v174 = vsub.f32 %v158, %v166
  %v175 = vsub.f32 %v159, %v167
  %v176 = vsub.f32 %v160, %v168
  %v177 = vsub.f32 %v161, %v169
  %v178 = vsub.f32 %v162, %v170
  %v179 = vsub.f32 %v163, %v171
  %v180 = vsub.f32 %v164, %v172
  %182 = vset.pattern.permute.xlu0 0
  %183 = vperm.xlu0 %182, %v149
  %v184 = vpop.permute.xlu0 %183
  %187 = vset.pattern.permute.xlu0 0
  %188 = vperm.xlu0 %187, %v150
  %v189 = vpop.permute.xlu0 %188
  %192 = vset.pattern.permute.xlu0 0
  %193 = vperm.xlu0 %192, %v151
  %v194 = vpop.permute.xlu0 %193
  %197 = vset.pattern.permute.xlu0 0
  %198 = vperm.xlu0 %197, %v152
  %v199 = vpop.permute.xlu0 %198
  %202 = vset.pattern.permute.xlu0 0
  %203 = vperm.xlu0 %202, %v153
  %v204 = vpop.permute.xlu0 %203
  %207 = vset.pattern.permute.xlu0 0
  %208 = vperm.xlu0 %207, %v154
  %v209 = vpop.permute.xlu0 %208
  %212 = vset.pattern.permute.xlu0 0
  %213 = vperm.xlu0 %212, %v155
  %v214 = vpop.permute.xlu0 %213
  %217 = vset.pattern.permute.xlu0 0
  %218 = vperm.xlu0 %217, %v156
  %v219 = vpop.permute.xlu0 %218
  %v221 = vmul.f32 %v20, %v184
  %v222 = vmul.f32 %v21, %v189
  %v223 = vmul.f32 %v22, %v194
  %v224 = vmul.f32 %v23, %v199
  %v225 = vmul.f32 %v24, %v204
  %v226 = vmul.f32 %v25, %v209
  %v227 = vmul.f32 %v26, %v214
  %v228 = vmul.f32 %v27, %v219
  %230 = vset.pattern.permute.xlu0 0
  %231 = vperm.xlu0 %230, %v173
  %v232 = vpop.permute.xlu0 %231
  %235 = vset.pattern.permute.xlu0 0
  %236 = vperm.xlu0 %235, %v174
  %v237 = vpop.permute.xlu0 %236
  %240 = vset.pattern.permute.xlu0 0
  %241 = vperm.xlu0 %240, %v175
  %v242 = vpop.permute.xlu0 %241
  %245 = vset.pattern.permute.xlu0 0
  %246 = vperm.xlu0 %245, %v176
  %v247 = vpop.permute.xlu0 %246
  %250 = vset.pattern.permute.xlu0 0
  %251 = vperm.xlu0 %250, %v177
  %v252 = vpop.permute.xlu0 %251
  %255 = vset.pattern.permute.xlu0 0
  %256 = vperm.xlu0 %255, %v178
  %v257 = vpop.permute.xlu0 %256
  %260 = vset.pattern.permute.xlu0 0
  %261 = vperm.xlu0 %260, %v179
  %v262 = vpop.permute.xlu0 %261
  %265 = vset.pattern.permute.xlu0 0
  %266 = vperm.xlu0 %265, %v180
  %v267 = vpop.permute.xlu0 %266
  %v269 = vadd.f32 %v221, %v232
  %v270 = vadd.f32 %v222, %v237
  %v271 = vadd.f32 %v223, %v242
  %v272 = vadd.f32 %v224, %v247
  %v273 = vadd.f32 %v225, %v252
  %v274 = vadd.f32 %v226, %v257
  %v275 = vadd.f32 %v227, %v262
  %v276 = vadd.f32 %v228, %v267
  %v277 = vmax.f32 %v269, 0.0
  %v278 = vmax.f32 %v270, 0.0
  %v279 = vmax.f32 %v271, 0.0
  %v280 = vmax.f32 %v272, 0.0
  %v281 = vmax.f32 %v273, 0.0
  %v282 = vmax.f32 %v274, 0.0
  %v283 = vmax.f32 %v275, 0.0
  %v284 = vmax.f32 %v276, 0.0
  %v285 = vpack.c.bf16 %v278, %v277
  %v286 = vpack.c.bf16 %v280, %v279
  %v287 = vpack.c.bf16 %v282, %v281
  %v288 = vpack.c.bf16 %v284, %v283
  %v289 = vlaneseq
  %v290 = vand.u32 %v289, 127
  %v291 = vand.u32 %v290, 3
  %v292 = vshra.s32 %v290, 2
  %v293 = vand.u32 %v292, 3
  %298 = vrot.lane.b32.xlu0 %v285, 5
  %v299 = vpop.permute.xlu0 %298
  %300 = vrot.lane.b32.xlu0 %v286, 5
  %v301 = vpop.permute.xlu0 %300
  %302 = vrot.lane.b32.xlu0 %v287, 5
  %v303 = vpop.permute.xlu0 %302
  %304 = vrot.lane.b32.xlu0 %v288, 5
  %v305 = vpop.permute.xlu0 %304
  %vm306 = vcmask 39936
  %v309 = vsel %vm306, 0, %v299
  %v312 = vsel %vm306, 0, %v301
  %v315 = vsel %vm306, 0, %v303
  %v318 = vsel %vm306, 0, %v305
  %v320 = vadd.s32 %v291, 4294967295
  %vm321 = vcmp.ge.s32.totalorder %v320, 0
  %vm322 = vcmp.lt.s32.totalorder %v320, 4
  %vm323 = vmand %vm321, %vm322
  %v324 = vadd.s32 %v293, 4294967295
  %vm325 = vcmp.ge.s32.totalorder %v324, 0
  %vm326 = vmand %vm323, %vm325
  %vm327 = vcmp.lt.s32.totalorder %v324, 4
  %vm328 = vmand %vm326, %vm327
  %vm329 = vmpackc.low %vm328, %vm328
  %v330 = vsel %vm329, 65537, 0
  %v331 = vlaneseq
  %v332 = vshrl.u32 %v331, 7
  %v333 = vsub.s32 0, %v332
  %v334 = vrot.slane %v330, %v333
  %vm335 = vcmp.ne.s16.totalorder %v334, 0
  %v336 = vsel %vm335, %v309, 0
  %v337 = vsel %vm335, %v312, 0
  %v338 = vsel %vm335, %v315, 0
  %v339 = vsel %vm335, %v318, 0
  %340 = vrot.lane.b32.xlu0 %v285, 4
  %v341 = vpop.permute.xlu0 %340
  %342 = vrot.lane.b32.xlu0 %v286, 4
  %v343 = vpop.permute.xlu0 %342
  %344 = vrot.lane.b32.xlu0 %v287, 4
  %v345 = vpop.permute.xlu0 %344
  %346 = vrot.lane.b32.xlu0 %v288, 4
  %v347 = vpop.permute.xlu0 %346
  %vm348 = vcmask 31744
  %v350 = vsel %vm348, 0, %v341
  %v353 = vsel %vm348, 0, %v343
  %v356 = vsel %vm348, 0, %v345
  %v359 = vsel %vm348, 0, %v347
  %vm361 = vcmp.ge.s32.totalorder %v291, 0
  %vm362 = vcmp.lt.s32.totalorder %v291, 4
  %vm363 = vmand %vm361, %vm362
  %vm364 = vmand %vm363, %vm325
  %vm365 = vmand %vm364, %vm327
  %vm366 = vmpackc.low %vm365, %vm365
  %v367 = vsel %vm366, 65537, 0
  %v368 = vlaneseq
  %v369 = vshrl.u32 %v368, 7
  %v370 = vsub.s32 0, %v369
  %v371 = vrot.slane %v367, %v370
  %vm372 = vcmp.ne.s16.totalorder %v371, 0
  %v373 = vsel %vm372, %v350, 0
  %v374 = vsel %vm372, %v353, 0
  %v375 = vsel %vm372, %v356, 0
  %v376 = vsel %vm372, %v359, 0
  %377 = vrot.lane.b32.xlu0 %v285, 3
  %v378 = vpop.permute.xlu0 %377
  %379 = vrot.lane.b32.xlu0 %v286, 3
  %v380 = vpop.permute.xlu0 %379
  %381 = vrot.lane.b32.xlu0 %v287, 3
  %v382 = vpop.permute.xlu0 %381
  %383 = vrot.lane.b32.xlu0 %v288, 3
  %v384 = vpop.permute.xlu0 %383
  %vm385 = vcmask 23552
  %v387 = vsel %vm385, 0, %v378
  %v390 = vsel %vm385, 0, %v380
  %v393 = vsel %vm385, 0, %v382
  %v396 = vsel %vm385, 0, %v384
  %v398 = vadd.s32 %v291, 1
  %vm399 = vcmp.ge.s32.totalorder %v398, 0
  %vm400 = vcmp.lt.s32.totalorder %v398, 4
  %vm401 = vmand %vm399, %vm400
  %vm402 = vmand %vm401, %vm325
  %vm403 = vmand %vm402, %vm327
  %vm404 = vmpackc.low %vm403, %vm403
  %v405 = vsel %vm404, 65537, 0
  %v406 = vlaneseq
  %v407 = vshrl.u32 %v406, 7
  %v408 = vsub.s32 0, %v407
  %v409 = vrot.slane %v405, %v408
  %vm410 = vcmp.ne.s16.totalorder %v409, 0
  %v411 = vsel %vm410, %v387, 0
  %v412 = vsel %vm410, %v390, 0
  %v413 = vsel %vm410, %v393, 0
  %v414 = vsel %vm410, %v396, 0
  %415 = vrot.lane.b32.xlu0 %v285, 1
  %v416 = vpop.permute.xlu0 %415
  %417 = vrot.lane.b32.xlu0 %v286, 1
  %v418 = vpop.permute.xlu0 %417
  %419 = vrot.lane.b32.xlu0 %v287, 1
  %v420 = vpop.permute.xlu0 %419
  %421 = vrot.lane.b32.xlu0 %v288, 1
  %v422 = vpop.permute.xlu0 %421
  %vm423 = vcmask 7168
  %v425 = vsel %vm423, 0, %v416
  %v428 = vsel %vm423, 0, %v418
  %v431 = vsel %vm423, 0, %v420
  %v434 = vsel %vm423, 0, %v422
  %vm436 = vcmp.ge.s32.totalorder %v293, 0
  %vm437 = vmand %vm323, %vm436
  %vm438 = vcmp.lt.s32.totalorder %v293, 4
  %vm439 = vmand %vm437, %vm438
  %vm440 = vmpackc.low %vm439, %vm439
  %v441 = vsel %vm440, 65537, 0
  %v442 = vlaneseq
  %v443 = vshrl.u32 %v442, 7
  %v444 = vsub.s32 0, %v443
  %v445 = vrot.slane %v441, %v444
  %vm446 = vcmp.ne.s16.totalorder %v445, 0
  %v447 = vsel %vm446, %v425, 0
  %v448 = vsel %vm446, %v428, 0
  %v449 = vsel %vm446, %v431, 0
  %v450 = vsel %vm446, %v434, 0
  %vm451 = vmand %vm363, %vm436
  %vm452 = vmand %vm451, %vm438
  %vm453 = vmpackc.low %vm452, %vm452
  %v454 = vsel %vm453, 65537, 0
  %v455 = vlaneseq
  %v456 = vshrl.u32 %v455, 7
  %v457 = vsub.s32 0, %v456
  %v458 = vrot.slane %v454, %v457
  %vm459 = vcmp.ne.s16.totalorder %v458, 0
  %v460 = vsel %vm459, %v285, 0
  %v461 = vsel %vm459, %v286, 0
  %v462 = vsel %vm459, %v287, 0
  %v463 = vsel %vm459, %v288, 0
  %464 = vrot.lane.b32.xlu0 %v285, 127
  %v465 = vpop.permute.xlu0 %464
  %466 = vrot.lane.b32.xlu0 %v286, 127
  %v467 = vpop.permute.xlu0 %466
  %468 = vrot.lane.b32.xlu0 %v287, 127
  %v469 = vpop.permute.xlu0 %468
  %470 = vrot.lane.b32.xlu0 %v288, 127
  %v471 = vpop.permute.xlu0 %470
  %vm472 = vcmask 252928
  %v474 = vsel %vm472, %v465, 0
  %v477 = vsel %vm472, %v467, 0
  %v480 = vsel %vm472, %v469, 0
  %v483 = vsel %vm472, %v471, 0
  %vm485 = vmand %vm401, %vm436
  %vm486 = vmand %vm485, %vm438
  %vm487 = vmpackc.low %vm486, %vm486
  %v488 = vsel %vm487, 65537, 0
  %v489 = vlaneseq
  %v490 = vshrl.u32 %v489, 7
  %v491 = vsub.s32 0, %v490
  %v492 = vrot.slane %v488, %v491
  %vm493 = vcmp.ne.s16.totalorder %v492, 0
  %v494 = vsel %vm493, %v474, 0
  %v495 = vsel %vm493, %v477, 0
  %v496 = vsel %vm493, %v480, 0
  %v497 = vsel %vm493, %v483, 0
  %498 = vrot.lane.b32.xlu0 %v285, 125
  %v499 = vpop.permute.xlu0 %498
  %500 = vrot.lane.b32.xlu0 %v286, 125
  %v501 = vpop.permute.xlu0 %500
  %502 = vrot.lane.b32.xlu0 %v287, 125
  %v503 = vpop.permute.xlu0 %502
  %504 = vrot.lane.b32.xlu0 %v288, 125
  %v505 = vpop.permute.xlu0 %504
  %vm506 = vcmask 236544
  %v508 = vsel %vm506, %v499, 0
  %v511 = vsel %vm506, %v501, 0
  %v514 = vsel %vm506, %v503, 0
  %v517 = vsel %vm506, %v505, 0
  %v519 = vadd.s32 %v293, 1
  %vm520 = vcmp.ge.s32.totalorder %v519, 0
  %vm521 = vmand %vm323, %vm520
  %vm522 = vcmp.lt.s32.totalorder %v519, 4
  %vm523 = vmand %vm521, %vm522
  %vm524 = vmpackc.low %vm523, %vm523
  %v525 = vsel %vm524, 65537, 0
  %v526 = vlaneseq
  %v527 = vshrl.u32 %v526, 7
  %v528 = vsub.s32 0, %v527
  %v529 = vrot.slane %v525, %v528
  %vm530 = vcmp.ne.s16.totalorder %v529, 0
  %v531 = vsel %vm530, %v508, 0
  %v532 = vsel %vm530, %v511, 0
  %v533 = vsel %vm530, %v514, 0
  %v534 = vsel %vm530, %v517, 0
  %535 = vrot.lane.b32.xlu0 %v285, 124
  %v536 = vpop.permute.xlu0 %535
  %537 = vrot.lane.b32.xlu0 %v286, 124
  %v538 = vpop.permute.xlu0 %537
  %539 = vrot.lane.b32.xlu0 %v287, 124
  %v540 = vpop.permute.xlu0 %539
  %541 = vrot.lane.b32.xlu0 %v288, 124
  %v542 = vpop.permute.xlu0 %541
  %vm543 = vcmask 228352
  %v545 = vsel %vm543, %v536, 0
  %v548 = vsel %vm543, %v538, 0
  %v551 = vsel %vm543, %v540, 0
  %v554 = vsel %vm543, %v542, 0
  %vm556 = vmand %vm363, %vm520
  %vm557 = vmand %vm556, %vm522
  %vm558 = vmpackc.low %vm557, %vm557
  %v559 = vsel %vm558, 65537, 0
  %v560 = vlaneseq
  %v561 = vshrl.u32 %v560, 7
  %v562 = vsub.s32 0, %v561
  %v563 = vrot.slane %v559, %v562
  %vm564 = vcmp.ne.s16.totalorder %v563, 0
  %v565 = vsel %vm564, %v545, 0
  %v566 = vsel %vm564, %v548, 0
  %v567 = vsel %vm564, %v551, 0
  %v568 = vsel %vm564, %v554, 0
  %569 = vrot.lane.b32.xlu0 %v285, 123
  %v570 = vpop.permute.xlu0 %569
  %571 = vrot.lane.b32.xlu0 %v286, 123
  %v572 = vpop.permute.xlu0 %571
  %573 = vrot.lane.b32.xlu0 %v287, 123
  %v574 = vpop.permute.xlu0 %573
  %575 = vrot.lane.b32.xlu0 %v288, 123
  %v576 = vpop.permute.xlu0 %575
  %vm577 = vcmask 220160
  %v579 = vsel %vm577, %v570, 0
  %v582 = vsel %vm577, %v572, 0
  %v585 = vsel %vm577, %v574, 0
  %v588 = vsel %vm577, %v576, 0
  %vm590 = vmand %vm401, %vm520
  %vm591 = vmand %vm590, %vm522
  %vm592 = vmpackc.low %vm591, %vm591
  %v593 = vsel %vm592, 65537, 0
  %v594 = vlaneseq
  %v595 = vshrl.u32 %v594, 7
  %v596 = vsub.s32 0, %v595
  %v597 = vrot.slane %v593, %v596
  %vm598 = vcmp.ne.s16.totalorder %v597, 0
  %v599 = vsel %vm598, %v579, 0
  %v600 = vsel %vm598, %v582, 0
  %v601 = vsel %vm598, %v585, 0
  %v602 = vsel %vm598, %v588, 0
  %v603 = vld [vmem:[%s3] sm:$0xff]
  %v604 = vld [vmem:[%s3 + $0x8] sm:$0xff]
  %v605 = vld [vmem:[%s3 + $0x10] sm:$0xf]
  %v606 = vld [vmem:[%s3 + $0x14] sm:$0xff]
  %v607 = vld [vmem:[%s3 + $0x1c] sm:$0xff]
  %v608 = vld [vmem:[%s3 + $0x24] sm:$0xf]
  %v609 = vld [vmem:[%s3 + $0x28] sm:$0xff]
  %v610 = vld [vmem:[%s3 + $0x30] sm:$0xff]
  %v611 = vld [vmem:[%s3 + $0x38] sm:$0xf]
  %v612 = vld [vmem:[%s3 + $0x3c] sm:$0xff]
  %v613 = vld [vmem:[%s3 + $0x44] sm:$0xff]
  %v614 = vld [vmem:[%s3 + $0x4c] sm:$0xf]
  %v615 = vld [vmem:[%s3 + $0x50] sm:$0xff]
  %v616 = vld [vmem:[%s3 + $0x58] sm:$0xff]
  %v617 = vld [vmem:[%s3 + $0x60] sm:$0xf]
  %v618 = vld [vmem:[%s3 + $0x64] sm:$0xff]
  %v619 = vld [vmem:[%s3 + $0x6c] sm:$0xff]
  %v620 = vld [vmem:[%s3 + $0x74] sm:$0xf]
  %v621 = vld [vmem:[%s3 + $0x78] sm:$0xff]
  %v622 = vld [vmem:[%s3 + $0x80] sm:$0xff]
  %v623 = vld [vmem:[%s3 + $0x88] sm:$0xf]
  %v624 = vld [vmem:[%s3 + $0x8c] sm:$0xff]
  %v625 = vld [vmem:[%s3 + $0x94] sm:$0xff]
  %v626 = vld [vmem:[%s3 + $0x9c] sm:$0xf]
  %v627 = vld [vmem:[%s3 + $0xa0] sm:$0xff]
  %v628 = vld [vmem:[%s3 + $0xa8] sm:$0xff]
  %v629 = vld [vmem:[%s3 + $0xb0] sm:$0xf]
  %v630 = vld [vmem:[%s3 + $0xb4] sm:$0xff]
  %v631 = vld [vmem:[%s3 + $0xbc] sm:$0xff]
  %v632 = vld [vmem:[%s3 + $0xc4] sm:$0xf]
  %v633 = vld [vmem:[%s3 + $0xc8] sm:$0xff]
  %v634 = vld [vmem:[%s3 + $0xd0] sm:$0xff]
  %v635 = vld [vmem:[%s3 + $0xd8] sm:$0xf]
  %v636 = vld [vmem:[%s3 + $0xdc] sm:$0xff]
  %v637 = vld [vmem:[%s3 + $0xe4] sm:$0xff]
  %v638 = vld [vmem:[%s3 + $0xec] sm:$0xf]
  %v639 = vld [vmem:[%s3 + $0xf0] sm:$0xff]
  %v640 = vld [vmem:[%s3 + $0xf8] sm:$0xff]
  %v641 = vld [vmem:[%s3 + $0x100] sm:$0xf]
  %v642 = vld [vmem:[%s3 + $0x104] sm:$0xff]
  %v643 = vld [vmem:[%s3 + $0x10c] sm:$0xff]
  %v644 = vld [vmem:[%s3 + $0x114] sm:$0xf]
  %v645 = vld [vmem:[%s3 + $0x118] sm:$0xff]
  %v646 = vld [vmem:[%s3 + $0x120] sm:$0xff]
  %v647 = vld [vmem:[%s3 + $0x128] sm:$0xf]
  %v648 = vld [vmem:[%s3 + $0x12c] sm:$0xff]
  %v649 = vld [vmem:[%s3 + $0x134] sm:$0xff]
  %v650 = vld [vmem:[%s3 + $0x13c] sm:$0xf]
  %v651 = vld [vmem:[%s3 + $0x140] sm:$0xff]
  %v652 = vld [vmem:[%s3 + $0x148] sm:$0xff]
  %v653 = vld [vmem:[%s3 + $0x150] sm:$0xf]
  %v654 = vld [vmem:[%s3 + $0x154] sm:$0xff]
  %v655 = vld [vmem:[%s3 + $0x15c] sm:$0xff]
  %v656 = vld [vmem:[%s3 + $0x164] sm:$0xf]
  %v657 = vld [vmem:[%s3 + $0x168] sm:$0xff]
  %v658 = vld [vmem:[%s3 + $0x170] sm:$0xff]
  %v659 = vld [vmem:[%s3 + $0x178] sm:$0xf]
  %v660 = vld [vmem:[%s3 + $0x17c] sm:$0xff]
  %v661 = vld [vmem:[%s3 + $0x184] sm:$0xff]
  %v662 = vld [vmem:[%s3 + $0x18c] sm:$0xf]
  %v663 = vld [vmem:[%s3 + $0x190] sm:$0xff]
  %v664 = vld [vmem:[%s3 + $0x198] sm:$0xff]
  %v665 = vld [vmem:[%s3 + $0x1a0] sm:$0xf]
  %v666 = vld [vmem:[%s3 + $0x1a4] sm:$0xff]
  %v667 = vld [vmem:[%s3 + $0x1ac] sm:$0xff]
  %v668 = vld [vmem:[%s3 + $0x1b4] sm:$0xf]
  %v669 = vld [vmem:[%s3 + $0x1b8] sm:$0xff]
  %v670 = vld [vmem:[%s3 + $0x1c0] sm:$0xff]
  %v671 = vld [vmem:[%s3 + $0x1c8] sm:$0xf]
  %v672 = vld [vmem:[%s3 + $0x1cc] sm:$0xff]
  %v673 = vld [vmem:[%s3 + $0x1d4] sm:$0xff]
  %v674 = vld [vmem:[%s3 + $0x1dc] sm:$0xf]
  %v675 = vld [vmem:[%s3 + $0x1e0] sm:$0xff]
  %v676 = vld [vmem:[%s3 + $0x1e8] sm:$0xff]
  %v677 = vld [vmem:[%s3 + $0x1f0] sm:$0xf]
  %v678 = vld [vmem:[%s3 + $0x1f4] sm:$0xff]
  %v679 = vld [vmem:[%s3 + $0x1fc] sm:$0xff]
  %v680 = vld [vmem:[%s3 + $0x204] sm:$0xf]
  %v681 = vld [vmem:[%s3 + $0x208] sm:$0xff]
  %v682 = vld [vmem:[%s3 + $0x210] sm:$0xff]
  %v683 = vld [vmem:[%s3 + $0x218] sm:$0xf]
  %v684 = vld [vmem:[%s3 + $0x21c] sm:$0xff]
  %v685 = vld [vmem:[%s3 + $0x224] sm:$0xff]
  %v686 = vld [vmem:[%s3 + $0x22c] sm:$0xf]
  %v687 = vld [vmem:[%s3 + $0x230] sm:$0xff]
  %v688 = vld [vmem:[%s3 + $0x238] sm:$0xff]
  %v689 = vld [vmem:[%s3 + $0x240] sm:$0xf]
  %v690 = vld [vmem:[%s3 + $0x244] sm:$0xff]
  %v691 = vld [vmem:[%s3 + $0x24c] sm:$0xff]
  %v692 = vld [vmem:[%s3 + $0x254] sm:$0xf]
  %v693 = vld [vmem:[%s3 + $0x258] sm:$0xff]
  %v694 = vld [vmem:[%s3 + $0x260] sm:$0xff]
  %v695 = vld [vmem:[%s3 + $0x268] sm:$0xf]
  %v696 = vld [vmem:[%s3 + $0x26c] sm:$0xff]
  %v697 = vld [vmem:[%s3 + $0x274] sm:$0xff]
  %v698 = vld [vmem:[%s3 + $0x27c] sm:$0xf]
  %v795 = vunpack.c.l.b16 %v603
  %v796 = vunpack.c.h.b16 %v603
  %v797 = vunpack.c.l.b16 %v604
  %v798 = vunpack.c.h.b16 %v604
  %v799 = vunpack.c.l.b16 %v605
  %v800 = vunpack.c.l.b16 %v606
  %v801 = vunpack.c.h.b16 %v606
  %v802 = vunpack.c.l.b16 %v607
  %v803 = vunpack.c.h.b16 %v607
  %v804 = vunpack.c.l.b16 %v608
  %v805 = vunpack.c.l.b16 %v609
  %v806 = vunpack.c.h.b16 %v609
  %v807 = vunpack.c.l.b16 %v610
  %v808 = vunpack.c.h.b16 %v610
  %v809 = vunpack.c.l.b16 %v611
  %v810 = vunpack.c.l.b16 %v612
  %v811 = vunpack.c.h.b16 %v612
  %v812 = vunpack.c.l.b16 %v613
  %v813 = vunpack.c.h.b16 %v613
  %v814 = vunpack.c.l.b16 %v614
  %v815 = vunpack.c.l.b16 %v615
  %v816 = vunpack.c.h.b16 %v615
  %v817 = vunpack.c.l.b16 %v616
  %v818 = vunpack.c.h.b16 %v616
  %v819 = vunpack.c.l.b16 %v617
  %v820 = vunpack.c.l.b16 %v618
  %v821 = vunpack.c.h.b16 %v618
  %v822 = vunpack.c.l.b16 %v619
  %v823 = vunpack.c.h.b16 %v619
  %v824 = vunpack.c.l.b16 %v620
  %v825 = vunpack.c.l.b16 %v621
  %v826 = vunpack.c.h.b16 %v621
  %v827 = vunpack.c.l.b16 %v622
  %v828 = vunpack.c.h.b16 %v622
  %v829 = vunpack.c.l.b16 %v623
  %v830 = vunpack.c.l.b16 %v624
  %v831 = vunpack.c.h.b16 %v624
  %v832 = vunpack.c.l.b16 %v625
  %v833 = vunpack.c.h.b16 %v625
  %v834 = vunpack.c.l.b16 %v626
  %v835 = vunpack.c.l.b16 %v627
  %v836 = vunpack.c.h.b16 %v627
  %v837 = vunpack.c.l.b16 %v628
  %v838 = vunpack.c.h.b16 %v628
  %v839 = vunpack.c.l.b16 %v629
  %v840 = vunpack.c.l.b16 %v630
  %v841 = vunpack.c.h.b16 %v630
  %v842 = vunpack.c.l.b16 %v631
  %v843 = vunpack.c.h.b16 %v631
  %v844 = vunpack.c.l.b16 %v632
  %v845 = vunpack.c.l.b16 %v633
  %v846 = vunpack.c.h.b16 %v633
  %v847 = vunpack.c.l.b16 %v634
  %v848 = vunpack.c.h.b16 %v634
  %v849 = vunpack.c.l.b16 %v635
  %v850 = vunpack.c.l.b16 %v636
  %v851 = vunpack.c.h.b16 %v636
  %v852 = vunpack.c.l.b16 %v637
  %v853 = vunpack.c.h.b16 %v637
  %v854 = vunpack.c.l.b16 %v638
  %v855 = vunpack.c.l.b16 %v639
  %v856 = vunpack.c.h.b16 %v639
  %v857 = vunpack.c.l.b16 %v640
  %v858 = vunpack.c.h.b16 %v640
  %v859 = vunpack.c.l.b16 %v641
  %v860 = vunpack.c.l.b16 %v642
  %v861 = vunpack.c.h.b16 %v642
  %v862 = vunpack.c.l.b16 %v643
  %v863 = vunpack.c.h.b16 %v643
  %v864 = vunpack.c.l.b16 %v644
  %v865 = vunpack.c.l.b16 %v645
  %v866 = vunpack.c.h.b16 %v645
  %v867 = vunpack.c.l.b16 %v646
  %v868 = vunpack.c.h.b16 %v646
  %v869 = vunpack.c.l.b16 %v647
  %v870 = vunpack.c.l.b16 %v648
  %v871 = vunpack.c.h.b16 %v648
  %v872 = vunpack.c.l.b16 %v649
  %v873 = vunpack.c.h.b16 %v649
  %v874 = vunpack.c.l.b16 %v650
  %v875 = vunpack.c.l.b16 %v651
  %v876 = vunpack.c.h.b16 %v651
  %v877 = vunpack.c.l.b16 %v652
  %v878 = vunpack.c.h.b16 %v652
  %v879 = vunpack.c.l.b16 %v653
  %v880 = vunpack.c.l.b16 %v654
  %v881 = vunpack.c.h.b16 %v654
  %v882 = vunpack.c.l.b16 %v655
  %v883 = vunpack.c.h.b16 %v655
  %v884 = vunpack.c.l.b16 %v656
  %v885 = vunpack.c.l.b16 %v657
  %v886 = vunpack.c.h.b16 %v657
  %v887 = vunpack.c.l.b16 %v658
  %v888 = vunpack.c.h.b16 %v658
  %v889 = vunpack.c.l.b16 %v659
  %v890 = vunpack.c.l.b16 %v660
  %v891 = vunpack.c.h.b16 %v660
  %v892 = vunpack.c.l.b16 %v661
  %v893 = vunpack.c.h.b16 %v661
  %v894 = vunpack.c.l.b16 %v662
  %v895 = vunpack.c.l.b16 %v663
  %v896 = vunpack.c.h.b16 %v663
  %v897 = vunpack.c.l.b16 %v664
  %v898 = vunpack.c.h.b16 %v664
  %v899 = vunpack.c.l.b16 %v665
  %v900 = vunpack.c.l.b16 %v666
  %v901 = vunpack.c.h.b16 %v666
  %v902 = vunpack.c.l.b16 %v667
  %v903 = vunpack.c.h.b16 %v667
  %v904 = vunpack.c.l.b16 %v668
  %v905 = vunpack.c.l.b16 %v669
  %v906 = vunpack.c.h.b16 %v669
  %v907 = vunpack.c.l.b16 %v670
  %v908 = vunpack.c.h.b16 %v670
  %v909 = vunpack.c.l.b16 %v671
  %v910 = vunpack.c.l.b16 %v672
  %v911 = vunpack.c.h.b16 %v672
  %v912 = vunpack.c.l.b16 %v673
  %v913 = vunpack.c.h.b16 %v673
  %v914 = vunpack.c.l.b16 %v674
  %v915 = vunpack.c.l.b16 %v675
  %v916 = vunpack.c.h.b16 %v675
  %v917 = vunpack.c.l.b16 %v676
  %v918 = vunpack.c.h.b16 %v676
  %v919 = vunpack.c.l.b16 %v677
  %v920 = vunpack.c.l.b16 %v678
  %v921 = vunpack.c.h.b16 %v678
  %v922 = vunpack.c.l.b16 %v679
  %v923 = vunpack.c.h.b16 %v679
  %v924 = vunpack.c.l.b16 %v680
  %v925 = vunpack.c.l.b16 %v681
  %v926 = vunpack.c.h.b16 %v681
  %v927 = vunpack.c.l.b16 %v682
  %v928 = vunpack.c.h.b16 %v682
  %v929 = vunpack.c.l.b16 %v683
  %v930 = vunpack.c.l.b16 %v684
  %v931 = vunpack.c.h.b16 %v684
  %v932 = vunpack.c.l.b16 %v685
  %v933 = vunpack.c.h.b16 %v685
  %v934 = vunpack.c.l.b16 %v686
  %v935 = vunpack.c.l.b16 %v687
  %v936 = vunpack.c.h.b16 %v687
  %v937 = vunpack.c.l.b16 %v688
  %v938 = vunpack.c.h.b16 %v688
  %v939 = vunpack.c.l.b16 %v689
  %v940 = vunpack.c.l.b16 %v690
  %v941 = vunpack.c.h.b16 %v690
  %v942 = vunpack.c.l.b16 %v691
  %v943 = vunpack.c.h.b16 %v691
  %v944 = vunpack.c.l.b16 %v692
  %v945 = vunpack.c.l.b16 %v693
  %v946 = vunpack.c.h.b16 %v693
  %v947 = vunpack.c.l.b16 %v694
  %v948 = vunpack.c.h.b16 %v694
  %v949 = vunpack.c.l.b16 %v695
  %v950 = vunpack.c.l.b16 %v696
  %v951 = vunpack.c.h.b16 %v696
  %v952 = vunpack.c.l.b16 %v697
  %v953 = vunpack.c.h.b16 %v697
  %v954 = vunpack.c.l.b16 %v698
  %v955 = vpack.c.b16 %v800, %v795
  %v956 = vpack.c.b16 %v801, %v796
  %v957 = vpack.c.b16 %v802, %v797
  %v958 = vpack.c.b16 %v803, %v798
  %v959 = vpack.c.b16 %v804, %v799
  %v960 = vpack.c.b16 %v810, %v805
  %v961 = vpack.c.b16 %v811, %v806
  %v962 = vpack.c.b16 %v812, %v807
  %v963 = vpack.c.b16 %v813, %v808
  %v964 = vpack.c.b16 %v814, %v809
  %v965 = vpack.c.b16 %v820, %v815
  %v966 = vpack.c.b16 %v821, %v816
  %v967 = vpack.c.b16 %v822, %v817
  %v968 = vpack.c.b16 %v823, %v818
  %v969 = vpack.c.b16 %v824, %v819
  %v970 = vpack.c.b16 %v830, %v825
  %v971 = vpack.c.b16 %v831, %v826
  %v972 = vpack.c.b16 %v832, %v827
  %v973 = vpack.c.b16 %v833, %v828
  %v974 = vpack.c.b16 %v834, %v829
  %v975 = vpack.c.b16 %v840, %v835
  %v976 = vpack.c.b16 %v841, %v836
  %v977 = vpack.c.b16 %v842, %v837
  %v978 = vpack.c.b16 %v843, %v838
  %v979 = vpack.c.b16 %v844, %v839
  %v980 = vpack.c.b16 %v850, %v845
  %v981 = vpack.c.b16 %v851, %v846
  %v982 = vpack.c.b16 %v852, %v847
  %v983 = vpack.c.b16 %v853, %v848
  %v984 = vpack.c.b16 %v854, %v849
  %v985 = vpack.c.b16 %v860, %v855
  %v986 = vpack.c.b16 %v861, %v856
  %v987 = vpack.c.b16 %v862, %v857
  %v988 = vpack.c.b16 %v863, %v858
  %v989 = vpack.c.b16 %v864, %v859
  %v990 = vpack.c.b16 %v870, %v865
  %v991 = vpack.c.b16 %v871, %v866
  %v992 = vpack.c.b16 %v872, %v867
  %v993 = vpack.c.b16 %v873, %v868
  %v994 = vpack.c.b16 %v874, %v869
  %v995 = vpack.c.b16 %v880, %v875
  %v996 = vpack.c.b16 %v881, %v876
  %v997 = vpack.c.b16 %v882, %v877
  %v998 = vpack.c.b16 %v883, %v878
  %v999 = vpack.c.b16 %v884, %v879
  %v1000 = vpack.c.b16 %v890, %v885
  %v1001 = vpack.c.b16 %v891, %v886
  %v1002 = vpack.c.b16 %v892, %v887
  %v1003 = vpack.c.b16 %v893, %v888
  %v1004 = vpack.c.b16 %v894, %v889
  %v1005 = vpack.c.b16 %v900, %v895
  %v1006 = vpack.c.b16 %v901, %v896
  %v1007 = vpack.c.b16 %v902, %v897
  %v1008 = vpack.c.b16 %v903, %v898
  %v1009 = vpack.c.b16 %v904, %v899
  %v1010 = vpack.c.b16 %v910, %v905
  %v1011 = vpack.c.b16 %v911, %v906
  %v1012 = vpack.c.b16 %v912, %v907
  %v1013 = vpack.c.b16 %v913, %v908
  %v1014 = vpack.c.b16 %v914, %v909
  %v1015 = vpack.c.b16 %v920, %v915
  %v1016 = vpack.c.b16 %v921, %v916
  %v1017 = vpack.c.b16 %v922, %v917
  %v1018 = vpack.c.b16 %v923, %v918
  %v1019 = vpack.c.b16 %v924, %v919
  %v1020 = vpack.c.b16 %v930, %v925
  %v1021 = vpack.c.b16 %v931, %v926
  %v1022 = vpack.c.b16 %v932, %v927
  %v1023 = vpack.c.b16 %v933, %v928
  %v1024 = vpack.c.b16 %v934, %v929
  %v1025 = vpack.c.b16 %v940, %v935
  %v1026 = vpack.c.b16 %v941, %v936
  %v1027 = vpack.c.b16 %v942, %v937
  %v1028 = vpack.c.b16 %v943, %v938
  %v1029 = vpack.c.b16 %v944, %v939
  %v1030 = vpack.c.b16 %v950, %v945
  %v1031 = vpack.c.b16 %v951, %v946
  %v1032 = vpack.c.b16 %v952, %v947
  %v1033 = vpack.c.b16 %v953, %v948
  %v1034 = vpack.c.b16 %v954, %v949
  %vm1099 = vcmask 523264
  %v1101 = vsel %vm1099, %v959, 0
  %v1104 = vsel %vm1099, %v964, 0
  %v1107 = vsel %vm1099, %v969, 0
  %v1110 = vsel %vm1099, %v974, 0
  %v1113 = vsel %vm1099, %v979, 0
  %v1116 = vsel %vm1099, %v984, 0
  %v1119 = vsel %vm1099, %v989, 0
  %v1122 = vsel %vm1099, %v994, 0
  %v1125 = vsel %vm1099, %v999, 0
  %v1128 = vsel %vm1099, %v1004, 0
  %v1131 = vsel %vm1099, %v1009, 0
  %v1134 = vsel %vm1099, %v1014, 0
  %v1137 = vsel %vm1099, %v1019, 0
  %v1140 = vsel %vm1099, %v1024, 0
  %v1143 = vsel %vm1099, %v1029, 0
  %v1146 = vsel %vm1099, %v1034, 0
  %1148 = vmatprep.subr.bf16.mxu0 0
  %1149 = vmatpush1.bf16.msra.mxu0 %v336
  %1150 = vmatprep.subr.bf16.mxu0 0
  %1151 = vmatpush1.bf16.msra.mxu0 %v337
  %1152 = vmatprep.subr.bf16.mxu0 0
  %1153 = vmatpush1.bf16.msra.mxu0 %v338
  %1154 = vmatprep.subr.bf16.mxu0 0
  %1155 = vmatpush1.bf16.msra.mxu0 %v339
  %1156 = vmatprep.subr.bf16.mxu0 0
  %1157 = vmatpush1.bf16.msra.mxu0 %v373
  %1158 = vmatprep.subr.bf16.mxu0 0
  %1159 = vmatpush1.bf16.msra.mxu0 %v374
  %1160 = vmatprep.subr.bf16.mxu0 0
  %1161 = vmatpush1.bf16.msra.mxu0 %v375
  %1162 = vmatprep.subr.bf16.mxu0 0
  %1163 = vmatpush1.bf16.msra.mxu0 %v376
  %1164 = vmatprep.subr.bf16.mxu0 0
  %1165 = vmatpush1.bf16.msra.mxu0 %v411
  %1166 = vmatprep.subr.bf16.mxu0 0
  %1167 = vmatpush1.bf16.msra.mxu0 %v412
  %1168 = vmatprep.subr.bf16.mxu0 0
  %1169 = vmatpush1.bf16.msra.mxu0 %v413
  %1170 = vmatprep.subr.bf16.mxu0 0
  %1171 = vmatpush1.bf16.msra.mxu0 %v414
  %1172 = vmatprep.subr.bf16.mxu0 0
  %1173 = vmatpush1.bf16.msra.mxu0 %v447
  %1174 = vmatprep.subr.bf16.mxu0 0
  %1175 = vmatpush1.bf16.msra.mxu0 %v448
  %1176 = vmatprep.subr.bf16.mxu0 0
  %1177 = vmatpush1.bf16.msra.mxu0 %v449
  %1178 = vmatprep.subr.bf16.mxu0 0
  %1179 = vmatpush1.bf16.msra.mxu0 %v450
  %1180 = vmatprep.mubr.bf16.mxu0 %v956
  %1181 = vmatmul.mubr.bf16.gmra.mrb[0].mxu0 %v955
  %v1182 = vpop.f32.mrb[0].mxu0
  %v1183 = vadd.f32 0.0, %v1182
  %v1184 = vpop.f32.mrb[0].mxu0
  %v1185 = vpop.f32.mrb[0].mxu0
  %v1186 = vadd.f32 0.0, %v1185
  %v1187 = vpop.f32.mrb[0].mxu0
  %1188 = vmatprep.mubr.bf16.mxu0 %v961
  %1189 = vmatmul.mubr.bf16.gmra.mrb[0].mxu0 %v960
  %v1190 = vpop.f32.mrb[0].mxu0
  %v1191 = vadd.f32 0.0, %v1190
  %v1192 = vpop.f32.mrb[0].mxu0
  %v1193 = vpop.f32.mrb[0].mxu0
  %v1194 = vadd.f32 0.0, %v1193
  %v1195 = vpop.f32.mrb[0].mxu0
  %1196 = vmatprep.mubr.bf16.mxu0 %v966
  %1197 = vmatmul.mubr.bf16.gmra.mrb[0].mxu0 %v965
  %v1198 = vpop.f32.mrb[0].mxu0
  %v1199 = vadd.f32 0.0, %v1198
  %v1200 = vpop.f32.mrb[0].mxu0
  %v1201 = vpop.f32.mrb[0].mxu0
  %v1202 = vadd.f32 0.0, %v1201
  %v1203 = vpop.f32.mrb[0].mxu0
  %1204 = vmatprep.mubr.bf16.mxu0 %v971
  %1205 = vmatmul.mubr.bf16.gmra.mrb[0].mxu0 %v970
  %v1206 = vpop.f32.mrb[0].mxu0
  %v1207 = vadd.f32 0.0, %v1206
  %v1208 = vpop.f32.mrb[0].mxu0
  %v1209 = vpop.f32.mrb[0].mxu0
  %v1210 = vadd.f32 0.0, %v1209
  %v1211 = vpop.f32.mrb[0].mxu0
  %1212 = vmatprep.mubr.bf16.mxu0 %v976
  %1213 = vmatmul.mubr.bf16.gmra.mrb[0].mxu0 %v975
  %v1214 = vpop.f32.mrb[0].mxu0
  %v1215 = vadd.f32 0.0, %v1214
  %v1216 = vpop.f32.mrb[0].mxu0
  %v1217 = vpop.f32.mrb[0].mxu0
  %v1218 = vadd.f32 0.0, %v1217
  %v1219 = vpop.f32.mrb[0].mxu0
  %1220 = vmatprep.mubr.bf16.mxu0 %v981
  %1221 = vmatmul.mubr.bf16.gmra.mrb[0].mxu0 %v980
  %v1222 = vpop.f32.mrb[0].mxu0
  %v1223 = vadd.f32 0.0, %v1222
  %v1224 = vpop.f32.mrb[0].mxu0
  %v1225 = vpop.f32.mrb[0].mxu0
  %v1226 = vadd.f32 0.0, %v1225
  %v1227 = vpop.f32.mrb[0].mxu0
  %1228 = vmatprep.mubr.bf16.mxu0 %v986
  %1229 = vmatmul.mubr.bf16.gmra.mrb[0].mxu0 %v985
  %v1230 = vpop.f32.mrb[0].mxu0
  %v1231 = vadd.f32 0.0, %v1230
  %v1232 = vpop.f32.mrb[0].mxu0
  %v1233 = vpop.f32.mrb[0].mxu0
  %v1234 = vadd.f32 0.0, %v1233
  %v1235 = vpop.f32.mrb[0].mxu0
  %1236 = vmatprep.mubr.bf16.mxu0 %v991
  %1237 = vmatmul.mubr.bf16.gmra.mrb[0].mxu0 %v990
  %v1238 = vpop.f32.mrb[0].mxu0
  %v1239 = vadd.f32 0.0, %v1238
  %v1240 = vpop.f32.mrb[0].mxu0
  %v1241 = vpop.f32.mrb[0].mxu0
  %v1242 = vadd.f32 0.0, %v1241
  %v1243 = vpop.f32.mrb[0].mxu0
  %1244 = vmatprep.mubr.bf16.mxu0 %v996
  %1245 = vmatmul.mubr.bf16.gmra.mrb[0].mxu0 %v995
  %v1246 = vpop.f32.mrb[0].mxu0
  %v1247 = vadd.f32 0.0, %v1246
  %v1248 = vpop.f32.mrb[0].mxu0
  %v1249 = vpop.f32.mrb[0].mxu0
  %v1250 = vadd.f32 0.0, %v1249
  %v1251 = vpop.f32.mrb[0].mxu0
  %1252 = vmatprep.mubr.bf16.mxu0 %v1001
  %1253 = vmatmul.mubr.bf16.gmra.mrb[0].mxu0 %v1000
  %v1254 = vpop.f32.mrb[0].mxu0
  %v1255 = vadd.f32 0.0, %v1254
  %v1256 = vpop.f32.mrb[0].mxu0
  %v1257 = vpop.f32.mrb[0].mxu0
  %v1258 = vadd.f32 0.0, %v1257
  %v1259 = vpop.f32.mrb[0].mxu0
  %1260 = vmatprep.mubr.bf16.mxu0 %v1006
  %1261 = vmatmul.mubr.bf16.gmra.mrb[0].mxu0 %v1005
  %v1262 = vpop.f32.mrb[0].mxu0
  %v1263 = vadd.f32 0.0, %v1262
  %v1264 = vpop.f32.mrb[0].mxu0
  %v1265 = vpop.f32.mrb[0].mxu0
  %v1266 = vadd.f32 0.0, %v1265
  %v1267 = vpop.f32.mrb[0].mxu0
  %1268 = vmatprep.mubr.bf16.mxu0 %v1011
  %1269 = vmatmul.mubr.bf16.gmra.mrb[0].mxu0 %v1010
  %v1270 = vpop.f32.mrb[0].mxu0
  %v1271 = vadd.f32 0.0, %v1270
  %v1272 = vpop.f32.mrb[0].mxu0
  %v1273 = vpop.f32.mrb[0].mxu0
  %v1274 = vadd.f32 0.0, %v1273
  %v1275 = vpop.f32.mrb[0].mxu0
  %1276 = vmatprep.mubr.bf16.mxu0 %v1016
  %1277 = vmatmul.mubr.bf16.gmra.mrb[0].mxu0 %v1015
  %v1278 = vpop.f32.mrb[0].mxu0
  %v1279 = vadd.f32 0.0, %v1278
  %v1280 = vpop.f32.mrb[0].mxu0
  %v1281 = vpop.f32.mrb[0].mxu0
  %v1282 = vadd.f32 0.0, %v1281
  %v1283 = vpop.f32.mrb[0].mxu0
  %1284 = vmatprep.mubr.bf16.mxu0 %v1021
  %1285 = vmatmul.mubr.bf16.gmra.mrb[0].mxu0 %v1020
  %v1286 = vpop.f32.mrb[0].mxu0
  %v1287 = vadd.f32 0.0, %v1286
  %v1288 = vpop.f32.mrb[0].mxu0
  %v1289 = vpop.f32.mrb[0].mxu0
  %v1290 = vadd.f32 0.0, %v1289
  %v1291 = vpop.f32.mrb[0].mxu0
  %1292 = vmatprep.mubr.bf16.mxu0 %v1026
  %1293 = vmatmul.mubr.bf16.gmra.mrb[0].mxu0 %v1025
  %v1294 = vpop.f32.mrb[0].mxu0
  %v1295 = vadd.f32 0.0, %v1294
  %v1296 = vpop.f32.mrb[0].mxu0
  %v1297 = vpop.f32.mrb[0].mxu0
  %v1298 = vadd.f32 0.0, %v1297
  %v1299 = vpop.f32.mrb[0].mxu0
  %1300 = vmatprep.mubr.bf16.mxu0 %v1031
  %1301 = vmatmul.mubr.bf16.gmra.mrb[0].mxu0 %v1030
  %v1302 = vpop.f32.mrb[0].mxu0
  %v1303 = vadd.f32 0.0, %v1302
  %v1304 = vpop.f32.mrb[0].mxu0
  %v1305 = vpop.f32.mrb[0].mxu0
  %v1306 = vadd.f32 0.0, %v1305
  %v1307 = vpop.f32.mrb[0].mxu0
  %1308 = vdwg.mxu0
  %1309 = vmatprep.subr.bf16.mxu0 0
  %1310 = vmatpush1.bf16.msra.mxu0 %v460
  %1311 = vmatprep.subr.bf16.mxu0 0
  %1312 = vmatpush1.bf16.msra.mxu0 %v461
  %1313 = vmatprep.subr.bf16.mxu0 0
  %1314 = vmatpush1.bf16.msra.mxu0 %v462
  %1315 = vmatprep.subr.bf16.mxu0 0
  %1316 = vmatpush1.bf16.msra.mxu0 %v463
  %1317 = vmatprep.subr.bf16.mxu0 0
  %1318 = vmatpush1.bf16.msra.mxu0 %v494
  %1319 = vmatprep.subr.bf16.mxu0 0
  %1320 = vmatpush1.bf16.msra.mxu0 %v495
  %1321 = vmatprep.subr.bf16.mxu0 0
  %1322 = vmatpush1.bf16.msra.mxu0 %v496
  %1323 = vmatprep.subr.bf16.mxu0 0
  %1324 = vmatpush1.bf16.msra.mxu0 %v497
  %1325 = vmatprep.subr.bf16.mxu0 0
  %1326 = vmatpush1.bf16.msra.mxu0 %v531
  %1327 = vmatprep.subr.bf16.mxu0 0
  %1328 = vmatpush1.bf16.msra.mxu0 %v532
  %1329 = vmatprep.subr.bf16.mxu0 0
  %1330 = vmatpush1.bf16.msra.mxu0 %v533
  %1331 = vmatprep.subr.bf16.mxu0 0
  %1332 = vmatpush1.bf16.msra.mxu0 %v534
  %1333 = vmatprep.subr.bf16.mxu0 0
  %1334 = vmatpush1.bf16.msra.mxu0 %v565
  %1335 = vmatprep.subr.bf16.mxu0 0
  %1336 = vmatpush1.bf16.msra.mxu0 %v566
  %1337 = vmatprep.subr.bf16.mxu0 0
  %1338 = vmatpush1.bf16.msra.mxu0 %v567
  %1339 = vmatprep.subr.bf16.mxu0 0
  %1340 = vmatpush1.bf16.msra.mxu0 %v568
  %1341 = vmatprep.mubr.bf16.mxu0 %v958
  %1342 = vmatmul.mubr.bf16.gmra.mrb[0].mxu0 %v957
  %v1343 = vpop.f32.mrb[0].mxu0
  %v1344 = vadd.f32 %v1183, %v1343
  %v1345 = vpop.f32.mrb[0].mxu0
  %v1346 = vpop.f32.mrb[0].mxu0
  %v1347 = vadd.f32 %v1186, %v1346
  %v1348 = vpop.f32.mrb[0].mxu0
  %1349 = vmatprep.mubr.bf16.mxu0 %v963
  %1350 = vmatmul.mubr.bf16.gmra.mrb[0].mxu0 %v962
  %v1351 = vpop.f32.mrb[0].mxu0
  %v1352 = vadd.f32 %v1191, %v1351
  %v1353 = vpop.f32.mrb[0].mxu0
  %v1354 = vpop.f32.mrb[0].mxu0
  %v1355 = vadd.f32 %v1194, %v1354
  %v1356 = vpop.f32.mrb[0].mxu0
  %1357 = vmatprep.mubr.bf16.mxu0 %v968
  %1358 = vmatmul.mubr.bf16.gmra.mrb[0].mxu0 %v967
  %v1359 = vpop.f32.mrb[0].mxu0
  %v1360 = vadd.f32 %v1199, %v1359
  %v1361 = vpop.f32.mrb[0].mxu0
  %v1362 = vpop.f32.mrb[0].mxu0
  %v1363 = vadd.f32 %v1202, %v1362
  %v1364 = vpop.f32.mrb[0].mxu0
  %1365 = vmatprep.mubr.bf16.mxu0 %v973
  %1366 = vmatmul.mubr.bf16.gmra.mrb[0].mxu0 %v972
  %v1367 = vpop.f32.mrb[0].mxu0
  %v1368 = vadd.f32 %v1207, %v1367
  %v1369 = vpop.f32.mrb[0].mxu0
  %v1370 = vpop.f32.mrb[0].mxu0
  %v1371 = vadd.f32 %v1210, %v1370
  %v1372 = vpop.f32.mrb[0].mxu0
  %1373 = vmatprep.mubr.bf16.mxu0 %v978
  %1374 = vmatmul.mubr.bf16.gmra.mrb[0].mxu0 %v977
  %v1375 = vpop.f32.mrb[0].mxu0
  %v1376 = vadd.f32 %v1215, %v1375
  %v1377 = vpop.f32.mrb[0].mxu0
  %v1378 = vpop.f32.mrb[0].mxu0
  %v1379 = vadd.f32 %v1218, %v1378
  %v1380 = vpop.f32.mrb[0].mxu0
  %1381 = vmatprep.mubr.bf16.mxu0 %v983
  %1382 = vmatmul.mubr.bf16.gmra.mrb[0].mxu0 %v982
  %v1383 = vpop.f32.mrb[0].mxu0
  %v1384 = vadd.f32 %v1223, %v1383
  %v1385 = vpop.f32.mrb[0].mxu0
  %v1386 = vpop.f32.mrb[0].mxu0
  %v1387 = vadd.f32 %v1226, %v1386
  %v1388 = vpop.f32.mrb[0].mxu0
  %1389 = vmatprep.mubr.bf16.mxu0 %v988
  %1390 = vmatmul.mubr.bf16.gmra.mrb[0].mxu0 %v987
  %v1391 = vpop.f32.mrb[0].mxu0
  %v1392 = vadd.f32 %v1231, %v1391
  %v1393 = vpop.f32.mrb[0].mxu0
  %v1394 = vpop.f32.mrb[0].mxu0
  %v1395 = vadd.f32 %v1234, %v1394
  %v1396 = vpop.f32.mrb[0].mxu0
  %1397 = vmatprep.mubr.bf16.mxu0 %v993
  %1398 = vmatmul.mubr.bf16.gmra.mrb[0].mxu0 %v992
  %v1399 = vpop.f32.mrb[0].mxu0
  %v1400 = vadd.f32 %v1239, %v1399
  %v1401 = vpop.f32.mrb[0].mxu0
  %v1402 = vpop.f32.mrb[0].mxu0
  %v1403 = vadd.f32 %v1242, %v1402
  %v1404 = vpop.f32.mrb[0].mxu0
  %1405 = vmatprep.mubr.bf16.mxu0 %v998
  %1406 = vmatmul.mubr.bf16.gmra.mrb[0].mxu0 %v997
  %v1407 = vpop.f32.mrb[0].mxu0
  %v1408 = vadd.f32 %v1247, %v1407
  %v1409 = vpop.f32.mrb[0].mxu0
  %v1410 = vpop.f32.mrb[0].mxu0
  %v1411 = vadd.f32 %v1250, %v1410
  %v1412 = vpop.f32.mrb[0].mxu0
  %1413 = vmatprep.mubr.bf16.mxu0 %v1003
  %1414 = vmatmul.mubr.bf16.gmra.mrb[0].mxu0 %v1002
  %v1415 = vpop.f32.mrb[0].mxu0
  %v1416 = vadd.f32 %v1255, %v1415
  %v1417 = vpop.f32.mrb[0].mxu0
  %v1418 = vpop.f32.mrb[0].mxu0
  %v1419 = vadd.f32 %v1258, %v1418
  %v1420 = vpop.f32.mrb[0].mxu0
  %1421 = vmatprep.mubr.bf16.mxu0 %v1008
  %1422 = vmatmul.mubr.bf16.gmra.mrb[0].mxu0 %v1007
  %v1423 = vpop.f32.mrb[0].mxu0
  %v1424 = vadd.f32 %v1263, %v1423
  %v1425 = vpop.f32.mrb[0].mxu0
  %v1426 = vpop.f32.mrb[0].mxu0
  %v1427 = vadd.f32 %v1266, %v1426
  %v1428 = vpop.f32.mrb[0].mxu0
  %1429 = vmatprep.mubr.bf16.mxu0 %v1013
  %1430 = vmatmul.mubr.bf16.gmra.mrb[0].mxu0 %v1012
  %v1431 = vpop.f32.mrb[0].mxu0
  %v1432 = vadd.f32 %v1271, %v1431
  %v1433 = vpop.f32.mrb[0].mxu0
  %v1434 = vpop.f32.mrb[0].mxu0
  %v1435 = vadd.f32 %v1274, %v1434
  %v1436 = vpop.f32.mrb[0].mxu0
  %1437 = vmatprep.mubr.bf16.mxu0 %v1018
  %1438 = vmatmul.mubr.bf16.gmra.mrb[0].mxu0 %v1017
  %v1439 = vpop.f32.mrb[0].mxu0
  %v1440 = vadd.f32 %v1279, %v1439
  %v1441 = vpop.f32.mrb[0].mxu0
  %v1442 = vpop.f32.mrb[0].mxu0
  %v1443 = vadd.f32 %v1282, %v1442
  %v1444 = vpop.f32.mrb[0].mxu0
  %1445 = vmatprep.mubr.bf16.mxu0 %v1023
  %1446 = vmatmul.mubr.bf16.gmra.mrb[0].mxu0 %v1022
  %v1447 = vpop.f32.mrb[0].mxu0
  %v1448 = vadd.f32 %v1287, %v1447
  %v1449 = vpop.f32.mrb[0].mxu0
  %v1450 = vpop.f32.mrb[0].mxu0
  %v1451 = vadd.f32 %v1290, %v1450
  %v1452 = vpop.f32.mrb[0].mxu0
  %1453 = vmatprep.mubr.bf16.mxu0 %v1028
  %1454 = vmatmul.mubr.bf16.gmra.mrb[0].mxu0 %v1027
  %v1455 = vpop.f32.mrb[0].mxu0
  %v1456 = vadd.f32 %v1295, %v1455
  %v1457 = vpop.f32.mrb[0].mxu0
  %v1458 = vpop.f32.mrb[0].mxu0
  %v1459 = vadd.f32 %v1298, %v1458
  %v1460 = vpop.f32.mrb[0].mxu0
  %1461 = vmatprep.mubr.bf16.mxu0 %v1033
  %1462 = vmatmul.mubr.bf16.gmra.mrb[0].mxu0 %v1032
  %v1463 = vpop.f32.mrb[0].mxu0
  %v1464 = vadd.f32 %v1303, %v1463
  %v1465 = vpop.f32.mrb[0].mxu0
  %v1466 = vpop.f32.mrb[0].mxu0
  %v1467 = vadd.f32 %v1306, %v1466
  %v1468 = vpop.f32.mrb[0].mxu0
  %1469 = vdwg.mxu0
  %1470 = vmatprep.subr.bf16.mxu0 0
  %1471 = vmatpush1.bf16.msra.mxu0 %v599
  %1472 = vmatprep.subr.bf16.mxu0 0
  %1473 = vmatpush1.bf16.msra.mxu0 %v600
  %1474 = vmatprep.subr.bf16.mxu0 0
  %1475 = vmatpush1.bf16.msra.mxu0 %v601
  %1476 = vmatprep.subr.bf16.mxu0 0
  %1477 = vmatpush1.bf16.msra.mxu0 %v602
  %1478 = vmatprep.subr.bf16.mxu0 0
  %1479 = vmatpush1.bf16.msra.mxu0 0
  %1480 = vmatprep.subr.bf16.mxu0 0
  %1481 = vmatpush1.bf16.msra.mxu0 0
  %1482 = vmatprep.subr.bf16.mxu0 0
  %1483 = vmatpush1.bf16.msra.mxu0 0
  %1484 = vmatprep.subr.bf16.mxu0 0
  %1485 = vmatpush1.bf16.msra.mxu0 0
  %1486 = vmatprep.subr.bf16.mxu0 0
  %1487 = vmatpush1.bf16.msra.mxu0 0
  %1488 = vmatprep.subr.bf16.mxu0 0
  %1489 = vmatpush1.bf16.msra.mxu0 0
  %1490 = vmatprep.subr.bf16.mxu0 0
  %1491 = vmatpush1.bf16.msra.mxu0 0
  %1492 = vmatprep.subr.bf16.mxu0 0
  %1493 = vmatpush1.bf16.msra.mxu0 0
  %1494 = vmatprep.subr.bf16.mxu0 0
  %1495 = vmatpush1.bf16.msra.mxu0 0
  %1496 = vmatprep.subr.bf16.mxu0 0
  %1497 = vmatpush1.bf16.msra.mxu0 0
  %1498 = vmatprep.subr.bf16.mxu0 0
  %1499 = vmatpush1.bf16.msra.mxu0 0
  %1500 = vmatprep.subr.bf16.mxu0 0
  %1501 = vmatpush1.bf16.msra.mxu0 0
  %1502 = vmatprep.mubr.bf16.mxu0 0
  %1503 = vmatmul.mubr.bf16.gmra.mrb[0].mxu0 %v1101
  %v1504 = vpop.f32.mrb[0].mxu0
  %v1505 = vadd.f32 %v1344, %v1504
  %v1506 = vpop.f32.mrb[0].mxu0
  %v1507 = vpop.f32.mrb[0].mxu0
  %v1508 = vadd.f32 %v1347, %v1507
  %v1509 = vpop.f32.mrb[0].mxu0
  %1510 = vmatprep.mubr.bf16.mxu0 0
  %1511 = vmatmul.mubr.bf16.gmra.mrb[0].mxu0 %v1104
  %v1512 = vpop.f32.mrb[0].mxu0
  %v1513 = vadd.f32 %v1352, %v1512
  %v1514 = vpop.f32.mrb[0].mxu0
  %v1515 = vpop.f32.mrb[0].mxu0
  %v1516 = vadd.f32 %v1355, %v1515
  %v1517 = vpop.f32.mrb[0].mxu0
  %1518 = vmatprep.mubr.bf16.mxu0 0
  %1519 = vmatmul.mubr.bf16.gmra.mrb[0].mxu0 %v1107
  %v1520 = vpop.f32.mrb[0].mxu0
  %v1521 = vadd.f32 %v1360, %v1520
  %v1522 = vpop.f32.mrb[0].mxu0
  %v1523 = vpop.f32.mrb[0].mxu0
  %v1524 = vadd.f32 %v1363, %v1523
  %v1525 = vpop.f32.mrb[0].mxu0
  %1526 = vmatprep.mubr.bf16.mxu0 0
  %1527 = vmatmul.mubr.bf16.gmra.mrb[0].mxu0 %v1110
  %v1528 = vpop.f32.mrb[0].mxu0
  %v1529 = vadd.f32 %v1368, %v1528
  %v1530 = vpop.f32.mrb[0].mxu0
  %v1531 = vpop.f32.mrb[0].mxu0
  %v1532 = vadd.f32 %v1371, %v1531
  %v1533 = vpop.f32.mrb[0].mxu0
  %1534 = vmatprep.mubr.bf16.mxu0 0
  %1535 = vmatmul.mubr.bf16.gmra.mrb[0].mxu0 %v1113
  %v1536 = vpop.f32.mrb[0].mxu0
  %v1537 = vadd.f32 %v1376, %v1536
  %v1538 = vpop.f32.mrb[0].mxu0
  %v1539 = vpop.f32.mrb[0].mxu0
  %v1540 = vadd.f32 %v1379, %v1539
  %v1541 = vpop.f32.mrb[0].mxu0
  %1542 = vmatprep.mubr.bf16.mxu0 0
  %1543 = vmatmul.mubr.bf16.gmra.mrb[0].mxu0 %v1116
  %v1544 = vpop.f32.mrb[0].mxu0
  %v1545 = vadd.f32 %v1384, %v1544
  %v1546 = vpop.f32.mrb[0].mxu0
  %v1547 = vpop.f32.mrb[0].mxu0
  %v1548 = vadd.f32 %v1387, %v1547
  %v1549 = vpop.f32.mrb[0].mxu0
  %1550 = vmatprep.mubr.bf16.mxu0 0
  %1551 = vmatmul.mubr.bf16.gmra.mrb[0].mxu0 %v1119
  %v1552 = vpop.f32.mrb[0].mxu0
  %v1553 = vadd.f32 %v1392, %v1552
  %v1554 = vpop.f32.mrb[0].mxu0
  %v1555 = vpop.f32.mrb[0].mxu0
  %v1556 = vadd.f32 %v1395, %v1555
  %v1557 = vpop.f32.mrb[0].mxu0
  %1558 = vmatprep.mubr.bf16.mxu0 0
  %1559 = vmatmul.mubr.bf16.gmra.mrb[0].mxu0 %v1122
  %v1560 = vpop.f32.mrb[0].mxu0
  %v1561 = vadd.f32 %v1400, %v1560
  %v1562 = vpop.f32.mrb[0].mxu0
  %v1563 = vpop.f32.mrb[0].mxu0
  %v1564 = vadd.f32 %v1403, %v1563
  %v1565 = vpop.f32.mrb[0].mxu0
  %1566 = vmatprep.mubr.bf16.mxu0 0
  %1567 = vmatmul.mubr.bf16.gmra.mrb[0].mxu0 %v1125
  %v1568 = vpop.f32.mrb[0].mxu0
  %v1569 = vadd.f32 %v1408, %v1568
  %v1570 = vpop.f32.mrb[0].mxu0
  %v1571 = vpop.f32.mrb[0].mxu0
  %v1572 = vadd.f32 %v1411, %v1571
  %v1573 = vpop.f32.mrb[0].mxu0
  %1574 = vmatprep.mubr.bf16.mxu0 0
  %1575 = vmatmul.mubr.bf16.gmra.mrb[0].mxu0 %v1128
  %v1576 = vpop.f32.mrb[0].mxu0
  %v1577 = vadd.f32 %v1416, %v1576
  %v1578 = vpop.f32.mrb[0].mxu0
  %v1579 = vpop.f32.mrb[0].mxu0
  %v1580 = vadd.f32 %v1419, %v1579
  %v1581 = vpop.f32.mrb[0].mxu0
  %1582 = vmatprep.mubr.bf16.mxu0 0
  %1583 = vmatmul.mubr.bf16.gmra.mrb[0].mxu0 %v1131
  %v1584 = vpop.f32.mrb[0].mxu0
  %v1585 = vadd.f32 %v1424, %v1584
  %v1586 = vpop.f32.mrb[0].mxu0
  %v1587 = vpop.f32.mrb[0].mxu0
  %v1588 = vadd.f32 %v1427, %v1587
  %v1589 = vpop.f32.mrb[0].mxu0
  %1590 = vmatprep.mubr.bf16.mxu0 0
  %1591 = vmatmul.mubr.bf16.gmra.mrb[0].mxu0 %v1134
  %v1592 = vpop.f32.mrb[0].mxu0
  %v1593 = vadd.f32 %v1432, %v1592
  %v1594 = vpop.f32.mrb[0].mxu0
  %v1595 = vpop.f32.mrb[0].mxu0
  %v1596 = vadd.f32 %v1435, %v1595
  %v1597 = vpop.f32.mrb[0].mxu0
  %1598 = vmatprep.mubr.bf16.mxu0 0
  %1599 = vmatmul.mubr.bf16.gmra.mrb[0].mxu0 %v1137
  %v1600 = vpop.f32.mrb[0].mxu0
  %v1601 = vadd.f32 %v1440, %v1600
  %v1602 = vpop.f32.mrb[0].mxu0
  %v1603 = vpop.f32.mrb[0].mxu0
  %v1604 = vadd.f32 %v1443, %v1603
  %v1605 = vpop.f32.mrb[0].mxu0
  %1606 = vmatprep.mubr.bf16.mxu0 0
  %1607 = vmatmul.mubr.bf16.gmra.mrb[0].mxu0 %v1140
  %v1608 = vpop.f32.mrb[0].mxu0
  %v1609 = vadd.f32 %v1448, %v1608
  %v1610 = vpop.f32.mrb[0].mxu0
  %v1611 = vpop.f32.mrb[0].mxu0
  %v1612 = vadd.f32 %v1451, %v1611
  %v1613 = vpop.f32.mrb[0].mxu0
  %1614 = vmatprep.mubr.bf16.mxu0 0
  %1615 = vmatmul.mubr.bf16.gmra.mrb[0].mxu0 %v1143
  %v1616 = vpop.f32.mrb[0].mxu0
  %v1617 = vadd.f32 %v1456, %v1616
  %v1618 = vpop.f32.mrb[0].mxu0
  %v1619 = vpop.f32.mrb[0].mxu0
  %v1620 = vadd.f32 %v1459, %v1619
  %v1621 = vpop.f32.mrb[0].mxu0
  %1622 = vmatprep.mubr.bf16.mxu0 0
  %1623 = vmatmul.mubr.bf16.gmra.mrb[0].mxu0 %v1146
  %v1624 = vpop.f32.mrb[0].mxu0
  %v1625 = vadd.f32 %v1464, %v1624
  %v1626 = vpop.f32.mrb[0].mxu0
  %v1627 = vpop.f32.mrb[0].mxu0
  %v1628 = vadd.f32 %v1467, %v1627
  %v1629 = vpop.f32.mrb[0].mxu0
  %1630 = vdwg.mxu0
  %1631 = vst.msk [vmem:[%s4] sm:$0xff] %vm28, %v1505
  %1632 = vst.msk [vmem:[%s4 + $0x8] sm:$0xff] %vm28, %v1508
  %1633 = vst.msk [vmem:[%s4 + $0x10] sm:$0xff] %vm28, %v1513
  %1634 = vst.msk [vmem:[%s4 + $0x18] sm:$0xff] %vm28, %v1516
  %1635 = vst.msk [vmem:[%s4 + $0x20] sm:$0xff] %vm28, %v1521
  %1636 = vst.msk [vmem:[%s4 + $0x28] sm:$0xff] %vm28, %v1524
  %1637 = vst.msk [vmem:[%s4 + $0x30] sm:$0xff] %vm28, %v1529
  %1638 = vst.msk [vmem:[%s4 + $0x38] sm:$0xff] %vm28, %v1532
  %1639 = vst.msk [vmem:[%s4 + $0x40] sm:$0xff] %vm28, %v1537
  %1640 = vst.msk [vmem:[%s4 + $0x48] sm:$0xff] %vm28, %v1540
  %1641 = vst.msk [vmem:[%s4 + $0x50] sm:$0xff] %vm28, %v1545
  %1642 = vst.msk [vmem:[%s4 + $0x58] sm:$0xff] %vm28, %v1548
  %1643 = vst.msk [vmem:[%s4 + $0x60] sm:$0xff] %vm28, %v1553
  %1644 = vst.msk [vmem:[%s4 + $0x68] sm:$0xff] %vm28, %v1556
  %1645 = vst.msk [vmem:[%s4 + $0x70] sm:$0xff] %vm28, %v1561
  %1646 = vst.msk [vmem:[%s4 + $0x78] sm:$0xff] %vm28, %v1564
  %1647 = vst.msk [vmem:[%s4 + $0x80] sm:$0xff] %vm28, %v1569
  %1648 = vst.msk [vmem:[%s4 + $0x88] sm:$0xff] %vm28, %v1572
  %1649 = vst.msk [vmem:[%s4 + $0x90] sm:$0xff] %vm28, %v1577
  %1650 = vst.msk [vmem:[%s4 + $0x98] sm:$0xff] %vm28, %v1580
  %1651 = vst.msk [vmem:[%s4 + $0xa0] sm:$0xff] %vm28, %v1585
  %1652 = vst.msk [vmem:[%s4 + $0xa8] sm:$0xff] %vm28, %v1588
  %1653 = vst.msk [vmem:[%s4 + $0xb0] sm:$0xff] %vm28, %v1593
  %1654 = vst.msk [vmem:[%s4 + $0xb8] sm:$0xff] %vm28, %v1596
  %1655 = vst.msk [vmem:[%s4 + $0xc0] sm:$0xff] %vm28, %v1601
  %1656 = vst.msk [vmem:[%s4 + $0xc8] sm:$0xff] %vm28, %v1604
  %1657 = vst.msk [vmem:[%s4 + $0xd0] sm:$0xff] %vm28, %v1609
  %1658 = vst.msk [vmem:[%s4 + $0xd8] sm:$0xff] %vm28, %v1612
  %1659 = vst.msk [vmem:[%s4 + $0xe0] sm:$0xff] %vm28, %v1617
  %1660 = vst.msk [vmem:[%s4 + $0xe8] sm:$0xff] %vm28, %v1620
  %1661 = vst.msk [vmem:[%s4 + $0xf0] sm:$0xff] %vm28, %v1625
  %1662 = vst.msk [vmem:[%s4 + $0xf8] sm:$0xff] %vm28, %v1628
  // Predicated region
  $region18: #{kitti_conv_decoder_forward.6} parent=0 // pred_check
    _
  $region19: #{kitti_conv_decoder_forward.6} parent=0 // pred_check_branch
    %1664 = sbr.rel (0) target = $region21
  $region20: #{kitti_conv_decoder_forward.6} parent=0 // pred_region
    _
  $region21: #{kitti_conv_decoder_forward.6} parent=0 // pred_fallthru
    _
  // Predicated region
  $region22: #{kitti_conv_decoder_forward.6} parent=0 // pred_check
    _
  $region23: #{kitti_conv_decoder_forward.6} parent=0 // pred_check_branch
    %1666 = sbr.rel (0) target = $region25
  $region24: #{kitti_conv_decoder_forward.6} parent=0 // pred_region
    _
  $region25: #{kitti_conv_decoder_forward.6} parent=0 // pred_fallthru
    _

// kernel: kitti_conv_decoder_forward.7
$region0: #{kitti_conv_decoder_forward.7}
  #allocation0 [shape = 'u32[]', space=smem, size = 0x4, offset = 0x4, fixed_abs, tag = 'smem constant byte address 0x4 - core index']
  #allocation1 [shape = 'u32[144,128]{1,0:T(1,128)}', space=vmem, size = 0x12000, scoped, tag = 'internal scratch']
  %s0 = inlined_call_operand.vmem [shape: f32[64,128], index: 0, kind: input, shape index: {}]
  %s1 = inlined_call_operand.vmem [shape: f32[64,1], index: 1, kind: input, shape index: {}]
  %s2 = inlined_call_operand.vmem [shape: f32[64,1], index: 2, kind: input, shape index: {}]
  %s3 = inlined_call_operand.vmem [shape: bf16[128,576], index: 3, kind: input, shape index: {}]
  %s4 = inlined_call_operand.vmem [shape: f32[128,128], index: 4, kind: output, shape index: {}]
  %s5 = sld [smem:[#allocation0]]
  $region26: #{kitti_conv_decoder_forward.7} parent=0
    _
  %s7 = ssub.s32 1, %s5
  %s8 = scalar_select 0, %s7, %s5
  // Predicated region
  $region2: #{kitti_conv_decoder_forward.7} parent=0 // pred_check
    _
  $region3: #{kitti_conv_decoder_forward.7} parent=0 // pred_check_branch
    %10 = sbr.rel (0) target = $region5
  $region4: #{kitti_conv_decoder_forward.7} parent=0 // pred_region
    _
  $region5: #{kitti_conv_decoder_forward.7} parent=0 // pred_fallthru
    _
  // Predicated region
  $region6: #{kitti_conv_decoder_forward.7} parent=0 // pred_check
    _
  $region7: #{kitti_conv_decoder_forward.7} parent=0 // pred_check_branch
    %12 = sbr.rel (0) target = $region9
  $region8: #{kitti_conv_decoder_forward.7} parent=0 // pred_region
    _
  $region9: #{kitti_conv_decoder_forward.7} parent=0 // pred_fallthru
    _
  // Predicated region
  $region10: #{kitti_conv_decoder_forward.7} parent=0 // pred_check
    _
  $region11: #{kitti_conv_decoder_forward.7} parent=0 // pred_check_branch
    %14 = sbr.rel (0) target = $region13
  $region12: #{kitti_conv_decoder_forward.7} parent=0 // pred_region
    _
  $region13: #{kitti_conv_decoder_forward.7} parent=0 // pred_fallthru
    _
  // Predicated region
  $region14: #{kitti_conv_decoder_forward.7} parent=0 // pred_check
    _
  $region15: #{kitti_conv_decoder_forward.7} parent=0 // pred_check_branch
    %16 = sbr.rel (0) target = $region17
  $region16: #{kitti_conv_decoder_forward.7} parent=0 // pred_region
    _
  $region17: #{kitti_conv_decoder_forward.7} parent=0 // pred_fallthru
    _
  %v20 = vld [vmem:[%s0] sm:$0xff]
  %v21 = vld [vmem:[%s0 + $0x8] sm:$0xff]
  %v22 = vld [vmem:[%s0 + $0x10] sm:$0xff]
  %v23 = vld [vmem:[%s0 + $0x18] sm:$0xff]
  %v24 = vld [vmem:[%s0 + $0x20] sm:$0xff]
  %v25 = vld [vmem:[%s0 + $0x28] sm:$0xff]
  %v26 = vld [vmem:[%s0 + $0x30] sm:$0xff]
  %v27 = vld [vmem:[%s0 + $0x38] sm:$0xff]
  %28 = vadd.xlane.f32.xlu0 %v20
  %v29 = vpop.xlane.xlu0 %28
  %30 = vadd.xlane.f32.xlu0 %v21
  %v31 = vpop.xlane.xlu0 %30
  %32 = vadd.xlane.f32.xlu0 %v22
  %v33 = vpop.xlane.xlu0 %32
  %34 = vadd.xlane.f32.xlu0 %v23
  %v35 = vpop.xlane.xlu0 %34
  %36 = vadd.xlane.f32.xlu0 %v24
  %v37 = vpop.xlane.xlu0 %36
  %38 = vadd.xlane.f32.xlu0 %v25
  %v39 = vpop.xlane.xlu0 %38
  %40 = vadd.xlane.f32.xlu0 %v26
  %v41 = vpop.xlane.xlu0 %40
  %42 = vadd.xlane.f32.xlu0 %v27
  %v43 = vpop.xlane.xlu0 %42
  %v44 = vmul.f32 %v20, %v20
  %v45 = vmul.f32 %v21, %v21
  %v46 = vmul.f32 %v22, %v22
  %v47 = vmul.f32 %v23, %v23
  %v48 = vmul.f32 %v24, %v24
  %v49 = vmul.f32 %v25, %v25
  %v50 = vmul.f32 %v26, %v26
  %v51 = vmul.f32 %v27, %v27
  %52 = vadd.xlane.f32.xlu0 %v44
  %v53 = vpop.xlane.xlu0 %52
  %54 = vadd.xlane.f32.xlu0 %v45
  %v55 = vpop.xlane.xlu0 %54
  %56 = vadd.xlane.f32.xlu0 %v46
  %v57 = vpop.xlane.xlu0 %56
  %58 = vadd.xlane.f32.xlu0 %v47
  %v59 = vpop.xlane.xlu0 %58
  %60 = vadd.xlane.f32.xlu0 %v48
  %v61 = vpop.xlane.xlu0 %60
  %62 = vadd.xlane.f32.xlu0 %v49
  %v63 = vpop.xlane.xlu0 %62
  %64 = vadd.xlane.f32.xlu0 %v50
  %v65 = vpop.xlane.xlu0 %64
  %66 = vadd.xlane.f32.xlu0 %v51
  %v67 = vpop.xlane.xlu0 %66
  %v68 = vmul.f32 %v29, 0.0078125
  %v69 = vmul.f32 %v31, 0.0078125
  %v70 = vmul.f32 %v33, 0.0078125
  %v71 = vmul.f32 %v35, 0.0078125
  %v72 = vmul.f32 %v37, 0.0078125
  %v73 = vmul.f32 %v39, 0.0078125
  %v74 = vmul.f32 %v41, 0.0078125
  %v75 = vmul.f32 %v43, 0.0078125
  %v76 = vmul.f32 %v53, 0.0078125
  %v77 = vmul.f32 %v55, 0.0078125
  %v78 = vmul.f32 %v57, 0.0078125
  %v79 = vmul.f32 %v59, 0.0078125
  %v80 = vmul.f32 %v61, 0.0078125
  %v81 = vmul.f32 %v63, 0.0078125
  %v82 = vmul.f32 %v65, 0.0078125
  %v83 = vmul.f32 %v67, 0.0078125
  %v84 = vmul.f32 %v68, %v68
  %v85 = vmul.f32 %v69, %v69
  %v86 = vmul.f32 %v70, %v70
  %v87 = vmul.f32 %v71, %v71
  %v88 = vmul.f32 %v72, %v72
  %v89 = vmul.f32 %v73, %v73
  %v90 = vmul.f32 %v74, %v74
  %v91 = vmul.f32 %v75, %v75
  %v92 = vsub.f32 %v76, %v84
  %v93 = vsub.f32 %v77, %v85
  %v94 = vsub.f32 %v78, %v86
  %v95 = vsub.f32 %v79, %v87
  %v96 = vsub.f32 %v80, %v88
  %v97 = vsub.f32 %v81, %v89
  %v98 = vsub.f32 %v82, %v90
  %v99 = vsub.f32 %v83, %v91
  %v100 = vmax.f32 %v92, 0.0
  %v101 = vmax.f32 %v93, 0.0
  %v102 = vmax.f32 %v94, 0.0
  %v103 = vmax.f32 %v95, 0.0
  %v104 = vmax.f32 %v96, 0.0
  %v105 = vmax.f32 %v97, 0.0
  %v106 = vmax.f32 %v98, 0.0
  %v107 = vmax.f32 %v99, 0.0
  %v108 = vld [vmem:[%s1] sm:$0xff]
  %v109 = vld [vmem:[%s1 + $0x8] sm:$0xff]
  %v110 = vld [vmem:[%s1 + $0x10] sm:$0xff]
  %v111 = vld [vmem:[%s1 + $0x18] sm:$0xff]
  %v112 = vld [vmem:[%s1 + $0x20] sm:$0xff]
  %v113 = vld [vmem:[%s1 + $0x28] sm:$0xff]
  %v114 = vld [vmem:[%s1 + $0x30] sm:$0xff]
  %v115 = vld [vmem:[%s1 + $0x38] sm:$0xff]
  %v116 = vadd.f32 %v100, 1e-05
  %v117 = vadd.f32 %v101, 1e-05
  %v118 = vadd.f32 %v102, 1e-05
  %v119 = vadd.f32 %v103, 1e-05
  %v120 = vadd.f32 %v104, 1e-05
  %v121 = vadd.f32 %v105, 1e-05
  %v122 = vadd.f32 %v106, 1e-05
  %v123 = vadd.f32 %v107, 1e-05
  %v124 = vrsqrt.pop %v116
  %v125 = vrsqrt.pop %v117
  %v126 = vrsqrt.pop %v118
  %v127 = vrsqrt.pop %v119
  %v128 = vrsqrt.pop %v120
  %v129 = vrsqrt.pop %v121
  %v130 = vrsqrt.pop %v122
  %v131 = vrsqrt.pop %v123
  %v132 = vmul.f32 %v108, %v124
  %v133 = vmul.f32 %v109, %v125
  %v134 = vmul.f32 %v110, %v126
  %v135 = vmul.f32 %v111, %v127
  %v136 = vmul.f32 %v112, %v128
  %v137 = vmul.f32 %v113, %v129
  %v138 = vmul.f32 %v114, %v130
  %v139 = vmul.f32 %v115, %v131
  %v140 = vld [vmem:[%s2] sm:$0xff]
  %v141 = vld [vmem:[%s2 + $0x8] sm:$0xff]
  %v142 = vld [vmem:[%s2 + $0x10] sm:$0xff]
  %v143 = vld [vmem:[%s2 + $0x18] sm:$0xff]
  %v144 = vld [vmem:[%s2 + $0x20] sm:$0xff]
  %v145 = vld [vmem:[%s2 + $0x28] sm:$0xff]
  %v146 = vld [vmem:[%s2 + $0x30] sm:$0xff]
  %v147 = vld [vmem:[%s2 + $0x38] sm:$0xff]
  %v148 = vmul.f32 %v68, %v132
  %v149 = vmul.f32 %v69, %v133
  %v150 = vmul.f32 %v70, %v134
  %v151 = vmul.f32 %v71, %v135
  %v152 = vmul.f32 %v72, %v136
  %v153 = vmul.f32 %v73, %v137
  %v154 = vmul.f32 %v74, %v138
  %v155 = vmul.f32 %v75, %v139
  %v156 = vsub.f32 %v140, %v148
  %v157 = vsub.f32 %v141, %v149
  %v158 = vsub.f32 %v142, %v150
  %v159 = vsub.f32 %v143, %v151
  %v160 = vsub.f32 %v144, %v152
  %v161 = vsub.f32 %v145, %v153
  %v162 = vsub.f32 %v146, %v154
  %v163 = vsub.f32 %v147, %v155
  %165 = vset.pattern.permute.xlu0 0
  %166 = vperm.xlu0 %165, %v132
  %v167 = vpop.permute.xlu0 %166
  %170 = vset.pattern.permute.xlu0 0
  %171 = vperm.xlu0 %170, %v133
  %v172 = vpop.permute.xlu0 %171
  %175 = vset.pattern.permute.xlu0 0
  %176 = vperm.xlu0 %175, %v134
  %v177 = vpop.permute.xlu0 %176
  %180 = vset.pattern.permute.xlu0 0
  %181 = vperm.xlu0 %180, %v135
  %v182 = vpop.permute.xlu0 %181
  %185 = vset.pattern.permute.xlu0 0
  %186 = vperm.xlu0 %185, %v136
  %v187 = vpop.permute.xlu0 %186
  %190 = vset.pattern.permute.xlu0 0
  %191 = vperm.xlu0 %190, %v137
  %v192 = vpop.permute.xlu0 %191
  %195 = vset.pattern.permute.xlu0 0
  %196 = vperm.xlu0 %195, %v138
  %v197 = vpop.permute.xlu0 %196
  %200 = vset.pattern.permute.xlu0 0
  %201 = vperm.xlu0 %200, %v139
  %v202 = vpop.permute.xlu0 %201
  %v204 = vmul.f32 %v20, %v167
  %v205 = vmul.f32 %v21, %v172
  %v206 = vmul.f32 %v22, %v177
  %v207 = vmul.f32 %v23, %v182
  %v208 = vmul.f32 %v24, %v187
  %v209 = vmul.f32 %v25, %v192
  %v210 = vmul.f32 %v26, %v197
  %v211 = vmul.f32 %v27, %v202
  %213 = vset.pattern.permute.xlu0 0
  %214 = vperm.xlu0 %213, %v156
  %v215 = vpop.permute.xlu0 %214
  %218 = vset.pattern.permute.xlu0 0
  %219 = vperm.xlu0 %218, %v157
  %v220 = vpop.permute.xlu0 %219
  %223 = vset.pattern.permute.xlu0 0
  %224 = vperm.xlu0 %223, %v158
  %v225 = vpop.permute.xlu0 %224
  %228 = vset.pattern.permute.xlu0 0
  %229 = vperm.xlu0 %228, %v159
  %v230 = vpop.permute.xlu0 %229
  %233 = vset.pattern.permute.xlu0 0
  %234 = vperm.xlu0 %233, %v160
  %v235 = vpop.permute.xlu0 %234
  %238 = vset.pattern.permute.xlu0 0
  %239 = vperm.xlu0 %238, %v161
  %v240 = vpop.permute.xlu0 %239
  %243 = vset.pattern.permute.xlu0 0
  %244 = vperm.xlu0 %243, %v162
  %v245 = vpop.permute.xlu0 %244
  %248 = vset.pattern.permute.xlu0 0
  %249 = vperm.xlu0 %248, %v163
  %v250 = vpop.permute.xlu0 %249
  %v252 = vadd.f32 %v204, %v215
  %v253 = vadd.f32 %v205, %v220
  %v254 = vadd.f32 %v206, %v225
  %v255 = vadd.f32 %v207, %v230
  %v256 = vadd.f32 %v208, %v235
  %v257 = vadd.f32 %v209, %v240
  %v258 = vadd.f32 %v210, %v245
  %v259 = vadd.f32 %v211, %v250
  %v260 = vmax.f32 %v252, 0.0
  %v261 = vmax.f32 %v253, 0.0
  %v262 = vmax.f32 %v254, 0.0
  %v263 = vmax.f32 %v255, 0.0
  %v264 = vmax.f32 %v256, 0.0
  %v265 = vmax.f32 %v257, 0.0
  %v266 = vmax.f32 %v258, 0.0
  %v267 = vmax.f32 %v259, 0.0
  %v268 = vpack.c.bf16 %v261, %v260
  %v269 = vpack.c.bf16 %v263, %v262
  %v270 = vpack.c.bf16 %v265, %v264
  %v271 = vpack.c.bf16 %v267, %v266
  %v272 = vlaneseq
  %v273 = vand.u32 %v272, 127
  %v274 = vand.u32 %v273, 7
  %v275 = vshra.s32 %v273, 3
  %v276 = vand.u32 %v275, 7
  %281 = vrot.lane.b32.xlu0 %v268, 9
  %v282 = vpop.permute.xlu0 %281
  %283 = vrot.lane.b32.xlu0 %v269, 9
  %v284 = vpop.permute.xlu0 %283
  %285 = vrot.lane.b32.xlu0 %v270, 9
  %v286 = vpop.permute.xlu0 %285
  %287 = vrot.lane.b32.xlu0 %v271, 9
  %v288 = vpop.permute.xlu0 %287
  %vm289 = vcmask 72704
  %v292 = vsel %vm289, 0, %v282
  %v295 = vsel %vm289, 0, %v284
  %v298 = vsel %vm289, 0, %v286
  %v301 = vsel %vm289, 0, %v288
  %v303 = vadd.s32 %v274, 4294967295
  %vm304 = vcmp.ge.s32.totalorder %v303, 0
  %vm305 = vcmp.lt.s32.totalorder %v303, 8
  %vm306 = vmand %vm304, %vm305
  %v307 = vadd.s32 %v276, 4294967295
  %vm308 = vcmp.ge.s32.totalorder %v307, 0
  %vm309 = vmand %vm306, %vm308
  %vm310 = vcmp.lt.s32.totalorder %v307, 8
  %vm311 = vmand %vm309, %vm310
  %vm312 = vmpackc.low %vm311, %vm311
  %v313 = vsel %vm312, 65537, 0
  %v314 = vlaneseq
  %v315 = vshrl.u32 %v314, 7
  %v316 = vsub.s32 0, %v315
  %v317 = vrot.slane %v313, %v316
  %vm318 = vcmp.ne.s16.totalorder %v317, 0
  %v319 = vsel %vm318, %v292, 0
  %v320 = vsel %vm318, %v295, 0
  %v321 = vsel %vm318, %v298, 0
  %v322 = vsel %vm318, %v301, 0
  %323 = vrot.lane.b32.xlu0 %v268, 8
  %v324 = vpop.permute.xlu0 %323
  %325 = vrot.lane.b32.xlu0 %v269, 8
  %v326 = vpop.permute.xlu0 %325
  %327 = vrot.lane.b32.xlu0 %v270, 8
  %v328 = vpop.permute.xlu0 %327
  %329 = vrot.lane.b32.xlu0 %v271, 8
  %v330 = vpop.permute.xlu0 %329
  %vm331 = vcmask 64512
  %v333 = vsel %vm331, 0, %v324
  %v336 = vsel %vm331, 0, %v326
  %v339 = vsel %vm331, 0, %v328
  %v342 = vsel %vm331, 0, %v330
  %vm344 = vcmp.ge.s32.totalorder %v274, 0
  %vm345 = vcmp.lt.s32.totalorder %v274, 8
  %vm346 = vmand %vm344, %vm345
  %vm347 = vmand %vm346, %vm308
  %vm348 = vmand %vm347, %vm310
  %vm349 = vmpackc.low %vm348, %vm348
  %v350 = vsel %vm349, 65537, 0
  %v351 = vlaneseq
  %v352 = vshrl.u32 %v351, 7
  %v353 = vsub.s32 0, %v352
  %v354 = vrot.slane %v350, %v353
  %vm355 = vcmp.ne.s16.totalorder %v354, 0
  %v356 = vsel %vm355, %v333, 0
  %v357 = vsel %vm355, %v336, 0
  %v358 = vsel %vm355, %v339, 0
  %v359 = vsel %vm355, %v342, 0
  %360 = vrot.lane.b32.xlu0 %v268, 7
  %v361 = vpop.permute.xlu0 %360
  %362 = vrot.lane.b32.xlu0 %v269, 7
  %v363 = vpop.permute.xlu0 %362
  %364 = vrot.lane.b32.xlu0 %v270, 7
  %v365 = vpop.permute.xlu0 %364
  %366 = vrot.lane.b32.xlu0 %v271, 7
  %v367 = vpop.permute.xlu0 %366
  %vm368 = vcmask 56320
  %v370 = vsel %vm368, 0, %v361
  %v373 = vsel %vm368, 0, %v363
  %v376 = vsel %vm368, 0, %v365
  %v379 = vsel %vm368, 0, %v367
  %v381 = vadd.s32 %v274, 1
  %vm382 = vcmp.ge.s32.totalorder %v381, 0
  %vm383 = vcmp.lt.s32.totalorder %v381, 8
  %vm384 = vmand %vm382, %vm383
  %vm385 = vmand %vm384, %vm308
  %vm386 = vmand %vm385, %vm310
  %vm387 = vmpackc.low %vm386, %vm386
  %v388 = vsel %vm387, 65537, 0
  %v389 = vlaneseq
  %v390 = vshrl.u32 %v389, 7
  %v391 = vsub.s32 0, %v390
  %v392 = vrot.slane %v388, %v391
  %vm393 = vcmp.ne.s16.totalorder %v392, 0
  %v394 = vsel %vm393, %v370, 0
  %v395 = vsel %vm393, %v373, 0
  %v396 = vsel %vm393, %v376, 0
  %v397 = vsel %vm393, %v379, 0
  %398 = vrot.lane.b32.xlu0 %v268, 1
  %v399 = vpop.permute.xlu0 %398
  %400 = vrot.lane.b32.xlu0 %v269, 1
  %v401 = vpop.permute.xlu0 %400
  %402 = vrot.lane.b32.xlu0 %v270, 1
  %v403 = vpop.permute.xlu0 %402
  %404 = vrot.lane.b32.xlu0 %v271, 1
  %v405 = vpop.permute.xlu0 %404
  %vm406 = vcmask 7168
  %v408 = vsel %vm406, 0, %v399
  %v411 = vsel %vm406, 0, %v401
  %v414 = vsel %vm406, 0, %v403
  %v417 = vsel %vm406, 0, %v405
  %vm419 = vcmp.ge.s32.totalorder %v276, 0
  %vm420 = vmand %vm306, %vm419
  %vm421 = vcmp.lt.s32.totalorder %v276, 8
  %vm422 = vmand %vm420, %vm421
  %vm423 = vmpackc.low %vm422, %vm422
  %v424 = vsel %vm423, 65537, 0
  %v425 = vlaneseq
  %v426 = vshrl.u32 %v425, 7
  %v427 = vsub.s32 0, %v426
  %v428 = vrot.slane %v424, %v427
  %vm429 = vcmp.ne.s16.totalorder %v428, 0
  %v430 = vsel %vm429, %v408, 0
  %v431 = vsel %vm429, %v411, 0
  %v432 = vsel %vm429, %v414, 0
  %v433 = vsel %vm429, %v417, 0
  %vm434 = vmand %vm346, %vm419
  %vm435 = vmand %vm434, %vm421
  %vm436 = vmpackc.low %vm435, %vm435
  %v437 = vsel %vm436, 65537, 0
  %v438 = vlaneseq
  %v439 = vshrl.u32 %v438, 7
  %v440 = vsub.s32 0, %v439
  %v441 = vrot.slane %v437, %v440
  %vm442 = vcmp.ne.s16.totalorder %v441, 0
  %v443 = vsel %vm442, %v268, 0
  %v444 = vsel %vm442, %v269, 0
  %v445 = vsel %vm442, %v270, 0
  %v446 = vsel %vm442, %v271, 0
  %447 = vrot.lane.b32.xlu0 %v268, 127
  %v448 = vpop.permute.xlu0 %447
  %449 = vrot.lane.b32.xlu0 %v269, 127
  %v450 = vpop.permute.xlu0 %449
  %451 = vrot.lane.b32.xlu0 %v270, 127
  %v452 = vpop.permute.xlu0 %451
  %453 = vrot.lane.b32.xlu0 %v271, 127
  %v454 = vpop.permute.xlu0 %453
  %vm455 = vcmask 1039360
  %v457 = vsel %vm455, %v448, 0
  %v460 = vsel %vm455, %v450, 0
  %v463 = vsel %vm455, %v452, 0
  %v466 = vsel %vm455, %v454, 0
  %vm468 = vmand %vm384, %vm419
  %vm469 = vmand %vm468, %vm421
  %vm470 = vmpackc.low %vm469, %vm469
  %v471 = vsel %vm470, 65537, 0
  %v472 = vlaneseq
  %v473 = vshrl.u32 %v472, 7
  %v474 = vsub.s32 0, %v473
  %v475 = vrot.slane %v471, %v474
  %vm476 = vcmp.ne.s16.totalorder %v475, 0
  %v477 = vsel %vm476, %v457, 0
  %v478 = vsel %vm476, %v460, 0
  %v479 = vsel %vm476, %v463, 0
  %v480 = vsel %vm476, %v466, 0
  %481 = vrot.lane.b32.xlu0 %v268, 121
  %v482 = vpop.permute.xlu0 %481
  %483 = vrot.lane.b32.xlu0 %v269, 121
  %v484 = vpop.permute.xlu0 %483
  %485 = vrot.lane.b32.xlu0 %v270, 121
  %v486 = vpop.permute.xlu0 %485
  %487 = vrot.lane.b32.xlu0 %v271, 121
  %v488 = vpop.permute.xlu0 %487
  %vm489 = vcmask 990208
  %v491 = vsel %vm489, %v482, 0
  %v494 = vsel %vm489, %v484, 0
  %v497 = vsel %vm489, %v486, 0
  %v500 = vsel %vm489, %v488, 0
  %v502 = vadd.s32 %v276, 1
  %vm503 = vcmp.ge.s32.totalorder %v502, 0
  %vm504 = vmand %vm306, %vm503
  %vm505 = vcmp.lt.s32.totalorder %v502, 8
  %vm506 = vmand %vm504, %vm505
  %vm507 = vmpackc.low %vm506, %vm506
  %v508 = vsel %vm507, 65537, 0
  %v509 = vlaneseq
  %v510 = vshrl.u32 %v509, 7
  %v511 = vsub.s32 0, %v510
  %v512 = vrot.slane %v508, %v511
  %vm513 = vcmp.ne.s16.totalorder %v512, 0
  %v514 = vsel %vm513, %v491, 0
  %v515 = vsel %vm513, %v494, 0
  %v516 = vsel %vm513, %v497, 0
  %v517 = vsel %vm513, %v500, 0
  %518 = vrot.lane.b32.xlu0 %v268, 120
  %v519 = vpop.permute.xlu0 %518
  %520 = vrot.lane.b32.xlu0 %v269, 120
  %v521 = vpop.permute.xlu0 %520
  %522 = vrot.lane.b32.xlu0 %v270, 120
  %v523 = vpop.permute.xlu0 %522
  %524 = vrot.lane.b32.xlu0 %v271, 120
  %v525 = vpop.permute.xlu0 %524
  %vm526 = vcmask 982016
  %v528 = vsel %vm526, %v519, 0
  %v531 = vsel %vm526, %v521, 0
  %v534 = vsel %vm526, %v523, 0
  %v537 = vsel %vm526, %v525, 0
  %vm539 = vmand %vm346, %vm503
  %vm540 = vmand %vm539, %vm505
  %vm541 = vmpackc.low %vm540, %vm540
  %v542 = vsel %vm541, 65537, 0
  %v543 = vlaneseq
  %v544 = vshrl.u32 %v543, 7
  %v545 = vsub.s32 0, %v544
  %v546 = vrot.slane %v542, %v545
  %vm547 = vcmp.ne.s16.totalorder %v546, 0
  %v548 = vsel %vm547, %v528, 0
  %v549 = vsel %vm547, %v531, 0
  %v550 = vsel %vm547, %v534, 0
  %v551 = vsel %vm547, %v537, 0
  %552 = vrot.lane.b32.xlu0 %v268, 119
  %v553 = vpop.permute.xlu0 %552
  %554 = vrot.lane.b32.xlu0 %v269, 119
  %v555 = vpop.permute.xlu0 %554
  %556 = vrot.lane.b32.xlu0 %v270, 119
  %v557 = vpop.permute.xlu0 %556
  %558 = vrot.lane.b32.xlu0 %v271, 119
  %v559 = vpop.permute.xlu0 %558
  %vm560 = vcmask 973824
  %v562 = vsel %vm560, %v553, 0
  %v565 = vsel %vm560, %v555, 0
  %v568 = vsel %vm560, %v557, 0
  %v571 = vsel %vm560, %v559, 0
  %vm573 = vmand %vm384, %vm503
  %vm574 = vmand %vm573, %vm505
  %vm575 = vmpackc.low %vm574, %vm574
  %v576 = vsel %vm575, 65537, 0
  %v577 = vlaneseq
  %v578 = vshrl.u32 %v577, 7
  %v579 = vsub.s32 0, %v578
  %v580 = vrot.slane %v576, %v579
  %vm581 = vcmp.ne.s16.totalorder %v580, 0
  %v582 = vsel %vm581, %v562, 0
  %v583 = vsel %vm581, %v565, 0
  %v584 = vsel %vm581, %v568, 0
  %v585 = vsel %vm581, %v571, 0
  %v586 = vld [vmem:[%s3] sm:$0xff]
  %v587 = vld [vmem:[%s3 + $0x8] sm:$0xff]
  %v588 = vld [vmem:[%s3 + $0x10] sm:$0xf]
  %v589 = vld [vmem:[%s3 + $0x14] sm:$0xff]
  %v590 = vld [vmem:[%s3 + $0x1c] sm:$0xff]
  %v591 = vld [vmem:[%s3 + $0x24] sm:$0xf]
  %v592 = vld [vmem:[%s3 + $0x28] sm:$0xff]
  %v593 = vld [vmem:[%s3 + $0x30] sm:$0xff]
  %v594 = vld [vmem:[%s3 + $0x38] sm:$0xf]
  %v595 = vld [vmem:[%s3 + $0x3c] sm:$0xff]
  %v596 = vld [vmem:[%s3 + $0x44] sm:$0xff]
  %v597 = vld [vmem:[%s3 + $0x4c] sm:$0xf]
  %v598 = vld [vmem:[%s3 + $0x50] sm:$0xff]
  %v599 = vld [vmem:[%s3 + $0x58] sm:$0xff]
  %v600 = vld [vmem:[%s3 + $0x60] sm:$0xf]
  %v601 = vld [vmem:[%s3 + $0x64] sm:$0xff]
  %v602 = vld [vmem:[%s3 + $0x6c] sm:$0xff]
  %v603 = vld [vmem:[%s3 + $0x74] sm:$0xf]
  %v604 = vld [vmem:[%s3 + $0x78] sm:$0xff]
  %v605 = vld [vmem:[%s3 + $0x80] sm:$0xff]
  %v606 = vld [vmem:[%s3 + $0x88] sm:$0xf]
  %v607 = vld [vmem:[%s3 + $0x8c] sm:$0xff]
  %v608 = vld [vmem:[%s3 + $0x94] sm:$0xff]
  %v609 = vld [vmem:[%s3 + $0x9c] sm:$0xf]
  %v610 = vld [vmem:[%s3 + $0xa0] sm:$0xff]
  %v611 = vld [vmem:[%s3 + $0xa8] sm:$0xff]
  %v612 = vld [vmem:[%s3 + $0xb0] sm:$0xf]
  %v613 = vld [vmem:[%s3 + $0xb4] sm:$0xff]
  %v614 = vld [vmem:[%s3 + $0xbc] sm:$0xff]
  %v615 = vld [vmem:[%s3 + $0xc4] sm:$0xf]
  %v616 = vld [vmem:[%s3 + $0xc8] sm:$0xff]
  %v617 = vld [vmem:[%s3 + $0xd0] sm:$0xff]
  %v618 = vld [vmem:[%s3 + $0xd8] sm:$0xf]
  %v619 = vld [vmem:[%s3 + $0xdc] sm:$0xff]
  %v620 = vld [vmem:[%s3 + $0xe4] sm:$0xff]
  %v621 = vld [vmem:[%s3 + $0xec] sm:$0xf]
  %v622 = vld [vmem:[%s3 + $0xf0] sm:$0xff]
  %v623 = vld [vmem:[%s3 + $0xf8] sm:$0xff]
  %v624 = vld [vmem:[%s3 + $0x100] sm:$0xf]
  %v625 = vld [vmem:[%s3 + $0x104] sm:$0xff]
  %v626 = vld [vmem:[%s3 + $0x10c] sm:$0xff]
  %v627 = vld [vmem:[%s3 + $0x114] sm:$0xf]
  %v628 = vld [vmem:[%s3 + $0x118] sm:$0xff]
  %v629 = vld [vmem:[%s3 + $0x120] sm:$0xff]
  %v630 = vld [vmem:[%s3 + $0x128] sm:$0xf]
  %v631 = vld [vmem:[%s3 + $0x12c] sm:$0xff]
  %v632 = vld [vmem:[%s3 + $0x134] sm:$0xff]
  %v633 = vld [vmem:[%s3 + $0x13c] sm:$0xf]
  %v682 = vunpack.c.l.b16 %v586
  %v683 = vunpack.c.h.b16 %v586
  %v684 = vunpack.c.l.b16 %v587
  %v685 = vunpack.c.h.b16 %v587
  %v686 = vunpack.c.l.b16 %v588
  %v687 = vunpack.c.l.b16 %v589
  %v688 = vunpack.c.h.b16 %v589
  %v689 = vunpack.c.l.b16 %v590
  %v690 = vunpack.c.h.b16 %v590
  %v691 = vunpack.c.l.b16 %v591
  %v692 = vunpack.c.l.b16 %v592
  %v693 = vunpack.c.h.b16 %v592
  %v694 = vunpack.c.l.b16 %v593
  %v695 = vunpack.c.h.b16 %v593
  %v696 = vunpack.c.l.b16 %v594
  %v697 = vunpack.c.l.b16 %v595
  %v698 = vunpack.c.h.b16 %v595
  %v699 = vunpack.c.l.b16 %v596
  %v700 = vunpack.c.h.b16 %v596
  %v701 = vunpack.c.l.b16 %v597
  %v702 = vunpack.c.l.b16 %v598
  %v703 = vunpack.c.h.b16 %v598
  %v704 = vunpack.c.l.b16 %v599
  %v705 = vunpack.c.h.b16 %v599
  %v706 = vunpack.c.l.b16 %v600
  %v707 = vunpack.c.l.b16 %v601
  %v708 = vunpack.c.h.b16 %v601
  %v709 = vunpack.c.l.b16 %v602
  %v710 = vunpack.c.h.b16 %v602
  %v711 = vunpack.c.l.b16 %v603
  %v712 = vunpack.c.l.b16 %v604
  %v713 = vunpack.c.h.b16 %v604
  %v714 = vunpack.c.l.b16 %v605
  %v715 = vunpack.c.h.b16 %v605
  %v716 = vunpack.c.l.b16 %v606
  %v717 = vunpack.c.l.b16 %v607
  %v718 = vunpack.c.h.b16 %v607
  %v719 = vunpack.c.l.b16 %v608
  %v720 = vunpack.c.h.b16 %v608
  %v721 = vunpack.c.l.b16 %v609
  %v722 = vunpack.c.l.b16 %v610
  %v723 = vunpack.c.h.b16 %v610
  %v724 = vunpack.c.l.b16 %v611
  %v725 = vunpack.c.h.b16 %v611
  %v726 = vunpack.c.l.b16 %v612
  %v727 = vunpack.c.l.b16 %v613
  %v728 = vunpack.c.h.b16 %v613
  %v729 = vunpack.c.l.b16 %v614
  %v730 = vunpack.c.h.b16 %v614
  %v731 = vunpack.c.l.b16 %v615
  %v732 = vunpack.c.l.b16 %v616
  %v733 = vunpack.c.h.b16 %v616
  %v734 = vunpack.c.l.b16 %v617
  %v735 = vunpack.c.h.b16 %v617
  %v736 = vunpack.c.l.b16 %v618
  %v737 = vunpack.c.l.b16 %v619
  %v738 = vunpack.c.h.b16 %v619
  %v739 = vunpack.c.l.b16 %v620
  %v740 = vunpack.c.h.b16 %v620
  %v741 = vunpack.c.l.b16 %v621
  %v742 = vunpack.c.l.b16 %v622
  %v743 = vunpack.c.h.b16 %v622
  %v744 = vunpack.c.l.b16 %v623
  %v745 = vunpack.c.h.b16 %v623
  %v746 = vunpack.c.l.b16 %v624
  %v747 = vunpack.c.l.b16 %v625
  %v748 = vunpack.c.h.b16 %v625
  %v749 = vunpack.c.l.b16 %v626
  %v750 = vunpack.c.h.b16 %v626
  %v751 = vunpack.c.l.b16 %v627
  %v752 = vunpack.c.l.b16 %v628
  %v753 = vunpack.c.h.b16 %v628
  %v754 = vunpack.c.l.b16 %v629
  %v755 = vunpack.c.h.b16 %v629
  %v756 = vunpack.c.l.b16 %v630
  %v757 = vunpack.c.l.b16 %v631
  %v758 = vunpack.c.h.b16 %v631
  %v759 = vunpack.c.l.b16 %v632
  %v760 = vunpack.c.h.b16 %v632
  %v761 = vunpack.c.l.b16 %v633
  %v762 = vpack.c.b16 %v687, %v682
  %v763 = vpack.c.b16 %v688, %v683
  %v764 = vpack.c.b16 %v689, %v684
  %v765 = vpack.c.b16 %v690, %v685
  %v766 = vpack.c.b16 %v691, %v686
  %v767 = vpack.c.b16 %v697, %v692
  %v768 = vpack.c.b16 %v698, %v693
  %v769 = vpack.c.b16 %v699, %v694
  %v770 = vpack.c.b16 %v700, %v695
  %v771 = vpack.c.b16 %v701, %v696
  %v772 = vpack.c.b16 %v707, %v702
  %v773 = vpack.c.b16 %v708, %v703
  %v774 = vpack.c.b16 %v709, %v704
  %v775 = vpack.c.b16 %v710, %v705
  %v776 = vpack.c.b16 %v711, %v706
  %v777 = vpack.c.b16 %v717, %v712
  %v778 = vpack.c.b16 %v718, %v713
  %v779 = vpack.c.b16 %v719, %v714
  %v780 = vpack.c.b16 %v720, %v715
  %v781 = vpack.c.b16 %v721, %v716
  %v782 = vpack.c.b16 %v727, %v722
  %v783 = vpack.c.b16 %v728, %v723
  %v784 = vpack.c.b16 %v729, %v724
  %v785 = vpack.c.b16 %v730, %v725
  %v786 = vpack.c.b16 %v731, %v726
  %v787 = vpack.c.b16 %v737, %v732
  %v788 = vpack.c.b16 %v738, %v733
  %v789 = vpack.c.b16 %v739, %v734
  %v790 = vpack.c.b16 %v740, %v735
  %v791 = vpack.c.b16 %v741, %v736
  %v792 = vpack.c.b16 %v747, %v742
  %v793 = vpack.c.b16 %v748, %v743
  %v794 = vpack.c.b16 %v749, %v744
  %v795 = vpack.c.b16 %v750, %v745
  %v796 = vpack.c.b16 %v751, %v746
  %v797 = vpack.c.b16 %v757, %v752
  %v798 = vpack.c.b16 %v758, %v753
  %v799 = vpack.c.b16 %v759, %v754
  %v800 = vpack.c.b16 %v760, %v755
  %v801 = vpack.c.b16 %v761, %v756
  %vm834 = vcmask 523264
  %v836 = vsel %vm834, %v766, 0
  %v839 = vsel %vm834, %v771, 0
  %v842 = vsel %vm834, %v776, 0
  %v845 = vsel %vm834, %v781, 0
  %v848 = vsel %vm834, %v786, 0
  %v851 = vsel %vm834, %v791, 0
  %v854 = vsel %vm834, %v796, 0
  %v857 = vsel %vm834, %v801, 0
  %859 = vmatprep.subr.bf16.mxu0 0
  %860 = vmatpush1.bf16.msra.mxu0 %v319
  %861 = vmatprep.subr.bf16.mxu0 0
  %862 = vmatpush1.bf16.msra.mxu0 %v320
  %863 = vmatprep.subr.bf16.mxu0 0
  %864 = vmatpush1.bf16.msra.mxu0 %v321
  %865 = vmatprep.subr.bf16.mxu0 0
  %866 = vmatpush1.bf16.msra.mxu0 %v322
  %867 = vmatprep.subr.bf16.mxu0 0
  %868 = vmatpush1.bf16.msra.mxu0 %v356
  %869 = vmatprep.subr.bf16.mxu0 0
  %870 = vmatpush1.bf16.msra.mxu0 %v357
  %871 = vmatprep.subr.bf16.mxu0 0
  %872 = vmatpush1.bf16.msra.mxu0 %v358
  %873 = vmatprep.subr.bf16.mxu0 0
  %874 = vmatpush1.bf16.msra.mxu0 %v359
  %875 = vmatprep.subr.bf16.mxu0 0
  %876 = vmatpush1.bf16.msra.mxu0 %v394
  %877 = vmatprep.subr.bf16.mxu0 0
  %878 = vmatpush1.bf16.msra.mxu0 %v395
  %879 = vmatprep.subr.bf16.mxu0 0
  %880 = vmatpush1.bf16.msra.mxu0 %v396
  %881 = vmatprep.subr.bf16.mxu0 0
  %882 = vmatpush1.bf16.msra.mxu0 %v397
  %883 = vmatprep.subr.bf16.mxu0 0
  %884 = vmatpush1.bf16.msra.mxu0 %v430
  %885 = vmatprep.subr.bf16.mxu0 0
  %886 = vmatpush1.bf16.msra.mxu0 %v431
  %887 = vmatprep.subr.bf16.mxu0 0
  %888 = vmatpush1.bf16.msra.mxu0 %v432
  %889 = vmatprep.subr.bf16.mxu0 0
  %890 = vmatpush1.bf16.msra.mxu0 %v433
  %891 = vmatprep.mubr.bf16.mxu0 %v763
  %892 = vmatmul.mubr.bf16.gmra.mrb[0].mxu0 %v762
  %v893 = vpop.f32.mrb[0].mxu0
  %v894 = vadd.f32 0.0, %v893
  %v895 = vpop.f32.mrb[0].mxu0
  %v896 = vpop.f32.mrb[0].mxu0
  %v897 = vadd.f32 0.0, %v896
  %v898 = vpop.f32.mrb[0].mxu0
  %899 = vmatprep.mubr.bf16.mxu0 %v768
  %900 = vmatmul.mubr.bf16.gmra.mrb[0].mxu0 %v767
  %v901 = vpop.f32.mrb[0].mxu0
  %v902 = vadd.f32 0.0, %v901
  %v903 = vpop.f32.mrb[0].mxu0
  %v904 = vpop.f32.mrb[0].mxu0
  %v905 = vadd.f32 0.0, %v904
  %v906 = vpop.f32.mrb[0].mxu0
  %907 = vmatprep.mubr.bf16.mxu0 %v773
  %908 = vmatmul.mubr.bf16.gmra.mrb[0].mxu0 %v772
  %v909 = vpop.f32.mrb[0].mxu0
  %v910 = vadd.f32 0.0, %v909
  %v911 = vpop.f32.mrb[0].mxu0
  %v912 = vpop.f32.mrb[0].mxu0
  %v913 = vadd.f32 0.0, %v912
  %v914 = vpop.f32.mrb[0].mxu0
  %915 = vmatprep.mubr.bf16.mxu0 %v778
  %916 = vmatmul.mubr.bf16.gmra.mrb[0].mxu0 %v777
  %v917 = vpop.f32.mrb[0].mxu0
  %v918 = vadd.f32 0.0, %v917
  %v919 = vpop.f32.mrb[0].mxu0
  %v920 = vpop.f32.mrb[0].mxu0
  %v921 = vadd.f32 0.0, %v920
  %v922 = vpop.f32.mrb[0].mxu0
  %923 = vmatprep.mubr.bf16.mxu0 %v783
  %924 = vmatmul.mubr.bf16.gmra.mrb[0].mxu0 %v782
  %v925 = vpop.f32.mrb[0].mxu0
  %v926 = vadd.f32 0.0, %v925
  %v927 = vpop.f32.mrb[0].mxu0
  %v928 = vpop.f32.mrb[0].mxu0
  %v929 = vadd.f32 0.0, %v928
  %v930 = vpop.f32.mrb[0].mxu0
  %931 = vmatprep.mubr.bf16.mxu0 %v788
  %932 = vmatmul.mubr.bf16.gmra.mrb[0].mxu0 %v787
  %v933 = vpop.f32.mrb[0].mxu0
  %v934 = vadd.f32 0.0, %v933
  %v935 = vpop.f32.mrb[0].mxu0
  %v936 = vpop.f32.mrb[0].mxu0
  %v937 = vadd.f32 0.0, %v936
  %v938 = vpop.f32.mrb[0].mxu0
  %939 = vmatprep.mubr.bf16.mxu0 %v793
  %940 = vmatmul.mubr.bf16.gmra.mrb[0].mxu0 %v792
  %v941 = vpop.f32.mrb[0].mxu0
  %v942 = vadd.f32 0.0, %v941
  %v943 = vpop.f32.mrb[0].mxu0
  %v944 = vpop.f32.mrb[0].mxu0
  %v945 = vadd.f32 0.0, %v944
  %v946 = vpop.f32.mrb[0].mxu0
  %947 = vmatprep.mubr.bf16.mxu0 %v798
  %948 = vmatmul.mubr.bf16.gmra.mrb[0].mxu0 %v797
  %v949 = vpop.f32.mrb[0].mxu0
  %v950 = vadd.f32 0.0, %v949
  %v951 = vpop.f32.mrb[0].mxu0
  %v952 = vpop.f32.mrb[0].mxu0
  %v953 = vadd.f32 0.0, %v952
  %v954 = vpop.f32.mrb[0].mxu0
  %955 = vdwg.mxu0
  %956 = vmatprep.subr.bf16.mxu0 0
  %957 = vmatpush1.bf16.msra.mxu0 %v443
  %958 = vmatprep.subr.bf16.mxu0 0
  %959 = vmatpush1.bf16.msra.mxu0 %v444
  %960 = vmatprep.subr.bf16.mxu0 0
  %961 = vmatpush1.bf16.msra.mxu0 %v445
  %962 = vmatprep.subr.bf16.mxu0 0
  %963 = vmatpush1.bf16.msra.mxu0 %v446
  %964 = vmatprep.subr.bf16.mxu0 0
  %965 = vmatpush1.bf16.msra.mxu0 %v477
  %966 = vmatprep.subr.bf16.mxu0 0
  %967 = vmatpush1.bf16.msra.mxu0 %v478
  %968 = vmatprep.subr.bf16.mxu0 0
  %969 = vmatpush1.bf16.msra.mxu0 %v479
  %970 = vmatprep.subr.bf16.mxu0 0
  %971 = vmatpush1.bf16.msra.mxu0 %v480
  %972 = vmatprep.subr.bf16.mxu0 0
  %973 = vmatpush1.bf16.msra.mxu0 %v514
  %974 = vmatprep.subr.bf16.mxu0 0
  %975 = vmatpush1.bf16.msra.mxu0 %v515
  %976 = vmatprep.subr.bf16.mxu0 0
  %977 = vmatpush1.bf16.msra.mxu0 %v516
  %978 = vmatprep.subr.bf16.mxu0 0
  %979 = vmatpush1.bf16.msra.mxu0 %v517
  %980 = vmatprep.subr.bf16.mxu0 0
  %981 = vmatpush1.bf16.msra.mxu0 %v548
  %982 = vmatprep.subr.bf16.mxu0 0
  %983 = vmatpush1.bf16.msra.mxu0 %v549
  %984 = vmatprep.subr.bf16.mxu0 0
  %985 = vmatpush1.bf16.msra.mxu0 %v550
  %986 = vmatprep.subr.bf16.mxu0 0
  %987 = vmatpush1.bf16.msra.mxu0 %v551
  %988 = vmatprep.mubr.bf16.mxu0 %v765
  %989 = vmatmul.mubr.bf16.gmra.mrb[0].mxu0 %v764
  %v990 = vpop.f32.mrb[0].mxu0
  %v991 = vadd.f32 %v894, %v990
  %v992 = vpop.f32.mrb[0].mxu0
  %v993 = vpop.f32.mrb[0].mxu0
  %v994 = vadd.f32 %v897, %v993
  %v995 = vpop.f32.mrb[0].mxu0
  %996 = vmatprep.mubr.bf16.mxu0 %v770
  %997 = vmatmul.mubr.bf16.gmra.mrb[0].mxu0 %v769
  %v998 = vpop.f32.mrb[0].mxu0
  %v999 = vadd.f32 %v902, %v998
  %v1000 = vpop.f32.mrb[0].mxu0
  %v1001 = vpop.f32.mrb[0].mxu0
  %v1002 = vadd.f32 %v905, %v1001
  %v1003 = vpop.f32.mrb[0].mxu0
  %1004 = vmatprep.mubr.bf16.mxu0 %v775
  %1005 = vmatmul.mubr.bf16.gmra.mrb[0].mxu0 %v774
  %v1006 = vpop.f32.mrb[0].mxu0
  %v1007 = vadd.f32 %v910, %v1006
  %v1008 = vpop.f32.mrb[0].mxu0
  %v1009 = vpop.f32.mrb[0].mxu0
  %v1010 = vadd.f32 %v913, %v1009
  %v1011 = vpop.f32.mrb[0].mxu0
  %1012 = vmatprep.mubr.bf16.mxu0 %v780
  %1013 = vmatmul.mubr.bf16.gmra.mrb[0].mxu0 %v779
  %v1014 = vpop.f32.mrb[0].mxu0
  %v1015 = vadd.f32 %v918, %v1014
  %v1016 = vpop.f32.mrb[0].mxu0
  %v1017 = vpop.f32.mrb[0].mxu0
  %v1018 = vadd.f32 %v921, %v1017
  %v1019 = vpop.f32.mrb[0].mxu0
  %1020 = vmatprep.mubr.bf16.mxu0 %v785
  %1021 = vmatmul.mubr.bf16.gmra.mrb[0].mxu0 %v784
  %v1022 = vpop.f32.mrb[0].mxu0
  %v1023 = vadd.f32 %v926, %v1022
  %v1024 = vpop.f32.mrb[0].mxu0
  %v1025 = vpop.f32.mrb[0].mxu0
  %v1026 = vadd.f32 %v929, %v1025
  %v1027 = vpop.f32.mrb[0].mxu0
  %1028 = vmatprep.mubr.bf16.mxu0 %v790
  %1029 = vmatmul.mubr.bf16.gmra.mrb[0].mxu0 %v789
  %v1030 = vpop.f32.mrb[0].mxu0
  %v1031 = vadd.f32 %v934, %v1030
  %v1032 = vpop.f32.mrb[0].mxu0
  %v1033 = vpop.f32.mrb[0].mxu0
  %v1034 = vadd.f32 %v937, %v1033
  %v1035 = vpop.f32.mrb[0].mxu0
  %1036 = vmatprep.mubr.bf16.mxu0 %v795
  %1037 = vmatmul.mubr.bf16.gmra.mrb[0].mxu0 %v794
  %v1038 = vpop.f32.mrb[0].mxu0
  %v1039 = vadd.f32 %v942, %v1038
  %v1040 = vpop.f32.mrb[0].mxu0
  %v1041 = vpop.f32.mrb[0].mxu0
  %v1042 = vadd.f32 %v945, %v1041
  %v1043 = vpop.f32.mrb[0].mxu0
  %1044 = vmatprep.mubr.bf16.mxu0 %v800
  %1045 = vmatmul.mubr.bf16.gmra.mrb[0].mxu0 %v799
  %v1046 = vpop.f32.mrb[0].mxu0
  %v1047 = vadd.f32 %v950, %v1046
  %v1048 = vpop.f32.mrb[0].mxu0
  %v1049 = vpop.f32.mrb[0].mxu0
  %v1050 = vadd.f32 %v953, %v1049
  %v1051 = vpop.f32.mrb[0].mxu0
  %1052 = vdwg.mxu0
  %1053 = vmatprep.subr.bf16.mxu0 0
  %1054 = vmatpush1.bf16.msra.mxu0 %v582
  %1055 = vmatprep.subr.bf16.mxu0 0
  %1056 = vmatpush1.bf16.msra.mxu0 %v583
  %1057 = vmatprep.subr.bf16.mxu0 0
  %1058 = vmatpush1.bf16.msra.mxu0 %v584
  %1059 = vmatprep.subr.bf16.mxu0 0
  %1060 = vmatpush1.bf16.msra.mxu0 %v585
  %1061 = vmatprep.subr.bf16.mxu0 0
  %1062 = vmatpush1.bf16.msra.mxu0 0
  %1063 = vmatprep.subr.bf16.mxu0 0
  %1064 = vmatpush1.bf16.msra.mxu0 0
  %1065 = vmatprep.subr.bf16.mxu0 0
  %1066 = vmatpush1.bf16.msra.mxu0 0
  %1067 = vmatprep.subr.bf16.mxu0 0
  %1068 = vmatpush1.bf16.msra.mxu0 0
  %1069 = vmatprep.subr.bf16.mxu0 0
  %1070 = vmatpush1.bf16.msra.mxu0 0
  %1071 = vmatprep.subr.bf16.mxu0 0
  %1072 = vmatpush1.bf16.msra.mxu0 0
  %1073 = vmatprep.subr.bf16.mxu0 0
  %1074 = vmatpush1.bf16.msra.mxu0 0
  %1075 = vmatprep.subr.bf16.mxu0 0
  %1076 = vmatpush1.bf16.msra.mxu0 0
  %1077 = vmatprep.subr.bf16.mxu0 0
  %1078 = vmatpush1.bf16.msra.mxu0 0
  %1079 = vmatprep.subr.bf16.mxu0 0
  %1080 = vmatpush1.bf16.msra.mxu0 0
  %1081 = vmatprep.subr.bf16.mxu0 0
  %1082 = vmatpush1.bf16.msra.mxu0 0
  %1083 = vmatprep.subr.bf16.mxu0 0
  %1084 = vmatpush1.bf16.msra.mxu0 0
  %1085 = vmatprep.mubr.bf16.mxu0 0
  %1086 = vmatmul.mubr.bf16.gmra.mrb[0].mxu0 %v836
  %v1087 = vpop.f32.mrb[0].mxu0
  %v1088 = vadd.f32 %v991, %v1087
  %v1089 = vpop.f32.mrb[0].mxu0
  %v1090 = vpop.f32.mrb[0].mxu0
  %v1091 = vadd.f32 %v994, %v1090
  %v1092 = vpop.f32.mrb[0].mxu0
  %1093 = vmatprep.mubr.bf16.mxu0 0
  %1094 = vmatmul.mubr.bf16.gmra.mrb[0].mxu0 %v839
  %v1095 = vpop.f32.mrb[0].mxu0
  %v1096 = vadd.f32 %v999, %v1095
  %v1097 = vpop.f32.mrb[0].mxu0
  %v1098 = vpop.f32.mrb[0].mxu0
  %v1099 = vadd.f32 %v1002, %v1098
  %v1100 = vpop.f32.mrb[0].mxu0
  %1101 = vmatprep.mubr.bf16.mxu0 0
  %1102 = vmatmul.mubr.bf16.gmra.mrb[0].mxu0 %v842
  %v1103 = vpop.f32.mrb[0].mxu0
  %v1104 = vadd.f32 %v1007, %v1103
  %v1105 = vpop.f32.mrb[0].mxu0
  %v1106 = vpop.f32.mrb[0].mxu0
  %v1107 = vadd.f32 %v1010, %v1106
  %v1108 = vpop.f32.mrb[0].mxu0
  %1109 = vmatprep.mubr.bf16.mxu0 0
  %1110 = vmatmul.mubr.bf16.gmra.mrb[0].mxu0 %v845
  %v1111 = vpop.f32.mrb[0].mxu0
  %v1112 = vadd.f32 %v1015, %v1111
  %v1113 = vpop.f32.mrb[0].mxu0
  %v1114 = vpop.f32.mrb[0].mxu0
  %v1115 = vadd.f32 %v1018, %v1114
  %v1116 = vpop.f32.mrb[0].mxu0
  %1117 = vmatprep.mubr.bf16.mxu0 0
  %1118 = vmatmul.mubr.bf16.gmra.mrb[0].mxu0 %v848
  %v1119 = vpop.f32.mrb[0].mxu0
  %v1120 = vadd.f32 %v1023, %v1119
  %v1121 = vpop.f32.mrb[0].mxu0
  %v1122 = vpop.f32.mrb[0].mxu0
  %v1123 = vadd.f32 %v1026, %v1122
  %v1124 = vpop.f32.mrb[0].mxu0
  %1125 = vmatprep.mubr.bf16.mxu0 0
  %1126 = vmatmul.mubr.bf16.gmra.mrb[0].mxu0 %v851
  %v1127 = vpop.f32.mrb[0].mxu0
  %v1128 = vadd.f32 %v1031, %v1127
  %v1129 = vpop.f32.mrb[0].mxu0
  %v1130 = vpop.f32.mrb[0].mxu0
  %v1131 = vadd.f32 %v1034, %v1130
  %v1132 = vpop.f32.mrb[0].mxu0
  %1133 = vmatprep.mubr.bf16.mxu0 0
  %1134 = vmatmul.mubr.bf16.gmra.mrb[0].mxu0 %v854
  %v1135 = vpop.f32.mrb[0].mxu0
  %v1136 = vadd.f32 %v1039, %v1135
  %v1137 = vpop.f32.mrb[0].mxu0
  %v1138 = vpop.f32.mrb[0].mxu0
  %v1139 = vadd.f32 %v1042, %v1138
  %v1140 = vpop.f32.mrb[0].mxu0
  %1141 = vmatprep.mubr.bf16.mxu0 0
  %1142 = vmatmul.mubr.bf16.gmra.mrb[0].mxu0 %v857
  %v1143 = vpop.f32.mrb[0].mxu0
  %v1144 = vadd.f32 %v1047, %v1143
  %v1145 = vpop.f32.mrb[0].mxu0
  %v1146 = vpop.f32.mrb[0].mxu0
  %v1147 = vadd.f32 %v1050, %v1146
  %v1148 = vpop.f32.mrb[0].mxu0
  %1149 = vdwg.mxu0
  %1150 = vst [vmem:[%s4] sm:$0xff] %v1088
  %1151 = vst [vmem:[%s4 + $0x8] sm:$0xff] %v1091
  %1152 = vst [vmem:[%s4 + $0x10] sm:$0xff] %v1096
  %1153 = vst [vmem:[%s4 + $0x18] sm:$0xff] %v1099
  %1154 = vst [vmem:[%s4 + $0x20] sm:$0xff] %v1104
  %1155 = vst [vmem:[%s4 + $0x28] sm:$0xff] %v1107
  %1156 = vst [vmem:[%s4 + $0x30] sm:$0xff] %v1112
  %1157 = vst [vmem:[%s4 + $0x38] sm:$0xff] %v1115
  %1158 = vst [vmem:[%s4 + $0x40] sm:$0xff] %v1120
  %1159 = vst [vmem:[%s4 + $0x48] sm:$0xff] %v1123
  %1160 = vst [vmem:[%s4 + $0x50] sm:$0xff] %v1128
  %1161 = vst [vmem:[%s4 + $0x58] sm:$0xff] %v1131
  %1162 = vst [vmem:[%s4 + $0x60] sm:$0xff] %v1136
  %1163 = vst [vmem:[%s4 + $0x68] sm:$0xff] %v1139
  %1164 = vst [vmem:[%s4 + $0x70] sm:$0xff] %v1144
  %1165 = vst [vmem:[%s4 + $0x78] sm:$0xff] %v1147
  // Predicated region
  $region18: #{kitti_conv_decoder_forward.7} parent=0 // pred_check
    _
  $region19: #{kitti_conv_decoder_forward.7} parent=0 // pred_check_branch
    %1167 = sbr.rel (0) target = $region21
  $region20: #{kitti_conv_decoder_forward.7} parent=0 // pred_region
    _
  $region21: #{kitti_conv_decoder_forward.7} parent=0 // pred_fallthru
    _
  // Predicated region
  $region22: #{kitti_conv_decoder_forward.7} parent=0 // pred_check
    _
  $region23: #{kitti_conv_decoder_forward.7} parent=0 // pred_check_branch
    %1169 = sbr.rel (0) target = $region25
  $region24: #{kitti_conv_decoder_forward.7} parent=0 // pred_region
    _
  $region25: #{kitti_conv_decoder_forward.7} parent=0 // pred_fallthru
    _

// kernel: kitti_conv_decoder_forward.8
$region0: #{kitti_conv_decoder_forward.8}
  #allocation0 [shape = 'u32[]', space=smem, size = 0x4, offset = 0x4, fixed_abs, tag = 'smem constant byte address 0x4 - core index']
  #allocation1 [shape = 'u32[144,128]{1,0:T(1,128)}', space=vmem, size = 0x12000, scoped, tag = 'internal scratch']
  %s0 = inlined_call_operand.vmem [shape: f32[32,512], index: 0, kind: input, shape index: {}]
  %s1 = inlined_call_operand.vmem [shape: f32[32,1], index: 1, kind: input, shape index: {}]
  %s2 = inlined_call_operand.vmem [shape: f32[32,1], index: 2, kind: input, shape index: {}]
  %s3 = inlined_call_operand.vmem [shape: bf16[128,288], index: 3, kind: input, shape index: {}]
  %s4 = inlined_call_operand.vmem [shape: f32[128,512], index: 4, kind: output, shape index: {}]
  %s5 = sld [smem:[#allocation0]]
  $region26: #{kitti_conv_decoder_forward.8} parent=0
    _
  %s7 = ssub.s32 1, %s5
  %s8 = scalar_select 0, %s7, %s5
  // Predicated region
  $region2: #{kitti_conv_decoder_forward.8} parent=0 // pred_check
    _
  $region3: #{kitti_conv_decoder_forward.8} parent=0 // pred_check_branch
    %10 = sbr.rel (0) target = $region5
  $region4: #{kitti_conv_decoder_forward.8} parent=0 // pred_region
    _
  $region5: #{kitti_conv_decoder_forward.8} parent=0 // pred_fallthru
    _
  // Predicated region
  $region6: #{kitti_conv_decoder_forward.8} parent=0 // pred_check
    _
  $region7: #{kitti_conv_decoder_forward.8} parent=0 // pred_check_branch
    %12 = sbr.rel (0) target = $region9
  $region8: #{kitti_conv_decoder_forward.8} parent=0 // pred_region
    _
  $region9: #{kitti_conv_decoder_forward.8} parent=0 // pred_fallthru
    _
  // Predicated region
  $region10: #{kitti_conv_decoder_forward.8} parent=0 // pred_check
    _
  $region11: #{kitti_conv_decoder_forward.8} parent=0 // pred_check_branch
    %14 = sbr.rel (0) target = $region13
  $region12: #{kitti_conv_decoder_forward.8} parent=0 // pred_region
    _
  $region13: #{kitti_conv_decoder_forward.8} parent=0 // pred_fallthru
    _
  // Predicated region
  $region14: #{kitti_conv_decoder_forward.8} parent=0 // pred_check
    _
  $region15: #{kitti_conv_decoder_forward.8} parent=0 // pred_check_branch
    %16 = sbr.rel (0) target = $region17
  $region16: #{kitti_conv_decoder_forward.8} parent=0 // pred_region
    _
  $region17: #{kitti_conv_decoder_forward.8} parent=0 // pred_fallthru
    _
  %v20 = vld [vmem:[%s0] sm:$0xff]
  %v21 = vld [vmem:[%s0 + $0x8] sm:$0xff]
  %v22 = vld [vmem:[%s0 + $0x10] sm:$0xff]
  %v23 = vld [vmem:[%s0 + $0x18] sm:$0xff]
  %v24 = vld [vmem:[%s0 + $0x20] sm:$0xff]
  %v25 = vld [vmem:[%s0 + $0x28] sm:$0xff]
  %v26 = vld [vmem:[%s0 + $0x30] sm:$0xff]
  %v27 = vld [vmem:[%s0 + $0x38] sm:$0xff]
  %v28 = vld [vmem:[%s0 + $0x40] sm:$0xff]
  %v29 = vld [vmem:[%s0 + $0x48] sm:$0xff]
  %v30 = vld [vmem:[%s0 + $0x50] sm:$0xff]
  %v31 = vld [vmem:[%s0 + $0x58] sm:$0xff]
  %v32 = vld [vmem:[%s0 + $0x60] sm:$0xff]
  %v33 = vld [vmem:[%s0 + $0x68] sm:$0xff]
  %v34 = vld [vmem:[%s0 + $0x70] sm:$0xff]
  %v35 = vld [vmem:[%s0 + $0x78] sm:$0xff]
  %v36 = vadd.f32 %v20, %v21
  %v37 = vadd.f32 %v36, %v22
  %v38 = vadd.f32 %v37, %v23
  %39 = vadd.xlane.f32.xlu0 %v38
  %v40 = vpop.xlane.xlu0 %39
  %v41 = vadd.f32 %v24, %v25
  %v42 = vadd.f32 %v41, %v26
  %v43 = vadd.f32 %v42, %v27
  %44 = vadd.xlane.f32.xlu0 %v43
  %v45 = vpop.xlane.xlu0 %44
  %v46 = vadd.f32 %v28, %v29
  %v47 = vadd.f32 %v46, %v30
  %v48 = vadd.f32 %v47, %v31
  %49 = vadd.xlane.f32.xlu0 %v48
  %v50 = vpop.xlane.xlu0 %49
  %v51 = vadd.f32 %v32, %v33
  %v52 = vadd.f32 %v51, %v34
  %v53 = vadd.f32 %v52, %v35
  %54 = vadd.xlane.f32.xlu0 %v53
  %v55 = vpop.xlane.xlu0 %54
  %v56 = vmul.f32 %v20, %v20
  %v57 = vmul.f32 %v21, %v21
  %v58 = vmul.f32 %v22, %v22
  %v59 = vmul.f32 %v23, %v23
  %v60 = vmul.f32 %v24, %v24
  %v61 = vmul.f32 %v25, %v25
  %v62 = vmul.f32 %v26, %v26
  %v63 = vmul.f32 %v27, %v27
  %v64 = vmul.f32 %v28, %v28
  %v65 = vmul.f32 %v29, %v29
  %v66 = vmul.f32 %v30, %v30
  %v67 = vmul.f32 %v31, %v31
  %v68 = vmul.f32 %v32, %v32
  %v69 = vmul.f32 %v33, %v33
  %v70 = vmul.f32 %v34, %v34
  %v71 = vmul.f32 %v35, %v35
  %v72 = vadd.f32 %v56, %v57
  %v73 = vadd.f32 %v72, %v58
  %v74 = vadd.f32 %v73, %v59
  %75 = vadd.xlane.f32.xlu0 %v74
  %v76 = vpop.xlane.xlu0 %75
  %v77 = vadd.f32 %v60, %v61
  %v78 = vadd.f32 %v77, %v62
  %v79 = vadd.f32 %v78, %v63
  %80 = vadd.xlane.f32.xlu0 %v79
  %v81 = vpop.xlane.xlu0 %80
  %v82 = vadd.f32 %v64, %v65
  %v83 = vadd.f32 %v82, %v66
  %v84 = vadd.f32 %v83, %v67
  %85 = vadd.xlane.f32.xlu0 %v84
  %v86 = vpop.xlane.xlu0 %85
  %v87 = vadd.f32 %v68, %v69
  %v88 = vadd.f32 %v87, %v70
  %v89 = vadd.f32 %v88, %v71
  %90 = vadd.xlane.f32.xlu0 %v89
  %v91 = vpop.xlane.xlu0 %90
  %v92 = vmul.f32 %v40, 0.001953125
  %v93 = vmul.f32 %v45, 0.001953125
  %v94 = vmul.f32 %v50, 0.001953125
  %v95 = vmul.f32 %v55, 0.001953125
  %v96 = vmul.f32 %v76, 0.001953125
  %v97 = vmul.f32 %v81, 0.001953125
  %v98 = vmul.f32 %v86, 0.001953125
  %v99 = vmul.f32 %v91, 0.001953125
  %v100 = vmul.f32 %v92, %v92
  %v101 = vmul.f32 %v93, %v93
  %v102 = vmul.f32 %v94, %v94
  %v103 = vmul.f32 %v95, %v95
  %v104 = vsub.f32 %v96, %v100
  %v105 = vsub.f32 %v97, %v101
  %v106 = vsub.f32 %v98, %v102
  %v107 = vsub.f32 %v99, %v103
  %v108 = vmax.f32 %v104, 0.0
  %v109 = vmax.f32 %v105, 0.0
  %v110 = vmax.f32 %v106, 0.0
  %v111 = vmax.f32 %v107, 0.0
  %v112 = vld [vmem:[%s1] sm:$0xff]
  %v113 = vld [vmem:[%s1 + $0x8] sm:$0xff]
  %v114 = vld [vmem:[%s1 + $0x10] sm:$0xff]
  %v115 = vld [vmem:[%s1 + $0x18] sm:$0xff]
  %v116 = vadd.f32 %v108, 1e-05
  %v117 = vadd.f32 %v109, 1e-05
  %v118 = vadd.f32 %v110, 1e-05
  %v119 = vadd.f32 %v111, 1e-05
  %v120 = vrsqrt.pop %v116
  %v121 = vrsqrt.pop %v117
  %v122 = vrsqrt.pop %v118
  %v123 = vrsqrt.pop %v119
  %v124 = vmul.f32 %v112, %v120
  %v125 = vmul.f32 %v113, %v121
  %v126 = vmul.f32 %v114, %v122
  %v127 = vmul.f32 %v115, %v123
  %v128 = vld [vmem:[%s2] sm:$0xff]
  %v129 = vld [vmem:[%s2 + $0x8] sm:$0xff]
  %v130 = vld [vmem:[%s2 + $0x10] sm:$0xff]
  %v131 = vld [vmem:[%s2 + $0x18] sm:$0xff]
  %v132 = vmul.f32 %v92, %v124
  %v133 = vmul.f32 %v93, %v125
  %v134 = vmul.f32 %v94, %v126
  %v135 = vmul.f32 %v95, %v127
  %v136 = vsub.f32 %v128, %v132
  %v137 = vsub.f32 %v129, %v133
  %v138 = vsub.f32 %v130, %v134
  %v139 = vsub.f32 %v131, %v135
  %141 = vset.pattern.permute.xlu0 0
  %142 = vperm.xlu0 %141, %v124
  %v143 = vpop.permute.xlu0 %142
  %146 = vset.pattern.permute.xlu0 0
  %147 = vperm.xlu0 %146, %v125
  %v148 = vpop.permute.xlu0 %147
  %151 = vset.pattern.permute.xlu0 0
  %152 = vperm.xlu0 %151, %v126
  %v153 = vpop.permute.xlu0 %152
  %156 = vset.pattern.permute.xlu0 0
  %157 = vperm.xlu0 %156, %v127
  %v158 = vpop.permute.xlu0 %157
  %v160 = vmul.f32 %v20, %v143
  %v161 = vmul.f32 %v21, %v143
  %v162 = vmul.f32 %v22, %v143
  %v163 = vmul.f32 %v23, %v143
  %v164 = vmul.f32 %v24, %v148
  %v165 = vmul.f32 %v25, %v148
  %v166 = vmul.f32 %v26, %v148
  %v167 = vmul.f32 %v27, %v148
  %v168 = vmul.f32 %v28, %v153
  %v169 = vmul.f32 %v29, %v153
  %v170 = vmul.f32 %v30, %v153
  %v171 = vmul.f32 %v31, %v153
  %v172 = vmul.f32 %v32, %v158
  %v173 = vmul.f32 %v33, %v158
  %v174 = vmul.f32 %v34, %v158
  %v175 = vmul.f32 %v35, %v158
  %177 = vset.pattern.permute.xlu0 0
  %178 = vperm.xlu0 %177, %v136
  %v179 = vpop.permute.xlu0 %178
  %182 = vset.pattern.permute.xlu0 0
  %183 = vperm.xlu0 %182, %v137
  %v184 = vpop.permute.xlu0 %183
  %187 = vset.pattern.permute.xlu0 0
  %188 = vperm.xlu0 %187, %v138
  %v189 = vpop.permute.xlu0 %188
  %192 = vset.pattern.permute.xlu0 0
  %193 = vperm.xlu0 %192, %v139
  %v194 = vpop.permute.xlu0 %193
  %v196 = vadd.f32 %v160, %v179
  %v197 = vadd.f32 %v161, %v179
  %v198 = vadd.f32 %v162, %v179
  %v199 = vadd.f32 %v163, %v179
  %v200 = vadd.f32 %v164, %v184
  %v201 = vadd.f32 %v165, %v184
  %v202 = vadd.f32 %v166, %v184
  %v203 = vadd.f32 %v167, %v184
  %v204 = vadd.f32 %v168, %v189
  %v205 = vadd.f32 %v169, %v189
  %v206 = vadd.f32 %v170, %v189
  %v207 = vadd.f32 %v171, %v189
  %v208 = vadd.f32 %v172, %v194
  %v209 = vadd.f32 %v173, %v194
  %v210 = vadd.f32 %v174, %v194
  %v211 = vadd.f32 %v175, %v194
  %v212 = vmax.f32 %v196, 0.0
  %v213 = vmax.f32 %v197, 0.0
  %v214 = vmax.f32 %v198, 0.0
  %v215 = vmax.f32 %v199, 0.0
  %v216 = vmax.f32 %v200, 0.0
  %v217 = vmax.f32 %v201, 0.0
  %v218 = vmax.f32 %v202, 0.0
  %v219 = vmax.f32 %v203, 0.0
  %v220 = vmax.f32 %v204, 0.0
  %v221 = vmax.f32 %v205, 0.0
  %v222 = vmax.f32 %v206, 0.0
  %v223 = vmax.f32 %v207, 0.0
  %v224 = vmax.f32 %v208, 0.0
  %v225 = vmax.f32 %v209, 0.0
  %v226 = vmax.f32 %v210, 0.0
  %v227 = vmax.f32 %v211, 0.0
  %v228 = vpack.c.bf16 %v216, %v212
  %v229 = vpack.c.bf16 %v217, %v213
  %v230 = vpack.c.bf16 %v218, %v214
  %v231 = vpack.c.bf16 %v219, %v215
  %v232 = vpack.c.bf16 %v224, %v220
  %v233 = vpack.c.bf16 %v225, %v221
  %v234 = vpack.c.bf16 %v226, %v222
  %v235 = vpack.c.bf16 %v227, %v223
  %v236 = vlaneseq
  %v237 = vand.u32 %v236, 127
  %v238 = vadd.s32 %v237, 128
  %v239 = vadd.s32 %v237, 256
  %v240 = vadd.s32 %v237, 384
  %v241 = vand.u32 %v237, 15
  %v242 = vand.u32 %v238, 15
  %v243 = vand.u32 %v239, 15
  %v244 = vand.u32 %v240, 15
  %v245 = vshra.s32 %v237, 4
  %v246 = vshra.s32 %v238, 4
  %v247 = vshra.s32 %v239, 4
  %v248 = vshra.s32 %v240, 4
  %v249 = vand.u32 %v245, 15
  %v250 = vand.u32 %v246, 15
  %v251 = vand.u32 %v247, 15
  %v252 = vand.u32 %v248, 15
  %261 = vrot.lane.b32.xlu0 %v228, 17
  %v262 = vpop.permute.xlu0 %261
  %263 = vrot.lane.b32.xlu0 %v229, 17
  %v264 = vpop.permute.xlu0 %263
  %265 = vrot.lane.b32.xlu0 %v230, 17
  %v266 = vpop.permute.xlu0 %265
  %267 = vrot.lane.b32.xlu0 %v231, 17
  %v268 = vpop.permute.xlu0 %267
  %269 = vrot.lane.b32.xlu0 %v232, 17
  %v270 = vpop.permute.xlu0 %269
  %271 = vrot.lane.b32.xlu0 %v233, 17
  %v272 = vpop.permute.xlu0 %271
  %273 = vrot.lane.b32.xlu0 %v234, 17
  %v274 = vpop.permute.xlu0 %273
  %275 = vrot.lane.b32.xlu0 %v235, 17
  %v276 = vpop.permute.xlu0 %275
  %vm277 = vcmask 138240
  %v278 = vsel %vm277, %v262, %v264
  %v279 = vsel %vm277, %v264, %v266
  %v280 = vsel %vm277, %v266, %v268
  %v281 = vsel %vm277, %v270, %v272
  %v282 = vsel %vm277, %v272, %v274
  %v283 = vsel %vm277, %v274, %v276
  %vm290 = vcmask 138240
  %v293 = vsel %vm290, 0, %v262
  %v296 = vsel %vm290, 0, %v270
  %v298 = vadd.s32 %v241, 4294967295
  %v299 = vadd.s32 %v242, 4294967295
  %v300 = vadd.s32 %v243, 4294967295
  %v301 = vadd.s32 %v244, 4294967295
  %vm302 = vcmp.ge.s32.totalorder %v298, 0
  %vm303 = vcmp.ge.s32.totalorder %v299, 0
  %vm304 = vcmp.ge.s32.totalorder %v300, 0
  %vm305 = vcmp.ge.s32.totalorder %v301, 0
  %vm306 = vcmp.lt.s32.totalorder %v298, 16
  %vm307 = vcmp.lt.s32.totalorder %v299, 16
  %vm308 = vcmp.lt.s32.totalorder %v300, 16
  %vm309 = vcmp.lt.s32.totalorder %v301, 16
  %vm310 = vmand %vm302, %vm306
  %vm311 = vmand %vm303, %vm307
  %vm312 = vmand %vm304, %vm308
  %vm313 = vmand %vm305, %vm309
  %v314 = vadd.s32 %v249, 4294967295
  %v315 = vadd.s32 %v250, 4294967295
  %v316 = vadd.s32 %v251, 4294967295
  %v317 = vadd.s32 %v252, 4294967295
  %vm318 = vcmp.ge.s32.totalorder %v314, 0
  %vm319 = vcmp.ge.s32.totalorder %v315, 0
  %vm320 = vcmp.ge.s32.totalorder %v316, 0
  %vm321 = vcmp.ge.s32.totalorder %v317, 0
  %vm322 = vmand %vm310, %vm318
  %vm323 = vmand %vm311, %vm319
  %vm324 = vmand %vm312, %vm320
  %vm325 = vmand %vm313, %vm321
  %vm326 = vcmp.lt.s32.totalorder %v314, 16
  %vm327 = vcmp.lt.s32.totalorder %v315, 16
  %vm328 = vcmp.lt.s32.totalorder %v316, 16
  %vm329 = vcmp.lt.s32.totalorder %v317, 16
  %vm330 = vmand %vm322, %vm326
  %vm331 = vmand %vm323, %vm327
  %vm332 = vmand %vm324, %vm328
  %vm333 = vmand %vm325, %vm329
  %vm334 = vmpackc.low %vm331, %vm330
  %vm335 = vmpackc.low %vm333, %vm332
  %v336 = vsel %vm334, 65537, 0
  %v337 = vsel %vm335, 65537, 0
  %v338 = vlaneseq
  %v339 = vshrl.u32 %v338, 7
  %v340 = vsub.s32 0, %v339
  %v341 = vrot.slane %v336, %v340
  %v342 = vlaneseq
  %v343 = vshrl.u32 %v342, 7
  %v344 = vsub.s32 4, %v343
  %v345 = vrot.slane %v336, %v344
  %v346 = vlaneseq
  %v347 = vshrl.u32 %v346, 7
  %v348 = vsub.s32 0, %v347
  %v349 = vrot.slane %v337, %v348
  %v350 = vlaneseq
  %v351 = vshrl.u32 %v350, 7
  %v352 = vsub.s32 4, %v351
  %v353 = vrot.slane %v337, %v352
  %vm354 = vcmp.ne.s16.totalorder %v341, 0
  %vm355 = vcmp.ne.s16.totalorder %v345, 0
  %vm356 = vcmp.ne.s16.totalorder %v349, 0
  %vm357 = vcmp.ne.s16.totalorder %v353, 0
  %v358 = vsel %vm354, %v293, 0
  %v359 = vsel %vm355, %v278, 0
  %v360 = vsel %vm356, %v279, 0
  %v361 = vsel %vm357, %v280, 0
  %v362 = vsel %vm354, %v296, 0
  %v363 = vsel %vm355, %v281, 0
  %v364 = vsel %vm356, %v282, 0
  %v365 = vsel %vm357, %v283, 0
  %366 = vrot.lane.b32.xlu0 %v228, 16
  %v367 = vpop.permute.xlu0 %366
  %368 = vrot.lane.b32.xlu0 %v229, 16
  %v369 = vpop.permute.xlu0 %368
  %370 = vrot.lane.b32.xlu0 %v230, 16
  %v371 = vpop.permute.xlu0 %370
  %372 = vrot.lane.b32.xlu0 %v231, 16
  %v373 = vpop.permute.xlu0 %372
  %374 = vrot.lane.b32.xlu0 %v232, 16
  %v375 = vpop.permute.xlu0 %374
  %376 = vrot.lane.b32.xlu0 %v233, 16
  %v377 = vpop.permute.xlu0 %376
  %378 = vrot.lane.b32.xlu0 %v234, 16
  %v379 = vpop.permute.xlu0 %378
  %380 = vrot.lane.b32.xlu0 %v235, 16
  %v381 = vpop.permute.xlu0 %380
  %vm382 = vcmask 130048
  %v383 = vsel %vm382, %v367, %v369
  %v384 = vsel %vm382, %v369, %v371
  %v385 = vsel %vm382, %v371, %v373
  %v386 = vsel %vm382, %v375, %v377
  %v387 = vsel %vm382, %v377, %v379
  %v388 = vsel %vm382, %v379, %v381
  %vm395 = vcmask 130048
  %v397 = vsel %vm395, 0, %v367
  %v400 = vsel %vm395, 0, %v375
  %vm402 = vcmp.ge.s32.totalorder %v241, 0
  %vm403 = vcmp.ge.s32.totalorder %v242, 0
  %vm404 = vcmp.ge.s32.totalorder %v243, 0
  %vm405 = vcmp.ge.s32.totalorder %v244, 0
  %vm406 = vcmp.lt.s32.totalorder %v241, 16
  %vm407 = vcmp.lt.s32.totalorder %v242, 16
  %vm408 = vcmp.lt.s32.totalorder %v243, 16
  %vm409 = vcmp.lt.s32.totalorder %v244, 16
  %vm410 = vmand %vm402, %vm406
  %vm411 = vmand %vm403, %vm407
  %vm412 = vmand %vm404, %vm408
  %vm413 = vmand %vm405, %vm409
  %vm414 = vmand %vm410, %vm318
  %vm415 = vmand %vm411, %vm319
  %vm416 = vmand %vm412, %vm320
  %vm417 = vmand %vm413, %vm321
  %vm418 = vmand %vm414, %vm326
  %vm419 = vmand %vm415, %vm327
  %vm420 = vmand %vm416, %vm328
  %vm421 = vmand %vm417, %vm329
  %vm422 = vmpackc.low %vm419, %vm418
  %vm423 = vmpackc.low %vm421, %vm420
  %v424 = vsel %vm422, 65537, 0
  %v425 = vsel %vm423, 65537, 0
  %v426 = vlaneseq
  %v427 = vshrl.u32 %v426, 7
  %v428 = vsub.s32 0, %v427
  %v429 = vrot.slane %v424, %v428
  %v430 = vlaneseq
  %v431 = vshrl.u32 %v430, 7
  %v432 = vsub.s32 4, %v431
  %v433 = vrot.slane %v424, %v432
  %v434 = vlaneseq
  %v435 = vshrl.u32 %v434, 7
  %v436 = vsub.s32 0, %v435
  %v437 = vrot.slane %v425, %v436
  %v438 = vlaneseq
  %v439 = vshrl.u32 %v438, 7
  %v440 = vsub.s32 4, %v439
  %v441 = vrot.slane %v425, %v440
  %vm442 = vcmp.ne.s16.totalorder %v429, 0
  %vm443 = vcmp.ne.s16.totalorder %v433, 0
  %vm444 = vcmp.ne.s16.totalorder %v437, 0
  %vm445 = vcmp.ne.s16.totalorder %v441, 0
  %v446 = vsel %vm442, %v397, 0
  %v447 = vsel %vm443, %v383, 0
  %v448 = vsel %vm444, %v384, 0
  %v449 = vsel %vm445, %v385, 0
  %v450 = vsel %vm442, %v400, 0
  %v451 = vsel %vm443, %v386, 0
  %v452 = vsel %vm444, %v387, 0
  %v453 = vsel %vm445, %v388, 0
  %454 = vrot.lane.b32.xlu0 %v228, 15
  %v455 = vpop.permute.xlu0 %454
  %456 = vrot.lane.b32.xlu0 %v229, 15
  %v457 = vpop.permute.xlu0 %456
  %458 = vrot.lane.b32.xlu0 %v230, 15
  %v459 = vpop.permute.xlu0 %458
  %460 = vrot.lane.b32.xlu0 %v231, 15
  %v461 = vpop.permute.xlu0 %460
  %462 = vrot.lane.b32.xlu0 %v232, 15
  %v463 = vpop.permute.xlu0 %462
  %464 = vrot.lane.b32.xlu0 %v233, 15
  %v465 = vpop.permute.xlu0 %464
  %466 = vrot.lane.b32.xlu0 %v234, 15
  %v467 = vpop.permute.xlu0 %466
  %468 = vrot.lane.b32.xlu0 %v235, 15
  %v469 = vpop.permute.xlu0 %468
  %vm470 = vcmask 121856
  %v471 = vsel %vm470, %v455, %v457
  %v472 = vsel %vm470, %v457, %v459
  %v473 = vsel %vm470, %v459, %v461
  %v474 = vsel %vm470, %v463, %v465
  %v475 = vsel %vm470, %v465, %v467
  %v476 = vsel %vm470, %v467, %v469
  %vm483 = vcmask 121856
  %v485 = vsel %vm483, 0, %v455
  %v488 = vsel %vm483, 0, %v463
  %v490 = vadd.s32 %v241, 1
  %v491 = vadd.s32 %v242, 1
  %v492 = vadd.s32 %v243, 1
  %v493 = vadd.s32 %v244, 1
  %vm494 = vcmp.ge.s32.totalorder %v490, 0
  %vm495 = vcmp.ge.s32.totalorder %v491, 0
  %vm496 = vcmp.ge.s32.totalorder %v492, 0
  %vm497 = vcmp.ge.s32.totalorder %v493, 0
  %vm498 = vcmp.lt.s32.totalorder %v490, 16
  %vm499 = vcmp.lt.s32.totalorder %v491, 16
  %vm500 = vcmp.lt.s32.totalorder %v492, 16
  %vm501 = vcmp.lt.s32.totalorder %v493, 16
  %vm502 = vmand %vm494, %vm498
  %vm503 = vmand %vm495, %vm499
  %vm504 = vmand %vm496, %vm500
  %vm505 = vmand %vm497, %vm501
  %vm506 = vmand %vm502, %vm318
  %vm507 = vmand %vm503, %vm319
  %vm508 = vmand %vm504, %vm320
  %vm509 = vmand %vm505, %vm321
  %vm510 = vmand %vm506, %vm326
  %vm511 = vmand %vm507, %vm327
  %vm512 = vmand %vm508, %vm328
  %vm513 = vmand %vm509, %vm329
  %vm514 = vmpackc.low %vm511, %vm510
  %vm515 = vmpackc.low %vm513, %vm512
  %v516 = vsel %vm514, 65537, 0
  %v517 = vsel %vm515, 65537, 0
  %v518 = vlaneseq
  %v519 = vshrl.u32 %v518, 7
  %v520 = vsub.s32 0, %v519
  %v521 = vrot.slane %v516, %v520
  %v522 = vlaneseq
  %v523 = vshrl.u32 %v522, 7
  %v524 = vsub.s32 4, %v523
  %v525 = vrot.slane %v516, %v524
  %v526 = vlaneseq
  %v527 = vshrl.u32 %v526, 7
  %v528 = vsub.s32 0, %v527
  %v529 = vrot.slane %v517, %v528
  %v530 = vlaneseq
  %v531 = vshrl.u32 %v530, 7
  %v532 = vsub.s32 4, %v531
  %v533 = vrot.slane %v517, %v532
  %vm534 = vcmp.ne.s16.totalorder %v521, 0
  %vm535 = vcmp.ne.s16.totalorder %v525, 0
  %vm536 = vcmp.ne.s16.totalorder %v529, 0
  %vm537 = vcmp.ne.s16.totalorder %v533, 0
  %v538 = vsel %vm534, %v485, 0
  %v539 = vsel %vm535, %v471, 0
  %v540 = vsel %vm536, %v472, 0
  %v541 = vsel %vm537, %v473, 0
  %v542 = vsel %vm534, %v488, 0
  %v543 = vsel %vm535, %v474, 0
  %v544 = vsel %vm536, %v475, 0
  %v545 = vsel %vm537, %v476, 0
  %546 = vrot.lane.b32.xlu0 %v228, 1
  %v547 = vpop.permute.xlu0 %546
  %548 = vrot.lane.b32.xlu0 %v229, 1
  %v549 = vpop.permute.xlu0 %548
  %550 = vrot.lane.b32.xlu0 %v230, 1
  %v551 = vpop.permute.xlu0 %550
  %552 = vrot.lane.b32.xlu0 %v231, 1
  %v553 = vpop.permute.xlu0 %552
  %554 = vrot.lane.b32.xlu0 %v232, 1
  %v555 = vpop.permute.xlu0 %554
  %556 = vrot.lane.b32.xlu0 %v233, 1
  %v557 = vpop.permute.xlu0 %556
  %558 = vrot.lane.b32.xlu0 %v234, 1
  %v559 = vpop.permute.xlu0 %558
  %560 = vrot.lane.b32.xlu0 %v235, 1
  %v561 = vpop.permute.xlu0 %560
  %vm562 = vcmask 7168
  %v563 = vsel %vm562, %v547, %v549
  %v564 = vsel %vm562, %v549, %v551
  %v565 = vsel %vm562, %v551, %v553
  %v566 = vsel %vm562, %v555, %v557
  %v567 = vsel %vm562, %v557, %v559
  %v568 = vsel %vm562, %v559, %v561
  %vm575 = vcmask 7168
  %v577 = vsel %vm575, 0, %v547
  %v580 = vsel %vm575, 0, %v555
  %vm582 = vcmp.ge.s32.totalorder %v249, 0
  %vm583 = vcmp.ge.s32.totalorder %v250, 0
  %vm584 = vcmp.ge.s32.totalorder %v251, 0
  %vm585 = vcmp.ge.s32.totalorder %v252, 0
  %vm586 = vmand %vm310, %vm582
  %vm587 = vmand %vm311, %vm583
  %vm588 = vmand %vm312, %vm584
  %vm589 = vmand %vm313, %vm585
  %vm590 = vcmp.lt.s32.totalorder %v249, 16
  %vm591 = vcmp.lt.s32.totalorder %v250, 16
  %vm592 = vcmp.lt.s32.totalorder %v251, 16
  %vm593 = vcmp.lt.s32.totalorder %v252, 16
  %vm594 = vmand %vm586, %vm590
  %vm595 = vmand %vm587, %vm591
  %vm596 = vmand %vm588, %vm592
  %vm597 = vmand %vm589, %vm593
  %vm598 = vmpackc.low %vm595, %vm594
  %vm599 = vmpackc.low %vm597, %vm596
  %v600 = vsel %vm598, 65537, 0
  %v601 = vsel %vm599, 65537, 0
  %v602 = vlaneseq
  %v603 = vshrl.u32 %v602, 7
  %v604 = vsub.s32 0, %v603
  %v605 = vrot.slane %v600, %v604
  %v606 = vlaneseq
  %v607 = vshrl.u32 %v606, 7
  %v608 = vsub.s32 4, %v607
  %v609 = vrot.slane %v600, %v608
  %v610 = vlaneseq
  %v611 = vshrl.u32 %v610, 7
  %v612 = vsub.s32 0, %v611
  %v613 = vrot.slane %v601, %v612
  %v614 = vlaneseq
  %v615 = vshrl.u32 %v614, 7
  %v616 = vsub.s32 4, %v615
  %v617 = vrot.slane %v601, %v616
  %vm618 = vcmp.ne.s16.totalorder %v605, 0
  %vm619 = vcmp.ne.s16.totalorder %v609, 0
  %vm620 = vcmp.ne.s16.totalorder %v613, 0
  %vm621 = vcmp.ne.s16.totalorder %v617, 0
  %v622 = vsel %vm618, %v577, 0
  %v623 = vsel %vm619, %v563, 0
  %v624 = vsel %vm620, %v564, 0
  %v625 = vsel %vm621, %v565, 0
  %v626 = vsel %vm618, %v580, 0
  %v627 = vsel %vm619, %v566, 0
  %v628 = vsel %vm620, %v567, 0
  %v629 = vsel %vm621, %v568, 0
  %vm630 = vmand %vm410, %vm582
  %vm631 = vmand %vm411, %vm583
  %vm632 = vmand %vm412, %vm584
  %vm633 = vmand %vm413, %vm585
  %vm634 = vmand %vm630, %vm590
  %vm635 = vmand %vm631, %vm591
  %vm636 = vmand %vm632, %vm592
  %vm637 = vmand %vm633, %vm593
  %vm638 = vmpackc.low %vm635, %vm634
  %vm639 = vmpackc.low %vm637, %vm636
  %v640 = vsel %vm638, 65537, 0
  %v641 = vsel %vm639, 65537, 0
  %v642 = vlaneseq
  %v643 = vshrl.u32 %v642, 7
  %v644 = vsub.s32 0, %v643
  %v645 = vrot.slane %v640, %v644
  %v646 = vlaneseq
  %v647 = vshrl.u32 %v646, 7
  %v648 = vsub.s32 4, %v647
  %v649 = vrot.slane %v640, %v648
  %v650 = vlaneseq
  %v651 = vshrl.u32 %v650, 7
  %v652 = vsub.s32 0, %v651
  %v653 = vrot.slane %v641, %v652
  %v654 = vlaneseq
  %v655 = vshrl.u32 %v654, 7
  %v656 = vsub.s32 4, %v655
  %v657 = vrot.slane %v641, %v656
  %vm658 = vcmp.ne.s16.totalorder %v645, 0
  %vm659 = vcmp.ne.s16.totalorder %v649, 0
  %vm660 = vcmp.ne.s16.totalorder %v653, 0
  %vm661 = vcmp.ne.s16.totalorder %v657, 0
  %v662 = vsel %vm658, %v228, 0
  %v663 = vsel %vm659, %v229, 0
  %v664 = vsel %vm660, %v230, 0
  %v665 = vsel %vm661, %v231, 0
  %v666 = vsel %vm658, %v232, 0
  %v667 = vsel %vm659, %v233, 0
  %v668 = vsel %vm660, %v234, 0
  %v669 = vsel %vm661, %v235, 0
  %670 = vrot.lane.b32.xlu0 %v228, 127
  %v671 = vpop.permute.xlu0 %670
  %672 = vrot.lane.b32.xlu0 %v229, 127
  %v673 = vpop.permute.xlu0 %672
  %674 = vrot.lane.b32.xlu0 %v230, 127
  %v675 = vpop.permute.xlu0 %674
  %676 = vrot.lane.b32.xlu0 %v231, 127
  %v677 = vpop.permute.xlu0 %676
  %678 = vrot.lane.b32.xlu0 %v232, 127
  %v679 = vpop.permute.xlu0 %678
  %680 = vrot.lane.b32.xlu0 %v233, 127
  %v681 = vpop.permute.xlu0 %680
  %682 = vrot.lane.b32.xlu0 %v234, 127
  %v683 = vpop.permute.xlu0 %682
  %684 = vrot.lane.b32.xlu0 %v235, 127
  %v685 = vpop.permute.xlu0 %684
  %vm686 = vcmask 1039360
  %v687 = vsel %vm686, %v671, %v673
  %v688 = vsel %vm686, %v673, %v675
  %v689 = vsel %vm686, %v675, %v677
  %v690 = vsel %vm686, %v679, %v681
  %v691 = vsel %vm686, %v681, %v683
  %v692 = vsel %vm686, %v683, %v685
  %vm699 = vcmask 1039360
  %v701 = vsel %vm699, %v677, 0
  %v704 = vsel %vm699, %v685, 0
  %vm706 = vmand %vm502, %vm582
  %vm707 = vmand %vm503, %vm583
  %vm708 = vmand %vm504, %vm584
  %vm709 = vmand %vm505, %vm585
  %vm710 = vmand %vm706, %vm590
  %vm711 = vmand %vm707, %vm591
  %vm712 = vmand %vm708, %vm592
  %vm713 = vmand %vm709, %vm593
  %vm714 = vmpackc.low %vm711, %vm710
  %vm715 = vmpackc.low %vm713, %vm712
  %v716 = vsel %vm714, 65537, 0
  %v717 = vsel %vm715, 65537, 0
  %v718 = vlaneseq
  %v719 = vshrl.u32 %v718, 7
  %v720 = vsub.s32 0, %v719
  %v721 = vrot.slane %v716, %v720
  %v722 = vlaneseq
  %v723 = vshrl.u32 %v722, 7
  %v724 = vsub.s32 4, %v723
  %v725 = vrot.slane %v716, %v724
  %v726 = vlaneseq
  %v727 = vshrl.u32 %v726, 7
  %v728 = vsub.s32 0, %v727
  %v729 = vrot.slane %v717, %v728
  %v730 = vlaneseq
  %v731 = vshrl.u32 %v730, 7
  %v732 = vsub.s32 4, %v731
  %v733 = vrot.slane %v717, %v732
  %vm734 = vcmp.ne.s16.totalorder %v721, 0
  %vm735 = vcmp.ne.s16.totalorder %v725, 0
  %vm736 = vcmp.ne.s16.totalorder %v729, 0
  %vm737 = vcmp.ne.s16.totalorder %v733, 0
  %v738 = vsel %vm734, %v687, 0
  %v739 = vsel %vm735, %v688, 0
  %v740 = vsel %vm736, %v689, 0
  %v741 = vsel %vm737, %v701, 0
  %v742 = vsel %vm734, %v690, 0
  %v743 = vsel %vm735, %v691, 0
  %v744 = vsel %vm736, %v692, 0
  %v745 = vsel %vm737, %v704, 0
  %746 = vrot.lane.b32.xlu0 %v228, 113
  %v747 = vpop.permute.xlu0 %746
  %748 = vrot.lane.b32.xlu0 %v229, 113
  %v749 = vpop.permute.xlu0 %748
  %750 = vrot.lane.b32.xlu0 %v230, 113
  %v751 = vpop.permute.xlu0 %750
  %752 = vrot.lane.b32.xlu0 %v231, 113
  %v753 = vpop.permute.xlu0 %752
  %754 = vrot.lane.b32.xlu0 %v232, 113
  %v755 = vpop.permute.xlu0 %754
  %756 = vrot.lane.b32.xlu0 %v233, 113
  %v757 = vpop.permute.xlu0 %756
  %758 = vrot.lane.b32.xlu0 %v234, 113
  %v759 = vpop.permute.xlu0 %758
  %760 = vrot.lane.b32.xlu0 %v235, 113
  %v761 = vpop.permute.xlu0 %760
  %vm762 = vcmask 924672
  %v763 = vsel %vm762, %v747, %v749
  %v764 = vsel %vm762, %v749, %v751
  %v765 = vsel %vm762, %v751, %v753
  %v766 = vsel %vm762, %v755, %v757
  %v767 = vsel %vm762, %v757, %v759
  %v768 = vsel %vm762, %v759, %v761
  %vm775 = vcmask 924672
  %v777 = vsel %vm775, %v753, 0
  %v780 = vsel %vm775, %v761, 0
  %v782 = vadd.s32 %v249, 1
  %v783 = vadd.s32 %v250, 1
  %v784 = vadd.s32 %v251, 1
  %v785 = vadd.s32 %v252, 1
  %vm786 = vcmp.ge.s32.totalorder %v782, 0
  %vm787 = vcmp.ge.s32.totalorder %v783, 0
  %vm788 = vcmp.ge.s32.totalorder %v784, 0
  %vm789 = vcmp.ge.s32.totalorder %v785, 0
  %vm790 = vmand %vm310, %vm786
  %vm791 = vmand %vm311, %vm787
  %vm792 = vmand %vm312, %vm788
  %vm793 = vmand %vm313, %vm789
  %vm794 = vcmp.lt.s32.totalorder %v782, 16
  %vm795 = vcmp.lt.s32.totalorder %v783, 16
  %vm796 = vcmp.lt.s32.totalorder %v784, 16
  %vm797 = vcmp.lt.s32.totalorder %v785, 16
  %vm798 = vmand %vm790, %vm794
  %vm799 = vmand %vm791, %vm795
  %vm800 = vmand %vm792, %vm796
  %vm801 = vmand %vm793, %vm797
  %vm802 = vmpackc.low %vm799, %vm798
  %vm803 = vmpackc.low %vm801, %vm800
  %v804 = vsel %vm802, 65537, 0
  %v805 = vsel %vm803, 65537, 0
  %v806 = vlaneseq
  %v807 = vshrl.u32 %v806, 7
  %v808 = vsub.s32 0, %v807
  %v809 = vrot.slane %v804, %v808
  %v810 = vlaneseq
  %v811 = vshrl.u32 %v810, 7
  %v812 = vsub.s32 4, %v811
  %v813 = vrot.slane %v804, %v812
  %v814 = vlaneseq
  %v815 = vshrl.u32 %v814, 7
  %v816 = vsub.s32 0, %v815
  %v817 = vrot.slane %v805, %v816
  %v818 = vlaneseq
  %v819 = vshrl.u32 %v818, 7
  %v820 = vsub.s32 4, %v819
  %v821 = vrot.slane %v805, %v820
  %vm822 = vcmp.ne.s16.totalorder %v809, 0
  %vm823 = vcmp.ne.s16.totalorder %v813, 0
  %vm824 = vcmp.ne.s16.totalorder %v817, 0
  %vm825 = vcmp.ne.s16.totalorder %v821, 0
  %v826 = vsel %vm822, %v763, 0
  %v827 = vsel %vm823, %v764, 0
  %v828 = vsel %vm824, %v765, 0
  %v829 = vsel %vm825, %v777, 0
  %v830 = vsel %vm822, %v766, 0
  %v831 = vsel %vm823, %v767, 0
  %v832 = vsel %vm824, %v768, 0
  %v833 = vsel %vm825, %v780, 0
  %834 = vrot.lane.b32.xlu0 %v228, 112
  %v835 = vpop.permute.xlu0 %834
  %836 = vrot.lane.b32.xlu0 %v229, 112
  %v837 = vpop.permute.xlu0 %836
  %838 = vrot.lane.b32.xlu0 %v230, 112
  %v839 = vpop.permute.xlu0 %838
  %840 = vrot.lane.b32.xlu0 %v231, 112
  %v841 = vpop.permute.xlu0 %840
  %842 = vrot.lane.b32.xlu0 %v232, 112
  %v843 = vpop.permute.xlu0 %842
  %844 = vrot.lane.b32.xlu0 %v233, 112
  %v845 = vpop.permute.xlu0 %844
  %846 = vrot.lane.b32.xlu0 %v234, 112
  %v847 = vpop.permute.xlu0 %846
  %848 = vrot.lane.b32.xlu0 %v235, 112
  %v849 = vpop.permute.xlu0 %848
  %vm850 = vcmask 916480
  %v851 = vsel %vm850, %v835, %v837
  %v852 = vsel %vm850, %v837, %v839
  %v853 = vsel %vm850, %v839, %v841
  %v854 = vsel %vm850, %v843, %v845
  %v855 = vsel %vm850, %v845, %v847
  %v856 = vsel %vm850, %v847, %v849
  %vm863 = vcmask 916480
  %v865 = vsel %vm863, %v841, 0
  %v868 = vsel %vm863, %v849, 0
  %vm870 = vmand %vm410, %vm786
  %vm871 = vmand %vm411, %vm787
  %vm872 = vmand %vm412, %vm788
  %vm873 = vmand %vm413, %vm789
  %vm874 = vmand %vm870, %vm794
  %vm875 = vmand %vm871, %vm795
  %vm876 = vmand %vm872, %vm796
  %vm877 = vmand %vm873, %vm797
  %vm878 = vmpackc.low %vm875, %vm874
  %vm879 = vmpackc.low %vm877, %vm876
  %v880 = vsel %vm878, 65537, 0
  %v881 = vsel %vm879, 65537, 0
  %v882 = vlaneseq
  %v883 = vshrl.u32 %v882, 7
  %v884 = vsub.s32 0, %v883
  %v885 = vrot.slane %v880, %v884
  %v886 = vlaneseq
  %v887 = vshrl.u32 %v886, 7
  %v888 = vsub.s32 4, %v887
  %v889 = vrot.slane %v880, %v888
  %v890 = vlaneseq
  %v891 = vshrl.u32 %v890, 7
  %v892 = vsub.s32 0, %v891
  %v893 = vrot.slane %v881, %v892
  %v894 = vlaneseq
  %v895 = vshrl.u32 %v894, 7
  %v896 = vsub.s32 4, %v895
  %v897 = vrot.slane %v881, %v896
  %vm898 = vcmp.ne.s16.totalorder %v885, 0
  %vm899 = vcmp.ne.s16.totalorder %v889, 0
  %vm900 = vcmp.ne.s16.totalorder %v893, 0
  %vm901 = vcmp.ne.s16.totalorder %v897, 0
  %v902 = vsel %vm898, %v851, 0
  %v903 = vsel %vm899, %v852, 0
  %v904 = vsel %vm900, %v853, 0
  %v905 = vsel %vm901, %v865, 0
  %v906 = vsel %vm898, %v854, 0
  %v907 = vsel %vm899, %v855, 0
  %v908 = vsel %vm900, %v856, 0
  %v909 = vsel %vm901, %v868, 0
  %910 = vrot.lane.b32.xlu0 %v228, 111
  %v911 = vpop.permute.xlu0 %910
  %912 = vrot.lane.b32.xlu0 %v229, 111
  %v913 = vpop.permute.xlu0 %912
  %914 = vrot.lane.b32.xlu0 %v230, 111
  %v915 = vpop.permute.xlu0 %914
  %916 = vrot.lane.b32.xlu0 %v231, 111
  %v917 = vpop.permute.xlu0 %916
  %918 = vrot.lane.b32.xlu0 %v232, 111
  %v919 = vpop.permute.xlu0 %918
  %920 = vrot.lane.b32.xlu0 %v233, 111
  %v921 = vpop.permute.xlu0 %920
  %922 = vrot.lane.b32.xlu0 %v234, 111
  %v923 = vpop.permute.xlu0 %922
  %924 = vrot.lane.b32.xlu0 %v235, 111
  %v925 = vpop.permute.xlu0 %924
  %vm926 = vcmask 908288
  %v927 = vsel %vm926, %v911, %v913
  %v928 = vsel %vm926, %v913, %v915
  %v929 = vsel %vm926, %v915, %v917
  %v930 = vsel %vm926, %v919, %v921
  %v931 = vsel %vm926, %v921, %v923
  %v932 = vsel %vm926, %v923, %v925
  %vm939 = vcmask 908288
  %v941 = vsel %vm939, %v917, 0
  %v944 = vsel %vm939, %v925, 0
  %vm946 = vmand %vm502, %vm786
  %vm947 = vmand %vm503, %vm787
  %vm948 = vmand %vm504, %vm788
  %vm949 = vmand %vm505, %vm789
  %vm950 = vmand %vm946, %vm794
  %vm951 = vmand %vm947, %vm795
  %vm952 = vmand %vm948, %vm796
  %vm953 = vmand %vm949, %vm797
  %vm954 = vmpackc.low %vm951, %vm950
  %vm955 = vmpackc.low %vm953, %vm952
  %v956 = vsel %vm954, 65537, 0
  %v957 = vsel %vm955, 65537, 0
  %v958 = vlaneseq
  %v959 = vshrl.u32 %v958, 7
  %v960 = vsub.s32 0, %v959
  %v961 = vrot.slane %v956, %v960
  %v962 = vlaneseq
  %v963 = vshrl.u32 %v962, 7
  %v964 = vsub.s32 4, %v963
  %v965 = vrot.slane %v956, %v964
  %v966 = vlaneseq
  %v967 = vshrl.u32 %v966, 7
  %v968 = vsub.s32 0, %v967
  %v969 = vrot.slane %v957, %v968
  %v970 = vlaneseq
  %v971 = vshrl.u32 %v970, 7
  %v972 = vsub.s32 4, %v971
  %v973 = vrot.slane %v957, %v972
  %vm974 = vcmp.ne.s16.totalorder %v961, 0
  %vm975 = vcmp.ne.s16.totalorder %v965, 0
  %vm976 = vcmp.ne.s16.totalorder %v969, 0
  %vm977 = vcmp.ne.s16.totalorder %v973, 0
  %v978 = vsel %vm974, %v927, 0
  %v979 = vsel %vm975, %v928, 0
  %v980 = vsel %vm976, %v929, 0
  %v981 = vsel %vm977, %v941, 0
  %v982 = vsel %vm974, %v930, 0
  %v983 = vsel %vm975, %v931, 0
  %v984 = vsel %vm976, %v932, 0
  %v985 = vsel %vm977, %v944, 0
  %v986 = vld [vmem:[%s3] sm:$0xff]
  %v987 = vld [vmem:[%s3 + $0x8] sm:$0xf]
  %v988 = vld [vmem:[%s3 + $0xc] sm:$0xff]
  %v989 = vld [vmem:[%s3 + $0x14] sm:$0xf]
  %v990 = vld [vmem:[%s3 + $0x18] sm:$0xff]
  %v991 = vld [vmem:[%s3 + $0x20] sm:$0xf]
  %v992 = vld [vmem:[%s3 + $0x24] sm:$0xff]
  %v993 = vld [vmem:[%s3 + $0x2c] sm:$0xf]
  %v994 = vld [vmem:[%s3 + $0x30] sm:$0xff]
  %v995 = vld [vmem:[%s3 + $0x38] sm:$0xf]
  %v996 = vld [vmem:[%s3 + $0x3c] sm:$0xff]
  %v997 = vld [vmem:[%s3 + $0x44] sm:$0xf]
  %v998 = vld [vmem:[%s3 + $0x48] sm:$0xff]
  %v999 = vld [vmem:[%s3 + $0x50] sm:$0xf]
  %v1000 = vld [vmem:[%s3 + $0x54] sm:$0xff]
  %v1001 = vld [vmem:[%s3 + $0x5c] sm:$0xf]
  %v1002 = vld [vmem:[%s3 + $0x60] sm:$0xff]
  %v1003 = vld [vmem:[%s3 + $0x68] sm:$0xf]
  %v1004 = vld [vmem:[%s3 + $0x6c] sm:$0xff]
  %v1005 = vld [vmem:[%s3 + $0x74] sm:$0xf]
  %v1006 = vld [vmem:[%s3 + $0x78] sm:$0xff]
  %v1007 = vld [vmem:[%s3 + $0x80] sm:$0xf]
  %v1008 = vld [vmem:[%s3 + $0x84] sm:$0xff]
  %v1009 = vld [vmem:[%s3 + $0x8c] sm:$0xf]
  %v1010 = vld [vmem:[%s3 + $0x90] sm:$0xff]
  %v1011 = vld [vmem:[%s3 + $0x98] sm:$0xf]
  %v1012 = vld [vmem:[%s3 + $0x9c] sm:$0xff]
  %v1013 = vld [vmem:[%s3 + $0xa4] sm:$0xf]
  %v1014 = vld [vmem:[%s3 + $0xa8] sm:$0xff]
  %v1015 = vld [vmem:[%s3 + $0xb0] sm:$0xf]
  %v1016 = vld [vmem:[%s3 + $0xb4] sm:$0xff]
  %v1017 = vld [vmem:[%s3 + $0xbc] sm:$0xf]
  %v1050 = vunpack.c.l.b16 %v986
  %v1051 = vunpack.c.h.b16 %v986
  %v1052 = vunpack.c.l.b16 %v987
  %v1053 = vunpack.c.l.b16 %v988
  %v1054 = vunpack.c.h.b16 %v988
  %v1055 = vunpack.c.l.b16 %v989
  %v1056 = vunpack.c.l.b16 %v990
  %v1057 = vunpack.c.h.b16 %v990
  %v1058 = vunpack.c.l.b16 %v991
  %v1059 = vunpack.c.l.b16 %v992
  %v1060 = vunpack.c.h.b16 %v992
  %v1061 = vunpack.c.l.b16 %v993
  %v1062 = vunpack.c.l.b16 %v994
  %v1063 = vunpack.c.h.b16 %v994
  %v1064 = vunpack.c.l.b16 %v995
  %v1065 = vunpack.c.l.b16 %v996
  %v1066 = vunpack.c.h.b16 %v996
  %v1067 = vunpack.c.l.b16 %v997
  %v1068 = vunpack.c.l.b16 %v998
  %v1069 = vunpack.c.h.b16 %v998
  %v1070 = vunpack.c.l.b16 %v999
  %v1071 = vunpack.c.l.b16 %v1000
  %v1072 = vunpack.c.h.b16 %v1000
  %v1073 = vunpack.c.l.b16 %v1001
  %v1074 = vunpack.c.l.b16 %v1002
  %v1075 = vunpack.c.h.b16 %v1002
  %v1076 = vunpack.c.l.b16 %v1003
  %v1077 = vunpack.c.l.b16 %v1004
  %v1078 = vunpack.c.h.b16 %v1004
  %v1079 = vunpack.c.l.b16 %v1005
  %v1080 = vunpack.c.l.b16 %v1006
  %v1081 = vunpack.c.h.b16 %v1006
  %v1082 = vunpack.c.l.b16 %v1007
  %v1083 = vunpack.c.l.b16 %v1008
  %v1084 = vunpack.c.h.b16 %v1008
  %v1085 = vunpack.c.l.b16 %v1009
  %v1086 = vunpack.c.l.b16 %v1010
  %v1087 = vunpack.c.h.b16 %v1010
  %v1088 = vunpack.c.l.b16 %v1011
  %v1089 = vunpack.c.l.b16 %v1012
  %v1090 = vunpack.c.h.b16 %v1012
  %v1091 = vunpack.c.l.b16 %v1013
  %v1092 = vunpack.c.l.b16 %v1014
  %v1093 = vunpack.c.h.b16 %v1014
  %v1094 = vunpack.c.l.b16 %v1015
  %v1095 = vunpack.c.l.b16 %v1016
  %v1096 = vunpack.c.h.b16 %v1016
  %v1097 = vunpack.c.l.b16 %v1017
  %v1098 = vpack.c.b16 %v1053, %v1050
  %v1099 = vpack.c.b16 %v1054, %v1051
  %v1100 = vpack.c.b16 %v1055, %v1052
  %v1101 = vpack.c.b16 %v1059, %v1056
  %v1102 = vpack.c.b16 %v1060, %v1057
  %v1103 = vpack.c.b16 %v1061, %v1058
  %v1104 = vpack.c.b16 %v1065, %v1062
  %v1105 = vpack.c.b16 %v1066, %v1063
  %v1106 = vpack.c.b16 %v1067, %v1064
  %v1107 = vpack.c.b16 %v1071, %v1068
  %v1108 = vpack.c.b16 %v1072, %v1069
  %v1109 = vpack.c.b16 %v1073, %v1070
  %v1110 = vpack.c.b16 %v1077, %v1074
  %v1111 = vpack.c.b16 %v1078, %v1075
  %v1112 = vpack.c.b16 %v1079, %v1076
  %v1113 = vpack.c.b16 %v1083, %v1080
  %v1114 = vpack.c.b16 %v1084, %v1081
  %v1115 = vpack.c.b16 %v1085, %v1082
  %v1116 = vpack.c.b16 %v1089, %v1086
  %v1117 = vpack.c.b16 %v1090, %v1087
  %v1118 = vpack.c.b16 %v1091, %v1088
  %v1119 = vpack.c.b16 %v1095, %v1092
  %v1120 = vpack.c.b16 %v1096, %v1093
  %v1121 = vpack.c.b16 %v1097, %v1094
  %vm1138 = vcmask 261120
  %v1140 = vsel %vm1138, %v1100, 0
  %v1143 = vsel %vm1138, %v1103, 0
  %v1146 = vsel %vm1138, %v1106, 0
  %v1149 = vsel %vm1138, %v1109, 0
  %v1152 = vsel %vm1138, %v1112, 0
  %v1155 = vsel %vm1138, %v1115, 0
  %v1158 = vsel %vm1138, %v1118, 0
  %v1161 = vsel %vm1138, %v1121, 0
  %1163 = vmatprep.subr.bf16.mxu0 %v359
  %1164 = vmatpush1.bf16.msra.mxu0 %v358
  %1165 = vmatprep.subr.bf16.mxu0 %v363
  %1166 = vmatpush1.bf16.msra.mxu0 %v362
  %1167 = vmatprep.subr.bf16.mxu0 %v447
  %1168 = vmatpush1.bf16.msra.mxu0 %v446
  %1169 = vmatprep.subr.bf16.mxu0 %v451
  %1170 = vmatpush1.bf16.msra.mxu0 %v450
  %1171 = vmatprep.subr.bf16.mxu0 %v539
  %1172 = vmatpush1.bf16.msra.mxu0 %v538
  %1173 = vmatprep.subr.bf16.mxu0 %v543
  %1174 = vmatpush1.bf16.msra.mxu0 %v542
  %1175 = vmatprep.subr.bf16.mxu0 %v623
  %1176 = vmatpush1.bf16.msra.mxu0 %v622
  %1177 = vmatprep.subr.bf16.mxu0 %v627
  %1178 = vmatpush1.bf16.msra.mxu0 %v626
  %1179 = vmatprep.subr.bf16.mxu0 %v663
  %1180 = vmatpush1.bf16.msra.mxu0 %v662
  %1181 = vmatprep.subr.bf16.mxu0 %v667
  %1182 = vmatpush1.bf16.msra.mxu0 %v666
  %1183 = vmatprep.subr.bf16.mxu0 %v739
  %1184 = vmatpush1.bf16.msra.mxu0 %v738
  %1185 = vmatprep.subr.bf16.mxu0 %v743
  %1186 = vmatpush1.bf16.msra.mxu0 %v742
  %1187 = vmatprep.subr.bf16.mxu0 %v827
  %1188 = vmatpush1.bf16.msra.mxu0 %v826
  %1189 = vmatprep.subr.bf16.mxu0 %v831
  %1190 = vmatpush1.bf16.msra.mxu0 %v830
  %1191 = vmatprep.subr.bf16.mxu0 %v903
  %1192 = vmatpush1.bf16.msra.mxu0 %v902
  %1193 = vmatprep.subr.bf16.mxu0 %v907
  %1194 = vmatpush1.bf16.msra.mxu0 %v906
  %1195 = vmatprep.mubr.bf16.mxu0 %v1099
  %1196 = vmatmul.mubr.bf16.gmra.mrb[0].mxu0 %v1098
  %v1197 = vpop.f32.mrb[0].mxu0
  %v1198 = vadd.f32 0.0, %v1197
  %v1199 = vpop.f32.mrb[0].mxu0
  %v1200 = vadd.f32 0.0, %v1199
  %v1201 = vpop.f32.mrb[0].mxu0
  %v1202 = vadd.f32 0.0, %v1201
  %v1203 = vpop.f32.mrb[0].mxu0
  %v1204 = vadd.f32 0.0, %v1203
  %1205 = vmatprep.mubr.bf16.mxu0 %v1102
  %1206 = vmatmul.mubr.bf16.gmra.mrb[0].mxu0 %v1101
  %v1207 = vpop.f32.mrb[0].mxu0
  %v1208 = vadd.f32 0.0, %v1207
  %v1209 = vpop.f32.mrb[0].mxu0
  %v1210 = vadd.f32 0.0, %v1209
  %v1211 = vpop.f32.mrb[0].mxu0
  %v1212 = vadd.f32 0.0, %v1211
  %v1213 = vpop.f32.mrb[0].mxu0
  %v1214 = vadd.f32 0.0, %v1213
  %1215 = vmatprep.mubr.bf16.mxu0 %v1105
  %1216 = vmatmul.mubr.bf16.gmra.mrb[0].mxu0 %v1104
  %v1217 = vpop.f32.mrb[0].mxu0
  %v1218 = vadd.f32 0.0, %v1217
  %v1219 = vpop.f32.mrb[0].mxu0
  %v1220 = vadd.f32 0.0, %v1219
  %v1221 = vpop.f32.mrb[0].mxu0
  %v1222 = vadd.f32 0.0, %v1221
  %v1223 = vpop.f32.mrb[0].mxu0
  %v1224 = vadd.f32 0.0, %v1223
  %1225 = vmatprep.mubr.bf16.mxu0 %v1108
  %1226 = vmatmul.mubr.bf16.gmra.mrb[0].mxu0 %v1107
  %v1227 = vpop.f32.mrb[0].mxu0
  %v1228 = vadd.f32 0.0, %v1227
  %v1229 = vpop.f32.mrb[0].mxu0
  %v1230 = vadd.f32 0.0, %v1229
  %v1231 = vpop.f32.mrb[0].mxu0
  %v1232 = vadd.f32 0.0, %v1231
  %v1233 = vpop.f32.mrb[0].mxu0
  %v1234 = vadd.f32 0.0, %v1233
  %1235 = vmatprep.mubr.bf16.mxu0 %v1111
  %1236 = vmatmul.mubr.bf16.gmra.mrb[0].mxu0 %v1110
  %v1237 = vpop.f32.mrb[0].mxu0
  %v1238 = vadd.f32 0.0, %v1237
  %v1239 = vpop.f32.mrb[0].mxu0
  %v1240 = vadd.f32 0.0, %v1239
  %v1241 = vpop.f32.mrb[0].mxu0
  %v1242 = vadd.f32 0.0, %v1241
  %v1243 = vpop.f32.mrb[0].mxu0
  %v1244 = vadd.f32 0.0, %v1243
  %1245 = vmatprep.mubr.bf16.mxu0 %v1114
  %1246 = vmatmul.mubr.bf16.gmra.mrb[0].mxu0 %v1113
  %v1247 = vpop.f32.mrb[0].mxu0
  %v1248 = vadd.f32 0.0, %v1247
  %v1249 = vpop.f32.mrb[0].mxu0
  %v1250 = vadd.f32 0.0, %v1249
  %v1251 = vpop.f32.mrb[0].mxu0
  %v1252 = vadd.f32 0.0, %v1251
  %v1253 = vpop.f32.mrb[0].mxu0
  %v1254 = vadd.f32 0.0, %v1253
  %1255 = vmatprep.mubr.bf16.mxu0 %v1117
  %1256 = vmatmul.mubr.bf16.gmra.mrb[0].mxu0 %v1116
  %v1257 = vpop.f32.mrb[0].mxu0
  %v1258 = vadd.f32 0.0, %v1257
  %v1259 = vpop.f32.mrb[0].mxu0
  %v1260 = vadd.f32 0.0, %v1259
  %v1261 = vpop.f32.mrb[0].mxu0
  %v1262 = vadd.f32 0.0, %v1261
  %v1263 = vpop.f32.mrb[0].mxu0
  %v1264 = vadd.f32 0.0, %v1263
  %1265 = vmatprep.mubr.bf16.mxu0 %v1120
  %1266 = vmatmul.mubr.bf16.gmra.mrb[0].mxu0 %v1119
  %v1267 = vpop.f32.mrb[0].mxu0
  %v1268 = vadd.f32 0.0, %v1267
  %v1269 = vpop.f32.mrb[0].mxu0
  %v1270 = vadd.f32 0.0, %v1269
  %v1271 = vpop.f32.mrb[0].mxu0
  %v1272 = vadd.f32 0.0, %v1271
  %v1273 = vpop.f32.mrb[0].mxu0
  %v1274 = vadd.f32 0.0, %v1273
  %1275 = vdwg.mxu0
  %1276 = vmatprep.subr.bf16.mxu0 %v979
  %1277 = vmatpush1.bf16.msra.mxu0 %v978
  %1278 = vmatprep.subr.bf16.mxu0 %v983
  %1279 = vmatpush1.bf16.msra.mxu0 %v982
  %1280 = vmatprep.subr.bf16.mxu0 0
  %1281 = vmatpush1.bf16.msra.mxu0 0
  %1282 = vmatprep.subr.bf16.mxu0 0
  %1283 = vmatpush1.bf16.msra.mxu0 0
  %1284 = vmatprep.subr.bf16.mxu0 0
  %1285 = vmatpush1.bf16.msra.mxu0 0
  %1286 = vmatprep.subr.bf16.mxu0 0
  %1287 = vmatpush1.bf16.msra.mxu0 0
  %1288 = vmatprep.subr.bf16.mxu0 0
  %1289 = vmatpush1.bf16.msra.mxu0 0
  %1290 = vmatprep.subr.bf16.mxu0 0
  %1291 = vmatpush1.bf16.msra.mxu0 0
  %1292 = vmatprep.subr.bf16.mxu0 0
  %1293 = vmatpush1.bf16.msra.mxu0 0
  %1294 = vmatprep.subr.bf16.mxu0 0
  %1295 = vmatpush1.bf16.msra.mxu0 0
  %1296 = vmatprep.subr.bf16.mxu0 0
  %1297 = vmatpush1.bf16.msra.mxu0 0
  %1298 = vmatprep.subr.bf16.mxu0 0
  %1299 = vmatpush1.bf16.msra.mxu0 0
  %1300 = vmatprep.subr.bf16.mxu0 0
  %1301 = vmatpush1.bf16.msra.mxu0 0
  %1302 = vmatprep.subr.bf16.mxu0 0
  %1303 = vmatpush1.bf16.msra.mxu0 0
  %1304 = vmatprep.subr.bf16.mxu0 0
  %1305 = vmatpush1.bf16.msra.mxu0 0
  %1306 = vmatprep.subr.bf16.mxu0 0
  %1307 = vmatpush1.bf16.msra.mxu0 0
  %1308 = vmatprep.mubr.bf16.mxu0 0
  %1309 = vmatmul.mubr.bf16.gmra.mrb[0].mxu0 %v1140
  %v1310 = vpop.f32.mrb[0].mxu0
  %v1311 = vadd.f32 %v1198, %v1310
  %v1312 = vpop.f32.mrb[0].mxu0
  %v1313 = vadd.f32 %v1200, %v1312
  %v1314 = vpop.f32.mrb[0].mxu0
  %v1315 = vadd.f32 %v1202, %v1314
  %v1316 = vpop.f32.mrb[0].mxu0
  %v1317 = vadd.f32 %v1204, %v1316
  %1318 = vmatprep.mubr.bf16.mxu0 0
  %1319 = vmatmul.mubr.bf16.gmra.mrb[0].mxu0 %v1143
  %v1320 = vpop.f32.mrb[0].mxu0
  %v1321 = vadd.f32 %v1208, %v1320
  %v1322 = vpop.f32.mrb[0].mxu0
  %v1323 = vadd.f32 %v1210, %v1322
  %v1324 = vpop.f32.mrb[0].mxu0
  %v1325 = vadd.f32 %v1212, %v1324
  %v1326 = vpop.f32.mrb[0].mxu0
  %v1327 = vadd.f32 %v1214, %v1326
  %1328 = vmatprep.mubr.bf16.mxu0 0
  %1329 = vmatmul.mubr.bf16.gmra.mrb[0].mxu0 %v1146
  %v1330 = vpop.f32.mrb[0].mxu0
  %v1331 = vadd.f32 %v1218, %v1330
  %v1332 = vpop.f32.mrb[0].mxu0
  %v1333 = vadd.f32 %v1220, %v1332
  %v1334 = vpop.f32.mrb[0].mxu0
  %v1335 = vadd.f32 %v1222, %v1334
  %v1336 = vpop.f32.mrb[0].mxu0
  %v1337 = vadd.f32 %v1224, %v1336
  %1338 = vmatprep.mubr.bf16.mxu0 0
  %1339 = vmatmul.mubr.bf16.gmra.mrb[0].mxu0 %v1149
  %v1340 = vpop.f32.mrb[0].mxu0
  %v1341 = vadd.f32 %v1228, %v1340
  %v1342 = vpop.f32.mrb[0].mxu0
  %v1343 = vadd.f32 %v1230, %v1342
  %v1344 = vpop.f32.mrb[0].mxu0
  %v1345 = vadd.f32 %v1232, %v1344
  %v1346 = vpop.f32.mrb[0].mxu0
  %v1347 = vadd.f32 %v1234, %v1346
  %1348 = vmatprep.mubr.bf16.mxu0 0
  %1349 = vmatmul.mubr.bf16.gmra.mrb[0].mxu0 %v1152
  %v1350 = vpop.f32.mrb[0].mxu0
  %v1351 = vadd.f32 %v1238, %v1350
  %v1352 = vpop.f32.mrb[0].mxu0
  %v1353 = vadd.f32 %v1240, %v1352
  %v1354 = vpop.f32.mrb[0].mxu0
  %v1355 = vadd.f32 %v1242, %v1354
  %v1356 = vpop.f32.mrb[0].mxu0
  %v1357 = vadd.f32 %v1244, %v1356
  %1358 = vmatprep.mubr.bf16.mxu0 0
  %1359 = vmatmul.mubr.bf16.gmra.mrb[0].mxu0 %v1155
  %v1360 = vpop.f32.mrb[0].mxu0
  %v1361 = vadd.f32 %v1248, %v1360
  %v1362 = vpop.f32.mrb[0].mxu0
  %v1363 = vadd.f32 %v1250, %v1362
  %v1364 = vpop.f32.mrb[0].mxu0
  %v1365 = vadd.f32 %v1252, %v1364
  %v1366 = vpop.f32.mrb[0].mxu0
  %v1367 = vadd.f32 %v1254, %v1366
  %1368 = vmatprep.mubr.bf16.mxu0 0
  %1369 = vmatmul.mubr.bf16.gmra.mrb[0].mxu0 %v1158
  %v1370 = vpop.f32.mrb[0].mxu0
  %v1371 = vadd.f32 %v1258, %v1370
  %v1372 = vpop.f32.mrb[0].mxu0
  %v1373 = vadd.f32 %v1260, %v1372
  %v1374 = vpop.f32.mrb[0].mxu0
  %v1375 = vadd.f32 %v1262, %v1374
  %v1376 = vpop.f32.mrb[0].mxu0
  %v1377 = vadd.f32 %v1264, %v1376
  %1378 = vmatprep.mubr.bf16.mxu0 0
  %1379 = vmatmul.mubr.bf16.gmra.mrb[0].mxu0 %v1161
  %v1380 = vpop.f32.mrb[0].mxu0
  %v1381 = vadd.f32 %v1268, %v1380
  %v1382 = vpop.f32.mrb[0].mxu0
  %v1383 = vadd.f32 %v1270, %v1382
  %v1384 = vpop.f32.mrb[0].mxu0
  %v1385 = vadd.f32 %v1272, %v1384
  %v1386 = vpop.f32.mrb[0].mxu0
  %v1387 = vadd.f32 %v1274, %v1386
  %1388 = vdwg.mxu0
  %1389 = vmatprep.subr.bf16.mxu0 %v361
  %1390 = vmatpush1.bf16.msra.mxu0 %v360
  %1391 = vmatprep.subr.bf16.mxu0 %v365
  %1392 = vmatpush1.bf16.msra.mxu0 %v364
  %1393 = vmatprep.subr.bf16.mxu0 %v449
  %1394 = vmatpush1.bf16.msra.mxu0 %v448
  %1395 = vmatprep.subr.bf16.mxu0 %v453
  %1396 = vmatpush1.bf16.msra.mxu0 %v452
  %1397 = vmatprep.subr.bf16.mxu0 %v541
  %1398 = vmatpush1.bf16.msra.mxu0 %v540
  %1399 = vmatprep.subr.bf16.mxu0 %v545
  %1400 = vmatpush1.bf16.msra.mxu0 %v544
  %1401 = vmatprep.subr.bf16.mxu0 %v625
  %1402 = vmatpush1.bf16.msra.mxu0 %v624
  %1403 = vmatprep.subr.bf16.mxu0 %v629
  %1404 = vmatpush1.bf16.msra.mxu0 %v628
  %1405 = vmatprep.subr.bf16.mxu0 %v665
  %1406 = vmatpush1.bf16.msra.mxu0 %v664
  %1407 = vmatprep.subr.bf16.mxu0 %v669
  %1408 = vmatpush1.bf16.msra.mxu0 %v668
  %1409 = vmatprep.subr.bf16.mxu0 %v741
  %1410 = vmatpush1.bf16.msra.mxu0 %v740
  %1411 = vmatprep.subr.bf16.mxu0 %v745
  %1412 = vmatpush1.bf16.msra.mxu0 %v744
  %1413 = vmatprep.subr.bf16.mxu0 %v829
  %1414 = vmatpush1.bf16.msra.mxu0 %v828
  %1415 = vmatprep.subr.bf16.mxu0 %v833
  %1416 = vmatpush1.bf16.msra.mxu0 %v832
  %1417 = vmatprep.subr.bf16.mxu0 %v905
  %1418 = vmatpush1.bf16.msra.mxu0 %v904
  %1419 = vmatprep.subr.bf16.mxu0 %v909
  %1420 = vmatpush1.bf16.msra.mxu0 %v908
  %1421 = vmatprep.mubr.bf16.mxu0 %v1099
  %1422 = vmatmul.mubr.bf16.gmra.mrb[0].mxu0 %v1098
  %v1423 = vpop.f32.mrb[0].mxu0
  %v1424 = vadd.f32 0.0, %v1423
  %v1425 = vpop.f32.mrb[0].mxu0
  %v1426 = vadd.f32 0.0, %v1425
  %v1427 = vpop.f32.mrb[0].mxu0
  %v1428 = vadd.f32 0.0, %v1427
  %v1429 = vpop.f32.mrb[0].mxu0
  %v1430 = vadd.f32 0.0, %v1429
  %1431 = vmatprep.mubr.bf16.mxu0 %v1102
  %1432 = vmatmul.mubr.bf16.gmra.mrb[0].mxu0 %v1101
  %v1433 = vpop.f32.mrb[0].mxu0
  %v1434 = vadd.f32 0.0, %v1433
  %v1435 = vpop.f32.mrb[0].mxu0
  %v1436 = vadd.f32 0.0, %v1435
  %v1437 = vpop.f32.mrb[0].mxu0
  %v1438 = vadd.f32 0.0, %v1437
  %v1439 = vpop.f32.mrb[0].mxu0
  %v1440 = vadd.f32 0.0, %v1439
  %1441 = vmatprep.mubr.bf16.mxu0 %v1105
  %1442 = vmatmul.mubr.bf16.gmra.mrb[0].mxu0 %v1104
  %v1443 = vpop.f32.mrb[0].mxu0
  %v1444 = vadd.f32 0.0, %v1443
  %v1445 = vpop.f32.mrb[0].mxu0
  %v1446 = vadd.f32 0.0, %v1445
  %v1447 = vpop.f32.mrb[0].mxu0
  %v1448 = vadd.f32 0.0, %v1447
  %v1449 = vpop.f32.mrb[0].mxu0
  %v1450 = vadd.f32 0.0, %v1449
  %1451 = vmatprep.mubr.bf16.mxu0 %v1108
  %1452 = vmatmul.mubr.bf16.gmra.mrb[0].mxu0 %v1107
  %v1453 = vpop.f32.mrb[0].mxu0
  %v1454 = vadd.f32 0.0, %v1453
  %v1455 = vpop.f32.mrb[0].mxu0
  %v1456 = vadd.f32 0.0, %v1455
  %v1457 = vpop.f32.mrb[0].mxu0
  %v1458 = vadd.f32 0.0, %v1457
  %v1459 = vpop.f32.mrb[0].mxu0
  %v1460 = vadd.f32 0.0, %v1459
  %1461 = vmatprep.mubr.bf16.mxu0 %v1111
  %1462 = vmatmul.mubr.bf16.gmra.mrb[0].mxu0 %v1110
  %v1463 = vpop.f32.mrb[0].mxu0
  %v1464 = vadd.f32 0.0, %v1463
  %v1465 = vpop.f32.mrb[0].mxu0
  %v1466 = vadd.f32 0.0, %v1465
  %v1467 = vpop.f32.mrb[0].mxu0
  %v1468 = vadd.f32 0.0, %v1467
  %v1469 = vpop.f32.mrb[0].mxu0
  %v1470 = vadd.f32 0.0, %v1469
  %1471 = vmatprep.mubr.bf16.mxu0 %v1114
  %1472 = vmatmul.mubr.bf16.gmra.mrb[0].mxu0 %v1113
  %v1473 = vpop.f32.mrb[0].mxu0
  %v1474 = vadd.f32 0.0, %v1473
  %v1475 = vpop.f32.mrb[0].mxu0
  %v1476 = vadd.f32 0.0, %v1475
  %v1477 = vpop.f32.mrb[0].mxu0
  %v1478 = vadd.f32 0.0, %v1477
  %v1479 = vpop.f32.mrb[0].mxu0
  %v1480 = vadd.f32 0.0, %v1479
  %1481 = vmatprep.mubr.bf16.mxu0 %v1117
  %1482 = vmatmul.mubr.bf16.gmra.mrb[0].mxu0 %v1116
  %v1483 = vpop.f32.mrb[0].mxu0
  %v1484 = vadd.f32 0.0, %v1483
  %v1485 = vpop.f32.mrb[0].mxu0
  %v1486 = vadd.f32 0.0, %v1485
  %v1487 = vpop.f32.mrb[0].mxu0
  %v1488 = vadd.f32 0.0, %v1487
  %v1489 = vpop.f32.mrb[0].mxu0
  %v1490 = vadd.f32 0.0, %v1489
  %1491 = vmatprep.mubr.bf16.mxu0 %v1120
  %1492 = vmatmul.mubr.bf16.gmra.mrb[0].mxu0 %v1119
  %v1493 = vpop.f32.mrb[0].mxu0
  %v1494 = vadd.f32 0.0, %v1493
  %v1495 = vpop.f32.mrb[0].mxu0
  %v1496 = vadd.f32 0.0, %v1495
  %v1497 = vpop.f32.mrb[0].mxu0
  %v1498 = vadd.f32 0.0, %v1497
  %v1499 = vpop.f32.mrb[0].mxu0
  %v1500 = vadd.f32 0.0, %v1499
  %1501 = vdwg.mxu0
  %1502 = vmatprep.subr.bf16.mxu0 %v981
  %1503 = vmatpush1.bf16.msra.mxu0 %v980
  %1504 = vmatprep.subr.bf16.mxu0 %v985
  %1505 = vmatpush1.bf16.msra.mxu0 %v984
  %1506 = vmatprep.subr.bf16.mxu0 0
  %1507 = vmatpush1.bf16.msra.mxu0 0
  %1508 = vmatprep.subr.bf16.mxu0 0
  %1509 = vmatpush1.bf16.msra.mxu0 0
  %1510 = vmatprep.subr.bf16.mxu0 0
  %1511 = vmatpush1.bf16.msra.mxu0 0
  %1512 = vmatprep.subr.bf16.mxu0 0
  %1513 = vmatpush1.bf16.msra.mxu0 0
  %1514 = vmatprep.subr.bf16.mxu0 0
  %1515 = vmatpush1.bf16.msra.mxu0 0
  %1516 = vmatprep.subr.bf16.mxu0 0
  %1517 = vmatpush1.bf16.msra.mxu0 0
  %1518 = vmatprep.subr.bf16.mxu0 0
  %1519 = vmatpush1.bf16.msra.mxu0 0
  %1520 = vmatprep.subr.bf16.mxu0 0
  %1521 = vmatpush1.bf16.msra.mxu0 0
  %1522 = vmatprep.subr.bf16.mxu0 0
  %1523 = vmatpush1.bf16.msra.mxu0 0
  %1524 = vmatprep.subr.bf16.mxu0 0
  %1525 = vmatpush1.bf16.msra.mxu0 0
  %1526 = vmatprep.subr.bf16.mxu0 0
  %1527 = vmatpush1.bf16.msra.mxu0 0
  %1528 = vmatprep.subr.bf16.mxu0 0
  %1529 = vmatpush1.bf16.msra.mxu0 0
  %1530 = vmatprep.subr.bf16.mxu0 0
  %1531 = vmatpush1.bf16.msra.mxu0 0
  %1532 = vmatprep.subr.bf16.mxu0 0
  %1533 = vmatpush1.bf16.msra.mxu0 0
  %1534 = vmatprep.mubr.bf16.mxu0 0
  %1535 = vmatmul.mubr.bf16.gmra.mrb[0].mxu0 %v1140
  %v1536 = vpop.f32.mrb[0].mxu0
  %v1537 = vadd.f32 %v1424, %v1536
  %v1538 = vpop.f32.mrb[0].mxu0
  %v1539 = vadd.f32 %v1426, %v1538
  %v1540 = vpop.f32.mrb[0].mxu0
  %v1541 = vadd.f32 %v1428, %v1540
  %v1542 = vpop.f32.mrb[0].mxu0
  %v1543 = vadd.f32 %v1430, %v1542
  %1544 = vmatprep.mubr.bf16.mxu0 0
  %1545 = vmatmul.mubr.bf16.gmra.mrb[0].mxu0 %v1143
  %v1546 = vpop.f32.mrb[0].mxu0
  %v1547 = vadd.f32 %v1434, %v1546
  %v1548 = vpop.f32.mrb[0].mxu0
  %v1549 = vadd.f32 %v1436, %v1548
  %v1550 = vpop.f32.mrb[0].mxu0
  %v1551 = vadd.f32 %v1438, %v1550
  %v1552 = vpop.f32.mrb[0].mxu0
  %v1553 = vadd.f32 %v1440, %v1552
  %1554 = vmatprep.mubr.bf16.mxu0 0
  %1555 = vmatmul.mubr.bf16.gmra.mrb[0].mxu0 %v1146
  %v1556 = vpop.f32.mrb[0].mxu0
  %v1557 = vadd.f32 %v1444, %v1556
  %v1558 = vpop.f32.mrb[0].mxu0
  %v1559 = vadd.f32 %v1446, %v1558
  %v1560 = vpop.f32.mrb[0].mxu0
  %v1561 = vadd.f32 %v1448, %v1560
  %v1562 = vpop.f32.mrb[0].mxu0
  %v1563 = vadd.f32 %v1450, %v1562
  %1564 = vmatprep.mubr.bf16.mxu0 0
  %1565 = vmatmul.mubr.bf16.gmra.mrb[0].mxu0 %v1149
  %v1566 = vpop.f32.mrb[0].mxu0
  %v1567 = vadd.f32 %v1454, %v1566
  %v1568 = vpop.f32.mrb[0].mxu0
  %v1569 = vadd.f32 %v1456, %v1568
  %v1570 = vpop.f32.mrb[0].mxu0
  %v1571 = vadd.f32 %v1458, %v1570
  %v1572 = vpop.f32.mrb[0].mxu0
  %v1573 = vadd.f32 %v1460, %v1572
  %1574 = vmatprep.mubr.bf16.mxu0 0
  %1575 = vmatmul.mubr.bf16.gmra.mrb[0].mxu0 %v1152
  %v1576 = vpop.f32.mrb[0].mxu0
  %v1577 = vadd.f32 %v1464, %v1576
  %v1578 = vpop.f32.mrb[0].mxu0
  %v1579 = vadd.f32 %v1466, %v1578
  %v1580 = vpop.f32.mrb[0].mxu0
  %v1581 = vadd.f32 %v1468, %v1580
  %v1582 = vpop.f32.mrb[0].mxu0
  %v1583 = vadd.f32 %v1470, %v1582
  %1584 = vmatprep.mubr.bf16.mxu0 0
  %1585 = vmatmul.mubr.bf16.gmra.mrb[0].mxu0 %v1155
  %v1586 = vpop.f32.mrb[0].mxu0
  %v1587 = vadd.f32 %v1474, %v1586
  %v1588 = vpop.f32.mrb[0].mxu0
  %v1589 = vadd.f32 %v1476, %v1588
  %v1590 = vpop.f32.mrb[0].mxu0
  %v1591 = vadd.f32 %v1478, %v1590
  %v1592 = vpop.f32.mrb[0].mxu0
  %v1593 = vadd.f32 %v1480, %v1592
  %1594 = vmatprep.mubr.bf16.mxu0 0
  %1595 = vmatmul.mubr.bf16.gmra.mrb[0].mxu0 %v1158
  %v1596 = vpop.f32.mrb[0].mxu0
  %v1597 = vadd.f32 %v1484, %v1596
  %v1598 = vpop.f32.mrb[0].mxu0
  %v1599 = vadd.f32 %v1486, %v1598
  %v1600 = vpop.f32.mrb[0].mxu0
  %v1601 = vadd.f32 %v1488, %v1600
  %v1602 = vpop.f32.mrb[0].mxu0
  %v1603 = vadd.f32 %v1490, %v1602
  %1604 = vmatprep.mubr.bf16.mxu0 0
  %1605 = vmatmul.mubr.bf16.gmra.mrb[0].mxu0 %v1161
  %v1606 = vpop.f32.mrb[0].mxu0
  %v1607 = vadd.f32 %v1494, %v1606
  %v1608 = vpop.f32.mrb[0].mxu0
  %v1609 = vadd.f32 %v1496, %v1608
  %v1610 = vpop.f32.mrb[0].mxu0
  %v1611 = vadd.f32 %v1498, %v1610
  %v1612 = vpop.f32.mrb[0].mxu0
  %v1613 = vadd.f32 %v1500, %v1612
  %1614 = vdwg.mxu0
  %1615 = vst [vmem:[%s4] sm:$0xff] %v1311
  %1616 = vst [vmem:[%s4 + $0x8] sm:$0xff] %v1313
  %1617 = vst [vmem:[%s4 + $0x10] sm:$0xff] %v1537
  %1618 = vst [vmem:[%s4 + $0x18] sm:$0xff] %v1539
  %1619 = vst [vmem:[%s4 + $0x20] sm:$0xff] %v1315
  %1620 = vst [vmem:[%s4 + $0x28] sm:$0xff] %v1317
  %1621 = vst [vmem:[%s4 + $0x30] sm:$0xff] %v1541
  %1622 = vst [vmem:[%s4 + $0x38] sm:$0xff] %v1543
  %1623 = vst [vmem:[%s4 + $0x40] sm:$0xff] %v1321
  %1624 = vst [vmem:[%s4 + $0x48] sm:$0xff] %v1323
  %1625 = vst [vmem:[%s4 + $0x50] sm:$0xff] %v1547
  %1626 = vst [vmem:[%s4 + $0x58] sm:$0xff] %v1549
  %1627 = vst [vmem:[%s4 + $0x60] sm:$0xff] %v1325
  %1628 = vst [vmem:[%s4 + $0x68] sm:$0xff] %v1327
  %1629 = vst [vmem:[%s4 + $0x70] sm:$0xff] %v1551
  %1630 = vst [vmem:[%s4 + $0x78] sm:$0xff] %v1553
  %1631 = vst [vmem:[%s4 + $0x80] sm:$0xff] %v1331
  %1632 = vst [vmem:[%s4 + $0x88] sm:$0xff] %v1333
  %1633 = vst [vmem:[%s4 + $0x90] sm:$0xff] %v1557
  %1634 = vst [vmem:[%s4 + $0x98] sm:$0xff] %v1559
  %1635 = vst [vmem:[%s4 + $0xa0] sm:$0xff] %v1335
  %1636 = vst [vmem:[%s4 + $0xa8] sm:$0xff] %v1337
  %1637 = vst [vmem:[%s4 + $0xb0] sm:$0xff] %v1561
  %1638 = vst [vmem:[%s4 + $0xb8] sm:$0xff] %v1563
  %1639 = vst [vmem:[%s4 + $0xc0] sm:$0xff] %v1341
  %1640 = vst [vmem:[%s4 + $0xc8] sm:$0xff] %v1343
  %1641 = vst [vmem:[%s4 + $0xd0] sm:$0xff] %v1567
  %1642 = vst [vmem:[%s4 + $0xd8] sm:$0xff] %v1569
  %1643 = vst [vmem:[%s4 + $0xe0] sm:$0xff] %v1345
  %1644 = vst [vmem:[%s4 + $0xe8] sm:$0xff] %v1347
  %1645 = vst [vmem:[%s4 + $0xf0] sm:$0xff] %v1571
  %1646 = vst [vmem:[%s4 + $0xf8] sm:$0xff] %v1573
  %1647 = vst [vmem:[%s4 + $0x100] sm:$0xff] %v1351
  %1648 = vst [vmem:[%s4 + $0x108] sm:$0xff] %v1353
  %1649 = vst [vmem:[%s4 + $0x110] sm:$0xff] %v1577
  %1650 = vst [vmem:[%s4 + $0x118] sm:$0xff] %v1579
  %1651 = vst [vmem:[%s4 + $0x120] sm:$0xff] %v1355
  %1652 = vst [vmem:[%s4 + $0x128] sm:$0xff] %v1357
  %1653 = vst [vmem:[%s4 + $0x130] sm:$0xff] %v1581
  %1654 = vst [vmem:[%s4 + $0x138] sm:$0xff] %v1583
  %1655 = vst [vmem:[%s4 + $0x140] sm:$0xff] %v1361
  %1656 = vst [vmem:[%s4 + $0x148] sm:$0xff] %v1363
  %1657 = vst [vmem:[%s4 + $0x150] sm:$0xff] %v1587
  %1658 = vst [vmem:[%s4 + $0x158] sm:$0xff] %v1589
  %1659 = vst [vmem:[%s4 + $0x160] sm:$0xff] %v1365
  %1660 = vst [vmem:[%s4 + $0x168] sm:$0xff] %v1367
  %1661 = vst [vmem:[%s4 + $0x170] sm:$0xff] %v1591
  %1662 = vst [vmem:[%s4 + $0x178] sm:$0xff] %v1593
  %1663 = vst [vmem:[%s4 + $0x180] sm:$0xff] %v1371
  %1664 = vst [vmem:[%s4 + $0x188] sm:$0xff] %v1373
  %1665 = vst [vmem:[%s4 + $0x190] sm:$0xff] %v1597
  %1666 = vst [vmem:[%s4 + $0x198] sm:$0xff] %v1599
  %1667 = vst [vmem:[%s4 + $0x1a0] sm:$0xff] %v1375
  %1668 = vst [vmem:[%s4 + $0x1a8] sm:$0xff] %v1377
  %1669 = vst [vmem:[%s4 + $0x1b0] sm:$0xff] %v1601
  %1670 = vst [vmem:[%s4 + $0x1b8] sm:$0xff] %v1603
  %1671 = vst [vmem:[%s4 + $0x1c0] sm:$0xff] %v1381
  %1672 = vst [vmem:[%s4 + $0x1c8] sm:$0xff] %v1383
  %1673 = vst [vmem:[%s4 + $0x1d0] sm:$0xff] %v1607
  %1674 = vst [vmem:[%s4 + $0x1d8] sm:$0xff] %v1609
  %1675 = vst [vmem:[%s4 + $0x1e0] sm:$0xff] %v1385
  %1676 = vst [vmem:[%s4 + $0x1e8] sm:$0xff] %v1387
  %1677 = vst [vmem:[%s4 + $0x1f0] sm:$0xff] %v1611
  %1678 = vst [vmem:[%s4 + $0x1f8] sm:$0xff] %v1613
  // Predicated region
  $region18: #{kitti_conv_decoder_forward.8} parent=0 // pred_check
    _
  $region19: #{kitti_conv_decoder_forward.8} parent=0 // pred_check_branch
    %1680 = sbr.rel (0) target = $region21
  $region20: #{kitti_conv_decoder_forward.8} parent=0 // pred_region
    _
  $region21: #{kitti_conv_decoder_forward.8} parent=0 // pred_fallthru
    _
  // Predicated region
  $region22: #{kitti_conv_decoder_forward.8} parent=0 // pred_check
    _
  $region23: #{kitti_conv_decoder_forward.8} parent=0 // pred_check_branch
    %1682 = sbr.rel (0) target = $region25
  $region24: #{kitti_conv_decoder_forward.8} parent=0 // pred_region
    _
  $region25: #{kitti_conv_decoder_forward.8} parent=0 // pred_fallthru
    _

// kernel: kitti_conv_decoder_forward.9
$region0: #{kitti_conv_decoder_forward.9}
  #allocation0 [shape = 'u32[]', space=smem, size = 0x4, offset = 0x4, fixed_abs, tag = 'smem constant byte address 0x4 - core index']
  #allocation1 [shape = 'u32[144,128]{1,0:T(1,128)}', space=vmem, size = 0x12000, scoped, tag = 'internal scratch']
  %s0 = inlined_call_operand.vmem [shape: f32[32,2048], index: 0, kind: input, shape index: {}]
  %s1 = inlined_call_operand.vmem [shape: f32[32,1], index: 1, kind: input, shape index: {}]
  %s2 = inlined_call_operand.vmem [shape: f32[32,1], index: 2, kind: input, shape index: {}]
  %s3 = inlined_call_operand.vmem [shape: bf16[12,288], index: 3, kind: input, shape index: {}]
  %s4 = inlined_call_operand.vmem [shape: f32[12,2048], index: 4, kind: output, shape index: {}]
  %s5 = sld [smem:[#allocation0]]
  $region26: #{kitti_conv_decoder_forward.9} parent=0
    _
  %s7 = ssub.s32 1, %s5
  %s8 = scalar_select 0, %s7, %s5
  // Predicated region
  $region2: #{kitti_conv_decoder_forward.9} parent=0 // pred_check
    _
  $region3: #{kitti_conv_decoder_forward.9} parent=0 // pred_check_branch
    %10 = sbr.rel (0) target = $region5
  $region4: #{kitti_conv_decoder_forward.9} parent=0 // pred_region
    _
  $region5: #{kitti_conv_decoder_forward.9} parent=0 // pred_fallthru
    _
  // Predicated region
  $region6: #{kitti_conv_decoder_forward.9} parent=0 // pred_check
    _
  $region7: #{kitti_conv_decoder_forward.9} parent=0 // pred_check_branch
    %12 = sbr.rel (0) target = $region9
  $region8: #{kitti_conv_decoder_forward.9} parent=0 // pred_region
    _
  $region9: #{kitti_conv_decoder_forward.9} parent=0 // pred_fallthru
    _
  // Predicated region
  $region10: #{kitti_conv_decoder_forward.9} parent=0 // pred_check
    _
  $region11: #{kitti_conv_decoder_forward.9} parent=0 // pred_check_branch
    %14 = sbr.rel (0) target = $region13
  $region12: #{kitti_conv_decoder_forward.9} parent=0 // pred_region
    _
  $region13: #{kitti_conv_decoder_forward.9} parent=0 // pred_fallthru
    _
  // Predicated region
  $region14: #{kitti_conv_decoder_forward.9} parent=0 // pred_check
    _
  $region15: #{kitti_conv_decoder_forward.9} parent=0 // pred_check_branch
    %16 = sbr.rel (0) target = $region17
  $region16: #{kitti_conv_decoder_forward.9} parent=0 // pred_region
    _
  $region17: #{kitti_conv_decoder_forward.9} parent=0 // pred_fallthru
    _
  %v20 = vld [vmem:[%s0] sm:$0xff]
  %v21 = vld [vmem:[%s0 + $0x8] sm:$0xff]
  %v22 = vld [vmem:[%s0 + $0x10] sm:$0xff]
  %v23 = vld [vmem:[%s0 + $0x18] sm:$0xff]
  %v24 = vld [vmem:[%s0 + $0x20] sm:$0xff]
  %v25 = vld [vmem:[%s0 + $0x28] sm:$0xff]
  %v26 = vld [vmem:[%s0 + $0x30] sm:$0xff]
  %v27 = vld [vmem:[%s0 + $0x38] sm:$0xff]
  %v28 = vld [vmem:[%s0 + $0x40] sm:$0xff]
  %v29 = vld [vmem:[%s0 + $0x48] sm:$0xff]
  %v30 = vld [vmem:[%s0 + $0x50] sm:$0xff]
  %v31 = vld [vmem:[%s0 + $0x58] sm:$0xff]
  %v32 = vld [vmem:[%s0 + $0x60] sm:$0xff]
  %v33 = vld [vmem:[%s0 + $0x68] sm:$0xff]
  %v34 = vld [vmem:[%s0 + $0x70] sm:$0xff]
  %v35 = vld [vmem:[%s0 + $0x78] sm:$0xff]
  %v36 = vld [vmem:[%s0 + $0x80] sm:$0xff]
  %v37 = vld [vmem:[%s0 + $0x88] sm:$0xff]
  %v38 = vld [vmem:[%s0 + $0x90] sm:$0xff]
  %v39 = vld [vmem:[%s0 + $0x98] sm:$0xff]
  %v40 = vld [vmem:[%s0 + $0xa0] sm:$0xff]
  %v41 = vld [vmem:[%s0 + $0xa8] sm:$0xff]
  %v42 = vld [vmem:[%s0 + $0xb0] sm:$0xff]
  %v43 = vld [vmem:[%s0 + $0xb8] sm:$0xff]
  %v44 = vld [vmem:[%s0 + $0xc0] sm:$0xff]
  %v45 = vld [vmem:[%s0 + $0xc8] sm:$0xff]
  %v46 = vld [vmem:[%s0 + $0xd0] sm:$0xff]
  %v47 = vld [vmem:[%s0 + $0xd8] sm:$0xff]
  %v48 = vld [vmem:[%s0 + $0xe0] sm:$0xff]
  %v49 = vld [vmem:[%s0 + $0xe8] sm:$0xff]
  %v50 = vld [vmem:[%s0 + $0xf0] sm:$0xff]
  %v51 = vld [vmem:[%s0 + $0xf8] sm:$0xff]
  %v52 = vld [vmem:[%s0 + $0x100] sm:$0xff]
  %v53 = vld [vmem:[%s0 + $0x108] sm:$0xff]
  %v54 = vld [vmem:[%s0 + $0x110] sm:$0xff]
  %v55 = vld [vmem:[%s0 + $0x118] sm:$0xff]
  %v56 = vld [vmem:[%s0 + $0x120] sm:$0xff]
  %v57 = vld [vmem:[%s0 + $0x128] sm:$0xff]
  %v58 = vld [vmem:[%s0 + $0x130] sm:$0xff]
  %v59 = vld [vmem:[%s0 + $0x138] sm:$0xff]
  %v60 = vld [vmem:[%s0 + $0x140] sm:$0xff]
  %v61 = vld [vmem:[%s0 + $0x148] sm:$0xff]
  %v62 = vld [vmem:[%s0 + $0x150] sm:$0xff]
  %v63 = vld [vmem:[%s0 + $0x158] sm:$0xff]
  %v64 = vld [vmem:[%s0 + $0x160] sm:$0xff]
  %v65 = vld [vmem:[%s0 + $0x168] sm:$0xff]
  %v66 = vld [vmem:[%s0 + $0x170] sm:$0xff]
  %v67 = vld [vmem:[%s0 + $0x178] sm:$0xff]
  %v68 = vld [vmem:[%s0 + $0x180] sm:$0xff]
  %v69 = vld [vmem:[%s0 + $0x188] sm:$0xff]
  %v70 = vld [vmem:[%s0 + $0x190] sm:$0xff]
  %v71 = vld [vmem:[%s0 + $0x198] sm:$0xff]
  %v72 = vld [vmem:[%s0 + $0x1a0] sm:$0xff]
  %v73 = vld [vmem:[%s0 + $0x1a8] sm:$0xff]
  %v74 = vld [vmem:[%s0 + $0x1b0] sm:$0xff]
  %v75 = vld [vmem:[%s0 + $0x1b8] sm:$0xff]
  %v76 = vld [vmem:[%s0 + $0x1c0] sm:$0xff]
  %v77 = vld [vmem:[%s0 + $0x1c8] sm:$0xff]
  %v78 = vld [vmem:[%s0 + $0x1d0] sm:$0xff]
  %v79 = vld [vmem:[%s0 + $0x1d8] sm:$0xff]
  %v80 = vld [vmem:[%s0 + $0x1e0] sm:$0xff]
  %v81 = vld [vmem:[%s0 + $0x1e8] sm:$0xff]
  %v82 = vld [vmem:[%s0 + $0x1f0] sm:$0xff]
  %v83 = vld [vmem:[%s0 + $0x1f8] sm:$0xff]
  %v84 = vadd.f32 %v20, %v21
  %v85 = vadd.f32 %v84, %v22
  %v86 = vadd.f32 %v85, %v23
  %v87 = vadd.f32 %v86, %v24
  %v88 = vadd.f32 %v87, %v25
  %v89 = vadd.f32 %v88, %v26
  %v90 = vadd.f32 %v89, %v27
  %v91 = vadd.f32 %v90, %v28
  %v92 = vadd.f32 %v91, %v29
  %v93 = vadd.f32 %v92, %v30
  %v94 = vadd.f32 %v93, %v31
  %v95 = vadd.f32 %v94, %v32
  %v96 = vadd.f32 %v95, %v33
  %v97 = vadd.f32 %v96, %v34
  %v98 = vadd.f32 %v97, %v35
  %99 = vadd.xlane.f32.xlu0 %v98
  %v100 = vpop.xlane.xlu0 %99
  %v101 = vadd.f32 %v36, %v37
  %v102 = vadd.f32 %v101, %v38
  %v103 = vadd.f32 %v102, %v39
  %v104 = vadd.f32 %v103, %v40
  %v105 = vadd.f32 %v104, %v41
  %v106 = vadd.f32 %v105, %v42
  %v107 = vadd.f32 %v106, %v43
  %v108 = vadd.f32 %v107, %v44
  %v109 = vadd.f32 %v108, %v45
  %v110 = vadd.f32 %v109, %v46
  %v111 = vadd.f32 %v110, %v47
  %v112 = vadd.f32 %v111, %v48
  %v113 = vadd.f32 %v112, %v49
  %v114 = vadd.f32 %v113, %v50
  %v115 = vadd.f32 %v114, %v51
  %116 = vadd.xlane.f32.xlu0 %v115
  %v117 = vpop.xlane.xlu0 %116
  %v118 = vadd.f32 %v52, %v53
  %v119 = vadd.f32 %v118, %v54
  %v120 = vadd.f32 %v119, %v55
  %v121 = vadd.f32 %v120, %v56
  %v122 = vadd.f32 %v121, %v57
  %v123 = vadd.f32 %v122, %v58
  %v124 = vadd.f32 %v123, %v59
  %v125 = vadd.f32 %v124, %v60
  %v126 = vadd.f32 %v125, %v61
  %v127 = vadd.f32 %v126, %v62
  %v128 = vadd.f32 %v127, %v63
  %v129 = vadd.f32 %v128, %v64
  %v130 = vadd.f32 %v129, %v65
  %v131 = vadd.f32 %v130, %v66
  %v132 = vadd.f32 %v131, %v67
  %133 = vadd.xlane.f32.xlu0 %v132
  %v134 = vpop.xlane.xlu0 %133
  %v135 = vadd.f32 %v68, %v69
  %v136 = vadd.f32 %v135, %v70
  %v137 = vadd.f32 %v136, %v71
  %v138 = vadd.f32 %v137, %v72
  %v139 = vadd.f32 %v138, %v73
  %v140 = vadd.f32 %v139, %v74
  %v141 = vadd.f32 %v140, %v75
  %v142 = vadd.f32 %v141, %v76
  %v143 = vadd.f32 %v142, %v77
  %v144 = vadd.f32 %v143, %v78
  %v145 = vadd.f32 %v144, %v79
  %v146 = vadd.f32 %v145, %v80
  %v147 = vadd.f32 %v146, %v81
  %v148 = vadd.f32 %v147, %v82
  %v149 = vadd.f32 %v148, %v83
  %150 = vadd.xlane.f32.xlu0 %v149
  %v151 = vpop.xlane.xlu0 %150
  %v152 = vmul.f32 %v20, %v20
  %v153 = vmul.f32 %v21, %v21
  %v154 = vmul.f32 %v22, %v22
  %v155 = vmul.f32 %v23, %v23
  %v156 = vmul.f32 %v24, %v24
  %v157 = vmul.f32 %v25, %v25
  %v158 = vmul.f32 %v26, %v26
  %v159 = vmul.f32 %v27, %v27
  %v160 = vmul.f32 %v28, %v28
  %v161 = vmul.f32 %v29, %v29
  %v162 = vmul.f32 %v30, %v30
  %v163 = vmul.f32 %v31, %v31
  %v164 = vmul.f32 %v32, %v32
  %v165 = vmul.f32 %v33, %v33
  %v166 = vmul.f32 %v34, %v34
  %v167 = vmul.f32 %v35, %v35
  %v168 = vmul.f32 %v36, %v36
  %v169 = vmul.f32 %v37, %v37
  %v170 = vmul.f32 %v38, %v38
  %v171 = vmul.f32 %v39, %v39
  %v172 = vmul.f32 %v40, %v40
  %v173 = vmul.f32 %v41, %v41
  %v174 = vmul.f32 %v42, %v42
  %v175 = vmul.f32 %v43, %v43
  %v176 = vmul.f32 %v44, %v44
  %v177 = vmul.f32 %v45, %v45
  %v178 = vmul.f32 %v46, %v46
  %v179 = vmul.f32 %v47, %v47
  %v180 = vmul.f32 %v48, %v48
  %v181 = vmul.f32 %v49, %v49
  %v182 = vmul.f32 %v50, %v50
  %v183 = vmul.f32 %v51, %v51
  %v184 = vmul.f32 %v52, %v52
  %v185 = vmul.f32 %v53, %v53
  %v186 = vmul.f32 %v54, %v54
  %v187 = vmul.f32 %v55, %v55
  %v188 = vmul.f32 %v56, %v56
  %v189 = vmul.f32 %v57, %v57
  %v190 = vmul.f32 %v58, %v58
  %v191 = vmul.f32 %v59, %v59
  %v192 = vmul.f32 %v60, %v60
  %v193 = vmul.f32 %v61, %v61
  %v194 = vmul.f32 %v62, %v62
  %v195 = vmul.f32 %v63, %v63
  %v196 = vmul.f32 %v64, %v64
  %v197 = vmul.f32 %v65, %v65
  %v198 = vmul.f32 %v66, %v66
  %v199 = vmul.f32 %v67, %v67
  %v200 = vmul.f32 %v68, %v68
  %v201 = vmul.f32 %v69, %v69
  %v202 = vmul.f32 %v70, %v70
  %v203 = vmul.f32 %v71, %v71
  %v204 = vmul.f32 %v72, %v72
  %v205 = vmul.f32 %v73, %v73
  %v206 = vmul.f32 %v74, %v74
  %v207 = vmul.f32 %v75, %v75
  %v208 = vmul.f32 %v76, %v76
  %v209 = vmul.f32 %v77, %v77
  %v210 = vmul.f32 %v78, %v78
  %v211 = vmul.f32 %v79, %v79
  %v212 = vmul.f32 %v80, %v80
  %v213 = vmul.f32 %v81, %v81
  %v214 = vmul.f32 %v82, %v82
  %v215 = vmul.f32 %v83, %v83
  %v216 = vadd.f32 %v152, %v153
  %v217 = vadd.f32 %v216, %v154
  %v218 = vadd.f32 %v217, %v155
  %v219 = vadd.f32 %v218, %v156
  %v220 = vadd.f32 %v219, %v157
  %v221 = vadd.f32 %v220, %v158
  %v222 = vadd.f32 %v221, %v159
  %v223 = vadd.f32 %v222, %v160
  %v224 = vadd.f32 %v223, %v161
  %v225 = vadd.f32 %v224, %v162
  %v226 = vadd.f32 %v225, %v163
  %v227 = vadd.f32 %v226, %v164
  %v228 = vadd.f32 %v227, %v165
  %v229 = vadd.f32 %v228, %v166
  %v230 = vadd.f32 %v229, %v167
  %231 = vadd.xlane.f32.xlu0 %v230
  %v232 = vpop.xlane.xlu0 %231
  %v233 = vadd.f32 %v168, %v169
  %v234 = vadd.f32 %v233, %v170
  %v235 = vadd.f32 %v234, %v171
  %v236 = vadd.f32 %v235, %v172
  %v237 = vadd.f32 %v236, %v173
  %v238 = vadd.f32 %v237, %v174
  %v239 = vadd.f32 %v238, %v175
  %v240 = vadd.f32 %v239, %v176
  %v241 = vadd.f32 %v240, %v177
  %v242 = vadd.f32 %v241, %v178
  %v243 = vadd.f32 %v242, %v179
  %v244 = vadd.f32 %v243, %v180
  %v245 = vadd.f32 %v244, %v181
  %v246 = vadd.f32 %v245, %v182
  %v247 = vadd.f32 %v246, %v183
  %248 = vadd.xlane.f32.xlu0 %v247
  %v249 = vpop.xlane.xlu0 %248
  %v250 = vadd.f32 %v184, %v185
  %v251 = vadd.f32 %v250, %v186
  %v252 = vadd.f32 %v251, %v187
  %v253 = vadd.f32 %v252, %v188
  %v254 = vadd.f32 %v253, %v189
  %v255 = vadd.f32 %v254, %v190
  %v256 = vadd.f32 %v255, %v191
  %v257 = vadd.f32 %v256, %v192
  %v258 = vadd.f32 %v257, %v193
  %v259 = vadd.f32 %v258, %v194
  %v260 = vadd.f32 %v259, %v195
  %v261 = vadd.f32 %v260, %v196
  %v262 = vadd.f32 %v261, %v197
  %v263 = vadd.f32 %v262, %v198
  %v264 = vadd.f32 %v263, %v199
  %265 = vadd.xlane.f32.xlu0 %v264
  %v266 = vpop.xlane.xlu0 %265
  %v267 = vadd.f32 %v200, %v201
  %v268 = vadd.f32 %v267, %v202
  %v269 = vadd.f32 %v268, %v203
  %v270 = vadd.f32 %v269, %v204
  %v271 = vadd.f32 %v270, %v205
  %v272 = vadd.f32 %v271, %v206
  %v273 = vadd.f32 %v272, %v207
  %v274 = vadd.f32 %v273, %v208
  %v275 = vadd.f32 %v274, %v209
  %v276 = vadd.f32 %v275, %v210
  %v277 = vadd.f32 %v276, %v211
  %v278 = vadd.f32 %v277, %v212
  %v279 = vadd.f32 %v278, %v213
  %v280 = vadd.f32 %v279, %v214
  %v281 = vadd.f32 %v280, %v215
  %282 = vadd.xlane.f32.xlu0 %v281
  %v283 = vpop.xlane.xlu0 %282
  %v284 = vmul.f32 %v100, 0.00048828125
  %v285 = vmul.f32 %v117, 0.00048828125
  %v286 = vmul.f32 %v134, 0.00048828125
  %v287 = vmul.f32 %v151, 0.00048828125
  %v288 = vmul.f32 %v232, 0.00048828125
  %v289 = vmul.f32 %v249, 0.00048828125
  %v290 = vmul.f32 %v266, 0.00048828125
  %v291 = vmul.f32 %v283, 0.00048828125
  %v292 = vmul.f32 %v284, %v284
  %v293 = vmul.f32 %v285, %v285
  %v294 = vmul.f32 %v286, %v286
  %v295 = vmul.f32 %v287, %v287
  %v296 = vsub.f32 %v288, %v292
  %v297 = vsub.f32 %v289, %v293
  %v298 = vsub.f32 %v290, %v294
  %v299 = vsub.f32 %v291, %v295
  %v300 = vmax.f32 %v296, 0.0
  %v301 = vmax.f32 %v297, 0.0
  %v302 = vmax.f32 %v298, 0.0
  %v303 = vmax.f32 %v299, 0.0
  %v304 = vld [vmem:[%s1] sm:$0xff]
  %v305 = vld [vmem:[%s1 + $0x8] sm:$0xff]
  %v306 = vld [vmem:[%s1 + $0x10] sm:$0xff]
  %v307 = vld [vmem:[%s1 + $0x18] sm:$0xff]
  %v308 = vadd.f32 %v300, 1e-05
  %v309 = vadd.f32 %v301, 1e-05
  %v310 = vadd.f32 %v302, 1e-05
  %v311 = vadd.f32 %v303, 1e-05
  %v312 = vrsqrt.pop %v308
  %v313 = vrsqrt.pop %v309
  %v314 = vrsqrt.pop %v310
  %v315 = vrsqrt.pop %v311
  %v316 = vmul.f32 %v304, %v312
  %v317 = vmul.f32 %v305, %v313
  %v318 = vmul.f32 %v306, %v314
  %v319 = vmul.f32 %v307, %v315
  %v320 = vld [vmem:[%s2] sm:$0xff]
  %v321 = vld [vmem:[%s2 + $0x8] sm:$0xff]
  %v322 = vld [vmem:[%s2 + $0x10] sm:$0xff]
  %v323 = vld [vmem:[%s2 + $0x18] sm:$0xff]
  %v324 = vmul.f32 %v284, %v316
  %v325 = vmul.f32 %v285, %v317
  %v326 = vmul.f32 %v286, %v318
  %v327 = vmul.f32 %v287, %v319
  %v328 = vsub.f32 %v320, %v324
  %v329 = vsub.f32 %v321, %v325
  %v330 = vsub.f32 %v322, %v326
  %v331 = vsub.f32 %v323, %v327
  %333 = vset.pattern.permute.xlu0 0
  %334 = vperm.xlu0 %333, %v316
  %v335 = vpop.permute.xlu0 %334
  %338 = vset.pattern.permute.xlu0 0
  %339 = vperm.xlu0 %338, %v317
  %v340 = vpop.permute.xlu0 %339
  %343 = vset.pattern.permute.xlu0 0
  %344 = vperm.xlu0 %343, %v318
  %v345 = vpop.permute.xlu0 %344
  %348 = vset.pattern.permute.xlu0 0
  %349 = vperm.xlu0 %348, %v319
  %v350 = vpop.permute.xlu0 %349
  %v352 = vmul.f32 %v20, %v335
  %v353 = vmul.f32 %v21, %v335
  %v354 = vmul.f32 %v22, %v335
  %v355 = vmul.f32 %v23, %v335
  %v356 = vmul.f32 %v24, %v335
  %v357 = vmul.f32 %v25, %v335
  %v358 = vmul.f32 %v26, %v335
  %v359 = vmul.f32 %v27, %v335
  %v360 = vmul.f32 %v28, %v335
  %v361 = vmul.f32 %v29, %v335
  %v362 = vmul.f32 %v30, %v335
  %v363 = vmul.f32 %v31, %v335
  %v364 = vmul.f32 %v32, %v335
  %v365 = vmul.f32 %v33, %v335
  %v366 = vmul.f32 %v34, %v335
  %v367 = vmul.f32 %v35, %v335
  %v368 = vmul.f32 %v36, %v340
  %v369 = vmul.f32 %v37, %v340
  %v370 = vmul.f32 %v38, %v340
  %v371 = vmul.f32 %v39, %v340
  %v372 = vmul.f32 %v40, %v340
  %v373 = vmul.f32 %v41, %v340
  %v374 = vmul.f32 %v42, %v340
  %v375 = vmul.f32 %v43, %v340
  %v376 = vmul.f32 %v44, %v340
  %v377 = vmul.f32 %v45, %v340
  %v378 = vmul.f32 %v46, %v340
  %v379 = vmul.f32 %v47, %v340
  %v380 = vmul.f32 %v48, %v340
  %v381 = vmul.f32 %v49, %v340
  %v382 = vmul.f32 %v50, %v340
  %v383 = vmul.f32 %v51, %v340
  %v384 = vmul.f32 %v52, %v345
  %v385 = vmul.f32 %v53, %v345
  %v386 = vmul.f32 %v54, %v345
  %v387 = vmul.f32 %v55, %v345
  %v388 = vmul.f32 %v56, %v345
  %v389 = vmul.f32 %v57, %v345
  %v390 = vmul.f32 %v58, %v345
  %v391 = vmul.f32 %v59, %v345
  %v392 = vmul.f32 %v60, %v345
  %v393 = vmul.f32 %v61, %v345
  %v394 = vmul.f32 %v62, %v345
  %v395 = vmul.f32 %v63, %v345
  %v396 = vmul.f32 %v64, %v345
  %v397 = vmul.f32 %v65, %v345
  %v398 = vmul.f32 %v66, %v345
  %v399 = vmul.f32 %v67, %v345
  %v400 = vmul.f32 %v68, %v350
  %v401 = vmul.f32 %v69, %v350
  %v402 = vmul.f32 %v70, %v350
  %v403 = vmul.f32 %v71, %v350
  %v404 = vmul.f32 %v72, %v350
  %v405 = vmul.f32 %v73, %v350
  %v406 = vmul.f32 %v74, %v350
  %v407 = vmul.f32 %v75, %v350
  %v408 = vmul.f32 %v76, %v350
  %v409 = vmul.f32 %v77, %v350
  %v410 = vmul.f32 %v78, %v350
  %v411 = vmul.f32 %v79, %v350
  %v412 = vmul.f32 %v80, %v350
  %v413 = vmul.f32 %v81, %v350
  %v414 = vmul.f32 %v82, %v350
  %v415 = vmul.f32 %v83, %v350
  %417 = vset.pattern.permute.xlu0 0
  %418 = vperm.xlu0 %417, %v328
  %v419 = vpop.permute.xlu0 %418
  %422 = vset.pattern.permute.xlu0 0
  %423 = vperm.xlu0 %422, %v329
  %v424 = vpop.permute.xlu0 %423
  %427 = vset.pattern.permute.xlu0 0
  %428 = vperm.xlu0 %427, %v330
  %v429 = vpop.permute.xlu0 %428
  %432 = vset.pattern.permute.xlu0 0
  %433 = vperm.xlu0 %432, %v331
  %v434 = vpop.permute.xlu0 %433
  %v436 = vadd.f32 %v352, %v419
  %v437 = vadd.f32 %v353, %v419
  %v438 = vadd.f32 %v354, %v419
  %v439 = vadd.f32 %v355, %v419
  %v440 = vadd.f32 %v356, %v419
  %v441 = vadd.f32 %v357, %v419
  %v442 = vadd.f32 %v358, %v419
  %v443 = vadd.f32 %v359, %v419
  %v444 = vadd.f32 %v360, %v419
  %v445 = vadd.f32 %v361, %v419
  %v446 = vadd.f32 %v362, %v419
  %v447 = vadd.f32 %v363, %v419
  %v448 = vadd.f32 %v364, %v419
  %v449 = vadd.f32 %v365, %v419
  %v450 = vadd.f32 %v366, %v419
  %v451 = vadd.f32 %v367, %v419
  %v452 = vadd.f32 %v368, %v424
  %v453 = vadd.f32 %v369, %v424
  %v454 = vadd.f32 %v370, %v424
  %v455 = vadd.f32 %v371, %v424
  %v456 = vadd.f32 %v372, %v424
  %v457 = vadd.f32 %v373, %v424
  %v458 = vadd.f32 %v374, %v424
  %v459 = vadd.f32 %v375, %v424
  %v460 = vadd.f32 %v376, %v424
  %v461 = vadd.f32 %v377, %v424
  %v462 = vadd.f32 %v378, %v424
  %v463 = vadd.f32 %v379, %v424
  %v464 = vadd.f32 %v380, %v424
  %v465 = vadd.f32 %v381, %v424
  %v466 = vadd.f32 %v382, %v424
  %v467 = vadd.f32 %v383, %v424
  %v468 = vadd.f32 %v384, %v429
  %v469 = vadd.f32 %v385, %v429
  %v470 = vadd.f32 %v386, %v429
  %v471 = vadd.f32 %v387, %v429
  %v472 = vadd.f32 %v388, %v429
  %v473 = vadd.f32 %v389, %v429
  %v474 = vadd.f32 %v390, %v429
  %v475 = vadd.f32 %v391, %v429
  %v476 = vadd.f32 %v392, %v429
  %v477 = vadd.f32 %v393, %v429
  %v478 = vadd.f32 %v394, %v429
  %v479 = vadd.f32 %v395, %v429
  %v480 = vadd.f32 %v396, %v429
  %v481 = vadd.f32 %v397, %v429
  %v482 = vadd.f32 %v398, %v429
  %v483 = vadd.f32 %v399, %v429
  %v484 = vadd.f32 %v400, %v434
  %v485 = vadd.f32 %v401, %v434
  %v486 = vadd.f32 %v402, %v434
  %v487 = vadd.f32 %v403, %v434
  %v488 = vadd.f32 %v404, %v434
  %v489 = vadd.f32 %v405, %v434
  %v490 = vadd.f32 %v406, %v434
  %v491 = vadd.f32 %v407, %v434
  %v492 = vadd.f32 %v408, %v434
  %v493 = vadd.f32 %v409, %v434
  %v494 = vadd.f32 %v410, %v434
  %v495 = vadd.f32 %v411, %v434
  %v496 = vadd.f32 %v412, %v434
  %v497 = vadd.f32 %v413, %v434
  %v498 = vadd.f32 %v414, %v434
  %v499 = vadd.f32 %v415, %v434
  %v500 = vmax.f32 %v436, 0.0
  %v501 = vmax.f32 %v437, 0.0
  %v502 = vmax.f32 %v438, 0.0
  %v503 = vmax.f32 %v439, 0.0
  %v504 = vmax.f32 %v440, 0.0
  %v505 = vmax.f32 %v441, 0.0
  %v506 = vmax.f32 %v442, 0.0
  %v507 = vmax.f32 %v443, 0.0
  %v508 = vmax.f32 %v444, 0.0
  %v509 = vmax.f32 %v445, 0.0
  %v510 = vmax.f32 %v446, 0.0
  %v511 = vmax.f32 %v447, 0.0
  %v512 = vmax.f32 %v448, 0.0
  %v513 = vmax.f32 %v449, 0.0
  %v514 = vmax.f32 %v450, 0.0
  %v515 = vmax.f32 %v451, 0.0
  %v516 = vmax.f32 %v452, 0.0
  %v517 = vmax.f32 %v453, 0.0
  %v518 = vmax.f32 %v454, 0.0
  %v519 = vmax.f32 %v455, 0.0
  %v520 = vmax.f32 %v456, 0.0
  %v521 = vmax.f32 %v457, 0.0
  %v522 = vmax.f32 %v458, 0.0
  %v523 = vmax.f32 %v459, 0.0
  %v524 = vmax.f32 %v460, 0.0
  %v525 = vmax.f32 %v461, 0.0
  %v526 = vmax.f32 %v462, 0.0
  %v527 = vmax.f32 %v463, 0.0
  %v528 = vmax.f32 %v464, 0.0
  %v529 = vmax.f32 %v465, 0.0
  %v530 = vmax.f32 %v466, 0.0
  %v531 = vmax.f32 %v467, 0.0
  %v532 = vmax.f32 %v468, 0.0
  %v533 = vmax.f32 %v469, 0.0
  %v534 = vmax.f32 %v470, 0.0
  %v535 = vmax.f32 %v471, 0.0
  %v536 = vmax.f32 %v472, 0.0
  %v537 = vmax.f32 %v473, 0.0
  %v538 = vmax.f32 %v474, 0.0
  %v539 = vmax.f32 %v475, 0.0
  %v540 = vmax.f32 %v476, 0.0
  %v541 = vmax.f32 %v477, 0.0
  %v542 = vmax.f32 %v478, 0.0
  %v543 = vmax.f32 %v479, 0.0
  %v544 = vmax.f32 %v480, 0.0
  %v545 = vmax.f32 %v481, 0.0
  %v546 = vmax.f32 %v482, 0.0
  %v547 = vmax.f32 %v483, 0.0
  %v548 = vmax.f32 %v484, 0.0
  %v549 = vmax.f32 %v485, 0.0
  %v550 = vmax.f32 %v486, 0.0
  %v551 = vmax.f32 %v487, 0.0
  %v552 = vmax.f32 %v488, 0.0
  %v553 = vmax.f32 %v489, 0.0
  %v554 = vmax.f32 %v490, 0.0
  %v555 = vmax.f32 %v491, 0.0
  %v556 = vmax.f32 %v492, 0.0
  %v557 = vmax.f32 %v493, 0.0
  %v558 = vmax.f32 %v494, 0.0
  %v559 = vmax.f32 %v495, 0.0
  %v560 = vmax.f32 %v496, 0.0
  %v561 = vmax.f32 %v497, 0.0
  %v562 = vmax.f32 %v498, 0.0
  %v563 = vmax.f32 %v499, 0.0
  %v564 = vpack.c.bf16 %v516, %v500
  %v565 = vpack.c.bf16 %v517, %v501
  %v566 = vpack.c.bf16 %v518, %v502
  %v567 = vpack.c.bf16 %v519, %v503
  %v568 = vpack.c.bf16 %v520, %v504
  %v569 = vpack.c.bf16 %v521, %v505
  %v570 = vpack.c.bf16 %v522, %v506
  %v571 = vpack.c.bf16 %v523, %v507
  %v572 = vpack.c.bf16 %v524, %v508
  %v573 = vpack.c.bf16 %v525, %v509
  %v574 = vpack.c.bf16 %v526, %v510
  %v575 = vpack.c.bf16 %v527, %v511
  %v576 = vpack.c.bf16 %v528, %v512
  %v577 = vpack.c.bf16 %v529, %v513
  %v578 = vpack.c.bf16 %v530, %v514
  %v579 = vpack.c.bf16 %v531, %v515
  %v580 = vpack.c.bf16 %v548, %v532
  %v581 = vpack.c.bf16 %v549, %v533
  %v582 = vpack.c.bf16 %v550, %v534
  %v583 = vpack.c.bf16 %v551, %v535
  %v584 = vpack.c.bf16 %v552, %v536
  %v585 = vpack.c.bf16 %v553, %v537
  %v586 = vpack.c.bf16 %v554, %v538
  %v587 = vpack.c.bf16 %v555, %v539
  %v588 = vpack.c.bf16 %v556, %v540
  %v589 = vpack.c.bf16 %v557, %v541
  %v590 = vpack.c.bf16 %v558, %v542
  %v591 = vpack.c.bf16 %v559, %v543
  %v592 = vpack.c.bf16 %v560, %v544
  %v593 = vpack.c.bf16 %v561, %v545
  %v594 = vpack.c.bf16 %v562, %v546
  %v595 = vpack.c.bf16 %v563, %v547
  %v596 = vlaneseq
  %v597 = vand.u32 %v596, 127
  %v598 = vadd.s32 %v597, 128
  %v599 = vadd.s32 %v597, 256
  %v600 = vadd.s32 %v597, 384
  %v601 = vadd.s32 %v597, 512
  %v602 = vadd.s32 %v597, 640
  %v603 = vadd.s32 %v597, 768
  %v604 = vadd.s32 %v597, 896
  %v605 = vadd.s32 %v597, 1024
  %v606 = vadd.s32 %v597, 1152
  %v607 = vadd.s32 %v597, 1280
  %v608 = vadd.s32 %v597, 1408
  %v609 = vadd.s32 %v597, 1536
  %v610 = vadd.s32 %v597, 1664
  %v611 = vadd.s32 %v597, 1792
  %v612 = vadd.s32 %v597, 1920
  %v613 = vand.u32 %v597, 31
  %v614 = vand.u32 %v598, 31
  %v615 = vand.u32 %v599, 31
  %v616 = vand.u32 %v600, 31
  %v617 = vand.u32 %v601, 31
  %v618 = vand.u32 %v602, 31
  %v619 = vand.u32 %v603, 31
  %v620 = vand.u32 %v604, 31
  %v621 = vand.u32 %v605, 31
  %v622 = vand.u32 %v606, 31
  %v623 = vand.u32 %v607, 31
  %v624 = vand.u32 %v608, 31
  %v625 = vand.u32 %v609, 31
  %v626 = vand.u32 %v610, 31
  %v627 = vand.u32 %v611, 31
  %v628 = vand.u32 %v612, 31
  %v629 = vshra.s32 %v597, 5
  %v630 = vshra.s32 %v598, 5
  %v631 = vshra.s32 %v599, 5
  %v632 = vshra.s32 %v600, 5
  %v633 = vshra.s32 %v601, 5
  %v634 = vshra.s32 %v602, 5
  %v635 = vshra.s32 %v603, 5
  %v636 = vshra.s32 %v604, 5
  %v637 = vshra.s32 %v605, 5
  %v638 = vshra.s32 %v606, 5
  %v639 = vshra.s32 %v607, 5
  %v640 = vshra.s32 %v608, 5
  %v641 = vshra.s32 %v609, 5
  %v642 = vshra.s32 %v610, 5
  %v643 = vshra.s32 %v611, 5
  %v644 = vshra.s32 %v612, 5
  %v645 = vand.u32 %v629, 31
  %v646 = vand.u32 %v630, 31
  %v647 = vand.u32 %v631, 31
  %v648 = vand.u32 %v632, 31
  %v649 = vand.u32 %v633, 31
  %v650 = vand.u32 %v634, 31
  %v651 = vand.u32 %v635, 31
  %v652 = vand.u32 %v636, 31
  %v653 = vand.u32 %v637, 31
  %v654 = vand.u32 %v638, 31
  %v655 = vand.u32 %v639, 31
  %v656 = vand.u32 %v640, 31
  %v657 = vand.u32 %v641, 31
  %v658 = vand.u32 %v642, 31
  %v659 = vand.u32 %v643, 31
  %v660 = vand.u32 %v644, 31
  %693 = vrot.lane.b32.xlu0 %v564, 33
  %v694 = vpop.permute.xlu0 %693
  %695 = vrot.lane.b32.xlu0 %v565, 33
  %v696 = vpop.permute.xlu0 %695
  %697 = vrot.lane.b32.xlu0 %v566, 33
  %v698 = vpop.permute.xlu0 %697
  %699 = vrot.lane.b32.xlu0 %v567, 33
  %v700 = vpop.permute.xlu0 %699
  %701 = vrot.lane.b32.xlu0 %v568, 33
  %v702 = vpop.permute.xlu0 %701
  %703 = vrot.lane.b32.xlu0 %v569, 33
  %v704 = vpop.permute.xlu0 %703
  %705 = vrot.lane.b32.xlu0 %v570, 33
  %v706 = vpop.permute.xlu0 %705
  %707 = vrot.lane.b32.xlu0 %v571, 33
  %v708 = vpop.permute.xlu0 %707
  %709 = vrot.lane.b32.xlu0 %v572, 33
  %v710 = vpop.permute.xlu0 %709
  %711 = vrot.lane.b32.xlu0 %v573, 33
  %v712 = vpop.permute.xlu0 %711
  %713 = vrot.lane.b32.xlu0 %v574, 33
  %v714 = vpop.permute.xlu0 %713
  %715 = vrot.lane.b32.xlu0 %v575, 33
  %v716 = vpop.permute.xlu0 %715
  %717 = vrot.lane.b32.xlu0 %v576, 33
  %v718 = vpop.permute.xlu0 %717
  %719 = vrot.lane.b32.xlu0 %v577, 33
  %v720 = vpop.permute.xlu0 %719
  %721 = vrot.lane.b32.xlu0 %v578, 33
  %v722 = vpop.permute.xlu0 %721
  %723 = vrot.lane.b32.xlu0 %v579, 33
  %v724 = vpop.permute.xlu0 %723
  %725 = vrot.lane.b32.xlu0 %v580, 33
  %v726 = vpop.permute.xlu0 %725
  %727 = vrot.lane.b32.xlu0 %v581, 33
  %v728 = vpop.permute.xlu0 %727
  %729 = vrot.lane.b32.xlu0 %v582, 33
  %v730 = vpop.permute.xlu0 %729
  %731 = vrot.lane.b32.xlu0 %v583, 33
  %v732 = vpop.permute.xlu0 %731
  %733 = vrot.lane.b32.xlu0 %v584, 33
  %v734 = vpop.permute.xlu0 %733
  %735 = vrot.lane.b32.xlu0 %v585, 33
  %v736 = vpop.permute.xlu0 %735
  %737 = vrot.lane.b32.xlu0 %v586, 33
  %v738 = vpop.permute.xlu0 %737
  %739 = vrot.lane.b32.xlu0 %v587, 33
  %v740 = vpop.permute.xlu0 %739
  %741 = vrot.lane.b32.xlu0 %v588, 33
  %v742 = vpop.permute.xlu0 %741
  %743 = vrot.lane.b32.xlu0 %v589, 33
  %v744 = vpop.permute.xlu0 %743
  %745 = vrot.lane.b32.xlu0 %v590, 33
  %v746 = vpop.permute.xlu0 %745
  %747 = vrot.lane.b32.xlu0 %v591, 33
  %v748 = vpop.permute.xlu0 %747
  %749 = vrot.lane.b32.xlu0 %v592, 33
  %v750 = vpop.permute.xlu0 %749
  %751 = vrot.lane.b32.xlu0 %v593, 33
  %v752 = vpop.permute.xlu0 %751
  %753 = vrot.lane.b32.xlu0 %v594, 33
  %v754 = vpop.permute.xlu0 %753
  %755 = vrot.lane.b32.xlu0 %v595, 33
  %v756 = vpop.permute.xlu0 %755
  %vm757 = vcmask 269312
  %v758 = vsel %vm757, %v694, %v696
  %v759 = vsel %vm757, %v696, %v698
  %v760 = vsel %vm757, %v698, %v700
  %v761 = vsel %vm757, %v700, %v702
  %v762 = vsel %vm757, %v702, %v704
  %v763 = vsel %vm757, %v704, %v706
  %v764 = vsel %vm757, %v706, %v708
  %v765 = vsel %vm757, %v708, %v710
  %v766 = vsel %vm757, %v710, %v712
  %v767 = vsel %vm757, %v712, %v714
  %v768 = vsel %vm757, %v714, %v716
  %v769 = vsel %vm757, %v716, %v718
  %v770 = vsel %vm757, %v718, %v720
  %v771 = vsel %vm757, %v720, %v722
  %v772 = vsel %vm757, %v722, %v724
  %v773 = vsel %vm757, %v726, %v728
  %v774 = vsel %vm757, %v728, %v730
  %v775 = vsel %vm757, %v730, %v732
  %v776 = vsel %vm757, %v732, %v734
  %v777 = vsel %vm757, %v734, %v736
  %v778 = vsel %vm757, %v736, %v738
  %v779 = vsel %vm757, %v738, %v740
  %v780 = vsel %vm757, %v740, %v742
  %v781 = vsel %vm757, %v742, %v744
  %v782 = vsel %vm757, %v744, %v746
  %v783 = vsel %vm757, %v746, %v748
  %v784 = vsel %vm757, %v748, %v750
  %v785 = vsel %vm757, %v750, %v752
  %v786 = vsel %vm757, %v752, %v754
  %v787 = vsel %vm757, %v754, %v756
  %vm818 = vcmask 269312
  %v821 = vsel %vm818, 0, %v694
  %v824 = vsel %vm818, 0, %v726
  %v826 = vadd.s32 %v613, 4294967295
  %v827 = vadd.s32 %v614, 4294967295
  %v828 = vadd.s32 %v615, 4294967295
  %v829 = vadd.s32 %v616, 4294967295
  %v830 = vadd.s32 %v617, 4294967295
  %v831 = vadd.s32 %v618, 4294967295
  %v832 = vadd.s32 %v619, 4294967295
  %v833 = vadd.s32 %v620, 4294967295
  %v834 = vadd.s32 %v621, 4294967295
  %v835 = vadd.s32 %v622, 4294967295
  %v836 = vadd.s32 %v623, 4294967295
  %v837 = vadd.s32 %v624, 4294967295
  %v838 = vadd.s32 %v625, 4294967295
  %v839 = vadd.s32 %v626, 4294967295
  %v840 = vadd.s32 %v627, 4294967295
  %v841 = vadd.s32 %v628, 4294967295
  %vm842 = vcmp.ge.s32.totalorder %v826, 0
  %vm843 = vcmp.ge.s32.totalorder %v827, 0
  %vm844 = vcmp.ge.s32.totalorder %v828, 0
  %vm845 = vcmp.ge.s32.totalorder %v829, 0
  %vm846 = vcmp.ge.s32.totalorder %v830, 0
  %vm847 = vcmp.ge.s32.totalorder %v831, 0
  %vm848 = vcmp.ge.s32.totalorder %v832, 0
  %vm849 = vcmp.ge.s32.totalorder %v833, 0
  %vm850 = vcmp.ge.s32.totalorder %v834, 0
  %vm851 = vcmp.ge.s32.totalorder %v835, 0
  %vm852 = vcmp.ge.s32.totalorder %v836, 0
  %vm853 = vcmp.ge.s32.totalorder %v837, 0
  %vm854 = vcmp.ge.s32.totalorder %v838, 0
  %vm855 = vcmp.ge.s32.totalorder %v839, 0
  %vm856 = vcmp.ge.s32.totalorder %v840, 0
  %vm857 = vcmp.ge.s32.totalorder %v841, 0
  %vm858 = vcmp.lt.s32.totalorder %v826, 32
  %vm859 = vcmp.lt.s32.totalorder %v827, 32
  %vm860 = vcmp.lt.s32.totalorder %v828, 32
  %vm861 = vcmp.lt.s32.totalorder %v829, 32
  %vm862 = vcmp.lt.s32.totalorder %v830, 32
  %vm863 = vcmp.lt.s32.totalorder %v831, 32
  %vm864 = vcmp.lt.s32.totalorder %v832, 32
  %vm865 = vcmp.lt.s32.totalorder %v833, 32
  %vm866 = vcmp.lt.s32.totalorder %v834, 32
  %vm867 = vcmp.lt.s32.totalorder %v835, 32
  %vm868 = vcmp.lt.s32.totalorder %v836, 32
  %vm869 = vcmp.lt.s32.totalorder %v837, 32
  %vm870 = vcmp.lt.s32.totalorder %v838, 32
  %vm871 = vcmp.lt.s32.totalorder %v839, 32
  %vm872 = vcmp.lt.s32.totalorder %v840, 32
  %vm873 = vcmp.lt.s32.totalorder %v841, 32
  %vm874 = vmand %vm842, %vm858
  %vm875 = vmand %vm843, %vm859
  %vm876 = vmand %vm844, %vm860
  %vm877 = vmand %vm845, %vm861
  %vm878 = vmand %vm846, %vm862
  %vm879 = vmand %vm847, %vm863
  %vm880 = vmand %vm848, %vm864
  %vm881 = vmand %vm849, %vm865
  %vm882 = vmand %vm850, %vm866
  %vm883 = vmand %vm851, %vm867
  %vm884 = vmand %vm852, %vm868
  %vm885 = vmand %vm853, %vm869
  %vm886 = vmand %vm854, %vm870
  %vm887 = vmand %vm855, %vm871
  %vm888 = vmand %vm856, %vm872
  %vm889 = vmand %vm857, %vm873
  %v890 = vadd.s32 %v645, 4294967295
  %v891 = vadd.s32 %v646, 4294967295
  %v892 = vadd.s32 %v647, 4294967295
  %v893 = vadd.s32 %v648, 4294967295
  %v894 = vadd.s32 %v649, 4294967295
  %v895 = vadd.s32 %v650, 4294967295
  %v896 = vadd.s32 %v651, 4294967295
  %v897 = vadd.s32 %v652, 4294967295
  %v898 = vadd.s32 %v653, 4294967295
  %v899 = vadd.s32 %v654, 4294967295
  %v900 = vadd.s32 %v655, 4294967295
  %v901 = vadd.s32 %v656, 4294967295
  %v902 = vadd.s32 %v657, 4294967295
  %v903 = vadd.s32 %v658, 4294967295
  %v904 = vadd.s32 %v659, 4294967295
  %v905 = vadd.s32 %v660, 4294967295
  %vm906 = vcmp.ge.s32.totalorder %v890, 0
  %vm907 = vcmp.ge.s32.totalorder %v891, 0
  %vm908 = vcmp.ge.s32.totalorder %v892, 0
  %vm909 = vcmp.ge.s32.totalorder %v893, 0
  %vm910 = vcmp.ge.s32.totalorder %v894, 0
  %vm911 = vcmp.ge.s32.totalorder %v895, 0
  %vm912 = vcmp.ge.s32.totalorder %v896, 0
  %vm913 = vcmp.ge.s32.totalorder %v897, 0
  %vm914 = vcmp.ge.s32.totalorder %v898, 0
  %vm915 = vcmp.ge.s32.totalorder %v899, 0
  %vm916 = vcmp.ge.s32.totalorder %v900, 0
  %vm917 = vcmp.ge.s32.totalorder %v901, 0
  %vm918 = vcmp.ge.s32.totalorder %v902, 0
  %vm919 = vcmp.ge.s32.totalorder %v903, 0
  %vm920 = vcmp.ge.s32.totalorder %v904, 0
  %vm921 = vcmp.ge.s32.totalorder %v905, 0
  %vm922 = vmand %vm874, %vm906
  %vm923 = vmand %vm875, %vm907
  %vm924 = vmand %vm876, %vm908
  %vm925 = vmand %vm877, %vm909
  %vm926 = vmand %vm878, %vm910
  %vm927 = vmand %vm879, %vm911
  %vm928 = vmand %vm880, %vm912
  %vm929 = vmand %vm881, %vm913
  %vm930 = vmand %vm882, %vm914
  %vm931 = vmand %vm883, %vm915
  %vm932 = vmand %vm884, %vm916
  %vm933 = vmand %vm885, %vm917
  %vm934 = vmand %vm886, %vm918
  %vm935 = vmand %vm887, %vm919
  %vm936 = vmand %vm888, %vm920
  %vm937 = vmand %vm889, %vm921
  %vm938 = vcmp.lt.s32.totalorder %v890, 32
  %vm939 = vcmp.lt.s32.totalorder %v891, 32
  %vm940 = vcmp.lt.s32.totalorder %v892, 32
  %vm941 = vcmp.lt.s32.totalorder %v893, 32
  %vm942 = vcmp.lt.s32.totalorder %v894, 32
  %vm943 = vcmp.lt.s32.totalorder %v895, 32
  %vm944 = vcmp.lt.s32.totalorder %v896, 32
  %vm945 = vcmp.lt.s32.totalorder %v897, 32
  %vm946 = vcmp.lt.s32.totalorder %v898, 32
  %vm947 = vcmp.lt.s32.totalorder %v899, 32
  %vm948 = vcmp.lt.s32.totalorder %v900, 32
  %vm949 = vcmp.lt.s32.totalorder %v901, 32
  %vm950 = vcmp.lt.s32.totalorder %v902, 32
  %vm951 = vcmp.lt.s32.totalorder %v903, 32
  %vm952 = vcmp.lt.s32.totalorder %v904, 32
  %vm953 = vcmp.lt.s32.totalorder %v905, 32
  %vm954 = vmand %vm922, %vm938
  %vm955 = vmand %vm923, %vm939
  %vm956 = vmand %vm924, %vm940
  %vm957 = vmand %vm925, %vm941
  %vm958 = vmand %vm926, %vm942
  %vm959 = vmand %vm927, %vm943
  %vm960 = vmand %vm928, %vm944
  %vm961 = vmand %vm929, %vm945
  %vm962 = vmand %vm930, %vm946
  %vm963 = vmand %vm931, %vm947
  %vm964 = vmand %vm932, %vm948
  %vm965 = vmand %vm933, %vm949
  %vm966 = vmand %vm934, %vm950
  %vm967 = vmand %vm935, %vm951
  %vm968 = vmand %vm936, %vm952
  %vm969 = vmand %vm937, %vm953
  %vm970 = vmpackc.low %vm955, %vm954
  %vm971 = vmpackc.low %vm957, %vm956
  %vm972 = vmpackc.low %vm959, %vm958
  %vm973 = vmpackc.low %vm961, %vm960
  %vm974 = vmpackc.low %vm963, %vm962
  %vm975 = vmpackc.low %vm965, %vm964
  %vm976 = vmpackc.low %vm967, %vm966
  %vm977 = vmpackc.low %vm969, %vm968
  %v978 = vsel %vm970, 65537, 0
  %v979 = vsel %vm971, 65537, 0
  %v980 = vsel %vm972, 65537, 0
  %v981 = vsel %vm973, 65537, 0
  %v982 = vsel %vm974, 65537, 0
  %v983 = vsel %vm975, 65537, 0
  %v984 = vsel %vm976, 65537, 0
  %v985 = vsel %vm977, 65537, 0
  %v986 = vlaneseq
  %v987 = vshrl.u32 %v986, 7
  %v988 = vsub.s32 0, %v987
  %v989 = vrot.slane %v978, %v988
  %v990 = vlaneseq
  %v991 = vshrl.u32 %v990, 7
  %v992 = vsub.s32 4, %v991
  %v993 = vrot.slane %v978, %v992
  %v994 = vlaneseq
  %v995 = vshrl.u32 %v994, 7
  %v996 = vsub.s32 0, %v995
  %v997 = vrot.slane %v979, %v996
  %v998 = vlaneseq
  %v999 = vshrl.u32 %v998, 7
  %v1000 = vsub.s32 4, %v999
  %v1001 = vrot.slane %v979, %v1000
  %v1002 = vlaneseq
  %v1003 = vshrl.u32 %v1002, 7
  %v1004 = vsub.s32 0, %v1003
  %v1005 = vrot.slane %v980, %v1004
  %v1006 = vlaneseq
  %v1007 = vshrl.u32 %v1006, 7
  %v1008 = vsub.s32 4, %v1007
  %v1009 = vrot.slane %v980, %v1008
  %v1010 = vlaneseq
  %v1011 = vshrl.u32 %v1010, 7
  %v1012 = vsub.s32 0, %v1011
  %v1013 = vrot.slane %v981, %v1012
  %v1014 = vlaneseq
  %v1015 = vshrl.u32 %v1014, 7
  %v1016 = vsub.s32 4, %v1015
  %v1017 = vrot.slane %v981, %v1016
  %v1018 = vlaneseq
  %v1019 = vshrl.u32 %v1018, 7
  %v1020 = vsub.s32 0, %v1019
  %v1021 = vrot.slane %v982, %v1020
  %v1022 = vlaneseq
  %v1023 = vshrl.u32 %v1022, 7
  %v1024 = vsub.s32 4, %v1023
  %v1025 = vrot.slane %v982, %v1024
  %v1026 = vlaneseq
  %v1027 = vshrl.u32 %v1026, 7
  %v1028 = vsub.s32 0, %v1027
  %v1029 = vrot.slane %v983, %v1028
  %v1030 = vlaneseq
  %v1031 = vshrl.u32 %v1030, 7
  %v1032 = vsub.s32 4, %v1031
  %v1033 = vrot.slane %v983, %v1032
  %v1034 = vlaneseq
  %v1035 = vshrl.u32 %v1034, 7
  %v1036 = vsub.s32 0, %v1035
  %v1037 = vrot.slane %v984, %v1036
  %v1038 = vlaneseq
  %v1039 = vshrl.u32 %v1038, 7
  %v1040 = vsub.s32 4, %v1039
  %v1041 = vrot.slane %v984, %v1040
  %v1042 = vlaneseq
  %v1043 = vshrl.u32 %v1042, 7
  %v1044 = vsub.s32 0, %v1043
  %v1045 = vrot.slane %v985, %v1044
  %v1046 = vlaneseq
  %v1047 = vshrl.u32 %v1046, 7
  %v1048 = vsub.s32 4, %v1047
  %v1049 = vrot.slane %v985, %v1048
  %vm1050 = vcmp.ne.s16.totalorder %v989, 0
  %vm1051 = vcmp.ne.s16.totalorder %v993, 0
  %vm1052 = vcmp.ne.s16.totalorder %v997, 0
  %vm1053 = vcmp.ne.s16.totalorder %v1001, 0
  %vm1054 = vcmp.ne.s16.totalorder %v1005, 0
  %vm1055 = vcmp.ne.s16.totalorder %v1009, 0
  %vm1056 = vcmp.ne.s16.totalorder %v1013, 0
  %vm1057 = vcmp.ne.s16.totalorder %v1017, 0
  %vm1058 = vcmp.ne.s16.totalorder %v1021, 0
  %vm1059 = vcmp.ne.s16.totalorder %v1025, 0
  %vm1060 = vcmp.ne.s16.totalorder %v1029, 0
  %vm1061 = vcmp.ne.s16.totalorder %v1033, 0
  %vm1062 = vcmp.ne.s16.totalorder %v1037, 0
  %vm1063 = vcmp.ne.s16.totalorder %v1041, 0
  %vm1064 = vcmp.ne.s16.totalorder %v1045, 0
  %vm1065 = vcmp.ne.s16.totalorder %v1049, 0
  %v1066 = vsel %vm1050, %v821, 0
  %v1067 = vsel %vm1051, %v758, 0
  %v1068 = vsel %vm1052, %v759, 0
  %v1069 = vsel %vm1053, %v760, 0
  %v1070 = vsel %vm1054, %v761, 0
  %v1071 = vsel %vm1055, %v762, 0
  %v1072 = vsel %vm1056, %v763, 0
  %v1073 = vsel %vm1057, %v764, 0
  %v1074 = vsel %vm1058, %v765, 0
  %v1075 = vsel %vm1059, %v766, 0
  %v1076 = vsel %vm1060, %v767, 0
  %v1077 = vsel %vm1061, %v768, 0
  %v1078 = vsel %vm1062, %v769, 0
  %v1079 = vsel %vm1063, %v770, 0
  %v1080 = vsel %vm1064, %v771, 0
  %v1081 = vsel %vm1065, %v772, 0
  %v1082 = vsel %vm1050, %v824, 0
  %v1083 = vsel %vm1051, %v773, 0
  %v1084 = vsel %vm1052, %v774, 0
  %v1085 = vsel %vm1053, %v775, 0
  %v1086 = vsel %vm1054, %v776, 0
  %v1087 = vsel %vm1055, %v777, 0
  %v1088 = vsel %vm1056, %v778, 0
  %v1089 = vsel %vm1057, %v779, 0
  %v1090 = vsel %vm1058, %v780, 0
  %v1091 = vsel %vm1059, %v781, 0
  %v1092 = vsel %vm1060, %v782, 0
  %v1093 = vsel %vm1061, %v783, 0
  %v1094 = vsel %vm1062, %v784, 0
  %v1095 = vsel %vm1063, %v785, 0
  %v1096 = vsel %vm1064, %v786, 0
  %v1097 = vsel %vm1065, %v787, 0
  %1098 = vrot.lane.b32.xlu0 %v564, 32
  %v1099 = vpop.permute.xlu0 %1098
  %1100 = vrot.lane.b32.xlu0 %v565, 32
  %v1101 = vpop.permute.xlu0 %1100
  %1102 = vrot.lane.b32.xlu0 %v566, 32
  %v1103 = vpop.permute.xlu0 %1102
  %1104 = vrot.lane.b32.xlu0 %v567, 32
  %v1105 = vpop.permute.xlu0 %1104
  %1106 = vrot.lane.b32.xlu0 %v568, 32
  %v1107 = vpop.permute.xlu0 %1106
  %1108 = vrot.lane.b32.xlu0 %v569, 32
  %v1109 = vpop.permute.xlu0 %1108
  %1110 = vrot.lane.b32.xlu0 %v570, 32
  %v1111 = vpop.permute.xlu0 %1110
  %1112 = vrot.lane.b32.xlu0 %v571, 32
  %v1113 = vpop.permute.xlu0 %1112
  %1114 = vrot.lane.b32.xlu0 %v572, 32
  %v1115 = vpop.permute.xlu0 %1114
  %1116 = vrot.lane.b32.xlu0 %v573, 32
  %v1117 = vpop.permute.xlu0 %1116
  %1118 = vrot.lane.b32.xlu0 %v574, 32
  %v1119 = vpop.permute.xlu0 %1118
  %1120 = vrot.lane.b32.xlu0 %v575, 32
  %v1121 = vpop.permute.xlu0 %1120
  %1122 = vrot.lane.b32.xlu0 %v576, 32
  %v1123 = vpop.permute.xlu0 %1122
  %1124 = vrot.lane.b32.xlu0 %v577, 32
  %v1125 = vpop.permute.xlu0 %1124
  %1126 = vrot.lane.b32.xlu0 %v578, 32
  %v1127 = vpop.permute.xlu0 %1126
  %1128 = vrot.lane.b32.xlu0 %v579, 32
  %v1129 = vpop.permute.xlu0 %1128
  %1130 = vrot.lane.b32.xlu0 %v580, 32
  %v1131 = vpop.permute.xlu0 %1130
  %1132 = vrot.lane.b32.xlu0 %v581, 32
  %v1133 = vpop.permute.xlu0 %1132
  %1134 = vrot.lane.b32.xlu0 %v582, 32
  %v1135 = vpop.permute.xlu0 %1134
  %1136 = vrot.lane.b32.xlu0 %v583, 32
  %v1137 = vpop.permute.xlu0 %1136
  %1138 = vrot.lane.b32.xlu0 %v584, 32
  %v1139 = vpop.permute.xlu0 %1138
  %1140 = vrot.lane.b32.xlu0 %v585, 32
  %v1141 = vpop.permute.xlu0 %1140
  %1142 = vrot.lane.b32.xlu0 %v586, 32
  %v1143 = vpop.permute.xlu0 %1142
  %1144 = vrot.lane.b32.xlu0 %v587, 32
  %v1145 = vpop.permute.xlu0 %1144
  %1146 = vrot.lane.b32.xlu0 %v588, 32
  %v1147 = vpop.permute.xlu0 %1146
  %1148 = vrot.lane.b32.xlu0 %v589, 32
  %v1149 = vpop.permute.xlu0 %1148
  %1150 = vrot.lane.b32.xlu0 %v590, 32
  %v1151 = vpop.permute.xlu0 %1150
  %1152 = vrot.lane.b32.xlu0 %v591, 32
  %v1153 = vpop.permute.xlu0 %1152
  %1154 = vrot.lane.b32.xlu0 %v592, 32
  %v1155 = vpop.permute.xlu0 %1154
  %1156 = vrot.lane.b32.xlu0 %v593, 32
  %v1157 = vpop.permute.xlu0 %1156
  %1158 = vrot.lane.b32.xlu0 %v594, 32
  %v1159 = vpop.permute.xlu0 %1158
  %1160 = vrot.lane.b32.xlu0 %v595, 32
  %v1161 = vpop.permute.xlu0 %1160
  %vm1162 = vcmask 261120
  %v1163 = vsel %vm1162, %v1099, %v1101
  %v1164 = vsel %vm1162, %v1101, %v1103
  %v1165 = vsel %vm1162, %v1103, %v1105
  %v1166 = vsel %vm1162, %v1105, %v1107
  %v1167 = vsel %vm1162, %v1107, %v1109
  %v1168 = vsel %vm1162, %v1109, %v1111
  %v1169 = vsel %vm1162, %v1111, %v1113
  %v1170 = vsel %vm1162, %v1113, %v1115
  %v1171 = vsel %vm1162, %v1115, %v1117
  %v1172 = vsel %vm1162, %v1117, %v1119
  %v1173 = vsel %vm1162, %v1119, %v1121
  %v1174 = vsel %vm1162, %v1121, %v1123
  %v1175 = vsel %vm1162, %v1123, %v1125
  %v1176 = vsel %vm1162, %v1125, %v1127
  %v1177 = vsel %vm1162, %v1127, %v1129
  %v1178 = vsel %vm1162, %v1131, %v1133
  %v1179 = vsel %vm1162, %v1133, %v1135
  %v1180 = vsel %vm1162, %v1135, %v1137
  %v1181 = vsel %vm1162, %v1137, %v1139
  %v1182 = vsel %vm1162, %v1139, %v1141
  %v1183 = vsel %vm1162, %v1141, %v1143
  %v1184 = vsel %vm1162, %v1143, %v1145
  %v1185 = vsel %vm1162, %v1145, %v1147
  %v1186 = vsel %vm1162, %v1147, %v1149
  %v1187 = vsel %vm1162, %v1149, %v1151
  %v1188 = vsel %vm1162, %v1151, %v1153
  %v1189 = vsel %vm1162, %v1153, %v1155
  %v1190 = vsel %vm1162, %v1155, %v1157
  %v1191 = vsel %vm1162, %v1157, %v1159
  %v1192 = vsel %vm1162, %v1159, %v1161
  %vm1223 = vcmask 261120
  %v1225 = vsel %vm1223, 0, %v1099
  %v1228 = vsel %vm1223, 0, %v1131
  %vm1230 = vcmp.ge.s32.totalorder %v613, 0
  %vm1231 = vcmp.ge.s32.totalorder %v614, 0
  %vm1232 = vcmp.ge.s32.totalorder %v615, 0
  %vm1233 = vcmp.ge.s32.totalorder %v616, 0
  %vm1234 = vcmp.ge.s32.totalorder %v617, 0
  %vm1235 = vcmp.ge.s32.totalorder %v618, 0
  %vm1236 = vcmp.ge.s32.totalorder %v619, 0
  %vm1237 = vcmp.ge.s32.totalorder %v620, 0
  %vm1238 = vcmp.ge.s32.totalorder %v621, 0
  %vm1239 = vcmp.ge.s32.totalorder %v622, 0
  %vm1240 = vcmp.ge.s32.totalorder %v623, 0
  %vm1241 = vcmp.ge.s32.totalorder %v624, 0
  %vm1242 = vcmp.ge.s32.totalorder %v625, 0
  %vm1243 = vcmp.ge.s32.totalorder %v626, 0
  %vm1244 = vcmp.ge.s32.totalorder %v627, 0
  %vm1245 = vcmp.ge.s32.totalorder %v628, 0
  %vm1246 = vcmp.lt.s32.totalorder %v613, 32
  %vm1247 = vcmp.lt.s32.totalorder %v614, 32
  %vm1248 = vcmp.lt.s32.totalorder %v615, 32
  %vm1249 = vcmp.lt.s32.totalorder %v616, 32
  %vm1250 = vcmp.lt.s32.totalorder %v617, 32
  %vm1251 = vcmp.lt.s32.totalorder %v618, 32
  %vm1252 = vcmp.lt.s32.totalorder %v619, 32
  %vm1253 = vcmp.lt.s32.totalorder %v620, 32
  %vm1254 = vcmp.lt.s32.totalorder %v621, 32
  %vm1255 = vcmp.lt.s32.totalorder %v622, 32
  %vm1256 = vcmp.lt.s32.totalorder %v623, 32
  %vm1257 = vcmp.lt.s32.totalorder %v624, 32
  %vm1258 = vcmp.lt.s32.totalorder %v625, 32
  %vm1259 = vcmp.lt.s32.totalorder %v626, 32
  %vm1260 = vcmp.lt.s32.totalorder %v627, 32
  %vm1261 = vcmp.lt.s32.totalorder %v628, 32
  %vm1262 = vmand %vm1230, %vm1246
  %vm1263 = vmand %vm1231, %vm1247
  %vm1264 = vmand %vm1232, %vm1248
  %vm1265 = vmand %vm1233, %vm1249
  %vm1266 = vmand %vm1234, %vm1250
  %vm1267 = vmand %vm1235, %vm1251
  %vm1268 = vmand %vm1236, %vm1252
  %vm1269 = vmand %vm1237, %vm1253
  %vm1270 = vmand %vm1238, %vm1254
  %vm1271 = vmand %vm1239, %vm1255
  %vm1272 = vmand %vm1240, %vm1256
  %vm1273 = vmand %vm1241, %vm1257
  %vm1274 = vmand %vm1242, %vm1258
  %vm1275 = vmand %vm1243, %vm1259
  %vm1276 = vmand %vm1244, %vm1260
  %vm1277 = vmand %vm1245, %vm1261
  %vm1278 = vmand %vm1262, %vm906
  %vm1279 = vmand %vm1263, %vm907
  %vm1280 = vmand %vm1264, %vm908
  %vm1281 = vmand %vm1265, %vm909
  %vm1282 = vmand %vm1266, %vm910
  %vm1283 = vmand %vm1267, %vm911
  %vm1284 = vmand %vm1268, %vm912
  %vm1285 = vmand %vm1269, %vm913
  %vm1286 = vmand %vm1270, %vm914
  %vm1287 = vmand %vm1271, %vm915
  %vm1288 = vmand %vm1272, %vm916
  %vm1289 = vmand %vm1273, %vm917
  %vm1290 = vmand %vm1274, %vm918
  %vm1291 = vmand %vm1275, %vm919
  %vm1292 = vmand %vm1276, %vm920
  %vm1293 = vmand %vm1277, %vm921
  %vm1294 = vmand %vm1278, %vm938
  %vm1295 = vmand %vm1279, %vm939
  %vm1296 = vmand %vm1280, %vm940
  %vm1297 = vmand %vm1281, %vm941
  %vm1298 = vmand %vm1282, %vm942
  %vm1299 = vmand %vm1283, %vm943
  %vm1300 = vmand %vm1284, %vm944
  %vm1301 = vmand %vm1285, %vm945
  %vm1302 = vmand %vm1286, %vm946
  %vm1303 = vmand %vm1287, %vm947
  %vm1304 = vmand %vm1288, %vm948
  %vm1305 = vmand %vm1289, %vm949
  %vm1306 = vmand %vm1290, %vm950
  %vm1307 = vmand %vm1291, %vm951
  %vm1308 = vmand %vm1292, %vm952
  %vm1309 = vmand %vm1293, %vm953
  %vm1310 = vmpackc.low %vm1295, %vm1294
  %vm1311 = vmpackc.low %vm1297, %vm1296
  %vm1312 = vmpackc.low %vm1299, %vm1298
  %vm1313 = vmpackc.low %vm1301, %vm1300
  %vm1314 = vmpackc.low %vm1303, %vm1302
  %vm1315 = vmpackc.low %vm1305, %vm1304
  %vm1316 = vmpackc.low %vm1307, %vm1306
  %vm1317 = vmpackc.low %vm1309, %vm1308
  %v1318 = vsel %vm1310, 65537, 0
  %v1319 = vsel %vm1311, 65537, 0
  %v1320 = vsel %vm1312, 65537, 0
  %v1321 = vsel %vm1313, 65537, 0
  %v1322 = vsel %vm1314, 65537, 0
  %v1323 = vsel %vm1315, 65537, 0
  %v1324 = vsel %vm1316, 65537, 0
  %v1325 = vsel %vm1317, 65537, 0
  %v1326 = vlaneseq
  %v1327 = vshrl.u32 %v1326, 7
  %v1328 = vsub.s32 0, %v1327
  %v1329 = vrot.slane %v1318, %v1328
  %v1330 = vlaneseq
  %v1331 = vshrl.u32 %v1330, 7
  %v1332 = vsub.s32 4, %v1331
  %v1333 = vrot.slane %v1318, %v1332
  %v1334 = vlaneseq
  %v1335 = vshrl.u32 %v1334, 7
  %v1336 = vsub.s32 0, %v1335
  %v1337 = vrot.slane %v1319, %v1336
  %v1338 = vlaneseq
  %v1339 = vshrl.u32 %v1338, 7
  %v1340 = vsub.s32 4, %v1339
  %v1341 = vrot.slane %v1319, %v1340
  %v1342 = vlaneseq
  %v1343 = vshrl.u32 %v1342, 7
  %v1344 = vsub.s32 0, %v1343
  %v1345 = vrot.slane %v1320, %v1344
  %v1346 = vlaneseq
  %v1347 = vshrl.u32 %v1346, 7
  %v1348 = vsub.s32 4, %v1347
  %v1349 = vrot.slane %v1320, %v1348
  %v1350 = vlaneseq
  %v1351 = vshrl.u32 %v1350, 7
  %v1352 = vsub.s32 0, %v1351
  %v1353 = vrot.slane %v1321, %v1352
  %v1354 = vlaneseq
  %v1355 = vshrl.u32 %v1354, 7
  %v1356 = vsub.s32 4, %v1355
  %v1357 = vrot.slane %v1321, %v1356
  %v1358 = vlaneseq
  %v1359 = vshrl.u32 %v1358, 7
  %v1360 = vsub.s32 0, %v1359
  %v1361 = vrot.slane %v1322, %v1360
  %v1362 = vlaneseq
  %v1363 = vshrl.u32 %v1362, 7
  %v1364 = vsub.s32 4, %v1363
  %v1365 = vrot.slane %v1322, %v1364
  %v1366 = vlaneseq
  %v1367 = vshrl.u32 %v1366, 7
  %v1368 = vsub.s32 0, %v1367
  %v1369 = vrot.slane %v1323, %v1368
  %v1370 = vlaneseq
  %v1371 = vshrl.u32 %v1370, 7
  %v1372 = vsub.s32 4, %v1371
  %v1373 = vrot.slane %v1323, %v1372
  %v1374 = vlaneseq
  %v1375 = vshrl.u32 %v1374, 7
  %v1376 = vsub.s32 0, %v1375
  %v1377 = vrot.slane %v1324, %v1376
  %v1378 = vlaneseq
  %v1379 = vshrl.u32 %v1378, 7
  %v1380 = vsub.s32 4, %v1379
  %v1381 = vrot.slane %v1324, %v1380
  %v1382 = vlaneseq
  %v1383 = vshrl.u32 %v1382, 7
  %v1384 = vsub.s32 0, %v1383
  %v1385 = vrot.slane %v1325, %v1384
  %v1386 = vlaneseq
  %v1387 = vshrl.u32 %v1386, 7
  %v1388 = vsub.s32 4, %v1387
  %v1389 = vrot.slane %v1325, %v1388
  %vm1390 = vcmp.ne.s16.totalorder %v1329, 0
  %vm1391 = vcmp.ne.s16.totalorder %v1333, 0
  %vm1392 = vcmp.ne.s16.totalorder %v1337, 0
  %vm1393 = vcmp.ne.s16.totalorder %v1341, 0
  %vm1394 = vcmp.ne.s16.totalorder %v1345, 0
  %vm1395 = vcmp.ne.s16.totalorder %v1349, 0
  %vm1396 = vcmp.ne.s16.totalorder %v1353, 0
  %vm1397 = vcmp.ne.s16.totalorder %v1357, 0
  %vm1398 = vcmp.ne.s16.totalorder %v1361, 0
  %vm1399 = vcmp.ne.s16.totalorder %v1365, 0
  %vm1400 = vcmp.ne.s16.totalorder %v1369, 0
  %vm1401 = vcmp.ne.s16.totalorder %v1373, 0
  %vm1402 = vcmp.ne.s16.totalorder %v1377, 0
  %vm1403 = vcmp.ne.s16.totalorder %v1381, 0
  %vm1404 = vcmp.ne.s16.totalorder %v1385, 0
  %vm1405 = vcmp.ne.s16.totalorder %v1389, 0
  %v1406 = vsel %vm1390, %v1225, 0
  %v1407 = vsel %vm1391, %v1163, 0
  %v1408 = vsel %vm1392, %v1164, 0
  %v1409 = vsel %vm1393, %v1165, 0
  %v1410 = vsel %vm1394, %v1166, 0
  %v1411 = vsel %vm1395, %v1167, 0
  %v1412 = vsel %vm1396, %v1168, 0
  %v1413 = vsel %vm1397, %v1169, 0
  %v1414 = vsel %vm1398, %v1170, 0
  %v1415 = vsel %vm1399, %v1171, 0
  %v1416 = vsel %vm1400, %v1172, 0
  %v1417 = vsel %vm1401, %v1173, 0
  %v1418 = vsel %vm1402, %v1174, 0
  %v1419 = vsel %vm1403, %v1175, 0
  %v1420 = vsel %vm1404, %v1176, 0
  %v1421 = vsel %vm1405, %v1177, 0
  %v1422 = vsel %vm1390, %v1228, 0
  %v1423 = vsel %vm1391, %v1178, 0
  %v1424 = vsel %vm1392, %v1179, 0
  %v1425 = vsel %vm1393, %v1180, 0
  %v1426 = vsel %vm1394, %v1181, 0
  %v1427 = vsel %vm1395, %v1182, 0
  %v1428 = vsel %vm1396, %v1183, 0
  %v1429 = vsel %vm1397, %v1184, 0
  %v1430 = vsel %vm1398, %v1185, 0
  %v1431 = vsel %vm1399, %v1186, 0
  %v1432 = vsel %vm1400, %v1187, 0
  %v1433 = vsel %vm1401, %v1188, 0
  %v1434 = vsel %vm1402, %v1189, 0
  %v1435 = vsel %vm1403, %v1190, 0
  %v1436 = vsel %vm1404, %v1191, 0
  %v1437 = vsel %vm1405, %v1192, 0
  %1438 = vrot.lane.b32.xlu0 %v564, 31
  %v1439 = vpop.permute.xlu0 %1438
  %1440 = vrot.lane.b32.xlu0 %v565, 31
  %v1441 = vpop.permute.xlu0 %1440
  %1442 = vrot.lane.b32.xlu0 %v566, 31
  %v1443 = vpop.permute.xlu0 %1442
  %1444 = vrot.lane.b32.xlu0 %v567, 31
  %v1445 = vpop.permute.xlu0 %1444
  %1446 = vrot.lane.b32.xlu0 %v568, 31
  %v1447 = vpop.permute.xlu0 %1446
  %1448 = vrot.lane.b32.xlu0 %v569, 31
  %v1449 = vpop.permute.xlu0 %1448
  %1450 = vrot.lane.b32.xlu0 %v570, 31
  %v1451 = vpop.permute.xlu0 %1450
  %1452 = vrot.lane.b32.xlu0 %v571, 31
  %v1453 = vpop.permute.xlu0 %1452
  %1454 = vrot.lane.b32.xlu0 %v572, 31
  %v1455 = vpop.permute.xlu0 %1454
  %1456 = vrot.lane.b32.xlu0 %v573, 31
  %v1457 = vpop.permute.xlu0 %1456
  %1458 = vrot.lane.b32.xlu0 %v574, 31
  %v1459 = vpop.permute.xlu0 %1458
  %1460 = vrot.lane.b32.xlu0 %v575, 31
  %v1461 = vpop.permute.xlu0 %1460
  %1462 = vrot.lane.b32.xlu0 %v576, 31
  %v1463 = vpop.permute.xlu0 %1462
  %1464 = vrot.lane.b32.xlu0 %v577, 31
  %v1465 = vpop.permute.xlu0 %1464
  %1466 = vrot.lane.b32.xlu0 %v578, 31
  %v1467 = vpop.permute.xlu0 %1466
  %1468 = vrot.lane.b32.xlu0 %v579, 31
  %v1469 = vpop.permute.xlu0 %1468
  %1470 = vrot.lane.b32.xlu0 %v580, 31
  %v1471 = vpop.permute.xlu0 %1470
  %1472 = vrot.lane.b32.xlu0 %v581, 31
  %v1473 = vpop.permute.xlu0 %1472
  %1474 = vrot.lane.b32.xlu0 %v582, 31
  %v1475 = vpop.permute.xlu0 %1474
  %1476 = vrot.lane.b32.xlu0 %v583, 31
  %v1477 = vpop.permute.xlu0 %1476
  %1478 = vrot.lane.b32.xlu0 %v584, 31
  %v1479 = vpop.permute.xlu0 %1478
  %1480 = vrot.lane.b32.xlu0 %v585, 31
  %v1481 = vpop.permute.xlu0 %1480
  %1482 = vrot.lane.b32.xlu0 %v586, 31
  %v1483 = vpop.permute.xlu0 %1482
  %1484 = vrot.lane.b32.xlu0 %v587, 31
  %v1485 = vpop.permute.xlu0 %1484
  %1486 = vrot.lane.b32.xlu0 %v588, 31
  %v1487 = vpop.permute.xlu0 %1486
  %1488 = vrot.lane.b32.xlu0 %v589, 31
  %v1489 = vpop.permute.xlu0 %1488
  %1490 = vrot.lane.b32.xlu0 %v590, 31
  %v1491 = vpop.permute.xlu0 %1490
  %1492 = vrot.lane.b32.xlu0 %v591, 31
  %v1493 = vpop.permute.xlu0 %1492
  %1494 = vrot.lane.b32.xlu0 %v592, 31
  %v1495 = vpop.permute.xlu0 %1494
  %1496 = vrot.lane.b32.xlu0 %v593, 31
  %v1497 = vpop.permute.xlu0 %1496
  %1498 = vrot.lane.b32.xlu0 %v594, 31
  %v1499 = vpop.permute.xlu0 %1498
  %1500 = vrot.lane.b32.xlu0 %v595, 31
  %v1501 = vpop.permute.xlu0 %1500
  %vm1502 = vcmask 252928
  %v1503 = vsel %vm1502, %v1439, %v1441
  %v1504 = vsel %vm1502, %v1441, %v1443
  %v1505 = vsel %vm1502, %v1443, %v1445
  %v1506 = vsel %vm1502, %v1445, %v1447
  %v1507 = vsel %vm1502, %v1447, %v1449
  %v1508 = vsel %vm1502, %v1449, %v1451
  %v1509 = vsel %vm1502, %v1451, %v1453
  %v1510 = vsel %vm1502, %v1453, %v1455
  %v1511 = vsel %vm1502, %v1455, %v1457
  %v1512 = vsel %vm1502, %v1457, %v1459
  %v1513 = vsel %vm1502, %v1459, %v1461
  %v1514 = vsel %vm1502, %v1461, %v1463
  %v1515 = vsel %vm1502, %v1463, %v1465
  %v1516 = vsel %vm1502, %v1465, %v1467
  %v1517 = vsel %vm1502, %v1467, %v1469
  %v1518 = vsel %vm1502, %v1471, %v1473
  %v1519 = vsel %vm1502, %v1473, %v1475
  %v1520 = vsel %vm1502, %v1475, %v1477
  %v1521 = vsel %vm1502, %v1477, %v1479
  %v1522 = vsel %vm1502, %v1479, %v1481
  %v1523 = vsel %vm1502, %v1481, %v1483
  %v1524 = vsel %vm1502, %v1483, %v1485
  %v1525 = vsel %vm1502, %v1485, %v1487
  %v1526 = vsel %vm1502, %v1487, %v1489
  %v1527 = vsel %vm1502, %v1489, %v1491
  %v1528 = vsel %vm1502, %v1491, %v1493
  %v1529 = vsel %vm1502, %v1493, %v1495
  %v1530 = vsel %vm1502, %v1495, %v1497
  %v1531 = vsel %vm1502, %v1497, %v1499
  %v1532 = vsel %vm1502, %v1499, %v1501
  %vm1563 = vcmask 252928
  %v1565 = vsel %vm1563, 0, %v1439
  %v1568 = vsel %vm1563, 0, %v1471
  %v1570 = vadd.s32 %v613, 1
  %v1571 = vadd.s32 %v614, 1
  %v1572 = vadd.s32 %v615, 1
  %v1573 = vadd.s32 %v616, 1
  %v1574 = vadd.s32 %v617, 1
  %v1575 = vadd.s32 %v618, 1
  %v1576 = vadd.s32 %v619, 1
  %v1577 = vadd.s32 %v620, 1
  %v1578 = vadd.s32 %v621, 1
  %v1579 = vadd.s32 %v622, 1
  %v1580 = vadd.s32 %v623, 1
  %v1581 = vadd.s32 %v624, 1
  %v1582 = vadd.s32 %v625, 1
  %v1583 = vadd.s32 %v626, 1
  %v1584 = vadd.s32 %v627, 1
  %v1585 = vadd.s32 %v628, 1
  %vm1586 = vcmp.ge.s32.totalorder %v1570, 0
  %vm1587 = vcmp.ge.s32.totalorder %v1571, 0
  %vm1588 = vcmp.ge.s32.totalorder %v1572, 0
  %vm1589 = vcmp.ge.s32.totalorder %v1573, 0
  %vm1590 = vcmp.ge.s32.totalorder %v1574, 0
  %vm1591 = vcmp.ge.s32.totalorder %v1575, 0
  %vm1592 = vcmp.ge.s32.totalorder %v1576, 0
  %vm1593 = vcmp.ge.s32.totalorder %v1577, 0
  %vm1594 = vcmp.ge.s32.totalorder %v1578, 0
  %vm1595 = vcmp.ge.s32.totalorder %v1579, 0
  %vm1596 = vcmp.ge.s32.totalorder %v1580, 0
  %vm1597 = vcmp.ge.s32.totalorder %v1581, 0
  %vm1598 = vcmp.ge.s32.totalorder %v1582, 0
  %vm1599 = vcmp.ge.s32.totalorder %v1583, 0
  %vm1600 = vcmp.ge.s32.totalorder %v1584, 0
  %vm1601 = vcmp.ge.s32.totalorder %v1585, 0
  %vm1602 = vcmp.lt.s32.totalorder %v1570, 32
  %vm1603 = vcmp.lt.s32.totalorder %v1571, 32
  %vm1604 = vcmp.lt.s32.totalorder %v1572, 32
  %vm1605 = vcmp.lt.s32.totalorder %v1573, 32
  %vm1606 = vcmp.lt.s32.totalorder %v1574, 32
  %vm1607 = vcmp.lt.s32.totalorder %v1575, 32
  %vm1608 = vcmp.lt.s32.totalorder %v1576, 32
  %vm1609 = vcmp.lt.s32.totalorder %v1577, 32
  %vm1610 = vcmp.lt.s32.totalorder %v1578, 32
  %vm1611 = vcmp.lt.s32.totalorder %v1579, 32
  %vm1612 = vcmp.lt.s32.totalorder %v1580, 32
  %vm1613 = vcmp.lt.s32.totalorder %v1581, 32
  %vm1614 = vcmp.lt.s32.totalorder %v1582, 32
  %vm1615 = vcmp.lt.s32.totalorder %v1583, 32
  %vm1616 = vcmp.lt.s32.totalorder %v1584, 32
  %vm1617 = vcmp.lt.s32.totalorder %v1585, 32
  %vm1618 = vmand %vm1586, %vm1602
  %vm1619 = vmand %vm1587, %vm1603
  %vm1620 = vmand %vm1588, %vm1604
  %vm1621 = vmand %vm1589, %vm1605
  %vm1622 = vmand %vm1590, %vm1606
  %vm1623 = vmand %vm1591, %vm1607
  %vm1624 = vmand %vm1592, %vm1608
  %vm1625 = vmand %vm1593, %vm1609
  %vm1626 = vmand %vm1594, %vm1610
  %vm1627 = vmand %vm1595, %vm1611
  %vm1628 = vmand %vm1596, %vm1612
  %vm1629 = vmand %vm1597, %vm1613
  %vm1630 = vmand %vm1598, %vm1614
  %vm1631 = vmand %vm1599, %vm1615
  %vm1632 = vmand %vm1600, %vm1616
  %vm1633 = vmand %vm1601, %vm1617
  %vm1634 = vmand %vm1618, %vm906
  %vm1635 = vmand %vm1619, %vm907
  %vm1636 = vmand %vm1620, %vm908
  %vm1637 = vmand %vm1621, %vm909
  %vm1638 = vmand %vm1622, %vm910
  %vm1639 = vmand %vm1623, %vm911
  %vm1640 = vmand %vm1624, %vm912
  %vm1641 = vmand %vm1625, %vm913
  %vm1642 = vmand %vm1626, %vm914
  %vm1643 = vmand %vm1627, %vm915
  %vm1644 = vmand %vm1628, %vm916
  %vm1645 = vmand %vm1629, %vm917
  %vm1646 = vmand %vm1630, %vm918
  %vm1647 = vmand %vm1631, %vm919
  %vm1648 = vmand %vm1632, %vm920
  %vm1649 = vmand %vm1633, %vm921
  %vm1650 = vmand %vm1634, %vm938
  %vm1651 = vmand %vm1635, %vm939
  %vm1652 = vmand %vm1636, %vm940
  %vm1653 = vmand %vm1637, %vm941
  %vm1654 = vmand %vm1638, %vm942
  %vm1655 = vmand %vm1639, %vm943
  %vm1656 = vmand %vm1640, %vm944
  %vm1657 = vmand %vm1641, %vm945
  %vm1658 = vmand %vm1642, %vm946
  %vm1659 = vmand %vm1643, %vm947
  %vm1660 = vmand %vm1644, %vm948
  %vm1661 = vmand %vm1645, %vm949
  %vm1662 = vmand %vm1646, %vm950
  %vm1663 = vmand %vm1647, %vm951
  %vm1664 = vmand %vm1648, %vm952
  %vm1665 = vmand %vm1649, %vm953
  %vm1666 = vmpackc.low %vm1651, %vm1650
  %vm1667 = vmpackc.low %vm1653, %vm1652
  %vm1668 = vmpackc.low %vm1655, %vm1654
  %vm1669 = vmpackc.low %vm1657, %vm1656
  %vm1670 = vmpackc.low %vm1659, %vm1658
  %vm1671 = vmpackc.low %vm1661, %vm1660
  %vm1672 = vmpackc.low %vm1663, %vm1662
  %vm1673 = vmpackc.low %vm1665, %vm1664
  %v1674 = vsel %vm1666, 65537, 0
  %v1675 = vsel %vm1667, 65537, 0
  %v1676 = vsel %vm1668, 65537, 0
  %v1677 = vsel %vm1669, 65537, 0
  %v1678 = vsel %vm1670, 65537, 0
  %v1679 = vsel %vm1671, 65537, 0
  %v1680 = vsel %vm1672, 65537, 0
  %v1681 = vsel %vm1673, 65537, 0
  %v1682 = vlaneseq
  %v1683 = vshrl.u32 %v1682, 7
  %v1684 = vsub.s32 0, %v1683
  %v1685 = vrot.slane %v1674, %v1684
  %v1686 = vlaneseq
  %v1687 = vshrl.u32 %v1686, 7
  %v1688 = vsub.s32 4, %v1687
  %v1689 = vrot.slane %v1674, %v1688
  %v1690 = vlaneseq
  %v1691 = vshrl.u32 %v1690, 7
  %v1692 = vsub.s32 0, %v1691
  %v1693 = vrot.slane %v1675, %v1692
  %v1694 = vlaneseq
  %v1695 = vshrl.u32 %v1694, 7
  %v1696 = vsub.s32 4, %v1695
  %v1697 = vrot.slane %v1675, %v1696
  %v1698 = vlaneseq
  %v1699 = vshrl.u32 %v1698, 7
  %v1700 = vsub.s32 0, %v1699
  %v1701 = vrot.slane %v1676, %v1700
  %v1702 = vlaneseq
  %v1703 = vshrl.u32 %v1702, 7
  %v1704 = vsub.s32 4, %v1703
  %v1705 = vrot.slane %v1676, %v1704
  %v1706 = vlaneseq
  %v1707 = vshrl.u32 %v1706, 7
  %v1708 = vsub.s32 0, %v1707
  %v1709 = vrot.slane %v1677, %v1708
  %v1710 = vlaneseq
  %v1711 = vshrl.u32 %v1710, 7
  %v1712 = vsub.s32 4, %v1711
  %v1713 = vrot.slane %v1677, %v1712
  %v1714 = vlaneseq
  %v1715 = vshrl.u32 %v1714, 7
  %v1716 = vsub.s32 0, %v1715
  %v1717 = vrot.slane %v1678, %v1716
  %v1718 = vlaneseq
  %v1719 = vshrl.u32 %v1718, 7
  %v1720 = vsub.s32 4, %v1719
  %v1721 = vrot.slane %v1678, %v1720
  %v1722 = vlaneseq
  %v1723 = vshrl.u32 %v1722, 7
  %v1724 = vsub.s32 0, %v1723
  %v1725 = vrot.slane %v1679, %v1724
  %v1726 = vlaneseq
  %v1727 = vshrl.u32 %v1726, 7
  %v1728 = vsub.s32 4, %v1727
  %v1729 = vrot.slane %v1679, %v1728
  %v1730 = vlaneseq
  %v1731 = vshrl.u32 %v1730, 7
  %v1732 = vsub.s32 0, %v1731
  %v1733 = vrot.slane %v1680, %v1732
  %v1734 = vlaneseq
  %v1735 = vshrl.u32 %v1734, 7
  %v1736 = vsub.s32 4, %v1735
  %v1737 = vrot.slane %v1680, %v1736
  %v1738 = vlaneseq
  %v1739 = vshrl.u32 %v1738, 7
  %v1740 = vsub.s32 0, %v1739
  %v1741 = vrot.slane %v1681, %v1740
  %v1742 = vlaneseq
  %v1743 = vshrl.u32 %v1742, 7
  %v1744 = vsub.s32 4, %v1743
  %v1745 = vrot.slane %v1681, %v1744
  %vm1746 = vcmp.ne.s16.totalorder %v1685, 0
  %vm1747 = vcmp.ne.s16.totalorder %v1689, 0
  %vm1748 = vcmp.ne.s16.totalorder %v1693, 0
  %vm1749 = vcmp.ne.s16.totalorder %v1697, 0
  %vm1750 = vcmp.ne.s16.totalorder %v1701, 0
  %vm1751 = vcmp.ne.s16.totalorder %v1705, 0
  %vm1752 = vcmp.ne.s16.totalorder %v1709, 0
  %vm1753 = vcmp.ne.s16.totalorder %v1713, 0
  %vm1754 = vcmp.ne.s16.totalorder %v1717, 0
  %vm1755 = vcmp.ne.s16.totalorder %v1721, 0
  %vm1756 = vcmp.ne.s16.totalorder %v1725, 0
  %vm1757 = vcmp.ne.s16.totalorder %v1729, 0
  %vm1758 = vcmp.ne.s16.totalorder %v1733, 0
  %vm1759 = vcmp.ne.s16.totalorder %v1737, 0
  %vm1760 = vcmp.ne.s16.totalorder %v1741, 0
  %vm1761 = vcmp.ne.s16.totalorder %v1745, 0
  %v1762 = vsel %vm1746, %v1565, 0
  %v1763 = vsel %vm1747, %v1503, 0
  %v1764 = vsel %vm1748, %v1504, 0
  %v1765 = vsel %vm1749, %v1505, 0
  %v1766 = vsel %vm1750, %v1506, 0
  %v1767 = vsel %vm1751, %v1507, 0
  %v1768 = vsel %vm1752, %v1508, 0
  %v1769 = vsel %vm1753, %v1509, 0
  %v1770 = vsel %vm1754, %v1510, 0
  %v1771 = vsel %vm1755, %v1511, 0
  %v1772 = vsel %vm1756, %v1512, 0
  %v1773 = vsel %vm1757, %v1513, 0
  %v1774 = vsel %vm1758, %v1514, 0
  %v1775 = vsel %vm1759, %v1515, 0
  %v1776 = vsel %vm1760, %v1516, 0
  %v1777 = vsel %vm1761, %v1517, 0
  %v1778 = vsel %vm1746, %v1568, 0
  %v1779 = vsel %vm1747, %v1518, 0
  %v1780 = vsel %vm1748, %v1519, 0
  %v1781 = vsel %vm1749, %v1520, 0
  %v1782 = vsel %vm1750, %v1521, 0
  %v1783 = vsel %vm1751, %v1522, 0
  %v1784 = vsel %vm1752, %v1523, 0
  %v1785 = vsel %vm1753, %v1524, 0
  %v1786 = vsel %vm1754, %v1525, 0
  %v1787 = vsel %vm1755, %v1526, 0
  %v1788 = vsel %vm1756, %v1527, 0
  %v1789 = vsel %vm1757, %v1528, 0
  %v1790 = vsel %vm1758, %v1529, 0
  %v1791 = vsel %vm1759, %v1530, 0
  %v1792 = vsel %vm1760, %v1531, 0
  %v1793 = vsel %vm1761, %v1532, 0
  %1794 = vrot.lane.b32.xlu0 %v564, 1
  %v1795 = vpop.permute.xlu0 %1794
  %1796 = vrot.lane.b32.xlu0 %v565, 1
  %v1797 = vpop.permute.xlu0 %1796
  %1798 = vrot.lane.b32.xlu0 %v566, 1
  %v1799 = vpop.permute.xlu0 %1798
  %1800 = vrot.lane.b32.xlu0 %v567, 1
  %v1801 = vpop.permute.xlu0 %1800
  %1802 = vrot.lane.b32.xlu0 %v568, 1
  %v1803 = vpop.permute.xlu0 %1802
  %1804 = vrot.lane.b32.xlu0 %v569, 1
  %v1805 = vpop.permute.xlu0 %1804
  %1806 = vrot.lane.b32.xlu0 %v570, 1
  %v1807 = vpop.permute.xlu0 %1806
  %1808 = vrot.lane.b32.xlu0 %v571, 1
  %v1809 = vpop.permute.xlu0 %1808
  %1810 = vrot.lane.b32.xlu0 %v572, 1
  %v1811 = vpop.permute.xlu0 %1810
  %1812 = vrot.lane.b32.xlu0 %v573, 1
  %v1813 = vpop.permute.xlu0 %1812
  %1814 = vrot.lane.b32.xlu0 %v574, 1
  %v1815 = vpop.permute.xlu0 %1814
  %1816 = vrot.lane.b32.xlu0 %v575, 1
  %v1817 = vpop.permute.xlu0 %1816
  %1818 = vrot.lane.b32.xlu0 %v576, 1
  %v1819 = vpop.permute.xlu0 %1818
  %1820 = vrot.lane.b32.xlu0 %v577, 1
  %v1821 = vpop.permute.xlu0 %1820
  %1822 = vrot.lane.b32.xlu0 %v578, 1
  %v1823 = vpop.permute.xlu0 %1822
  %1824 = vrot.lane.b32.xlu0 %v579, 1
  %v1825 = vpop.permute.xlu0 %1824
  %1826 = vrot.lane.b32.xlu0 %v580, 1
  %v1827 = vpop.permute.xlu0 %1826
  %1828 = vrot.lane.b32.xlu0 %v581, 1
  %v1829 = vpop.permute.xlu0 %1828
  %1830 = vrot.lane.b32.xlu0 %v582, 1
  %v1831 = vpop.permute.xlu0 %1830
  %1832 = vrot.lane.b32.xlu0 %v583, 1
  %v1833 = vpop.permute.xlu0 %1832
  %1834 = vrot.lane.b32.xlu0 %v584, 1
  %v1835 = vpop.permute.xlu0 %1834
  %1836 = vrot.lane.b32.xlu0 %v585, 1
  %v1837 = vpop.permute.xlu0 %1836
  %1838 = vrot.lane.b32.xlu0 %v586, 1
  %v1839 = vpop.permute.xlu0 %1838
  %1840 = vrot.lane.b32.xlu0 %v587, 1
  %v1841 = vpop.permute.xlu0 %1840
  %1842 = vrot.lane.b32.xlu0 %v588, 1
  %v1843 = vpop.permute.xlu0 %1842
  %1844 = vrot.lane.b32.xlu0 %v589, 1
  %v1845 = vpop.permute.xlu0 %1844
  %1846 = vrot.lane.b32.xlu0 %v590, 1
  %v1847 = vpop.permute.xlu0 %1846
  %1848 = vrot.lane.b32.xlu0 %v591, 1
  %v1849 = vpop.permute.xlu0 %1848
  %1850 = vrot.lane.b32.xlu0 %v592, 1
  %v1851 = vpop.permute.xlu0 %1850
  %1852 = vrot.lane.b32.xlu0 %v593, 1
  %v1853 = vpop.permute.xlu0 %1852
  %1854 = vrot.lane.b32.xlu0 %v594, 1
  %v1855 = vpop.permute.xlu0 %1854
  %1856 = vrot.lane.b32.xlu0 %v595, 1
  %v1857 = vpop.permute.xlu0 %1856
  %vm1858 = vcmask 7168
  %v1859 = vsel %vm1858, %v1795, %v1797
  %v1860 = vsel %vm1858, %v1797, %v1799
  %v1861 = vsel %vm1858, %v1799, %v1801
  %v1862 = vsel %vm1858, %v1801, %v1803
  %v1863 = vsel %vm1858, %v1803, %v1805
  %v1864 = vsel %vm1858, %v1805, %v1807
  %v1865 = vsel %vm1858, %v1807, %v1809
  %v1866 = vsel %vm1858, %v1809, %v1811
  %v1867 = vsel %vm1858, %v1811, %v1813
  %v1868 = vsel %vm1858, %v1813, %v1815
  %v1869 = vsel %vm1858, %v1815, %v1817
  %v1870 = vsel %vm1858, %v1817, %v1819
  %v1871 = vsel %vm1858, %v1819, %v1821
  %v1872 = vsel %vm1858, %v1821, %v1823
  %v1873 = vsel %vm1858, %v1823, %v1825
  %v1874 = vsel %vm1858, %v1827, %v1829
  %v1875 = vsel %vm1858, %v1829, %v1831
  %v1876 = vsel %vm1858, %v1831, %v1833
  %v1877 = vsel %vm1858, %v1833, %v1835
  %v1878 = vsel %vm1858, %v1835, %v1837
  %v1879 = vsel %vm1858, %v1837, %v1839
  %v1880 = vsel %vm1858, %v1839, %v1841
  %v1881 = vsel %vm1858, %v1841, %v1843
  %v1882 = vsel %vm1858, %v1843, %v1845
  %v1883 = vsel %vm1858, %v1845, %v1847
  %v1884 = vsel %vm1858, %v1847, %v1849
  %v1885 = vsel %vm1858, %v1849, %v1851
  %v1886 = vsel %vm1858, %v1851, %v1853
  %v1887 = vsel %vm1858, %v1853, %v1855
  %v1888 = vsel %vm1858, %v1855, %v1857
  %vm1919 = vcmask 7168
  %v1921 = vsel %vm1919, 0, %v1795
  %v1924 = vsel %vm1919, 0, %v1827
  %vm1926 = vcmp.ge.s32.totalorder %v645, 0
  %vm1927 = vcmp.ge.s32.totalorder %v646, 0
  %vm1928 = vcmp.ge.s32.totalorder %v647, 0
  %vm1929 = vcmp.ge.s32.totalorder %v648, 0
  %vm1930 = vcmp.ge.s32.totalorder %v649, 0
  %vm1931 = vcmp.ge.s32.totalorder %v650, 0
  %vm1932 = vcmp.ge.s32.totalorder %v651, 0
  %vm1933 = vcmp.ge.s32.totalorder %v652, 0
  %vm1934 = vcmp.ge.s32.totalorder %v653, 0
  %vm1935 = vcmp.ge.s32.totalorder %v654, 0
  %vm1936 = vcmp.ge.s32.totalorder %v655, 0
  %vm1937 = vcmp.ge.s32.totalorder %v656, 0
  %vm1938 = vcmp.ge.s32.totalorder %v657, 0
  %vm1939 = vcmp.ge.s32.totalorder %v658, 0
  %vm1940 = vcmp.ge.s32.totalorder %v659, 0
  %vm1941 = vcmp.ge.s32.totalorder %v660, 0
  %vm1942 = vmand %vm874, %vm1926
  %vm1943 = vmand %vm875, %vm1927
  %vm1944 = vmand %vm876, %vm1928
  %vm1945 = vmand %vm877, %vm1929
  %vm1946 = vmand %vm878, %vm1930
  %vm1947 = vmand %vm879, %vm1931
  %vm1948 = vmand %vm880, %vm1932
  %vm1949 = vmand %vm881, %vm1933
  %vm1950 = vmand %vm882, %vm1934
  %vm1951 = vmand %vm883, %vm1935
  %vm1952 = vmand %vm884, %vm1936
  %vm1953 = vmand %vm885, %vm1937
  %vm1954 = vmand %vm886, %vm1938
  %vm1955 = vmand %vm887, %vm1939
  %vm1956 = vmand %vm888, %vm1940
  %vm1957 = vmand %vm889, %vm1941
  %vm1958 = vcmp.lt.s32.totalorder %v645, 32
  %vm1959 = vcmp.lt.s32.totalorder %v646, 32
  %vm1960 = vcmp.lt.s32.totalorder %v647, 32
  %vm1961 = vcmp.lt.s32.totalorder %v648, 32
  %vm1962 = vcmp.lt.s32.totalorder %v649, 32
  %vm1963 = vcmp.lt.s32.totalorder %v650, 32
  %vm1964 = vcmp.lt.s32.totalorder %v651, 32
  %vm1965 = vcmp.lt.s32.totalorder %v652, 32
  %vm1966 = vcmp.lt.s32.totalorder %v653, 32
  %vm1967 = vcmp.lt.s32.totalorder %v654, 32
  %vm1968 = vcmp.lt.s32.totalorder %v655, 32
  %vm1969 = vcmp.lt.s32.totalorder %v656, 32
  %vm1970 = vcmp.lt.s32.totalorder %v657, 32
  %vm1971 = vcmp.lt.s32.totalorder %v658, 32
  %vm1972 = vcmp.lt.s32.totalorder %v659, 32
  %vm1973 = vcmp.lt.s32.totalorder %v660, 32
  %vm1974 = vmand %vm1942, %vm1958
  %vm1975 = vmand %vm1943, %vm1959
  %vm1976 = vmand %vm1944, %vm1960
  %vm1977 = vmand %vm1945, %vm1961
  %vm1978 = vmand %vm1946, %vm1962
  %vm1979 = vmand %vm1947, %vm1963
  %vm1980 = vmand %vm1948, %vm1964
  %vm1981 = vmand %vm1949, %vm1965
  %vm1982 = vmand %vm1950, %vm1966
  %vm1983 = vmand %vm1951, %vm1967
  %vm1984 = vmand %vm1952, %vm1968
  %vm1985 = vmand %vm1953, %vm1969
  %vm1986 = vmand %vm1954, %vm1970
  %vm1987 = vmand %vm1955, %vm1971
  %vm1988 = vmand %vm1956, %vm1972
  %vm1989 = vmand %vm1957, %vm1973
  %vm1990 = vmpackc.low %vm1975, %vm1974
  %vm1991 = vmpackc.low %vm1977, %vm1976
  %vm1992 = vmpackc.low %vm1979, %vm1978
  %vm1993 = vmpackc.low %vm1981, %vm1980
  %vm1994 = vmpackc.low %vm1983, %vm1982
  %vm1995 = vmpackc.low %vm1985, %vm1984
  %vm1996 = vmpackc.low %vm1987, %vm1986
  %vm1997 = vmpackc.low %vm1989, %vm1988
  %v1998 = vsel %vm1990, 65537, 0
  %v1999 = vsel %vm1991, 65537, 0
  %v2000 = vsel %vm1992, 65537, 0
  %v2001 = vsel %vm1993, 65537, 0
  %v2002 = vsel %vm1994, 65537, 0
  %v2003 = vsel %vm1995, 65537, 0
  %v2004 = vsel %vm1996, 65537, 0
  %v2005 = vsel %vm1997, 65537, 0
  %v2006 = vlaneseq
  %v2007 = vshrl.u32 %v2006, 7
  %v2008 = vsub.s32 0, %v2007
  %v2009 = vrot.slane %v1998, %v2008
  %v2010 = vlaneseq
  %v2011 = vshrl.u32 %v2010, 7
  %v2012 = vsub.s32 4, %v2011
  %v2013 = vrot.slane %v1998, %v2012
  %v2014 = vlaneseq
  %v2015 = vshrl.u32 %v2014, 7
  %v2016 = vsub.s32 0, %v2015
  %v2017 = vrot.slane %v1999, %v2016
  %v2018 = vlaneseq
  %v2019 = vshrl.u32 %v2018, 7
  %v2020 = vsub.s32 4, %v2019
  %v2021 = vrot.slane %v1999, %v2020
  %v2022 = vlaneseq
  %v2023 = vshrl.u32 %v2022, 7
  %v2024 = vsub.s32 0, %v2023
  %v2025 = vrot.slane %v2000, %v2024
  %v2026 = vlaneseq
  %v2027 = vshrl.u32 %v2026, 7
  %v2028 = vsub.s32 4, %v2027
  %v2029 = vrot.slane %v2000, %v2028
  %v2030 = vlaneseq
  %v2031 = vshrl.u32 %v2030, 7
  %v2032 = vsub.s32 0, %v2031
  %v2033 = vrot.slane %v2001, %v2032
  %v2034 = vlaneseq
  %v2035 = vshrl.u32 %v2034, 7
  %v2036 = vsub.s32 4, %v2035
  %v2037 = vrot.slane %v2001, %v2036
  %v2038 = vlaneseq
  %v2039 = vshrl.u32 %v2038, 7
  %v2040 = vsub.s32 0, %v2039
  %v2041 = vrot.slane %v2002, %v2040
  %v2042 = vlaneseq
  %v2043 = vshrl.u32 %v2042, 7
  %v2044 = vsub.s32 4, %v2043
  %v2045 = vrot.slane %v2002, %v2044
  %v2046 = vlaneseq
  %v2047 = vshrl.u32 %v2046, 7
  %v2048 = vsub.s32 0, %v2047
  %v2049 = vrot.slane %v2003, %v2048
  %v2050 = vlaneseq
  %v2051 = vshrl.u32 %v2050, 7
  %v2052 = vsub.s32 4, %v2051
  %v2053 = vrot.slane %v2003, %v2052
  %v2054 = vlaneseq
  %v2055 = vshrl.u32 %v2054, 7
  %v2056 = vsub.s32 0, %v2055
  %v2057 = vrot.slane %v2004, %v2056
  %v2058 = vlaneseq
  %v2059 = vshrl.u32 %v2058, 7
  %v2060 = vsub.s32 4, %v2059
  %v2061 = vrot.slane %v2004, %v2060
  %v2062 = vlaneseq
  %v2063 = vshrl.u32 %v2062, 7
  %v2064 = vsub.s32 0, %v2063
  %v2065 = vrot.slane %v2005, %v2064
  %v2066 = vlaneseq
  %v2067 = vshrl.u32 %v2066, 7
  %v2068 = vsub.s32 4, %v2067
  %v2069 = vrot.slane %v2005, %v2068
  %vm2070 = vcmp.ne.s16.totalorder %v2009, 0
  %vm2071 = vcmp.ne.s16.totalorder %v2013, 0
  %vm2072 = vcmp.ne.s16.totalorder %v2017, 0
  %vm2073 = vcmp.ne.s16.totalorder %v2021, 0
  %vm2074 = vcmp.ne.s16.totalorder %v2025, 0
  %vm2075 = vcmp.ne.s16.totalorder %v2029, 0
  %vm2076 = vcmp.ne.s16.totalorder %v2033, 0
  %vm2077 = vcmp.ne.s16.totalorder %v2037, 0
  %vm2078 = vcmp.ne.s16.totalorder %v2041, 0
  %vm2079 = vcmp.ne.s16.totalorder %v2045, 0
  %vm2080 = vcmp.ne.s16.totalorder %v2049, 0
  %vm2081 = vcmp.ne.s16.totalorder %v2053, 0
  %vm2082 = vcmp.ne.s16.totalorder %v2057, 0
  %vm2083 = vcmp.ne.s16.totalorder %v2061, 0
  %vm2084 = vcmp.ne.s16.totalorder %v2065, 0
  %vm2085 = vcmp.ne.s16.totalorder %v2069, 0
  %v2086 = vsel %vm2070, %v1921, 0
  %v2087 = vsel %vm2071, %v1859, 0
  %v2088 = vsel %vm2072, %v1860, 0
  %v2089 = vsel %vm2073, %v1861, 0
  %v2090 = vsel %vm2074, %v1862, 0
  %v2091 = vsel %vm2075, %v1863, 0
  %v2092 = vsel %vm2076, %v1864, 0
  %v2093 = vsel %vm2077, %v1865, 0
  %v2094 = vsel %vm2078, %v1866, 0
  %v2095 = vsel %vm2079, %v1867, 0
  %v2096 = vsel %vm2080, %v1868, 0
  %v2097 = vsel %vm2081, %v1869, 0
  %v2098 = vsel %vm2082, %v1870, 0
  %v2099 = vsel %vm2083, %v1871, 0
  %v2100 = vsel %vm2084, %v1872, 0
  %v2101 = vsel %vm2085, %v1873, 0
  %v2102 = vsel %vm2070, %v1924, 0
  %v2103 = vsel %vm2071, %v1874, 0
  %v2104 = vsel %vm2072, %v1875, 0
  %v2105 = vsel %vm2073, %v1876, 0
  %v2106 = vsel %vm2074, %v1877, 0
  %v2107 = vsel %vm2075, %v1878, 0
  %v2108 = vsel %vm2076, %v1879, 0
  %v2109 = vsel %vm2077, %v1880, 0
  %v2110 = vsel %vm2078, %v1881, 0
  %v2111 = vsel %vm2079, %v1882, 0
  %v2112 = vsel %vm2080, %v1883, 0
  %v2113 = vsel %vm2081, %v1884, 0
  %v2114 = vsel %vm2082, %v1885, 0
  %v2115 = vsel %vm2083, %v1886, 0
  %v2116 = vsel %vm2084, %v1887, 0
  %v2117 = vsel %vm2085, %v1888, 0
  %vm2118 = vmand %vm1262, %vm1926
  %vm2119 = vmand %vm1263, %vm1927
  %vm2120 = vmand %vm1264, %vm1928
  %vm2121 = vmand %vm1265, %vm1929
  %vm2122 = vmand %vm1266, %vm1930
  %vm2123 = vmand %vm1267, %vm1931
  %vm2124 = vmand %vm1268, %vm1932
  %vm2125 = vmand %vm1269, %vm1933
  %vm2126 = vmand %vm1270, %vm1934
  %vm2127 = vmand %vm1271, %vm1935
  %vm2128 = vmand %vm1272, %vm1936
  %vm2129 = vmand %vm1273, %vm1937
  %vm2130 = vmand %vm1274, %vm1938
  %vm2131 = vmand %vm1275, %vm1939
  %vm2132 = vmand %vm1276, %vm1940
  %vm2133 = vmand %vm1277, %vm1941
  %vm2134 = vmand %vm2118, %vm1958
  %vm2135 = vmand %vm2119, %vm1959
  %vm2136 = vmand %vm2120, %vm1960
  %vm2137 = vmand %vm2121, %vm1961
  %vm2138 = vmand %vm2122, %vm1962
  %vm2139 = vmand %vm2123, %vm1963
  %vm2140 = vmand %vm2124, %vm1964
  %vm2141 = vmand %vm2125, %vm1965
  %vm2142 = vmand %vm2126, %vm1966
  %vm2143 = vmand %vm2127, %vm1967
  %vm2144 = vmand %vm2128, %vm1968
  %vm2145 = vmand %vm2129, %vm1969
  %vm2146 = vmand %vm2130, %vm1970
  %vm2147 = vmand %vm2131, %vm1971
  %vm2148 = vmand %vm2132, %vm1972
  %vm2149 = vmand %vm2133, %vm1973
  %vm2150 = vmpackc.low %vm2135, %vm2134
  %vm2151 = vmpackc.low %vm2137, %vm2136
  %vm2152 = vmpackc.low %vm2139, %vm2138
  %vm2153 = vmpackc.low %vm2141, %vm2140
  %vm2154 = vmpackc.low %vm2143, %vm2142
  %vm2155 = vmpackc.low %vm2145, %vm2144
  %vm2156 = vmpackc.low %vm2147, %vm2146
  %vm2157 = vmpackc.low %vm2149, %vm2148
  %v2158 = vsel %vm2150, 65537, 0
  %v2159 = vsel %vm2151, 65537, 0
  %v2160 = vsel %vm2152, 65537, 0
  %v2161 = vsel %vm2153, 65537, 0
  %v2162 = vsel %vm2154, 65537, 0
  %v2163 = vsel %vm2155, 65537, 0
  %v2164 = vsel %vm2156, 65537, 0
  %v2165 = vsel %vm2157, 65537, 0
  %v2166 = vlaneseq
  %v2167 = vshrl.u32 %v2166, 7
  %v2168 = vsub.s32 0, %v2167
  %v2169 = vrot.slane %v2158, %v2168
  %v2170 = vlaneseq
  %v2171 = vshrl.u32 %v2170, 7
  %v2172 = vsub.s32 4, %v2171
  %v2173 = vrot.slane %v2158, %v2172
  %v2174 = vlaneseq
  %v2175 = vshrl.u32 %v2174, 7
  %v2176 = vsub.s32 0, %v2175
  %v2177 = vrot.slane %v2159, %v2176
  %v2178 = vlaneseq
  %v2179 = vshrl.u32 %v2178, 7
  %v2180 = vsub.s32 4, %v2179
  %v2181 = vrot.slane %v2159, %v2180
  %v2182 = vlaneseq
  %v2183 = vshrl.u32 %v2182, 7
  %v2184 = vsub.s32 0, %v2183
  %v2185 = vrot.slane %v2160, %v2184
  %v2186 = vlaneseq
  %v2187 = vshrl.u32 %v2186, 7
  %v2188 = vsub.s32 4, %v2187
  %v2189 = vrot.slane %v2160, %v2188
  %v2190 = vlaneseq
  %v2191 = vshrl.u32 %v2190, 7
  %v2192 = vsub.s32 0, %v2191
  %v2193 = vrot.slane %v2161, %v2192
  %v2194 = vlaneseq
  %v2195 = vshrl.u32 %v2194, 7
  %v2196 = vsub.s32 4, %v2195
  %v2197 = vrot.slane %v2161, %v2196
  %v2198 = vlaneseq
  %v2199 = vshrl.u32 %v2198, 7
  %v2200 = vsub.s32 0, %v2199
  %v2201 = vrot.slane %v2162, %v2200
  %v2202 = vlaneseq
  %v2203 = vshrl.u32 %v2202, 7
  %v2204 = vsub.s32 4, %v2203
  %v2205 = vrot.slane %v2162, %v2204
  %v2206 = vlaneseq
  %v2207 = vshrl.u32 %v2206, 7
  %v2208 = vsub.s32 0, %v2207
  %v2209 = vrot.slane %v2163, %v2208
  %v2210 = vlaneseq
  %v2211 = vshrl.u32 %v2210, 7
  %v2212 = vsub.s32 4, %v2211
  %v2213 = vrot.slane %v2163, %v2212
  %v2214 = vlaneseq
  %v2215 = vshrl.u32 %v2214, 7
  %v2216 = vsub.s32 0, %v2215
  %v2217 = vrot.slane %v2164, %v2216
  %v2218 = vlaneseq
  %v2219 = vshrl.u32 %v2218, 7
  %v2220 = vsub.s32 4, %v2219
  %v2221 = vrot.slane %v2164, %v2220
  %v2222 = vlaneseq
  %v2223 = vshrl.u32 %v2222, 7
  %v2224 = vsub.s32 0, %v2223
  %v2225 = vrot.slane %v2165, %v2224
  %v2226 = vlaneseq
  %v2227 = vshrl.u32 %v2226, 7
  %v2228 = vsub.s32 4, %v2227
  %v2229 = vrot.slane %v2165, %v2228
  %vm2230 = vcmp.ne.s16.totalorder %v2169, 0
  %vm2231 = vcmp.ne.s16.totalorder %v2173, 0
  %vm2232 = vcmp.ne.s16.totalorder %v2177, 0
  %vm2233 = vcmp.ne.s16.totalorder %v2181, 0
  %vm2234 = vcmp.ne.s16.totalorder %v2185, 0
  %vm2235 = vcmp.ne.s16.totalorder %v2189, 0
  %vm2236 = vcmp.ne.s16.totalorder %v2193, 0
  %vm2237 = vcmp.ne.s16.totalorder %v2197, 0
  %vm2238 = vcmp.ne.s16.totalorder %v2201, 0
  %vm2239 = vcmp.ne.s16.totalorder %v2205, 0
  %vm2240 = vcmp.ne.s16.totalorder %v2209, 0
  %vm2241 = vcmp.ne.s16.totalorder %v2213, 0
  %vm2242 = vcmp.ne.s16.totalorder %v2217, 0
  %vm2243 = vcmp.ne.s16.totalorder %v2221, 0
  %vm2244 = vcmp.ne.s16.totalorder %v2225, 0
  %vm2245 = vcmp.ne.s16.totalorder %v2229, 0
  %v2246 = vsel %vm2230, %v564, 0
  %v2247 = vsel %vm2231, %v565, 0
  %v2248 = vsel %vm2232, %v566, 0
  %v2249 = vsel %vm2233, %v567, 0
  %v2250 = vsel %vm2234, %v568, 0
  %v2251 = vsel %vm2235, %v569, 0
  %v2252 = vsel %vm2236, %v570, 0
  %v2253 = vsel %vm2237, %v571, 0
  %v2254 = vsel %vm2238, %v572, 0
  %v2255 = vsel %vm2239, %v573, 0
  %v2256 = vsel %vm2240, %v574, 0
  %v2257 = vsel %vm2241, %v575, 0
  %v2258 = vsel %vm2242, %v576, 0
  %v2259 = vsel %vm2243, %v577, 0
  %v2260 = vsel %vm2244, %v578, 0
  %v2261 = vsel %vm2245, %v579, 0
  %v2262 = vsel %vm2230, %v580, 0
  %v2263 = vsel %vm2231, %v581, 0
  %v2264 = vsel %vm2232, %v582, 0
  %v2265 = vsel %vm2233, %v583, 0
  %v2266 = vsel %vm2234, %v584, 0
  %v2267 = vsel %vm2235, %v585, 0
  %v2268 = vsel %vm2236, %v586, 0
  %v2269 = vsel %vm2237, %v587, 0
  %v2270 = vsel %vm2238, %v588, 0
  %v2271 = vsel %vm2239, %v589, 0
  %v2272 = vsel %vm2240, %v590, 0
  %v2273 = vsel %vm2241, %v591, 0
  %v2274 = vsel %vm2242, %v592, 0
  %v2275 = vsel %vm2243, %v593, 0
  %v2276 = vsel %vm2244, %v594, 0
  %v2277 = vsel %vm2245, %v595, 0
  %2278 = vrot.lane.b32.xlu0 %v564, 127
  %v2279 = vpop.permute.xlu0 %2278
  %2280 = vrot.lane.b32.xlu0 %v565, 127
  %v2281 = vpop.permute.xlu0 %2280
  %2282 = vrot.lane.b32.xlu0 %v566, 127
  %v2283 = vpop.permute.xlu0 %2282
  %2284 = vrot.lane.b32.xlu0 %v567, 127
  %v2285 = vpop.permute.xlu0 %2284
  %2286 = vrot.lane.b32.xlu0 %v568, 127
  %v2287 = vpop.permute.xlu0 %2286
  %2288 = vrot.lane.b32.xlu0 %v569, 127
  %v2289 = vpop.permute.xlu0 %2288
  %2290 = vrot.lane.b32.xlu0 %v570, 127
  %v2291 = vpop.permute.xlu0 %2290
  %2292 = vrot.lane.b32.xlu0 %v571, 127
  %v2293 = vpop.permute.xlu0 %2292
  %2294 = vrot.lane.b32.xlu0 %v572, 127
  %v2295 = vpop.permute.xlu0 %2294
  %2296 = vrot.lane.b32.xlu0 %v573, 127
  %v2297 = vpop.permute.xlu0 %2296
  %2298 = vrot.lane.b32.xlu0 %v574, 127
  %v2299 = vpop.permute.xlu0 %2298
  %2300 = vrot.lane.b32.xlu0 %v575, 127
  %v2301 = vpop.permute.xlu0 %2300
  %2302 = vrot.lane.b32.xlu0 %v576, 127
  %v2303 = vpop.permute.xlu0 %2302
  %2304 = vrot.lane.b32.xlu0 %v577, 127
  %v2305 = vpop.permute.xlu0 %2304
  %2306 = vrot.lane.b32.xlu0 %v578, 127
  %v2307 = vpop.permute.xlu0 %2306
  %2308 = vrot.lane.b32.xlu0 %v579, 127
  %v2309 = vpop.permute.xlu0 %2308
  %2310 = vrot.lane.b32.xlu0 %v580, 127
  %v2311 = vpop.permute.xlu0 %2310
  %2312 = vrot.lane.b32.xlu0 %v581, 127
  %v2313 = vpop.permute.xlu0 %2312
  %2314 = vrot.lane.b32.xlu0 %v582, 127
  %v2315 = vpop.permute.xlu0 %2314
  %2316 = vrot.lane.b32.xlu0 %v583, 127
  %v2317 = vpop.permute.xlu0 %2316
  %2318 = vrot.lane.b32.xlu0 %v584, 127
  %v2319 = vpop.permute.xlu0 %2318
  %2320 = vrot.lane.b32.xlu0 %v585, 127
  %v2321 = vpop.permute.xlu0 %2320
  %2322 = vrot.lane.b32.xlu0 %v586, 127
  %v2323 = vpop.permute.xlu0 %2322
  %2324 = vrot.lane.b32.xlu0 %v587, 127
  %v2325 = vpop.permute.xlu0 %2324
  %2326 = vrot.lane.b32.xlu0 %v588, 127
  %v2327 = vpop.permute.xlu0 %2326
  %2328 = vrot.lane.b32.xlu0 %v589, 127
  %v2329 = vpop.permute.xlu0 %2328
  %2330 = vrot.lane.b32.xlu0 %v590, 127
  %v2331 = vpop.permute.xlu0 %2330
  %2332 = vrot.lane.b32.xlu0 %v591, 127
  %v2333 = vpop.permute.xlu0 %2332
  %2334 = vrot.lane.b32.xlu0 %v592, 127
  %v2335 = vpop.permute.xlu0 %2334
  %2336 = vrot.lane.b32.xlu0 %v593, 127
  %v2337 = vpop.permute.xlu0 %2336
  %2338 = vrot.lane.b32.xlu0 %v594, 127
  %v2339 = vpop.permute.xlu0 %2338
  %2340 = vrot.lane.b32.xlu0 %v595, 127
  %v2341 = vpop.permute.xlu0 %2340
  %vm2342 = vcmask 1039360
  %v2343 = vsel %vm2342, %v2279, %v2281
  %v2344 = vsel %vm2342, %v2281, %v2283
  %v2345 = vsel %vm2342, %v2283, %v2285
  %v2346 = vsel %vm2342, %v2285, %v2287
  %v2347 = vsel %vm2342, %v2287, %v2289
  %v2348 = vsel %vm2342, %v2289, %v2291
  %v2349 = vsel %vm2342, %v2291, %v2293
  %v2350 = vsel %vm2342, %v2293, %v2295
  %v2351 = vsel %vm2342, %v2295, %v2297
  %v2352 = vsel %vm2342, %v2297, %v2299
  %v2353 = vsel %vm2342, %v2299, %v2301
  %v2354 = vsel %vm2342, %v2301, %v2303
  %v2355 = vsel %vm2342, %v2303, %v2305
  %v2356 = vsel %vm2342, %v2305, %v2307
  %v2357 = vsel %vm2342, %v2307, %v2309
  %v2358 = vsel %vm2342, %v2311, %v2313
  %v2359 = vsel %vm2342, %v2313, %v2315
  %v2360 = vsel %vm2342, %v2315, %v2317
  %v2361 = vsel %vm2342, %v2317, %v2319
  %v2362 = vsel %vm2342, %v2319, %v2321
  %v2363 = vsel %vm2342, %v2321, %v2323
  %v2364 = vsel %vm2342, %v2323, %v2325
  %v2365 = vsel %vm2342, %v2325, %v2327
  %v2366 = vsel %vm2342, %v2327, %v2329
  %v2367 = vsel %vm2342, %v2329, %v2331
  %v2368 = vsel %vm2342, %v2331, %v2333
  %v2369 = vsel %vm2342, %v2333, %v2335
  %v2370 = vsel %vm2342, %v2335, %v2337
  %v2371 = vsel %vm2342, %v2337, %v2339
  %v2372 = vsel %vm2342, %v2339, %v2341
  %vm2403 = vcmask 1039360
  %v2405 = vsel %vm2403, %v2309, 0
  %v2408 = vsel %vm2403, %v2341, 0
  %vm2410 = vmand %vm1618, %vm1926
  %vm2411 = vmand %vm1619, %vm1927
  %vm2412 = vmand %vm1620, %vm1928
  %vm2413 = vmand %vm1621, %vm1929
  %vm2414 = vmand %vm1622, %vm1930
  %vm2415 = vmand %vm1623, %vm1931
  %vm2416 = vmand %vm1624, %vm1932
  %vm2417 = vmand %vm1625, %vm1933
  %vm2418 = vmand %vm1626, %vm1934
  %vm2419 = vmand %vm1627, %vm1935
  %vm2420 = vmand %vm1628, %vm1936
  %vm2421 = vmand %vm1629, %vm1937
  %vm2422 = vmand %vm1630, %vm1938
  %vm2423 = vmand %vm1631, %vm1939
  %vm2424 = vmand %vm1632, %vm1940
  %vm2425 = vmand %vm1633, %vm1941
  %vm2426 = vmand %vm2410, %vm1958
  %vm2427 = vmand %vm2411, %vm1959
  %vm2428 = vmand %vm2412, %vm1960
  %vm2429 = vmand %vm2413, %vm1961
  %vm2430 = vmand %vm2414, %vm1962
  %vm2431 = vmand %vm2415, %vm1963
  %vm2432 = vmand %vm2416, %vm1964
  %vm2433 = vmand %vm2417, %vm1965
  %vm2434 = vmand %vm2418, %vm1966
  %vm2435 = vmand %vm2419, %vm1967
  %vm2436 = vmand %vm2420, %vm1968
  %vm2437 = vmand %vm2421, %vm1969
  %vm2438 = vmand %vm2422, %vm1970
  %vm2439 = vmand %vm2423, %vm1971
  %vm2440 = vmand %vm2424, %vm1972
  %vm2441 = vmand %vm2425, %vm1973
  %vm2442 = vmpackc.low %vm2427, %vm2426
  %vm2443 = vmpackc.low %vm2429, %vm2428
  %vm2444 = vmpackc.low %vm2431, %vm2430
  %vm2445 = vmpackc.low %vm2433, %vm2432
  %vm2446 = vmpackc.low %vm2435, %vm2434
  %vm2447 = vmpackc.low %vm2437, %vm2436
  %vm2448 = vmpackc.low %vm2439, %vm2438
  %vm2449 = vmpackc.low %vm2441, %vm2440
  %v2450 = vsel %vm2442, 65537, 0
  %v2451 = vsel %vm2443, 65537, 0
  %v2452 = vsel %vm2444, 65537, 0
  %v2453 = vsel %vm2445, 65537, 0
  %v2454 = vsel %vm2446, 65537, 0
  %v2455 = vsel %vm2447, 65537, 0
  %v2456 = vsel %vm2448, 65537, 0
  %v2457 = vsel %vm2449, 65537, 0
  %v2458 = vlaneseq
  %v2459 = vshrl.u32 %v2458, 7
  %v2460 = vsub.s32 0, %v2459
  %v2461 = vrot.slane %v2450, %v2460
  %v2462 = vlaneseq
  %v2463 = vshrl.u32 %v2462, 7
  %v2464 = vsub.s32 4, %v2463
  %v2465 = vrot.slane %v2450, %v2464
  %v2466 = vlaneseq
  %v2467 = vshrl.u32 %v2466, 7
  %v2468 = vsub.s32 0, %v2467
  %v2469 = vrot.slane %v2451, %v2468
  %v2470 = vlaneseq
  %v2471 = vshrl.u32 %v2470, 7
  %v2472 = vsub.s32 4, %v2471
  %v2473 = vrot.slane %v2451, %v2472
  %v2474 = vlaneseq
  %v2475 = vshrl.u32 %v2474, 7
  %v2476 = vsub.s32 0, %v2475
  %v2477 = vrot.slane %v2452, %v2476
  %v2478 = vlaneseq
  %v2479 = vshrl.u32 %v2478, 7
  %v2480 = vsub.s32 4, %v2479
  %v2481 = vrot.slane %v2452, %v2480
  %v2482 = vlaneseq
  %v2483 = vshrl.u32 %v2482, 7
  %v2484 = vsub.s32 0, %v2483
  %v2485 = vrot.slane %v2453, %v2484
  %v2486 = vlaneseq
  %v2487 = vshrl.u32 %v2486, 7
  %v2488 = vsub.s32 4, %v2487
  %v2489 = vrot.slane %v2453, %v2488
  %v2490 = vlaneseq
  %v2491 = vshrl.u32 %v2490, 7
  %v2492 = vsub.s32 0, %v2491
  %v2493 = vrot.slane %v2454, %v2492
  %v2494 = vlaneseq
  %v2495 = vshrl.u32 %v2494, 7
  %v2496 = vsub.s32 4, %v2495
  %v2497 = vrot.slane %v2454, %v2496
  %v2498 = vlaneseq
  %v2499 = vshrl.u32 %v2498, 7
  %v2500 = vsub.s32 0, %v2499
  %v2501 = vrot.slane %v2455, %v2500
  %v2502 = vlaneseq
  %v2503 = vshrl.u32 %v2502, 7
  %v2504 = vsub.s32 4, %v2503
  %v2505 = vrot.slane %v2455, %v2504
  %v2506 = vlaneseq
  %v2507 = vshrl.u32 %v2506, 7
  %v2508 = vsub.s32 0, %v2507
  %v2509 = vrot.slane %v2456, %v2508
  %v2510 = vlaneseq
  %v2511 = vshrl.u32 %v2510, 7
  %v2512 = vsub.s32 4, %v2511
  %v2513 = vrot.slane %v2456, %v2512
  %v2514 = vlaneseq
  %v2515 = vshrl.u32 %v2514, 7
  %v2516 = vsub.s32 0, %v2515
  %v2517 = vrot.slane %v2457, %v2516
  %v2518 = vlaneseq
  %v2519 = vshrl.u32 %v2518, 7
  %v2520 = vsub.s32 4, %v2519
  %v2521 = vrot.slane %v2457, %v2520
  %vm2522 = vcmp.ne.s16.totalorder %v2461, 0
  %vm2523 = vcmp.ne.s16.totalorder %v2465, 0
  %vm2524 = vcmp.ne.s16.totalorder %v2469, 0
  %vm2525 = vcmp.ne.s16.totalorder %v2473, 0
  %vm2526 = vcmp.ne.s16.totalorder %v2477, 0
  %vm2527 = vcmp.ne.s16.totalorder %v2481, 0
  %vm2528 = vcmp.ne.s16.totalorder %v2485, 0
  %vm2529 = vcmp.ne.s16.totalorder %v2489, 0
  %vm2530 = vcmp.ne.s16.totalorder %v2493, 0
  %vm2531 = vcmp.ne.s16.totalorder %v2497, 0
  %vm2532 = vcmp.ne.s16.totalorder %v2501, 0
  %vm2533 = vcmp.ne.s16.totalorder %v2505, 0
  %vm2534 = vcmp.ne.s16.totalorder %v2509, 0
  %vm2535 = vcmp.ne.s16.totalorder %v2513, 0
  %vm2536 = vcmp.ne.s16.totalorder %v2517, 0
  %vm2537 = vcmp.ne.s16.totalorder %v2521, 0
  %v2538 = vsel %vm2522, %v2343, 0
  %v2539 = vsel %vm2523, %v2344, 0
  %v2540 = vsel %vm2524, %v2345, 0
  %v2541 = vsel %vm2525, %v2346, 0
  %v2542 = vsel %vm2526, %v2347, 0
  %v2543 = vsel %vm2527, %v2348, 0
  %v2544 = vsel %vm2528, %v2349, 0
  %v2545 = vsel %vm2529, %v2350, 0
  %v2546 = vsel %vm2530, %v2351, 0
  %v2547 = vsel %vm2531, %v2352, 0
  %v2548 = vsel %vm2532, %v2353, 0
  %v2549 = vsel %vm2533, %v2354, 0
  %v2550 = vsel %vm2534, %v2355, 0
  %v2551 = vsel %vm2535, %v2356, 0
  %v2552 = vsel %vm2536, %v2357, 0
  %v2553 = vsel %vm2537, %v2405, 0
  %v2554 = vsel %vm2522, %v2358, 0
  %v2555 = vsel %vm2523, %v2359, 0
  %v2556 = vsel %vm2524, %v2360, 0
  %v2557 = vsel %vm2525, %v2361, 0
  %v2558 = vsel %vm2526, %v2362, 0
  %v2559 = vsel %vm2527, %v2363, 0
  %v2560 = vsel %vm2528, %v2364, 0
  %v2561 = vsel %vm2529, %v2365, 0
  %v2562 = vsel %vm2530, %v2366, 0
  %v2563 = vsel %vm2531, %v2367, 0
  %v2564 = vsel %vm2532, %v2368, 0
  %v2565 = vsel %vm2533, %v2369, 0
  %v2566 = vsel %vm2534, %v2370, 0
  %v2567 = vsel %vm2535, %v2371, 0
  %v2568 = vsel %vm2536, %v2372, 0
  %v2569 = vsel %vm2537, %v2408, 0
  %2570 = vrot.lane.b32.xlu0 %v564, 97
  %v2571 = vpop.permute.xlu0 %2570
  %2572 = vrot.lane.b32.xlu0 %v565, 97
  %v2573 = vpop.permute.xlu0 %2572
  %2574 = vrot.lane.b32.xlu0 %v566, 97
  %v2575 = vpop.permute.xlu0 %2574
  %2576 = vrot.lane.b32.xlu0 %v567, 97
  %v2577 = vpop.permute.xlu0 %2576
  %2578 = vrot.lane.b32.xlu0 %v568, 97
  %v2579 = vpop.permute.xlu0 %2578
  %2580 = vrot.lane.b32.xlu0 %v569, 97
  %v2581 = vpop.permute.xlu0 %2580
  %2582 = vrot.lane.b32.xlu0 %v570, 97
  %v2583 = vpop.permute.xlu0 %2582
  %2584 = vrot.lane.b32.xlu0 %v571, 97
  %v2585 = vpop.permute.xlu0 %2584
  %2586 = vrot.lane.b32.xlu0 %v572, 97
  %v2587 = vpop.permute.xlu0 %2586
  %2588 = vrot.lane.b32.xlu0 %v573, 97
  %v2589 = vpop.permute.xlu0 %2588
  %2590 = vrot.lane.b32.xlu0 %v574, 97
  %v2591 = vpop.permute.xlu0 %2590
  %2592 = vrot.lane.b32.xlu0 %v575, 97
  %v2593 = vpop.permute.xlu0 %2592
  %2594 = vrot.lane.b32.xlu0 %v576, 97
  %v2595 = vpop.permute.xlu0 %2594
  %2596 = vrot.lane.b32.xlu0 %v577, 97
  %v2597 = vpop.permute.xlu0 %2596
  %2598 = vrot.lane.b32.xlu0 %v578, 97
  %v2599 = vpop.permute.xlu0 %2598
  %2600 = vrot.lane.b32.xlu0 %v579, 97
  %v2601 = vpop.permute.xlu0 %2600
  %2602 = vrot.lane.b32.xlu0 %v580, 97
  %v2603 = vpop.permute.xlu0 %2602
  %2604 = vrot.lane.b32.xlu0 %v581, 97
  %v2605 = vpop.permute.xlu0 %2604
  %2606 = vrot.lane.b32.xlu0 %v582, 97
  %v2607 = vpop.permute.xlu0 %2606
  %2608 = vrot.lane.b32.xlu0 %v583, 97
  %v2609 = vpop.permute.xlu0 %2608
  %2610 = vrot.lane.b32.xlu0 %v584, 97
  %v2611 = vpop.permute.xlu0 %2610
  %2612 = vrot.lane.b32.xlu0 %v585, 97
  %v2613 = vpop.permute.xlu0 %2612
  %2614 = vrot.lane.b32.xlu0 %v586, 97
  %v2615 = vpop.permute.xlu0 %2614
  %2616 = vrot.lane.b32.xlu0 %v587, 97
  %v2617 = vpop.permute.xlu0 %2616
  %2618 = vrot.lane.b32.xlu0 %v588, 97
  %v2619 = vpop.permute.xlu0 %2618
  %2620 = vrot.lane.b32.xlu0 %v589, 97
  %v2621 = vpop.permute.xlu0 %2620
  %2622 = vrot.lane.b32.xlu0 %v590, 97
  %v2623 = vpop.permute.xlu0 %2622
  %2624 = vrot.lane.b32.xlu0 %v591, 97
  %v2625 = vpop.permute.xlu0 %2624
  %2626 = vrot.lane.b32.xlu0 %v592, 97
  %v2627 = vpop.permute.xlu0 %2626
  %2628 = vrot.lane.b32.xlu0 %v593, 97
  %v2629 = vpop.permute.xlu0 %2628
  %2630 = vrot.lane.b32.xlu0 %v594, 97
  %v2631 = vpop.permute.xlu0 %2630
  %2632 = vrot.lane.b32.xlu0 %v595, 97
  %v2633 = vpop.permute.xlu0 %2632
  %vm2634 = vcmask 793600
  %v2635 = vsel %vm2634, %v2571, %v2573
  %v2636 = vsel %vm2634, %v2573, %v2575
  %v2637 = vsel %vm2634, %v2575, %v2577
  %v2638 = vsel %vm2634, %v2577, %v2579
  %v2639 = vsel %vm2634, %v2579, %v2581
  %v2640 = vsel %vm2634, %v2581, %v2583
  %v2641 = vsel %vm2634, %v2583, %v2585
  %v2642 = vsel %vm2634, %v2585, %v2587
  %v2643 = vsel %vm2634, %v2587, %v2589
  %v2644 = vsel %vm2634, %v2589, %v2591
  %v2645 = vsel %vm2634, %v2591, %v2593
  %v2646 = vsel %vm2634, %v2593, %v2595
  %v2647 = vsel %vm2634, %v2595, %v2597
  %v2648 = vsel %vm2634, %v2597, %v2599
  %v2649 = vsel %vm2634, %v2599, %v2601
  %v2650 = vsel %vm2634, %v2603, %v2605
  %v2651 = vsel %vm2634, %v2605, %v2607
  %v2652 = vsel %vm2634, %v2607, %v2609
  %v2653 = vsel %vm2634, %v2609, %v2611
  %v2654 = vsel %vm2634, %v2611, %v2613
  %v2655 = vsel %vm2634, %v2613, %v2615
  %v2656 = vsel %vm2634, %v2615, %v2617
  %v2657 = vsel %vm2634, %v2617, %v2619
  %v2658 = vsel %vm2634, %v2619, %v2621
  %v2659 = vsel %vm2634, %v2621, %v2623
  %v2660 = vsel %vm2634, %v2623, %v2625
  %v2661 = vsel %vm2634, %v2625, %v2627
  %v2662 = vsel %vm2634, %v2627, %v2629
  %v2663 = vsel %vm2634, %v2629, %v2631
  %v2664 = vsel %vm2634, %v2631, %v2633
  %vm2695 = vcmask 793600
  %v2697 = vsel %vm2695, %v2601, 0
  %v2700 = vsel %vm2695, %v2633, 0
  %v2702 = vadd.s32 %v645, 1
  %v2703 = vadd.s32 %v646, 1
  %v2704 = vadd.s32 %v647, 1
  %v2705 = vadd.s32 %v648, 1
  %v2706 = vadd.s32 %v649, 1
  %v2707 = vadd.s32 %v650, 1
  %v2708 = vadd.s32 %v651, 1
  %v2709 = vadd.s32 %v652, 1
  %v2710 = vadd.s32 %v653, 1
  %v2711 = vadd.s32 %v654, 1
  %v2712 = vadd.s32 %v655, 1
  %v2713 = vadd.s32 %v656, 1
  %v2714 = vadd.s32 %v657, 1
  %v2715 = vadd.s32 %v658, 1
  %v2716 = vadd.s32 %v659, 1
  %v2717 = vadd.s32 %v660, 1
  %vm2718 = vcmp.ge.s32.totalorder %v2702, 0
  %vm2719 = vcmp.ge.s32.totalorder %v2703, 0
  %vm2720 = vcmp.ge.s32.totalorder %v2704, 0
  %vm2721 = vcmp.ge.s32.totalorder %v2705, 0
  %vm2722 = vcmp.ge.s32.totalorder %v2706, 0
  %vm2723 = vcmp.ge.s32.totalorder %v2707, 0
  %vm2724 = vcmp.ge.s32.totalorder %v2708, 0
  %vm2725 = vcmp.ge.s32.totalorder %v2709, 0
  %vm2726 = vcmp.ge.s32.totalorder %v2710, 0
  %vm2727 = vcmp.ge.s32.totalorder %v2711, 0
  %vm2728 = vcmp.ge.s32.totalorder %v2712, 0
  %vm2729 = vcmp.ge.s32.totalorder %v2713, 0
  %vm2730 = vcmp.ge.s32.totalorder %v2714, 0
  %vm2731 = vcmp.ge.s32.totalorder %v2715, 0
  %vm2732 = vcmp.ge.s32.totalorder %v2716, 0
  %vm2733 = vcmp.ge.s32.totalorder %v2717, 0
  %vm2734 = vmand %vm874, %vm2718
  %vm2735 = vmand %vm875, %vm2719
  %vm2736 = vmand %vm876, %vm2720
  %vm2737 = vmand %vm877, %vm2721
  %vm2738 = vmand %vm878, %vm2722
  %vm2739 = vmand %vm879, %vm2723
  %vm2740 = vmand %vm880, %vm2724
  %vm2741 = vmand %vm881, %vm2725
  %vm2742 = vmand %vm882, %vm2726
  %vm2743 = vmand %vm883, %vm2727
  %vm2744 = vmand %vm884, %vm2728
  %vm2745 = vmand %vm885, %vm2729
  %vm2746 = vmand %vm886, %vm2730
  %vm2747 = vmand %vm887, %vm2731
  %vm2748 = vmand %vm888, %vm2732
  %vm2749 = vmand %vm889, %vm2733
  %vm2750 = vcmp.lt.s32.totalorder %v2702, 32
  %vm2751 = vcmp.lt.s32.totalorder %v2703, 32
  %vm2752 = vcmp.lt.s32.totalorder %v2704, 32
  %vm2753 = vcmp.lt.s32.totalorder %v2705, 32
  %vm2754 = vcmp.lt.s32.totalorder %v2706, 32
  %vm2755 = vcmp.lt.s32.totalorder %v2707, 32
  %vm2756 = vcmp.lt.s32.totalorder %v2708, 32
  %vm2757 = vcmp.lt.s32.totalorder %v2709, 32
  %vm2758 = vcmp.lt.s32.totalorder %v2710, 32
  %vm2759 = vcmp.lt.s32.totalorder %v2711, 32
  %vm2760 = vcmp.lt.s32.totalorder %v2712, 32
  %vm2761 = vcmp.lt.s32.totalorder %v2713, 32
  %vm2762 = vcmp.lt.s32.totalorder %v2714, 32
  %vm2763 = vcmp.lt.s32.totalorder %v2715, 32
  %vm2764 = vcmp.lt.s32.totalorder %v2716, 32
  %vm2765 = vcmp.lt.s32.totalorder %v2717, 32
  %vm2766 = vmand %vm2734, %vm2750
  %vm2767 = vmand %vm2735, %vm2751
  %vm2768 = vmand %vm2736, %vm2752
  %vm2769 = vmand %vm2737, %vm2753
  %vm2770 = vmand %vm2738, %vm2754
  %vm2771 = vmand %vm2739, %vm2755
  %vm2772 = vmand %vm2740, %vm2756
  %vm2773 = vmand %vm2741, %vm2757
  %vm2774 = vmand %vm2742, %vm2758
  %vm2775 = vmand %vm2743, %vm2759
  %vm2776 = vmand %vm2744, %vm2760
  %vm2777 = vmand %vm2745, %vm2761
  %vm2778 = vmand %vm2746, %vm2762
  %vm2779 = vmand %vm2747, %vm2763
  %vm2780 = vmand %vm2748, %vm2764
  %vm2781 = vmand %vm2749, %vm2765
  %vm2782 = vmpackc.low %vm2767, %vm2766
  %vm2783 = vmpackc.low %vm2769, %vm2768
  %vm2784 = vmpackc.low %vm2771, %vm2770
  %vm2785 = vmpackc.low %vm2773, %vm2772
  %vm2786 = vmpackc.low %vm2775, %vm2774
  %vm2787 = vmpackc.low %vm2777, %vm2776
  %vm2788 = vmpackc.low %vm2779, %vm2778
  %vm2789 = vmpackc.low %vm2781, %vm2780
  %v2790 = vsel %vm2782, 65537, 0
  %v2791 = vsel %vm2783, 65537, 0
  %v2792 = vsel %vm2784, 65537, 0
  %v2793 = vsel %vm2785, 65537, 0
  %v2794 = vsel %vm2786, 65537, 0
  %v2795 = vsel %vm2787, 65537, 0
  %v2796 = vsel %vm2788, 65537, 0
  %v2797 = vsel %vm2789, 65537, 0
  %v2798 = vlaneseq
  %v2799 = vshrl.u32 %v2798, 7
  %v2800 = vsub.s32 0, %v2799
  %v2801 = vrot.slane %v2790, %v2800
  %v2802 = vlaneseq
  %v2803 = vshrl.u32 %v2802, 7
  %v2804 = vsub.s32 4, %v2803
  %v2805 = vrot.slane %v2790, %v2804
  %v2806 = vlaneseq
  %v2807 = vshrl.u32 %v2806, 7
  %v2808 = vsub.s32 0, %v2807
  %v2809 = vrot.slane %v2791, %v2808
  %v2810 = vlaneseq
  %v2811 = vshrl.u32 %v2810, 7
  %v2812 = vsub.s32 4, %v2811
  %v2813 = vrot.slane %v2791, %v2812
  %v2814 = vlaneseq
  %v2815 = vshrl.u32 %v2814, 7
  %v2816 = vsub.s32 0, %v2815
  %v2817 = vrot.slane %v2792, %v2816
  %v2818 = vlaneseq
  %v2819 = vshrl.u32 %v2818, 7
  %v2820 = vsub.s32 4, %v2819
  %v2821 = vrot.slane %v2792, %v2820
  %v2822 = vlaneseq
  %v2823 = vshrl.u32 %v2822, 7
  %v2824 = vsub.s32 0, %v2823
  %v2825 = vrot.slane %v2793, %v2824
  %v2826 = vlaneseq
  %v2827 = vshrl.u32 %v2826, 7
  %v2828 = vsub.s32 4, %v2827
  %v2829 = vrot.slane %v2793, %v2828
  %v2830 = vlaneseq
  %v2831 = vshrl.u32 %v2830, 7
  %v2832 = vsub.s32 0, %v2831
  %v2833 = vrot.slane %v2794, %v2832
  %v2834 = vlaneseq
  %v2835 = vshrl.u32 %v2834, 7
  %v2836 = vsub.s32 4, %v2835
  %v2837 = vrot.slane %v2794, %v2836
  %v2838 = vlaneseq
  %v2839 = vshrl.u32 %v2838, 7
  %v2840 = vsub.s32 0, %v2839
  %v2841 = vrot.slane %v2795, %v2840
  %v2842 = vlaneseq
  %v2843 = vshrl.u32 %v2842, 7
  %v2844 = vsub.s32 4, %v2843
  %v2845 = vrot.slane %v2795, %v2844
  %v2846 = vlaneseq
  %v2847 = vshrl.u32 %v2846, 7
  %v2848 = vsub.s32 0, %v2847
  %v2849 = vrot.slane %v2796, %v2848
  %v2850 = vlaneseq
  %v2851 = vshrl.u32 %v2850, 7
  %v2852 = vsub.s32 4, %v2851
  %v2853 = vrot.slane %v2796, %v2852
  %v2854 = vlaneseq
  %v2855 = vshrl.u32 %v2854, 7
  %v2856 = vsub.s32 0, %v2855
  %v2857 = vrot.slane %v2797, %v2856
  %v2858 = vlaneseq
  %v2859 = vshrl.u32 %v2858, 7
  %v2860 = vsub.s32 4, %v2859
  %v2861 = vrot.slane %v2797, %v2860
  %vm2862 = vcmp.ne.s16.totalorder %v2801, 0
  %vm2863 = vcmp.ne.s16.totalorder %v2805, 0
  %vm2864 = vcmp.ne.s16.totalorder %v2809, 0
  %vm2865 = vcmp.ne.s16.totalorder %v2813, 0
  %vm2866 = vcmp.ne.s16.totalorder %v2817, 0
  %vm2867 = vcmp.ne.s16.totalorder %v2821, 0
  %vm2868 = vcmp.ne.s16.totalorder %v2825, 0
  %vm2869 = vcmp.ne.s16.totalorder %v2829, 0
  %vm2870 = vcmp.ne.s16.totalorder %v2833, 0
  %vm2871 = vcmp.ne.s16.totalorder %v2837, 0
  %vm2872 = vcmp.ne.s16.totalorder %v2841, 0
  %vm2873 = vcmp.ne.s16.totalorder %v2845, 0
  %vm2874 = vcmp.ne.s16.totalorder %v2849, 0
  %vm2875 = vcmp.ne.s16.totalorder %v2853, 0
  %vm2876 = vcmp.ne.s16.totalorder %v2857, 0
  %vm2877 = vcmp.ne.s16.totalorder %v2861, 0
  %v2878 = vsel %vm2862, %v2635, 0
  %v2879 = vsel %vm2863, %v2636, 0
  %v2880 = vsel %vm2864, %v2637, 0
  %v2881 = vsel %vm2865, %v2638, 0
  %v2882 = vsel %vm2866, %v2639, 0
  %v2883 = vsel %vm2867, %v2640, 0
  %v2884 = vsel %vm2868, %v2641, 0
  %v2885 = vsel %vm2869, %v2642, 0
  %v2886 = vsel %vm2870, %v2643, 0
  %v2887 = vsel %vm2871, %v2644, 0
  %v2888 = vsel %vm2872, %v2645, 0
  %v2889 = vsel %vm2873, %v2646, 0
  %v2890 = vsel %vm2874, %v2647, 0
  %v2891 = vsel %vm2875, %v2648, 0
  %v2892 = vsel %vm2876, %v2649, 0
  %v2893 = vsel %vm2877, %v2697, 0
  %v2894 = vsel %vm2862, %v2650, 0
  %v2895 = vsel %vm2863, %v2651, 0
  %v2896 = vsel %vm2864, %v2652, 0
  %v2897 = vsel %vm2865, %v2653, 0
  %v2898 = vsel %vm2866, %v2654, 0
  %v2899 = vsel %vm2867, %v2655, 0
  %v2900 = vsel %vm2868, %v2656, 0
  %v2901 = vsel %vm2869, %v2657, 0
  %v2902 = vsel %vm2870, %v2658, 0
  %v2903 = vsel %vm2871, %v2659, 0
  %v2904 = vsel %vm2872, %v2660, 0
  %v2905 = vsel %vm2873, %v2661, 0
  %v2906 = vsel %vm2874, %v2662, 0
  %v2907 = vsel %vm2875, %v2663, 0
  %v2908 = vsel %vm2876, %v2664, 0
  %v2909 = vsel %vm2877, %v2700, 0
  %2910 = vrot.lane.b32.xlu0 %v564, 96
  %v2911 = vpop.permute.xlu0 %2910
  %2912 = vrot.lane.b32.xlu0 %v565, 96
  %v2913 = vpop.permute.xlu0 %2912
  %2914 = vrot.lane.b32.xlu0 %v566, 96
  %v2915 = vpop.permute.xlu0 %2914
  %2916 = vrot.lane.b32.xlu0 %v567, 96
  %v2917 = vpop.permute.xlu0 %2916
  %2918 = vrot.lane.b32.xlu0 %v568, 96
  %v2919 = vpop.permute.xlu0 %2918
  %2920 = vrot.lane.b32.xlu0 %v569, 96
  %v2921 = vpop.permute.xlu0 %2920
  %2922 = vrot.lane.b32.xlu0 %v570, 96
  %v2923 = vpop.permute.xlu0 %2922
  %2924 = vrot.lane.b32.xlu0 %v571, 96
  %v2925 = vpop.permute.xlu0 %2924
  %2926 = vrot.lane.b32.xlu0 %v572, 96
  %v2927 = vpop.permute.xlu0 %2926
  %2928 = vrot.lane.b32.xlu0 %v573, 96
  %v2929 = vpop.permute.xlu0 %2928
  %2930 = vrot.lane.b32.xlu0 %v574, 96
  %v2931 = vpop.permute.xlu0 %2930
  %2932 = vrot.lane.b32.xlu0 %v575, 96
  %v2933 = vpop.permute.xlu0 %2932
  %2934 = vrot.lane.b32.xlu0 %v576, 96
  %v2935 = vpop.permute.xlu0 %2934
  %2936 = vrot.lane.b32.xlu0 %v577, 96
  %v2937 = vpop.permute.xlu0 %2936
  %2938 = vrot.lane.b32.xlu0 %v578, 96
  %v2939 = vpop.permute.xlu0 %2938
  %2940 = vrot.lane.b32.xlu0 %v579, 96
  %v2941 = vpop.permute.xlu0 %2940
  %2942 = vrot.lane.b32.xlu0 %v580, 96
  %v2943 = vpop.permute.xlu0 %2942
  %2944 = vrot.lane.b32.xlu0 %v581, 96
  %v2945 = vpop.permute.xlu0 %2944
  %2946 = vrot.lane.b32.xlu0 %v582, 96
  %v2947 = vpop.permute.xlu0 %2946
  %2948 = vrot.lane.b32.xlu0 %v583, 96
  %v2949 = vpop.permute.xlu0 %2948
  %2950 = vrot.lane.b32.xlu0 %v584, 96
  %v2951 = vpop.permute.xlu0 %2950
  %2952 = vrot.lane.b32.xlu0 %v585, 96
  %v2953 = vpop.permute.xlu0 %2952
  %2954 = vrot.lane.b32.xlu0 %v586, 96
  %v2955 = vpop.permute.xlu0 %2954
  %2956 = vrot.lane.b32.xlu0 %v587, 96
  %v2957 = vpop.permute.xlu0 %2956
  %2958 = vrot.lane.b32.xlu0 %v588, 96
  %v2959 = vpop.permute.xlu0 %2958
  %2960 = vrot.lane.b32.xlu0 %v589, 96
  %v2961 = vpop.permute.xlu0 %2960
  %2962 = vrot.lane.b32.xlu0 %v590, 96
  %v2963 = vpop.permute.xlu0 %2962
  %2964 = vrot.lane.b32.xlu0 %v591, 96
  %v2965 = vpop.permute.xlu0 %2964
  %2966 = vrot.lane.b32.xlu0 %v592, 96
  %v2967 = vpop.permute.xlu0 %2966
  %2968 = vrot.lane.b32.xlu0 %v593, 96
  %v2969 = vpop.permute.xlu0 %2968
  %2970 = vrot.lane.b32.xlu0 %v594, 96
  %v2971 = vpop.permute.xlu0 %2970
  %2972 = vrot.lane.b32.xlu0 %v595, 96
  %v2973 = vpop.permute.xlu0 %2972
  %vm2974 = vcmask 785408
  %v2975 = vsel %vm2974, %v2911, %v2913
  %v2976 = vsel %vm2974, %v2913, %v2915
  %v2977 = vsel %vm2974, %v2915, %v2917
  %v2978 = vsel %vm2974, %v2917, %v2919
  %v2979 = vsel %vm2974, %v2919, %v2921
  %v2980 = vsel %vm2974, %v2921, %v2923
  %v2981 = vsel %vm2974, %v2923, %v2925
  %v2982 = vsel %vm2974, %v2925, %v2927
  %v2983 = vsel %vm2974, %v2927, %v2929
  %v2984 = vsel %vm2974, %v2929, %v2931
  %v2985 = vsel %vm2974, %v2931, %v2933
  %v2986 = vsel %vm2974, %v2933, %v2935
  %v2987 = vsel %vm2974, %v2935, %v2937
  %v2988 = vsel %vm2974, %v2937, %v2939
  %v2989 = vsel %vm2974, %v2939, %v2941
  %v2990 = vsel %vm2974, %v2943, %v2945
  %v2991 = vsel %vm2974, %v2945, %v2947
  %v2992 = vsel %vm2974, %v2947, %v2949
  %v2993 = vsel %vm2974, %v2949, %v2951
  %v2994 = vsel %vm2974, %v2951, %v2953
  %v2995 = vsel %vm2974, %v2953, %v2955
  %v2996 = vsel %vm2974, %v2955, %v2957
  %v2997 = vsel %vm2974, %v2957, %v2959
  %v2998 = vsel %vm2974, %v2959, %v2961
  %v2999 = vsel %vm2974, %v2961, %v2963
  %v3000 = vsel %vm2974, %v2963, %v2965
  %v3001 = vsel %vm2974, %v2965, %v2967
  %v3002 = vsel %vm2974, %v2967, %v2969
  %v3003 = vsel %vm2974, %v2969, %v2971
  %v3004 = vsel %vm2974, %v2971, %v2973
  %vm3035 = vcmask 785408
  %v3037 = vsel %vm3035, %v2941, 0
  %v3040 = vsel %vm3035, %v2973, 0
  %vm3042 = vmand %vm1262, %vm2718
  %vm3043 = vmand %vm1263, %vm2719
  %vm3044 = vmand %vm1264, %vm2720
  %vm3045 = vmand %vm1265, %vm2721
  %vm3046 = vmand %vm1266, %vm2722
  %vm3047 = vmand %vm1267, %vm2723
  %vm3048 = vmand %vm1268, %vm2724
  %vm3049 = vmand %vm1269, %vm2725
  %vm3050 = vmand %vm1270, %vm2726
  %vm3051 = vmand %vm1271, %vm2727
  %vm3052 = vmand %vm1272, %vm2728
  %vm3053 = vmand %vm1273, %vm2729
  %vm3054 = vmand %vm1274, %vm2730
  %vm3055 = vmand %vm1275, %vm2731
  %vm3056 = vmand %vm1276, %vm2732
  %vm3057 = vmand %vm1277, %vm2733
  %vm3058 = vmand %vm3042, %vm2750
  %vm3059 = vmand %vm3043, %vm2751
  %vm3060 = vmand %vm3044, %vm2752
  %vm3061 = vmand %vm3045, %vm2753
  %vm3062 = vmand %vm3046, %vm2754
  %vm3063 = vmand %vm3047, %vm2755
  %vm3064 = vmand %vm3048, %vm2756
  %vm3065 = vmand %vm3049, %vm2757
  %vm3066 = vmand %vm3050, %vm2758
  %vm3067 = vmand %vm3051, %vm2759
  %vm3068 = vmand %vm3052, %vm2760
  %vm3069 = vmand %vm3053, %vm2761
  %vm3070 = vmand %vm3054, %vm2762
  %vm3071 = vmand %vm3055, %vm2763
  %vm3072 = vmand %vm3056, %vm2764
  %vm3073 = vmand %vm3057, %vm2765
  %vm3074 = vmpackc.low %vm3059, %vm3058
  %vm3075 = vmpackc.low %vm3061, %vm3060
  %vm3076 = vmpackc.low %vm3063, %vm3062
  %vm3077 = vmpackc.low %vm3065, %vm3064
  %vm3078 = vmpackc.low %vm3067, %vm3066
  %vm3079 = vmpackc.low %vm3069, %vm3068
  %vm3080 = vmpackc.low %vm3071, %vm3070
  %vm3081 = vmpackc.low %vm3073, %vm3072
  %v3082 = vsel %vm3074, 65537, 0
  %v3083 = vsel %vm3075, 65537, 0
  %v3084 = vsel %vm3076, 65537, 0
  %v3085 = vsel %vm3077, 65537, 0
  %v3086 = vsel %vm3078, 65537, 0
  %v3087 = vsel %vm3079, 65537, 0
  %v3088 = vsel %vm3080, 65537, 0
  %v3089 = vsel %vm3081, 65537, 0
  %v3090 = vlaneseq
  %v3091 = vshrl.u32 %v3090, 7
  %v3092 = vsub.s32 0, %v3091
  %v3093 = vrot.slane %v3082, %v3092
  %v3094 = vlaneseq
  %v3095 = vshrl.u32 %v3094, 7
  %v3096 = vsub.s32 4, %v3095
  %v3097 = vrot.slane %v3082, %v3096
  %v3098 = vlaneseq
  %v3099 = vshrl.u32 %v3098, 7
  %v3100 = vsub.s32 0, %v3099
  %v3101 = vrot.slane %v3083, %v3100
  %v3102 = vlaneseq
  %v3103 = vshrl.u32 %v3102, 7
  %v3104 = vsub.s32 4, %v3103
  %v3105 = vrot.slane %v3083, %v3104
  %v3106 = vlaneseq
  %v3107 = vshrl.u32 %v3106, 7
  %v3108 = vsub.s32 0, %v3107
  %v3109 = vrot.slane %v3084, %v3108
  %v3110 = vlaneseq
  %v3111 = vshrl.u32 %v3110, 7
  %v3112 = vsub.s32 4, %v3111
  %v3113 = vrot.slane %v3084, %v3112
  %v3114 = vlaneseq
  %v3115 = vshrl.u32 %v3114, 7
  %v3116 = vsub.s32 0, %v3115
  %v3117 = vrot.slane %v3085, %v3116
  %v3118 = vlaneseq
  %v3119 = vshrl.u32 %v3118, 7
  %v3120 = vsub.s32 4, %v3119
  %v3121 = vrot.slane %v3085, %v3120
  %v3122 = vlaneseq
  %v3123 = vshrl.u32 %v3122, 7
  %v3124 = vsub.s32 0, %v3123
  %v3125 = vrot.slane %v3086, %v3124
  %v3126 = vlaneseq
  %v3127 = vshrl.u32 %v3126, 7
  %v3128 = vsub.s32 4, %v3127
  %v3129 = vrot.slane %v3086, %v3128
  %v3130 = vlaneseq
  %v3131 = vshrl.u32 %v3130, 7
  %v3132 = vsub.s32 0, %v3131
  %v3133 = vrot.slane %v3087, %v3132
  %v3134 = vlaneseq
  %v3135 = vshrl.u32 %v3134, 7
  %v3136 = vsub.s32 4, %v3135
  %v3137 = vrot.slane %v3087, %v3136
  %v3138 = vlaneseq
  %v3139 = vshrl.u32 %v3138, 7
  %v3140 = vsub.s32 0, %v3139
  %v3141 = vrot.slane %v3088, %v3140
  %v3142 = vlaneseq
  %v3143 = vshrl.u32 %v3142, 7
  %v3144 = vsub.s32 4, %v3143
  %v3145 = vrot.slane %v3088, %v3144
  %v3146 = vlaneseq
  %v3147 = vshrl.u32 %v3146, 7
  %v3148 = vsub.s32 0, %v3147
  %v3149 = vrot.slane %v3089, %v3148
  %v3150 = vlaneseq
  %v3151 = vshrl.u32 %v3150, 7
  %v3152 = vsub.s32 4, %v3151
  %v3153 = vrot.slane %v3089, %v3152
  %vm3154 = vcmp.ne.s16.totalorder %v3093, 0
  %vm3155 = vcmp.ne.s16.totalorder %v3097, 0
  %vm3156 = vcmp.ne.s16.totalorder %v3101, 0
  %vm3157 = vcmp.ne.s16.totalorder %v3105, 0
  %vm3158 = vcmp.ne.s16.totalorder %v3109, 0
  %vm3159 = vcmp.ne.s16.totalorder %v3113, 0
  %vm3160 = vcmp.ne.s16.totalorder %v3117, 0
  %vm3161 = vcmp.ne.s16.totalorder %v3121, 0
  %vm3162 = vcmp.ne.s16.totalorder %v3125, 0
  %vm3163 = vcmp.ne.s16.totalorder %v3129, 0
  %vm3164 = vcmp.ne.s16.totalorder %v3133, 0
  %vm3165 = vcmp.ne.s16.totalorder %v3137, 0
  %vm3166 = vcmp.ne.s16.totalorder %v3141, 0
  %vm3167 = vcmp.ne.s16.totalorder %v3145, 0
  %vm3168 = vcmp.ne.s16.totalorder %v3149, 0
  %vm3169 = vcmp.ne.s16.totalorder %v3153, 0
  %v3170 = vsel %vm3154, %v2975, 0
  %v3171 = vsel %vm3155, %v2976, 0
  %v3172 = vsel %vm3156, %v2977, 0
  %v3173 = vsel %vm3157, %v2978, 0
  %v3174 = vsel %vm3158, %v2979, 0
  %v3175 = vsel %vm3159, %v2980, 0
  %v3176 = vsel %vm3160, %v2981, 0
  %v3177 = vsel %vm3161, %v2982, 0
  %v3178 = vsel %vm3162, %v2983, 0
  %v3179 = vsel %vm3163, %v2984, 0
  %v3180 = vsel %vm3164, %v2985, 0
  %v3181 = vsel %vm3165, %v2986, 0
  %v3182 = vsel %vm3166, %v2987, 0
  %v3183 = vsel %vm3167, %v2988, 0
  %v3184 = vsel %vm3168, %v2989, 0
  %v3185 = vsel %vm3169, %v3037, 0
  %v3186 = vsel %vm3154, %v2990, 0
  %v3187 = vsel %vm3155, %v2991, 0
  %v3188 = vsel %vm3156, %v2992, 0
  %v3189 = vsel %vm3157, %v2993, 0
  %v3190 = vsel %vm3158, %v2994, 0
  %v3191 = vsel %vm3159, %v2995, 0
  %v3192 = vsel %vm3160, %v2996, 0
  %v3193 = vsel %vm3161, %v2997, 0
  %v3194 = vsel %vm3162, %v2998, 0
  %v3195 = vsel %vm3163, %v2999, 0
  %v3196 = vsel %vm3164, %v3000, 0
  %v3197 = vsel %vm3165, %v3001, 0
  %v3198 = vsel %vm3166, %v3002, 0
  %v3199 = vsel %vm3167, %v3003, 0
  %v3200 = vsel %vm3168, %v3004, 0
  %v3201 = vsel %vm3169, %v3040, 0
  %3202 = vrot.lane.b32.xlu0 %v564, 95
  %v3203 = vpop.permute.xlu0 %3202
  %3204 = vrot.lane.b32.xlu0 %v565, 95
  %v3205 = vpop.permute.xlu0 %3204
  %3206 = vrot.lane.b32.xlu0 %v566, 95
  %v3207 = vpop.permute.xlu0 %3206
  %3208 = vrot.lane.b32.xlu0 %v567, 95
  %v3209 = vpop.permute.xlu0 %3208
  %3210 = vrot.lane.b32.xlu0 %v568, 95
  %v3211 = vpop.permute.xlu0 %3210
  %3212 = vrot.lane.b32.xlu0 %v569, 95
  %v3213 = vpop.permute.xlu0 %3212
  %3214 = vrot.lane.b32.xlu0 %v570, 95
  %v3215 = vpop.permute.xlu0 %3214
  %3216 = vrot.lane.b32.xlu0 %v571, 95
  %v3217 = vpop.permute.xlu0 %3216
  %3218 = vrot.lane.b32.xlu0 %v572, 95
  %v3219 = vpop.permute.xlu0 %3218
  %3220 = vrot.lane.b32.xlu0 %v573, 95
  %v3221 = vpop.permute.xlu0 %3220
  %3222 = vrot.lane.b32.xlu0 %v574, 95
  %v3223 = vpop.permute.xlu0 %3222
  %3224 = vrot.lane.b32.xlu0 %v575, 95
  %v3225 = vpop.permute.xlu0 %3224
  %3226 = vrot.lane.b32.xlu0 %v576, 95
  %v3227 = vpop.permute.xlu0 %3226
  %3228 = vrot.lane.b32.xlu0 %v577, 95
  %v3229 = vpop.permute.xlu0 %3228
  %3230 = vrot.lane.b32.xlu0 %v578, 95
  %v3231 = vpop.permute.xlu0 %3230
  %3232 = vrot.lane.b32.xlu0 %v579, 95
  %v3233 = vpop.permute.xlu0 %3232
  %3234 = vrot.lane.b32.xlu0 %v580, 95
  %v3235 = vpop.permute.xlu0 %3234
  %3236 = vrot.lane.b32.xlu0 %v581, 95
  %v3237 = vpop.permute.xlu0 %3236
  %3238 = vrot.lane.b32.xlu0 %v582, 95
  %v3239 = vpop.permute.xlu0 %3238
  %3240 = vrot.lane.b32.xlu0 %v583, 95
  %v3241 = vpop.permute.xlu0 %3240
  %3242 = vrot.lane.b32.xlu0 %v584, 95
  %v3243 = vpop.permute.xlu0 %3242
  %3244 = vrot.lane.b32.xlu0 %v585, 95
  %v3245 = vpop.permute.xlu0 %3244
  %3246 = vrot.lane.b32.xlu0 %v586, 95
  %v3247 = vpop.permute.xlu0 %3246
  %3248 = vrot.lane.b32.xlu0 %v587, 95
  %v3249 = vpop.permute.xlu0 %3248
  %3250 = vrot.lane.b32.xlu0 %v588, 95
  %v3251 = vpop.permute.xlu0 %3250
  %3252 = vrot.lane.b32.xlu0 %v589, 95
  %v3253 = vpop.permute.xlu0 %3252
  %3254 = vrot.lane.b32.xlu0 %v590, 95
  %v3255 = vpop.permute.xlu0 %3254
  %3256 = vrot.lane.b32.xlu0 %v591, 95
  %v3257 = vpop.permute.xlu0 %3256
  %3258 = vrot.lane.b32.xlu0 %v592, 95
  %v3259 = vpop.permute.xlu0 %3258
  %3260 = vrot.lane.b32.xlu0 %v593, 95
  %v3261 = vpop.permute.xlu0 %3260
  %3262 = vrot.lane.b32.xlu0 %v594, 95
  %v3263 = vpop.permute.xlu0 %3262
  %3264 = vrot.lane.b32.xlu0 %v595, 95
  %v3265 = vpop.permute.xlu0 %3264
  %vm3266 = vcmask 777216
  %v3267 = vsel %vm3266, %v3203, %v3205
  %v3268 = vsel %vm3266, %v3205, %v3207
  %v3269 = vsel %vm3266, %v3207, %v3209
  %v3270 = vsel %vm3266, %v3209, %v3211
  %v3271 = vsel %vm3266, %v3211, %v3213
  %v3272 = vsel %vm3266, %v3213, %v3215
  %v3273 = vsel %vm3266, %v3215, %v3217
  %v3274 = vsel %vm3266, %v3217, %v3219
  %v3275 = vsel %vm3266, %v3219, %v3221
  %v3276 = vsel %vm3266, %v3221, %v3223
  %v3277 = vsel %vm3266, %v3223, %v3225
  %v3278 = vsel %vm3266, %v3225, %v3227
  %v3279 = vsel %vm3266, %v3227, %v3229
  %v3280 = vsel %vm3266, %v3229, %v3231
  %v3281 = vsel %vm3266, %v3231, %v3233
  %v3282 = vsel %vm3266, %v3235, %v3237
  %v3283 = vsel %vm3266, %v3237, %v3239
  %v3284 = vsel %vm3266, %v3239, %v3241
  %v3285 = vsel %vm3266, %v3241, %v3243
  %v3286 = vsel %vm3266, %v3243, %v3245
  %v3287 = vsel %vm3266, %v3245, %v3247
  %v3288 = vsel %vm3266, %v3247, %v3249
  %v3289 = vsel %vm3266, %v3249, %v3251
  %v3290 = vsel %vm3266, %v3251, %v3253
  %v3291 = vsel %vm3266, %v3253, %v3255
  %v3292 = vsel %vm3266, %v3255, %v3257
  %v3293 = vsel %vm3266, %v3257, %v3259
  %v3294 = vsel %vm3266, %v3259, %v3261
  %v3295 = vsel %vm3266, %v3261, %v3263
  %v3296 = vsel %vm3266, %v3263, %v3265
  %vm3327 = vcmask 777216
  %v3329 = vsel %vm3327, %v3233, 0
  %v3332 = vsel %vm3327, %v3265, 0
  %vm3334 = vmand %vm1618, %vm2718
  %vm3335 = vmand %vm1619, %vm2719
  %vm3336 = vmand %vm1620, %vm2720
  %vm3337 = vmand %vm1621, %vm2721
  %vm3338 = vmand %vm1622, %vm2722
  %vm3339 = vmand %vm1623, %vm2723
  %vm3340 = vmand %vm1624, %vm2724
  %vm3341 = vmand %vm1625, %vm2725
  %vm3342 = vmand %vm1626, %vm2726
  %vm3343 = vmand %vm1627, %vm2727
  %vm3344 = vmand %vm1628, %vm2728
  %vm3345 = vmand %vm1629, %vm2729
  %vm3346 = vmand %vm1630, %vm2730
  %vm3347 = vmand %vm1631, %vm2731
  %vm3348 = vmand %vm1632, %vm2732
  %vm3349 = vmand %vm1633, %vm2733
  %vm3350 = vmand %vm3334, %vm2750
  %vm3351 = vmand %vm3335, %vm2751
  %vm3352 = vmand %vm3336, %vm2752
  %vm3353 = vmand %vm3337, %vm2753
  %vm3354 = vmand %vm3338, %vm2754
  %vm3355 = vmand %vm3339, %vm2755
  %vm3356 = vmand %vm3340, %vm2756
  %vm3357 = vmand %vm3341, %vm2757
  %vm3358 = vmand %vm3342, %vm2758
  %vm3359 = vmand %vm3343, %vm2759
  %vm3360 = vmand %vm3344, %vm2760
  %vm3361 = vmand %vm3345, %vm2761
  %vm3362 = vmand %vm3346, %vm2762
  %vm3363 = vmand %vm3347, %vm2763
  %vm3364 = vmand %vm3348, %vm2764
  %vm3365 = vmand %vm3349, %vm2765
  %vm3366 = vmpackc.low %vm3351, %vm3350
  %vm3367 = vmpackc.low %vm3353, %vm3352
  %vm3368 = vmpackc.low %vm3355, %vm3354
  %vm3369 = vmpackc.low %vm3357, %vm3356
  %vm3370 = vmpackc.low %vm3359, %vm3358
  %vm3371 = vmpackc.low %vm3361, %vm3360
  %vm3372 = vmpackc.low %vm3363, %vm3362
  %vm3373 = vmpackc.low %vm3365, %vm3364
  %v3374 = vsel %vm3366, 65537, 0
  %v3375 = vsel %vm3367, 65537, 0
  %v3376 = vsel %vm3368, 65537, 0
  %v3377 = vsel %vm3369, 65537, 0
  %v3378 = vsel %vm3370, 65537, 0
  %v3379 = vsel %vm3371, 65537, 0
  %v3380 = vsel %vm3372, 65537, 0
  %v3381 = vsel %vm3373, 65537, 0
  %v3382 = vlaneseq
  %v3383 = vshrl.u32 %v3382, 7
  %v3384 = vsub.s32 0, %v3383
  %v3385 = vrot.slane %v3374, %v3384
  %v3386 = vlaneseq
  %v3387 = vshrl.u32 %v3386, 7
  %v3388 = vsub.s32 4, %v3387
  %v3389 = vrot.slane %v3374, %v3388
  %v3390 = vlaneseq
  %v3391 = vshrl.u32 %v3390, 7
  %v3392 = vsub.s32 0, %v3391
  %v3393 = vrot.slane %v3375, %v3392
  %v3394 = vlaneseq
  %v3395 = vshrl.u32 %v3394, 7
  %v3396 = vsub.s32 4, %v3395
  %v3397 = vrot.slane %v3375, %v3396
  %v3398 = vlaneseq
  %v3399 = vshrl.u32 %v3398, 7
  %v3400 = vsub.s32 0, %v3399
  %v3401 = vrot.slane %v3376, %v3400
  %v3402 = vlaneseq
  %v3403 = vshrl.u32 %v3402, 7
  %v3404 = vsub.s32 4, %v3403
  %v3405 = vrot.slane %v3376, %v3404
  %v3406 = vlaneseq
  %v3407 = vshrl.u32 %v3406, 7
  %v3408 = vsub.s32 0, %v3407
  %v3409 = vrot.slane %v3377, %v3408
  %v3410 = vlaneseq
  %v3411 = vshrl.u32 %v3410, 7
  %v3412 = vsub.s32 4, %v3411
  %v3413 = vrot.slane %v3377, %v3412
  %v3414 = vlaneseq
  %v3415 = vshrl.u32 %v3414, 7
  %v3416 = vsub.s32 0, %v3415
  %v3417 = vrot.slane %v3378, %v3416
  %v3418 = vlaneseq
  %v3419 = vshrl.u32 %v3418, 7
  %v3420 = vsub.s32 4, %v3419
  %v3421 = vrot.slane %v3378, %v3420
  %v3422 = vlaneseq
  %v3423 = vshrl.u32 %v3422, 7
  %v3424 = vsub.s32 0, %v3423
  %v3425 = vrot.slane %v3379, %v3424
  %v3426 = vlaneseq
  %v3427 = vshrl.u32 %v3426, 7
  %v3428 = vsub.s32 4, %v3427
  %v3429 = vrot.slane %v3379, %v3428
  %v3430 = vlaneseq
  %v3431 = vshrl.u32 %v3430, 7
  %v3432 = vsub.s32 0, %v3431
  %v3433 = vrot.slane %v3380, %v3432
  %v3434 = vlaneseq
  %v3435 = vshrl.u32 %v3434, 7
  %v3436 = vsub.s32 4, %v3435
  %v3437 = vrot.slane %v3380, %v3436
  %v3438 = vlaneseq
  %v3439 = vshrl.u32 %v3438, 7
  %v3440 = vsub.s32 0, %v3439
  %v3441 = vrot.slane %v3381, %v3440
  %v3442 = vlaneseq
  %v3443 = vshrl.u32 %v3442, 7
  %v3444 = vsub.s32 4, %v3443
  %v3445 = vrot.slane %v3381, %v3444
  %vm3446 = vcmp.ne.s16.totalorder %v3385, 0
  %vm3447 = vcmp.ne.s16.totalorder %v3389, 0
  %vm3448 = vcmp.ne.s16.totalorder %v3393, 0
  %vm3449 = vcmp.ne.s16.totalorder %v3397, 0
  %vm3450 = vcmp.ne.s16.totalorder %v3401, 0
  %vm3451 = vcmp.ne.s16.totalorder %v3405, 0
  %vm3452 = vcmp.ne.s16.totalorder %v3409, 0
  %vm3453 = vcmp.ne.s16.totalorder %v3413, 0
  %vm3454 = vcmp.ne.s16.totalorder %v3417, 0
  %vm3455 = vcmp.ne.s16.totalorder %v3421, 0
  %vm3456 = vcmp.ne.s16.totalorder %v3425, 0
  %vm3457 = vcmp.ne.s16.totalorder %v3429, 0
  %vm3458 = vcmp.ne.s16.totalorder %v3433, 0
  %vm3459 = vcmp.ne.s16.totalorder %v3437, 0
  %vm3460 = vcmp.ne.s16.totalorder %v3441, 0
  %vm3461 = vcmp.ne.s16.totalorder %v3445, 0
  %v3462 = vsel %vm3446, %v3267, 0
  %v3463 = vsel %vm3447, %v3268, 0
  %v3464 = vsel %vm3448, %v3269, 0
  %v3465 = vsel %vm3449, %v3270, 0
  %v3466 = vsel %vm3450, %v3271, 0
  %v3467 = vsel %vm3451, %v3272, 0
  %v3468 = vsel %vm3452, %v3273, 0
  %v3469 = vsel %vm3453, %v3274, 0
  %v3470 = vsel %vm3454, %v3275, 0
  %v3471 = vsel %vm3455, %v3276, 0
  %v3472 = vsel %vm3456, %v3277, 0
  %v3473 = vsel %vm3457, %v3278, 0
  %v3474 = vsel %vm3458, %v3279, 0
  %v3475 = vsel %vm3459, %v3280, 0
  %v3476 = vsel %vm3460, %v3281, 0
  %v3477 = vsel %vm3461, %v3329, 0
  %v3478 = vsel %vm3446, %v3282, 0
  %v3479 = vsel %vm3447, %v3283, 0
  %v3480 = vsel %vm3448, %v3284, 0
  %v3481 = vsel %vm3449, %v3285, 0
  %v3482 = vsel %vm3450, %v3286, 0
  %v3483 = vsel %vm3451, %v3287, 0
  %v3484 = vsel %vm3452, %v3288, 0
  %v3485 = vsel %vm3453, %v3289, 0
  %v3486 = vsel %vm3454, %v3290, 0
  %v3487 = vsel %vm3455, %v3291, 0
  %v3488 = vsel %vm3456, %v3292, 0
  %v3489 = vsel %vm3457, %v3293, 0
  %v3490 = vsel %vm3458, %v3294, 0
  %v3491 = vsel %vm3459, %v3295, 0
  %v3492 = vsel %vm3460, %v3296, 0
  %v3493 = vsel %vm3461, %v3332, 0
  %v3494 = vld [vmem:[%s3] sm:$0xff]
  %v3495 = vld [vmem:[%s3 + $0x8] sm:$0xf]
  %v3496 = vld [vmem:[%s3 + $0xc] sm:$0x33]
  %v3497 = vld [vmem:[%s3 + $0x14] sm:$0x3]
  %v3502 = vunpack.c.l.b16 %v3494
  %v3503 = vunpack.c.h.b16 %v3494
  %v3504 = vunpack.c.l.b16 %v3495
  %v3505 = vunpack.c.l.b16 %v3496
  %v3506 = vunpack.c.h.b16 %v3496
  %v3507 = vunpack.c.l.b16 %v3497
  %v3508 = vpack.c.b16 %v3505, %v3502
  %v3509 = vpack.c.b16 %v3506, %v3503
  %v3510 = vpack.c.b16 %v3507, %v3504
  %v3514 = vsel %vm1223, %v3510, 0
  %3516 = vmatprep.subr.bf16.mxu0 %v1067
  %3517 = vmatpush1.bf16.msra.mxu0 %v1066
  %3518 = vmatprep.subr.bf16.mxu0 %v1083
  %3519 = vmatpush1.bf16.msra.mxu0 %v1082
  %3520 = vmatprep.subr.bf16.mxu0 %v1407
  %3521 = vmatpush1.bf16.msra.mxu0 %v1406
  %3522 = vmatprep.subr.bf16.mxu0 %v1423
  %3523 = vmatpush1.bf16.msra.mxu0 %v1422
  %3524 = vmatprep.subr.bf16.mxu0 %v1763
  %3525 = vmatpush1.bf16.msra.mxu0 %v1762
  %3526 = vmatprep.subr.bf16.mxu0 %v1779
  %3527 = vmatpush1.bf16.msra.mxu0 %v1778
  %3528 = vmatprep.subr.bf16.mxu0 %v2087
  %3529 = vmatpush1.bf16.msra.mxu0 %v2086
  %3530 = vmatprep.subr.bf16.mxu0 %v2103
  %3531 = vmatpush1.bf16.msra.mxu0 %v2102
  %3532 = vmatprep.subr.bf16.mxu0 %v2247
  %3533 = vmatpush1.bf16.msra.mxu0 %v2246
  %3534 = vmatprep.subr.bf16.mxu0 %v2263
  %3535 = vmatpush1.bf16.msra.mxu0 %v2262
  %3536 = vmatprep.subr.bf16.mxu0 %v2539
  %3537 = vmatpush1.bf16.msra.mxu0 %v2538
  %3538 = vmatprep.subr.bf16.mxu0 %v2555
  %3539 = vmatpush1.bf16.msra.mxu0 %v2554
  %3540 = vmatprep.subr.bf16.mxu0 %v2879
  %3541 = vmatpush1.bf16.msra.mxu0 %v2878
  %3542 = vmatprep.subr.bf16.mxu0 %v2895
  %3543 = vmatpush1.bf16.msra.mxu0 %v2894
  %3544 = vmatprep.subr.bf16.mxu0 %v3171
  %3545 = vmatpush1.bf16.msra.mxu0 %v3170
  %3546 = vmatprep.subr.bf16.mxu0 %v3187
  %3547 = vmatpush1.bf16.msra.mxu0 %v3186
  %3548 = vmatprep.mubr.bf16.mxu0 %v3509
  %3549 = vmatmul.mubr.bf16.gmra.mrb[0].mxu0 %v3508
  %v3550 = vpop.f32.mrb[0].mxu0
  %v3551 = vadd.f32 0.0, %v3550
  %v3552 = vpop.f32.mrb[0].mxu0
  %v3553 = vadd.f32 0.0, %v3552
  %v3554 = vpop.f32.mrb[0].mxu0
  %v3555 = vadd.f32 0.0, %v3554
  %v3556 = vpop.f32.mrb[0].mxu0
  %v3557 = vadd.f32 0.0, %v3556
  %3558 = vdwg.mxu0
  %3559 = vmatprep.subr.bf16.mxu0 %v3463
  %3560 = vmatpush1.bf16.msra.mxu0 %v3462
  %3561 = vmatprep.subr.bf16.mxu0 %v3479
  %3562 = vmatpush1.bf16.msra.mxu0 %v3478
  %3563 = vmatprep.subr.bf16.mxu0 0
  %3564 = vmatpush1.bf16.msra.mxu0 0
  %3565 = vmatprep.subr.bf16.mxu0 0
  %3566 = vmatpush1.bf16.msra.mxu0 0
  %3567 = vmatprep.subr.bf16.mxu0 0
  %3568 = vmatpush1.bf16.msra.mxu0 0
  %3569 = vmatprep.subr.bf16.mxu0 0
  %3570 = vmatpush1.bf16.msra.mxu0 0
  %3571 = vmatprep.subr.bf16.mxu0 0
  %3572 = vmatpush1.bf16.msra.mxu0 0
  %3573 = vmatprep.subr.bf16.mxu0 0
  %3574 = vmatpush1.bf16.msra.mxu0 0
  %3575 = vmatprep.subr.bf16.mxu0 0
  %3576 = vmatpush1.bf16.msra.mxu0 0
  %3577 = vmatprep.subr.bf16.mxu0 0
  %3578 = vmatpush1.bf16.msra.mxu0 0
  %3579 = vmatprep.subr.bf16.mxu0 0
  %3580 = vmatpush1.bf16.msra.mxu0 0
  %3581 = vmatprep.subr.bf16.mxu0 0
  %3582 = vmatpush1.bf16.msra.mxu0 0
  %3583 = vmatprep.subr.bf16.mxu0 0
  %3584 = vmatpush1.bf16.msra.mxu0 0
  %3585 = vmatprep.subr.bf16.mxu0 0
  %3586 = vmatpush1.bf16.msra.mxu0 0
  %3587 = vmatprep.subr.bf16.mxu0 0
  %3588 = vmatpush1.bf16.msra.mxu0 0
  %3589 = vmatprep.subr.bf16.mxu0 0
  %3590 = vmatpush1.bf16.msra.mxu0 0
  %3591 = vmatprep.mubr.bf16.mxu0 0
  %3592 = vmatmul.mubr.bf16.gmra.mrb[0].mxu0 %v3514
  %v3593 = vpop.f32.mrb[0].mxu0
  %v3594 = vadd.f32 %v3551, %v3593
  %v3595 = vpop.f32.mrb[0].mxu0
  %v3596 = vadd.f32 %v3553, %v3595
  %v3597 = vpop.f32.mrb[0].mxu0
  %v3598 = vadd.f32 %v3555, %v3597
  %v3599 = vpop.f32.mrb[0].mxu0
  %v3600 = vadd.f32 %v3557, %v3599
  %3601 = vdwg.mxu0
  %3602 = vmatprep.subr.bf16.mxu0 %v1069
  %3603 = vmatpush1.bf16.msra.mxu0 %v1068
  %3604 = vmatprep.subr.bf16.mxu0 %v1085
  %3605 = vmatpush1.bf16.msra.mxu0 %v1084
  %3606 = vmatprep.subr.bf16.mxu0 %v1409
  %3607 = vmatpush1.bf16.msra.mxu0 %v1408
  %3608 = vmatprep.subr.bf16.mxu0 %v1425
  %3609 = vmatpush1.bf16.msra.mxu0 %v1424
  %3610 = vmatprep.subr.bf16.mxu0 %v1765
  %3611 = vmatpush1.bf16.msra.mxu0 %v1764
  %3612 = vmatprep.subr.bf16.mxu0 %v1781
  %3613 = vmatpush1.bf16.msra.mxu0 %v1780
  %3614 = vmatprep.subr.bf16.mxu0 %v2089
  %3615 = vmatpush1.bf16.msra.mxu0 %v2088
  %3616 = vmatprep.subr.bf16.mxu0 %v2105
  %3617 = vmatpush1.bf16.msra.mxu0 %v2104
  %3618 = vmatprep.subr.bf16.mxu0 %v2249
  %3619 = vmatpush1.bf16.msra.mxu0 %v2248
  %3620 = vmatprep.subr.bf16.mxu0 %v2265
  %3621 = vmatpush1.bf16.msra.mxu0 %v2264
  %3622 = vmatprep.subr.bf16.mxu0 %v2541
  %3623 = vmatpush1.bf16.msra.mxu0 %v2540
  %3624 = vmatprep.subr.bf16.mxu0 %v2557
  %3625 = vmatpush1.bf16.msra.mxu0 %v2556
  %3626 = vmatprep.subr.bf16.mxu0 %v2881
  %3627 = vmatpush1.bf16.msra.mxu0 %v2880
  %3628 = vmatprep.subr.bf16.mxu0 %v2897
  %3629 = vmatpush1.bf16.msra.mxu0 %v2896
  %3630 = vmatprep.subr.bf16.mxu0 %v3173
  %3631 = vmatpush1.bf16.msra.mxu0 %v3172
  %3632 = vmatprep.subr.bf16.mxu0 %v3189
  %3633 = vmatpush1.bf16.msra.mxu0 %v3188
  %3634 = vmatprep.mubr.bf16.mxu0 %v3509
  %3635 = vmatmul.mubr.bf16.gmra.mrb[0].mxu0 %v3508
  %v3636 = vpop.f32.mrb[0].mxu0
  %v3637 = vadd.f32 0.0, %v3636
  %v3638 = vpop.f32.mrb[0].mxu0
  %v3639 = vadd.f32 0.0, %v3638
  %v3640 = vpop.f32.mrb[0].mxu0
  %v3641 = vadd.f32 0.0, %v3640
  %v3642 = vpop.f32.mrb[0].mxu0
  %v3643 = vadd.f32 0.0, %v3642
  %3644 = vdwg.mxu0
  %3645 = vmatprep.subr.bf16.mxu0 %v3465
  %3646 = vmatpush1.bf16.msra.mxu0 %v3464
  %3647 = vmatprep.subr.bf16.mxu0 %v3481
  %3648 = vmatpush1.bf16.msra.mxu0 %v3480
  %3649 = vmatprep.subr.bf16.mxu0 0
  %3650 = vmatpush1.bf16.msra.mxu0 0
  %3651 = vmatprep.subr.bf16.mxu0 0
  %3652 = vmatpush1.bf16.msra.mxu0 0
  %3653 = vmatprep.subr.bf16.mxu0 0
  %3654 = vmatpush1.bf16.msra.mxu0 0
  %3655 = vmatprep.subr.bf16.mxu0 0
  %3656 = vmatpush1.bf16.msra.mxu0 0
  %3657 = vmatprep.subr.bf16.mxu0 0
  %3658 = vmatpush1.bf16.msra.mxu0 0
  %3659 = vmatprep.subr.bf16.mxu0 0
  %3660 = vmatpush1.bf16.msra.mxu0 0
  %3661 = vmatprep.subr.bf16.mxu0 0
  %3662 = vmatpush1.bf16.msra.mxu0 0
  %3663 = vmatprep.subr.bf16.mxu0 0
  %3664 = vmatpush1.bf16.msra.mxu0 0
  %3665 = vmatprep.subr.bf16.mxu0 0
  %3666 = vmatpush1.bf16.msra.mxu0 0
  %3667 = vmatprep.subr.bf16.mxu0 0
  %3668 = vmatpush1.bf16.msra.mxu0 0
  %3669 = vmatprep.subr.bf16.mxu0 0
  %3670 = vmatpush1.bf16.msra.mxu0 0
  %3671 = vmatprep.subr.bf16.mxu0 0
  %3672 = vmatpush1.bf16.msra.mxu0 0
  %3673 = vmatprep.subr.bf16.mxu0 0
  %3674 = vmatpush1.bf16.msra.mxu0 0
  %3675 = vmatprep.subr.bf16.mxu0 0
  %3676 = vmatpush1.bf16.msra.mxu0 0
  %3677 = vmatprep.mubr.bf16.mxu0 0
  %3678 = vmatmul.mubr.bf16.gmra.mrb[0].mxu0 %v3514
  %v3679 = vpop.f32.mrb[0].mxu0
  %v3680 = vadd.f32 %v3637, %v3679
  %v3681 = vpop.f32.mrb[0].mxu0
  %v3682 = vadd.f32 %v3639, %v3681
  %v3683 = vpop.f32.mrb[0].mxu0
  %v3684 = vadd.f32 %v3641, %v3683
  %v3685 = vpop.f32.mrb[0].mxu0
  %v3686 = vadd.f32 %v3643, %v3685
  %3687 = vdwg.mxu0
  %3688 = vmatprep.subr.bf16.mxu0 %v1071
  %3689 = vmatpush1.bf16.msra.mxu0 %v1070
  %3690 = vmatprep.subr.bf16.mxu0 %v1087
  %3691 = vmatpush1.bf16.msra.mxu0 %v1086
  %3692 = vmatprep.subr.bf16.mxu0 %v1411
  %3693 = vmatpush1.bf16.msra.mxu0 %v1410
  %3694 = vmatprep.subr.bf16.mxu0 %v1427
  %3695 = vmatpush1.bf16.msra.mxu0 %v1426
  %3696 = vmatprep.subr.bf16.mxu0 %v1767
  %3697 = vmatpush1.bf16.msra.mxu0 %v1766
  %3698 = vmatprep.subr.bf16.mxu0 %v1783
  %3699 = vmatpush1.bf16.msra.mxu0 %v1782
  %3700 = vmatprep.subr.bf16.mxu0 %v2091
  %3701 = vmatpush1.bf16.msra.mxu0 %v2090
  %3702 = vmatprep.subr.bf16.mxu0 %v2107
  %3703 = vmatpush1.bf16.msra.mxu0 %v2106
  %3704 = vmatprep.subr.bf16.mxu0 %v2251
  %3705 = vmatpush1.bf16.msra.mxu0 %v2250
  %3706 = vmatprep.subr.bf16.mxu0 %v2267
  %3707 = vmatpush1.bf16.msra.mxu0 %v2266
  %3708 = vmatprep.subr.bf16.mxu0 %v2543
  %3709 = vmatpush1.bf16.msra.mxu0 %v2542
  %3710 = vmatprep.subr.bf16.mxu0 %v2559
  %3711 = vmatpush1.bf16.msra.mxu0 %v2558
  %3712 = vmatprep.subr.bf16.mxu0 %v2883
  %3713 = vmatpush1.bf16.msra.mxu0 %v2882
  %3714 = vmatprep.subr.bf16.mxu0 %v2899
  %3715 = vmatpush1.bf16.msra.mxu0 %v2898
  %3716 = vmatprep.subr.bf16.mxu0 %v3175
  %3717 = vmatpush1.bf16.msra.mxu0 %v3174
  %3718 = vmatprep.subr.bf16.mxu0 %v3191
  %3719 = vmatpush1.bf16.msra.mxu0 %v3190
  %3720 = vmatprep.mubr.bf16.mxu0 %v3509
  %3721 = vmatmul.mubr.bf16.gmra.mrb[0].mxu0 %v3508
  %v3722 = vpop.f32.mrb[0].mxu0
  %v3723 = vadd.f32 0.0, %v3722
  %v3724 = vpop.f32.mrb[0].mxu0
  %v3725 = vadd.f32 0.0, %v3724
  %v3726 = vpop.f32.mrb[0].mxu0
  %v3727 = vadd.f32 0.0, %v3726
  %v3728 = vpop.f32.mrb[0].mxu0
  %v3729 = vadd.f32 0.0, %v3728
  %3730 = vdwg.mxu0
  %3731 = vmatprep.subr.bf16.mxu0 %v3467
  %3732 = vmatpush1.bf16.msra.mxu0 %v3466
  %3733 = vmatprep.subr.bf16.mxu0 %v3483
  %3734 = vmatpush1.bf16.msra.mxu0 %v3482
  %3735 = vmatprep.subr.bf16.mxu0 0
  %3736 = vmatpush1.bf16.msra.mxu0 0
  %3737 = vmatprep.subr.bf16.mxu0 0
  %3738 = vmatpush1.bf16.msra.mxu0 0
  %3739 = vmatprep.subr.bf16.mxu0 0
  %3740 = vmatpush1.bf16.msra.mxu0 0
  %3741 = vmatprep.subr.bf16.mxu0 0
  %3742 = vmatpush1.bf16.msra.mxu0 0
  %3743 = vmatprep.subr.bf16.mxu0 0
  %3744 = vmatpush1.bf16.msra.mxu0 0
  %3745 = vmatprep.subr.bf16.mxu0 0
  %3746 = vmatpush1.bf16.msra.mxu0 0
  %3747 = vmatprep.subr.bf16.mxu0 0
  %3748 = vmatpush1.bf16.msra.mxu0 0
  %3749 = vmatprep.subr.bf16.mxu0 0
  %3750 = vmatpush1.bf16.msra.mxu0 0
  %3751 = vmatprep.subr.bf16.mxu0 0
  %3752 = vmatpush1.bf16.msra.mxu0 0
  %3753 = vmatprep.subr.bf16.mxu0 0
  %3754 = vmatpush1.bf16.msra.mxu0 0
  %3755 = vmatprep.subr.bf16.mxu0 0
  %3756 = vmatpush1.bf16.msra.mxu0 0
  %3757 = vmatprep.subr.bf16.mxu0 0
  %3758 = vmatpush1.bf16.msra.mxu0 0
  %3759 = vmatprep.subr.bf16.mxu0 0
  %3760 = vmatpush1.bf16.msra.mxu0 0
  %3761 = vmatprep.subr.bf16.mxu0 0
  %3762 = vmatpush1.bf16.msra.mxu0 0
  %3763 = vmatprep.mubr.bf16.mxu0 0
  %3764 = vmatmul.mubr.bf16.gmra.mrb[0].mxu0 %v3514
  %v3765 = vpop.f32.mrb[0].mxu0
  %v3766 = vadd.f32 %v3723, %v3765
  %v3767 = vpop.f32.mrb[0].mxu0
  %v3768 = vadd.f32 %v3725, %v3767
  %v3769 = vpop.f32.mrb[0].mxu0
  %v3770 = vadd.f32 %v3727, %v3769
  %v3771 = vpop.f32.mrb[0].mxu0
  %v3772 = vadd.f32 %v3729, %v3771
  %3773 = vdwg.mxu0
  %3774 = vmatprep.subr.bf16.mxu0 %v1073
  %3775 = vmatpush1.bf16.msra.mxu0 %v1072
  %3776 = vmatprep.subr.bf16.mxu0 %v1089
  %3777 = vmatpush1.bf16.msra.mxu0 %v1088
  %3778 = vmatprep.subr.bf16.mxu0 %v1413
  %3779 = vmatpush1.bf16.msra.mxu0 %v1412
  %3780 = vmatprep.subr.bf16.mxu0 %v1429
  %3781 = vmatpush1.bf16.msra.mxu0 %v1428
  %3782 = vmatprep.subr.bf16.mxu0 %v1769
  %3783 = vmatpush1.bf16.msra.mxu0 %v1768
  %3784 = vmatprep.subr.bf16.mxu0 %v1785
  %3785 = vmatpush1.bf16.msra.mxu0 %v1784
  %3786 = vmatprep.subr.bf16.mxu0 %v2093
  %3787 = vmatpush1.bf16.msra.mxu0 %v2092
  %3788 = vmatprep.subr.bf16.mxu0 %v2109
  %3789 = vmatpush1.bf16.msra.mxu0 %v2108
  %3790 = vmatprep.subr.bf16.mxu0 %v2253
  %3791 = vmatpush1.bf16.msra.mxu0 %v2252
  %3792 = vmatprep.subr.bf16.mxu0 %v2269
  %3793 = vmatpush1.bf16.msra.mxu0 %v2268
  %3794 = vmatprep.subr.bf16.mxu0 %v2545
  %3795 = vmatpush1.bf16.msra.mxu0 %v2544
  %3796 = vmatprep.subr.bf16.mxu0 %v2561
  %3797 = vmatpush1.bf16.msra.mxu0 %v2560
  %3798 = vmatprep.subr.bf16.mxu0 %v2885
  %3799 = vmatpush1.bf16.msra.mxu0 %v2884
  %3800 = vmatprep.subr.bf16.mxu0 %v2901
  %3801 = vmatpush1.bf16.msra.mxu0 %v2900
  %3802 = vmatprep.subr.bf16.mxu0 %v3177
  %3803 = vmatpush1.bf16.msra.mxu0 %v3176
  %3804 = vmatprep.subr.bf16.mxu0 %v3193
  %3805 = vmatpush1.bf16.msra.mxu0 %v3192
  %3806 = vmatprep.mubr.bf16.mxu0 %v3509
  %3807 = vmatmul.mubr.bf16.gmra.mrb[0].mxu0 %v3508
  %v3808 = vpop.f32.mrb[0].mxu0
  %v3809 = vadd.f32 0.0, %v3808
  %v3810 = vpop.f32.mrb[0].mxu0
  %v3811 = vadd.f32 0.0, %v3810
  %v3812 = vpop.f32.mrb[0].mxu0
  %v3813 = vadd.f32 0.0, %v3812
  %v3814 = vpop.f32.mrb[0].mxu0
  %v3815 = vadd.f32 0.0, %v3814
  %3816 = vdwg.mxu0
  %3817 = vmatprep.subr.bf16.mxu0 %v3469
  %3818 = vmatpush1.bf16.msra.mxu0 %v3468
  %3819 = vmatprep.subr.bf16.mxu0 %v3485
  %3820 = vmatpush1.bf16.msra.mxu0 %v3484
  %3821 = vmatprep.subr.bf16.mxu0 0
  %3822 = vmatpush1.bf16.msra.mxu0 0
  %3823 = vmatprep.subr.bf16.mxu0 0
  %3824 = vmatpush1.bf16.msra.mxu0 0
  %3825 = vmatprep.subr.bf16.mxu0 0
  %3826 = vmatpush1.bf16.msra.mxu0 0
  %3827 = vmatprep.subr.bf16.mxu0 0
  %3828 = vmatpush1.bf16.msra.mxu0 0
  %3829 = vmatprep.subr.bf16.mxu0 0
  %3830 = vmatpush1.bf16.msra.mxu0 0
  %3831 = vmatprep.subr.bf16.mxu0 0
  %3832 = vmatpush1.bf16.msra.mxu0 0
  %3833 = vmatprep.subr.bf16.mxu0 0
  %3834 = vmatpush1.bf16.msra.mxu0 0
  %3835 = vmatprep.subr.bf16.mxu0 0
  %3836 = vmatpush1.bf16.msra.mxu0 0
  %3837 = vmatprep.subr.bf16.mxu0 0
  %3838 = vmatpush1.bf16.msra.mxu0 0
  %3839 = vmatprep.subr.bf16.mxu0 0
  %3840 = vmatpush1.bf16.msra.mxu0 0
  %3841 = vmatprep.subr.bf16.mxu0 0
  %3842 = vmatpush1.bf16.msra.mxu0 0
  %3843 = vmatprep.subr.bf16.mxu0 0
  %3844 = vmatpush1.bf16.msra.mxu0 0
  %3845 = vmatprep.subr.bf16.mxu0 0
  %3846 = vmatpush1.bf16.msra.mxu0 0
  %3847 = vmatprep.subr.bf16.mxu0 0
  %3848 = vmatpush1.bf16.msra.mxu0 0
  %3849 = vmatprep.mubr.bf16.mxu0 0
  %3850 = vmatmul.mubr.bf16.gmra.mrb[0].mxu0 %v3514
  %v3851 = vpop.f32.mrb[0].mxu0
  %v3852 = vadd.f32 %v3809, %v3851
  %v3853 = vpop.f32.mrb[0].mxu0
  %v3854 = vadd.f32 %v3811, %v3853
  %v3855 = vpop.f32.mrb[0].mxu0
  %v3856 = vadd.f32 %v3813, %v3855
  %v3857 = vpop.f32.mrb[0].mxu0
  %v3858 = vadd.f32 %v3815, %v3857
  %3859 = vdwg.mxu0
  %3860 = vmatprep.subr.bf16.mxu0 %v1075
  %3861 = vmatpush1.bf16.msra.mxu0 %v1074
  %3862 = vmatprep.subr.bf16.mxu0 %v1091
  %3863 = vmatpush1.bf16.msra.mxu0 %v1090
  %3864 = vmatprep.subr.bf16.mxu0 %v1415
  %3865 = vmatpush1.bf16.msra.mxu0 %v1414
  %3866 = vmatprep.subr.bf16.mxu0 %v1431
  %3867 = vmatpush1.bf16.msra.mxu0 %v1430
  %3868 = vmatprep.subr.bf16.mxu0 %v1771
  %3869 = vmatpush1.bf16.msra.mxu0 %v1770
  %3870 = vmatprep.subr.bf16.mxu0 %v1787
  %3871 = vmatpush1.bf16.msra.mxu0 %v1786
  %3872 = vmatprep.subr.bf16.mxu0 %v2095
  %3873 = vmatpush1.bf16.msra.mxu0 %v2094
  %3874 = vmatprep.subr.bf16.mxu0 %v2111
  %3875 = vmatpush1.bf16.msra.mxu0 %v2110
  %3876 = vmatprep.subr.bf16.mxu0 %v2255
  %3877 = vmatpush1.bf16.msra.mxu0 %v2254
  %3878 = vmatprep.subr.bf16.mxu0 %v2271
  %3879 = vmatpush1.bf16.msra.mxu0 %v2270
  %3880 = vmatprep.subr.bf16.mxu0 %v2547
  %3881 = vmatpush1.bf16.msra.mxu0 %v2546
  %3882 = vmatprep.subr.bf16.mxu0 %v2563
  %3883 = vmatpush1.bf16.msra.mxu0 %v2562
  %3884 = vmatprep.subr.bf16.mxu0 %v2887
  %3885 = vmatpush1.bf16.msra.mxu0 %v2886
  %3886 = vmatprep.subr.bf16.mxu0 %v2903
  %3887 = vmatpush1.bf16.msra.mxu0 %v2902
  %3888 = vmatprep.subr.bf16.mxu0 %v3179
  %3889 = vmatpush1.bf16.msra.mxu0 %v3178
  %3890 = vmatprep.subr.bf16.mxu0 %v3195
  %3891 = vmatpush1.bf16.msra.mxu0 %v3194
  %3892 = vmatprep.mubr.bf16.mxu0 %v3509
  %3893 = vmatmul.mubr.bf16.gmra.mrb[0].mxu0 %v3508
  %v3894 = vpop.f32.mrb[0].mxu0
  %v3895 = vadd.f32 0.0, %v3894
  %v3896 = vpop.f32.mrb[0].mxu0
  %v3897 = vadd.f32 0.0, %v3896
  %v3898 = vpop.f32.mrb[0].mxu0
  %v3899 = vadd.f32 0.0, %v3898
  %v3900 = vpop.f32.mrb[0].mxu0
  %v3901 = vadd.f32 0.0, %v3900
  %3902 = vdwg.mxu0
  %3903 = vmatprep.subr.bf16.mxu0 %v3471
  %3904 = vmatpush1.bf16.msra.mxu0 %v3470
  %3905 = vmatprep.subr.bf16.mxu0 %v3487
  %3906 = vmatpush1.bf16.msra.mxu0 %v3486
  %3907 = vmatprep.subr.bf16.mxu0 0
  %3908 = vmatpush1.bf16.msra.mxu0 0
  %3909 = vmatprep.subr.bf16.mxu0 0
  %3910 = vmatpush1.bf16.msra.mxu0 0
  %3911 = vmatprep.subr.bf16.mxu0 0
  %3912 = vmatpush1.bf16.msra.mxu0 0
  %3913 = vmatprep.subr.bf16.mxu0 0
  %3914 = vmatpush1.bf16.msra.mxu0 0
  %3915 = vmatprep.subr.bf16.mxu0 0
  %3916 = vmatpush1.bf16.msra.mxu0 0
  %3917 = vmatprep.subr.bf16.mxu0 0
  %3918 = vmatpush1.bf16.msra.mxu0 0
  %3919 = vmatprep.subr.bf16.mxu0 0
  %3920 = vmatpush1.bf16.msra.mxu0 0
  %3921 = vmatprep.subr.bf16.mxu0 0
  %3922 = vmatpush1.bf16.msra.mxu0 0
  %3923 = vmatprep.subr.bf16.mxu0 0
  %3924 = vmatpush1.bf16.msra.mxu0 0
  %3925 = vmatprep.subr.bf16.mxu0 0
  %3926 = vmatpush1.bf16.msra.mxu0 0
  %3927 = vmatprep.subr.bf16.mxu0 0
  %3928 = vmatpush1.bf16.msra.mxu0 0
  %3929 = vmatprep.subr.bf16.mxu0 0
  %3930 = vmatpush1.bf16.msra.mxu0 0
  %3931 = vmatprep.subr.bf16.mxu0 0
  %3932 = vmatpush1.bf16.msra.mxu0 0
  %3933 = vmatprep.subr.bf16.mxu0 0
  %3934 = vmatpush1.bf16.msra.mxu0 0
  %3935 = vmatprep.mubr.bf16.mxu0 0
  %3936 = vmatmul.mubr.bf16.gmra.mrb[0].mxu0 %v3514
  %v3937 = vpop.f32.mrb[0].mxu0
  %v3938 = vadd.f32 %v3895, %v3937
  %v3939 = vpop.f32.mrb[0].mxu0
  %v3940 = vadd.f32 %v3897, %v3939
  %v3941 = vpop.f32.mrb[0].mxu0
  %v3942 = vadd.f32 %v3899, %v3941
  %v3943 = vpop.f32.mrb[0].mxu0
  %v3944 = vadd.f32 %v3901, %v3943
  %3945 = vdwg.mxu0
  %3946 = vmatprep.subr.bf16.mxu0 %v1077
  %3947 = vmatpush1.bf16.msra.mxu0 %v1076
  %3948 = vmatprep.subr.bf16.mxu0 %v1093
  %3949 = vmatpush1.bf16.msra.mxu0 %v1092
  %3950 = vmatprep.subr.bf16.mxu0 %v1417
  %3951 = vmatpush1.bf16.msra.mxu0 %v1416
  %3952 = vmatprep.subr.bf16.mxu0 %v1433
  %3953 = vmatpush1.bf16.msra.mxu0 %v1432
  %3954 = vmatprep.subr.bf16.mxu0 %v1773
  %3955 = vmatpush1.bf16.msra.mxu0 %v1772
  %3956 = vmatprep.subr.bf16.mxu0 %v1789
  %3957 = vmatpush1.bf16.msra.mxu0 %v1788
  %3958 = vmatprep.subr.bf16.mxu0 %v2097
  %3959 = vmatpush1.bf16.msra.mxu0 %v2096
  %3960 = vmatprep.subr.bf16.mxu0 %v2113
  %3961 = vmatpush1.bf16.msra.mxu0 %v2112
  %3962 = vmatprep.subr.bf16.mxu0 %v2257
  %3963 = vmatpush1.bf16.msra.mxu0 %v2256
  %3964 = vmatprep.subr.bf16.mxu0 %v2273
  %3965 = vmatpush1.bf16.msra.mxu0 %v2272
  %3966 = vmatprep.subr.bf16.mxu0 %v2549
  %3967 = vmatpush1.bf16.msra.mxu0 %v2548
  %3968 = vmatprep.subr.bf16.mxu0 %v2565
  %3969 = vmatpush1.bf16.msra.mxu0 %v2564
  %3970 = vmatprep.subr.bf16.mxu0 %v2889
  %3971 = vmatpush1.bf16.msra.mxu0 %v2888
  %3972 = vmatprep.subr.bf16.mxu0 %v2905
  %3973 = vmatpush1.bf16.msra.mxu0 %v2904
  %3974 = vmatprep.subr.bf16.mxu0 %v3181
  %3975 = vmatpush1.bf16.msra.mxu0 %v3180
  %3976 = vmatprep.subr.bf16.mxu0 %v3197
  %3977 = vmatpush1.bf16.msra.mxu0 %v3196
  %3978 = vmatprep.mubr.bf16.mxu0 %v3509
  %3979 = vmatmul.mubr.bf16.gmra.mrb[0].mxu0 %v3508
  %v3980 = vpop.f32.mrb[0].mxu0
  %v3981 = vadd.f32 0.0, %v3980
  %v3982 = vpop.f32.mrb[0].mxu0
  %v3983 = vadd.f32 0.0, %v3982
  %v3984 = vpop.f32.mrb[0].mxu0
  %v3985 = vadd.f32 0.0, %v3984
  %v3986 = vpop.f32.mrb[0].mxu0
  %v3987 = vadd.f32 0.0, %v3986
  %3988 = vdwg.mxu0
  %3989 = vmatprep.subr.bf16.mxu0 %v3473
  %3990 = vmatpush1.bf16.msra.mxu0 %v3472
  %3991 = vmatprep.subr.bf16.mxu0 %v3489
  %3992 = vmatpush1.bf16.msra.mxu0 %v3488
  %3993 = vmatprep.subr.bf16.mxu0 0
  %3994 = vmatpush1.bf16.msra.mxu0 0
  %3995 = vmatprep.subr.bf16.mxu0 0
  %3996 = vmatpush1.bf16.msra.mxu0 0
  %3997 = vmatprep.subr.bf16.mxu0 0
  %3998 = vmatpush1.bf16.msra.mxu0 0
  %3999 = vmatprep.subr.bf16.mxu0 0
  %4000 = vmatpush1.bf16.msra.mxu0 0
  %4001 = vmatprep.subr.bf16.mxu0 0
  %4002 = vmatpush1.bf16.msra.mxu0 0
  %4003 = vmatprep.subr.bf16.mxu0 0
  %4004 = vmatpush1.bf16.msra.mxu0 0
  %4005 = vmatprep.subr.bf16.mxu0 0
  %4006 = vmatpush1.bf16.msra.mxu0 0
  %4007 = vmatprep.subr.bf16.mxu0 0
  %4008 = vmatpush1.bf16.msra.mxu0 0
  %4009 = vmatprep.subr.bf16.mxu0 0
  %4010 = vmatpush1.bf16.msra.mxu0 0
  %4011 = vmatprep.subr.bf16.mxu0 0
  %4012 = vmatpush1.bf16.msra.mxu0 0
  %4013 = vmatprep.subr.bf16.mxu0 0
  %4014 = vmatpush1.bf16.msra.mxu0 0
  %4015 = vmatprep.subr.bf16.mxu0 0
  %4016 = vmatpush1.bf16.msra.mxu0 0
  %4017 = vmatprep.subr.bf16.mxu0 0
  %4018 = vmatpush1.bf16.msra.mxu0 0
  %4019 = vmatprep.subr.bf16.mxu0 0
  %4020 = vmatpush1.bf16.msra.mxu0 0
  %4021 = vmatprep.mubr.bf16.mxu0 0
  %4022 = vmatmul.mubr.bf16.gmra.mrb[0].mxu0 %v3514
  %v4023 = vpop.f32.mrb[0].mxu0
  %v4024 = vadd.f32 %v3981, %v4023
  %v4025 = vpop.f32.mrb[0].mxu0
  %v4026 = vadd.f32 %v3983, %v4025
  %v4027 = vpop.f32.mrb[0].mxu0
  %v4028 = vadd.f32 %v3985, %v4027
  %v4029 = vpop.f32.mrb[0].mxu0
  %v4030 = vadd.f32 %v3987, %v4029
  %4031 = vdwg.mxu0
  %4032 = vmatprep.subr.bf16.mxu0 %v1079
  %4033 = vmatpush1.bf16.msra.mxu0 %v1078
  %4034 = vmatprep.subr.bf16.mxu0 %v1095
  %4035 = vmatpush1.bf16.msra.mxu0 %v1094
  %4036 = vmatprep.subr.bf16.mxu0 %v1419
  %4037 = vmatpush1.bf16.msra.mxu0 %v1418
  %4038 = vmatprep.subr.bf16.mxu0 %v1435
  %4039 = vmatpush1.bf16.msra.mxu0 %v1434
  %4040 = vmatprep.subr.bf16.mxu0 %v1775
  %4041 = vmatpush1.bf16.msra.mxu0 %v1774
  %4042 = vmatprep.subr.bf16.mxu0 %v1791
  %4043 = vmatpush1.bf16.msra.mxu0 %v1790
  %4044 = vmatprep.subr.bf16.mxu0 %v2099
  %4045 = vmatpush1.bf16.msra.mxu0 %v2098
  %4046 = vmatprep.subr.bf16.mxu0 %v2115
  %4047 = vmatpush1.bf16.msra.mxu0 %v2114
  %4048 = vmatprep.subr.bf16.mxu0 %v2259
  %4049 = vmatpush1.bf16.msra.mxu0 %v2258
  %4050 = vmatprep.subr.bf16.mxu0 %v2275
  %4051 = vmatpush1.bf16.msra.mxu0 %v2274
  %4052 = vmatprep.subr.bf16.mxu0 %v2551
  %4053 = vmatpush1.bf16.msra.mxu0 %v2550
  %4054 = vmatprep.subr.bf16.mxu0 %v2567
  %4055 = vmatpush1.bf16.msra.mxu0 %v2566
  %4056 = vmatprep.subr.bf16.mxu0 %v2891
  %4057 = vmatpush1.bf16.msra.mxu0 %v2890
  %4058 = vmatprep.subr.bf16.mxu0 %v2907
  %4059 = vmatpush1.bf16.msra.mxu0 %v2906
  %4060 = vmatprep.subr.bf16.mxu0 %v3183
  %4061 = vmatpush1.bf16.msra.mxu0 %v3182
  %4062 = vmatprep.subr.bf16.mxu0 %v3199
  %4063 = vmatpush1.bf16.msra.mxu0 %v3198
  %4064 = vmatprep.mubr.bf16.mxu0 %v3509
  %4065 = vmatmul.mubr.bf16.gmra.mrb[0].mxu0 %v3508
  %v4066 = vpop.f32.mrb[0].mxu0
  %v4067 = vadd.f32 0.0, %v4066
  %v4068 = vpop.f32.mrb[0].mxu0
  %v4069 = vadd.f32 0.0, %v4068
  %v4070 = vpop.f32.mrb[0].mxu0
  %v4071 = vadd.f32 0.0, %v4070
  %v4072 = vpop.f32.mrb[0].mxu0
  %v4073 = vadd.f32 0.0, %v4072
  %4074 = vdwg.mxu0
  %4075 = vmatprep.subr.bf16.mxu0 %v3475
  %4076 = vmatpush1.bf16.msra.mxu0 %v3474
  %4077 = vmatprep.subr.bf16.mxu0 %v3491
  %4078 = vmatpush1.bf16.msra.mxu0 %v3490
  %4079 = vmatprep.subr.bf16.mxu0 0
  %4080 = vmatpush1.bf16.msra.mxu0 0
  %4081 = vmatprep.subr.bf16.mxu0 0
  %4082 = vmatpush1.bf16.msra.mxu0 0
  %4083 = vmatprep.subr.bf16.mxu0 0
  %4084 = vmatpush1.bf16.msra.mxu0 0
  %4085 = vmatprep.subr.bf16.mxu0 0
  %4086 = vmatpush1.bf16.msra.mxu0 0
  %4087 = vmatprep.subr.bf16.mxu0 0
  %4088 = vmatpush1.bf16.msra.mxu0 0
  %4089 = vmatprep.subr.bf16.mxu0 0
  %4090 = vmatpush1.bf16.msra.mxu0 0
  %4091 = vmatprep.subr.bf16.mxu0 0
  %4092 = vmatpush1.bf16.msra.mxu0 0
  %4093 = vmatprep.subr.bf16.mxu0 0
  %4094 = vmatpush1.bf16.msra.mxu0 0
  %4095 = vmatprep.subr.bf16.mxu0 0
  %4096 = vmatpush1.bf16.msra.mxu0 0
  %4097 = vmatprep.subr.bf16.mxu0 0
  %4098 = vmatpush1.bf16.msra.mxu0 0
  %4099 = vmatprep.subr.bf16.mxu0 0
  %4100 = vmatpush1.bf16.msra.mxu0 0
  %4101 = vmatprep.subr.bf16.mxu0 0
  %4102 = vmatpush1.bf16.msra.mxu0 0
  %4103 = vmatprep.subr.bf16.mxu0 0
  %4104 = vmatpush1.bf16.msra.mxu0 0
  %4105 = vmatprep.subr.bf16.mxu0 0
  %4106 = vmatpush1.bf16.msra.mxu0 0
  %4107 = vmatprep.mubr.bf16.mxu0 0
  %4108 = vmatmul.mubr.bf16.gmra.mrb[0].mxu0 %v3514
  %v4109 = vpop.f32.mrb[0].mxu0
  %v4110 = vadd.f32 %v4067, %v4109
  %v4111 = vpop.f32.mrb[0].mxu0
  %v4112 = vadd.f32 %v4069, %v4111
  %v4113 = vpop.f32.mrb[0].mxu0
  %v4114 = vadd.f32 %v4071, %v4113
  %v4115 = vpop.f32.mrb[0].mxu0
  %v4116 = vadd.f32 %v4073, %v4115
  %4117 = vdwg.mxu0
  %4118 = vmatprep.subr.bf16.mxu0 %v1081
  %4119 = vmatpush1.bf16.msra.mxu0 %v1080
  %4120 = vmatprep.subr.bf16.mxu0 %v1097
  %4121 = vmatpush1.bf16.msra.mxu0 %v1096
  %4122 = vmatprep.subr.bf16.mxu0 %v1421
  %4123 = vmatpush1.bf16.msra.mxu0 %v1420
  %4124 = vmatprep.subr.bf16.mxu0 %v1437
  %4125 = vmatpush1.bf16.msra.mxu0 %v1436
  %4126 = vmatprep.subr.bf16.mxu0 %v1777
  %4127 = vmatpush1.bf16.msra.mxu0 %v1776
  %4128 = vmatprep.subr.bf16.mxu0 %v1793
  %4129 = vmatpush1.bf16.msra.mxu0 %v1792
  %4130 = vmatprep.subr.bf16.mxu0 %v2101
  %4131 = vmatpush1.bf16.msra.mxu0 %v2100
  %4132 = vmatprep.subr.bf16.mxu0 %v2117
  %4133 = vmatpush1.bf16.msra.mxu0 %v2116
  %4134 = vmatprep.subr.bf16.mxu0 %v2261
  %4135 = vmatpush1.bf16.msra.mxu0 %v2260
  %4136 = vmatprep.subr.bf16.mxu0 %v2277
  %4137 = vmatpush1.bf16.msra.mxu0 %v2276
  %4138 = vmatprep.subr.bf16.mxu0 %v2553
  %4139 = vmatpush1.bf16.msra.mxu0 %v2552
  %4140 = vmatprep.subr.bf16.mxu0 %v2569
  %4141 = vmatpush1.bf16.msra.mxu0 %v2568
  %4142 = vmatprep.subr.bf16.mxu0 %v2893
  %4143 = vmatpush1.bf16.msra.mxu0 %v2892
  %4144 = vmatprep.subr.bf16.mxu0 %v2909
  %4145 = vmatpush1.bf16.msra.mxu0 %v2908
  %4146 = vmatprep.subr.bf16.mxu0 %v3185
  %4147 = vmatpush1.bf16.msra.mxu0 %v3184
  %4148 = vmatprep.subr.bf16.mxu0 %v3201
  %4149 = vmatpush1.bf16.msra.mxu0 %v3200
  %4150 = vmatprep.mubr.bf16.mxu0 %v3509
  %4151 = vmatmul.mubr.bf16.gmra.mrb[0].mxu0 %v3508
  %v4152 = vpop.f32.mrb[0].mxu0
  %v4153 = vadd.f32 0.0, %v4152
  %v4154 = vpop.f32.mrb[0].mxu0
  %v4155 = vadd.f32 0.0, %v4154
  %v4156 = vpop.f32.mrb[0].mxu0
  %v4157 = vadd.f32 0.0, %v4156
  %v4158 = vpop.f32.mrb[0].mxu0
  %v4159 = vadd.f32 0.0, %v4158
  %4160 = vdwg.mxu0
  %4161 = vmatprep.subr.bf16.mxu0 %v3477
  %4162 = vmatpush1.bf16.msra.mxu0 %v3476
  %4163 = vmatprep.subr.bf16.mxu0 %v3493
  %4164 = vmatpush1.bf16.msra.mxu0 %v3492
  %4165 = vmatprep.subr.bf16.mxu0 0
  %4166 = vmatpush1.bf16.msra.mxu0 0
  %4167 = vmatprep.subr.bf16.mxu0 0
  %4168 = vmatpush1.bf16.msra.mxu0 0
  %4169 = vmatprep.subr.bf16.mxu0 0
  %4170 = vmatpush1.bf16.msra.mxu0 0
  %4171 = vmatprep.subr.bf16.mxu0 0
  %4172 = vmatpush1.bf16.msra.mxu0 0
  %4173 = vmatprep.subr.bf16.mxu0 0
  %4174 = vmatpush1.bf16.msra.mxu0 0
  %4175 = vmatprep.subr.bf16.mxu0 0
  %4176 = vmatpush1.bf16.msra.mxu0 0
  %4177 = vmatprep.subr.bf16.mxu0 0
  %4178 = vmatpush1.bf16.msra.mxu0 0
  %4179 = vmatprep.subr.bf16.mxu0 0
  %4180 = vmatpush1.bf16.msra.mxu0 0
  %4181 = vmatprep.subr.bf16.mxu0 0
  %4182 = vmatpush1.bf16.msra.mxu0 0
  %4183 = vmatprep.subr.bf16.mxu0 0
  %4184 = vmatpush1.bf16.msra.mxu0 0
  %4185 = vmatprep.subr.bf16.mxu0 0
  %4186 = vmatpush1.bf16.msra.mxu0 0
  %4187 = vmatprep.subr.bf16.mxu0 0
  %4188 = vmatpush1.bf16.msra.mxu0 0
  %4189 = vmatprep.subr.bf16.mxu0 0
  %4190 = vmatpush1.bf16.msra.mxu0 0
  %4191 = vmatprep.subr.bf16.mxu0 0
  %4192 = vmatpush1.bf16.msra.mxu0 0
  %4193 = vmatprep.mubr.bf16.mxu0 0
  %4194 = vmatmul.mubr.bf16.gmra.mrb[0].mxu0 %v3514
  %v4195 = vpop.f32.mrb[0].mxu0
  %v4196 = vadd.f32 %v4153, %v4195
  %v4197 = vpop.f32.mrb[0].mxu0
  %v4198 = vadd.f32 %v4155, %v4197
  %v4199 = vpop.f32.mrb[0].mxu0
  %v4200 = vadd.f32 %v4157, %v4199
  %v4201 = vpop.f32.mrb[0].mxu0
  %v4202 = vadd.f32 %v4159, %v4201
  %4203 = vdwg.mxu0
  %4204 = vst [vmem:[%s4] sm:$0xff] %v3594
  %4205 = vst [vmem:[%s4 + $0x8] sm:$0xff] %v3596
  %4206 = vst [vmem:[%s4 + $0x10] sm:$0xff] %v3680
  %4207 = vst [vmem:[%s4 + $0x18] sm:$0xff] %v3682
  %4208 = vst [vmem:[%s4 + $0x20] sm:$0xff] %v3766
  %4209 = vst [vmem:[%s4 + $0x28] sm:$0xff] %v3768
  %4210 = vst [vmem:[%s4 + $0x30] sm:$0xff] %v3852
  %4211 = vst [vmem:[%s4 + $0x38] sm:$0xff] %v3854
  %4212 = vst [vmem:[%s4 + $0x40] sm:$0xff] %v3938
  %4213 = vst [vmem:[%s4 + $0x48] sm:$0xff] %v3940
  %4214 = vst [vmem:[%s4 + $0x50] sm:$0xff] %v4024
  %4215 = vst [vmem:[%s4 + $0x58] sm:$0xff] %v4026
  %4216 = vst [vmem:[%s4 + $0x60] sm:$0xff] %v4110
  %4217 = vst [vmem:[%s4 + $0x68] sm:$0xff] %v4112
  %4218 = vst [vmem:[%s4 + $0x70] sm:$0xff] %v4196
  %4219 = vst [vmem:[%s4 + $0x78] sm:$0xff] %v4198
  %4220 = vst [vmem:[%s4 + $0x80] sm:$0xf] %v3598
  %4221 = vst [vmem:[%s4 + $0x88] sm:$0xf] %v3600
  %4222 = vst [vmem:[%s4 + $0x90] sm:$0xf] %v3684
  %4223 = vst [vmem:[%s4 + $0x98] sm:$0xf] %v3686
  %4224 = vst [vmem:[%s4 + $0xa0] sm:$0xf] %v3770
  %4225 = vst [vmem:[%s4 + $0xa8] sm:$0xf] %v3772
  %4226 = vst [vmem:[%s4 + $0xb0] sm:$0xf] %v3856
  %4227 = vst [vmem:[%s4 + $0xb8] sm:$0xf] %v3858
  %4228 = vst [vmem:[%s4 + $0xc0] sm:$0xf] %v3942
  %4229 = vst [vmem:[%s4 + $0xc8] sm:$0xf] %v3944
  %4230 = vst [vmem:[%s4 + $0xd0] sm:$0xf] %v4028
  %4231 = vst [vmem:[%s4 + $0xd8] sm:$0xf] %v4030
  %4232 = vst [vmem:[%s4 + $0xe0] sm:$0xf] %v4114
  %4233 = vst [vmem:[%s4 + $0xe8] sm:$0xf] %v4116
  %4234 = vst [vmem:[%s4 + $0xf0] sm:$0xf] %v4200
  %4235 = vst [vmem:[%s4 + $0xf8] sm:$0xf] %v4202
  // Predicated region
  $region18: #{kitti_conv_decoder_forward.9} parent=0 // pred_check
    _
  $region19: #{kitti_conv_decoder_forward.9} parent=0 // pred_check_branch
    %4237 = sbr.rel (0) target = $region21
  $region20: #{kitti_conv_decoder_forward.9} parent=0 // pred_region
    _
  $region21: #{kitti_conv_decoder_forward.9} parent=0 // pred_fallthru
    _
  // Predicated region
  $region22: #{kitti_conv_decoder_forward.9} parent=0 // pred_check
    _
  $region23: #{kitti_conv_decoder_forward.9} parent=0 // pred_check_branch
    %4239 = sbr.rel (0) target = $region25
  $region24: #{kitti_conv_decoder_forward.9} parent=0 // pred_region
    _
  $region25: #{kitti_conv_decoder_forward.9} parent=0 // pred_fallthru
    _

</llo_original>
